<compile_context>
chip_gen: v7x
topology: tpu7x:2x2x1
jax: 0.10.0
libtpu: 0.0.40
codegen_flags: <defaults>
</compile_context>

<pallas_src>
import math
import jax
import jax.numpy as jnp
from jax.experimental import pallas as pl
from jax.experimental.pallas import tpu as pltpu

# --- small config consistent with ModelArgs structure ---
VOCAB = 64
EMBED = 32                     # embeddings_dims
HEADS = 4                      # no_of_heads
HEAD_SIZE = EMBED // HEADS     # 8
LATENT = 16                    # latent_dim
EXPERTS = 8
TOP_K = 2                      # top_experts (hard-wired to 2 in the routing code)
LAYERS = 2                     # no_of_decoder_layers
HIDDEN = 2 * EMBED             # SwiGLU hidden dims (64)
B = 2
T = 8                          # block_size / seq len

BT = B * T                     # 16 tokens
S_MAX = LAYERS * HEADS * T     # 64 kv-cache rows per batch at the end of the forward
NH = (EXPERTS + 1) * HIDDEN    # 576: width of the fused expert hidden slab (per w1 / w2 half)

# Plain Python scalars only (safe to close over inside Pallas kernels).
EPS = float(jnp.finfo(jnp.float32).eps)   # torch.nn.RMSNorm(eps=None) default
NEG = -1e20
SCALE = HEAD_SIZE ** (-0.5)
OUT_SCALE = 2.0 * (LAYERS ** (-0.5))


# ----------------------------------------------------------------------------
# The single fused forward kernel (no grid; everything resident in VMEM)
# ----------------------------------------------------------------------------
def _fwd_kernel(tok_ref, emb_ref, emb_t_ref, pe_ref,
                wdkv_ref, aq_ref, wv_ref, wo_ref,
                gate_ref, rbias_ref, w12_ref, w3_ref, expand_ref,
                logits_ref, cache_ref):
    f32 = jnp.float32

    # ---- embedding lookup as a one-hot matmul (no separate XLA gather / extra launch) + PE ----
    tok = tok_ref[...]                                                       # (BT, 1) int32
    onehot = (tok == jax.lax.broadcasted_iota(jnp.int32, (BT, VOCAB), 1)).astype(f32)
    x = jnp.dot(onehot, emb_ref[...], preferred_element_type=f32) + pe_ref[...]   # (BT, C)

    # ---- causal mask hoisted once: rectangular tril(T, S) vs absolute cache columns ----
    row = jax.lax.broadcasted_iota(jnp.int32, (T, S_MAX), 0)
    col = jax.lax.broadcasted_iota(jnp.int32, (T, S_MAX), 1)
    causal = col <= row                                                      # (T, S_MAX) bool

    for l in range(LAYERS):                                                  # static unroll (2)
        s0 = l * HEADS * T

        # ================= multi-head latent attention =================
        xn = x * jax.lax.rsqrt(jnp.mean(x * x, axis=-1, keepdims=True) + EPS)   # layer_norm1
        # all-head latent / absorbed-query projections: two lane-dense matmuls
        lat = jnp.dot(xn, wdkv_ref[l], preferred_element_type=f32)          # (BT, H*L) = (16, 64)
        q = jnp.dot(xn, aq_ref[l], preferred_element_type=f32)              # (BT, H*L) = (16, 64)

        # append this layer's latents to the VMEM-resident cache (torch head-major row order)
        for b in range(B):
            for h in range(HEADS):
                cache_ref[b, s0 + h * T: s0 + (h + 1) * T, :] = \
                    lat[b * T:(b + 1) * T, h * LATENT:(h + 1) * LATENT]

        wv_l = wv_ref[l]                                                    # (H, L, Hd)
        batch_rows = []
        for b in range(B):                                                  # static unroll (2)
            per_head = []
            for h in range(HEADS):                                          # growing cache prefix
                s_h = s0 + (h + 1) * T
                kvp = cache_ref[b, :s_h, :]                                 # (s_h, L)
                qbh = q[b * T:(b + 1) * T, h * LATENT:(h + 1) * LATENT]     # (T, L)
                # scores = q @ kv^T * head_size**-0.5
                sc = jax.lax.dot_general(qbh, kvp, (((1,), (1,)), ((), ())),
                                         preferred_element_type=f32) * SCALE       # (T, s_h)
                sc = jnp.where(causal[:, :s_h], sc, NEG)
                m = jnp.max(sc, axis=-1, keepdims=True)
                p = jnp.exp(sc - m)
                w = p / jnp.sum(p, axis=-1, keepdims=True)                  # exact softmax
                v = jnp.dot(kvp, wv_l[h], preferred_element_type=f32)       # (s_h, Hd)
                per_head.append(jnp.dot(w, v, preferred_element_type=f32))  # (T, Hd)
            batch_rows.append(jnp.concatenate(per_head, axis=-1))           # (T, C)
        heads_cat = jnp.concatenate(batch_rows, axis=0)                     # (BT, C)
        # concat(head_outs) @ Wo as one matmul, then residual
        x = x + jnp.dot(heads_cat, wo_ref[l], preferred_element_type=f32)

        # ========================= MoE block ============================
        xn2 = x * jax.lax.rsqrt(jnp.mean(x * x, axis=-1, keepdims=True) + EPS)  # layer_norm2
        g = jnp.dot(xn2, gate_ref[l], preferred_element_type=f32) + rbias_ref[l]     # (BT, E)
        # top-2 routing: scatter(-1e20) + softmax (exact division)
        m1 = jnp.max(g, axis=-1, keepdims=True)
        m2 = jnp.max(jnp.where(g >= m1, -1e30, g), axis=-1, keepdims=True)
        masked = jnp.where(g >= m2, g, NEG)
        pz = jnp.exp(masked - m1)
        probs = pz / jnp.sum(pz, axis=-1, keepdims=True)                    # (BT, E)

        # 8 routed experts + shared expert in two lane-dense matmuls
        up = jnp.dot(xn2, w12_ref[l], preferred_element_type=f32)          # (BT, 2*NH) = (16,1152)
        h1 = up[:, :NH]                                                     # all w1 outputs
        h2 = up[:, NH:]                                                     # all w2 outputs
        act = (h1 * jax.nn.sigmoid(h1)) * h2                                # SwiGLU slab (BT, NH)
        # per-expert routing prob -> its 64-wide block (shared expert block gets weight 1)
        ex = expand_ref[...]                                                # (E+1, NH) 0/1 blocks
        colscale = jnp.dot(probs, ex[:EXPERTS, :], preferred_element_type=f32) + ex[EXPERTS:, :]
        x = x + jnp.dot(act * colscale, w3_ref[l], preferred_element_type=f32)      # residual

    # ---- epilogue: dropout (identity) -> 2*L^-0.5 scale -> RMSNorm -> tied LM head ----
    x = OUT_SCALE * x
    xn = x * jax.lax.rsqrt(jnp.mean(x * x, axis=-1, keepdims=True) + EPS)
    logits_ref[...] = jnp.dot(xn, emb_t_ref[...], preferred_element_type=f32)       # (BT, V)


# ----------------------------------------------------------------------------
# Forward wrapper: ONE pallas_call for the whole model
# ----------------------------------------------------------------------------
def deepseek_forward(tokens, params):
    assert tokens.shape == (B, T)
    tok2 = tokens.reshape(BT, 1).astype(jnp.int32)
    logits = pl.pallas_call(
        _fwd_kernel,
        out_shape=jax.ShapeDtypeStruct((BT, VOCAB), jnp.float32),
        scratch_shapes=[pltpu.VMEM((B, S_MAX, LATENT), jnp.float32)],   # kv cache, never in HBM
    )(tok2, params["embed_table"], params["embed_t"], params["pe"],
      params["wdkv"], params["aq"], params["wv"], params["wo"],
      params["gate_t"], params["routing_bias"], params["w12"], params["w3"],
      params["expand"])
    return logits.reshape(B, T, VOCAB)
    # TODO(synk): on v7x a grid=(B,) with dimension_semantics=("parallel",) could use the second
    # TensorCore; skipped here since the whole forward is launch-overhead bound at this size.


# ----------------------------------------------------------------------------
# Parameters (weights stored transposed vs nn.Linear -> plain x @ W matmuls; per-layer stacked)
# ----------------------------------------------------------------------------
def make_params(key):
    std = 0.02

    def nrm(k, shape):
        return std * jax.random.normal(k, shape, dtype=jnp.float32)

    keys = iter(jax.random.split(key, 1024))
    params = {}
    emb = nrm(next(keys), (VOCAB, EMBED))            # tied with linear_layer.weight
    params["embed_table"] = emb
    params["embed_t"] = emb.T                        # pre-transposed once for the LM head

    pos = jnp.arange(T, dtype=jnp.float32)[:, None]
    div = jnp.exp(jnp.arange(0, EMBED, 2, dtype=jnp.float32) * (-math.log(10000.0) / EMBED))
    pe = jnp.zeros((T, EMBED), dtype=jnp.float32)
    pe = pe.at[:, 0::2].set(jnp.sin(pos * div))
    pe = pe.at[:, 1::2].set(jnp.cos(pos * div))
    params["pe"] = jnp.tile(pe, (B, 1))              # (BT, C), batch-major token rows

    wdkv_L, aq_L, wv_L, wo_L, gate_L, rb_L, w12_L, w3_L = [], [], [], [], [], [], [], []
    for _ in range(LAYERS):
        wdkv_h, aq_h, wv_h = [], [], []
        for _ in range(HEADS):
            w_dkv_t = nrm(next(keys), (EMBED, LATENT))     # W_dkv.weight.T
            w_k_w = nrm(next(keys), (HEAD_SIZE, LATENT))   # W_k.weight
            w_v_t = nrm(next(keys), (LATENT, HEAD_SIZE))   # W_v.weight.T
            query_wT = nrm(next(keys), (EMBED, HEAD_SIZE))  # query.weight.T
            wdkv_h.append(w_dkv_t)
            aq_h.append(query_wT @ w_k_w)                  # absorbed_q (C, L), input-independent
            wv_h.append(w_v_t)
        wdkv_L.append(jnp.concatenate(wdkv_h, axis=1))     # (C, H*L): all heads side by side
        aq_L.append(jnp.concatenate(aq_h, axis=1))         # (C, H*L)
        wv_L.append(jnp.stack(wv_h))                       # (H, L, Hd)
        wo_L.append(nrm(next(keys), (EMBED, EMBED)))       # MHLA linear.weight.T
        gate_L.append(nrm(next(keys), (EMBED, EXPERTS)))
        rb_L.append(jnp.zeros((1, EXPERTS), dtype=jnp.float32))   # registered zero buffer

        w1s, w2s, w3s = [], [], []
        for _ in range(EXPERTS + 1):                       # last entry = shared expert
            w1s.append(nrm(next(keys), (EMBED, HIDDEN)))   # linear_layer1.weight.T
            w2s.append(nrm(next(keys), (EMBED, HIDDEN)))   # linear_layer2.weight.T
            w3s.append(nrm(next(keys), (HIDDEN, EMBED)))   # linear_layer3.weight.T
        # fused up-projection weight: [ w1_0 .. w1_8 | w2_0 .. w2_8 ]  -> (C, 2*NH) = (32, 1152)
        w12_L.append(jnp.concatenate(w1s + w2s, axis=1))
        # stacked down-projection weight: rows expert-major -> (NH, C) = (576, 32)
        w3_L.append(jnp.concatenate(w3s, axis=0))

    params["wdkv"] = jnp.stack(wdkv_L)                     # (LAYERS, C, H*L)
    params["aq"] = jnp.stack(aq_L)                         # (LAYERS, C, H*L)
    params["wv"] = jnp.stack(wv_L)                         # (LAYERS, H, L, Hd)
    params["wo"] = jnp.stack(wo_L)                         # (LAYERS, C, C)
    params["gate_t"] = jnp.stack(gate_L)                   # (LAYERS, C, E)
    params["routing_bias"] = jnp.stack(rb_L)               # (LAYERS, 1, E)
    params["w12"] = jnp.stack(w12_L)                       # (LAYERS, C, 2*NH)
    params["w3"] = jnp.stack(w3_L)                         # (LAYERS, NH, C)
    # 0/1 block-expansion matrix: expert e (row) -> its HIDDEN-wide activation block (columns)
    params["expand"] = jnp.repeat(jnp.eye(EXPERTS + 1, dtype=jnp.float32), HIDDEN, axis=1)  # (9,NH)
    return params


if __name__ == "__main__":
    key = jax.random.PRNGKey(0)
    pkey, tkey = jax.random.split(key)
    params = make_params(pkey)
    tokens = jax.random.randint(tkey, (B, T), 0, VOCAB, dtype=jnp.int32)

    fwd = jax.jit(deepseek_forward)
    logits = fwd(tokens, params)
    jax.block_until_ready(logits)

    assert logits.shape == (B, T, VOCAB)
    assert bool(jnp.all(jnp.isfinite(logits)))
    print("KERNEL_OK")
</pallas_src>

<mosaic_0001>
module attributes {stable_mosaic.version = 11 : i64} {
  func.func @_fwd_kernel(%arg0: memref<16x1xi32, #tpu.memory_space<vmem>>, %arg1: memref<64x32xf32, #tpu.memory_space<vmem>>, %arg2: memref<32x64xf32, #tpu.memory_space<vmem>>, %arg3: memref<16x32xf32, #tpu.memory_space<vmem>>, %arg4: memref<2x32x64xf32, #tpu.memory_space<vmem>>, %arg5: memref<2x32x64xf32, #tpu.memory_space<vmem>>, %arg6: memref<2x4x16x8xf32, #tpu.memory_space<vmem>>, %arg7: memref<2x32x32xf32, #tpu.memory_space<vmem>>, %arg8: memref<2x32x8xf32, #tpu.memory_space<vmem>>, %arg9: memref<2x1x8xf32, #tpu.memory_space<vmem>>, %arg10: memref<2x32x1152xf32, #tpu.memory_space<vmem>>, %arg11: memref<2x576x32xf32, #tpu.memory_space<vmem>>, %arg12: memref<9x576xf32, #tpu.memory_space<vmem>>, %arg13: memref<16x64xf32, #tpu.memory_space<vmem>>, %arg14: memref<2x64x16xf32, #tpu.memory_space<vmem>>) attributes {dimension_semantics = [], scalar_prefetch = 0 : i64, scratch_operands = 1 : i64, tpu.core_type = #tpu.core_type<tc>} {
    %c0 = arith.constant 0 : index
    %c0_0 = arith.constant 0 : index
    %0 = vector.load %arg0[%c0, %c0_0] : memref<16x1xi32, #tpu.memory_space<vmem>>, vector<16x1xi32>
    %1 = tpu.iota {dimensions = array<i32: 1>} : vector<16x64xi32>
    %2 = vector.broadcast %0 : vector<16x1xi32> to vector<16x64xi32>
    %3 = arith.cmpi eq, %2, %1 : vector<16x64xi32>
    %4 = arith.extui %3 : vector<16x64xi1> to vector<16x64xi32>
    %5 = arith.sitofp %4 : vector<16x64xi32> to vector<16x64xf32>
    %c0_1 = arith.constant 0 : index
    %c0_2 = arith.constant 0 : index
    %6 = vector.load %arg1[%c0_1, %c0_2] : memref<64x32xf32, #tpu.memory_space<vmem>>, vector<64x32xf32>
    %cst = arith.constant dense<0.000000e+00> : vector<16x32xf32>
    %7 = tpu.matmul %5, %6, %cst {dimension_numbers = #tpu.dot_dimension_numbers<[1], [0], [0], [1], [0, 0, 1, 1], [], []>} : vector<16x64xf32>, vector<64x32xf32>, vector<16x32xf32> -> vector<16x32xf32>
    %c0_3 = arith.constant 0 : index
    %c0_4 = arith.constant 0 : index
    %8 = vector.load %arg3[%c0_3, %c0_4] : memref<16x32xf32, #tpu.memory_space<vmem>>, vector<16x32xf32>
    %9 = arith.addf %7, %8 : vector<16x32xf32>
    %10 = tpu.iota {dimensions = array<i32: 0>} : vector<8x64xi32>
    %11 = tpu.iota {dimensions = array<i32: 1>} : vector<8x64xi32>
    %12 = arith.cmpi sle, %11, %10 : vector<8x64xi32>
    %13 = arith.mulf %9, %9 : vector<16x32xf32>
    %cst_5 = arith.constant dense<0.000000e+00> : vector<16xf32>
    %14 = vector.multi_reduction <add>, %13, %cst_5 [1] : vector<16x32xf32> to vector<16xf32>
    %15 = vector.shape_cast %14 : vector<16xf32> to vector<16x1xf32>
    %cst_6 = arith.constant 3.200000e+01 : f32
    %16 = vector.broadcast %cst_6 : f32 to vector<16x1xf32>
    %17 = arith.divf %15, %16 : vector<16x1xf32>
    %cst_7 = arith.constant 1.1920929E-7 : f32
    %18 = vector.broadcast %cst_7 : f32 to vector<16x1xf32>
    %19 = arith.addf %17, %18 : vector<16x1xf32>
    %20 = math.rsqrt %19 : vector<16x1xf32>
    %21 = vector.broadcast %20 : vector<16x1xf32> to vector<16x32xf32>
    %22 = arith.mulf %9, %21 : vector<16x32xf32>
    %c0_8 = arith.constant 0 : index
    %c0_9 = arith.constant 0 : index
    %c0_10 = arith.constant 0 : index
    %23 = vector.load %arg4[%c0_8, %c0_9, %c0_10] : memref<2x32x64xf32, #tpu.memory_space<vmem>>, vector<1x32x64xf32>
    %24 = vector.shape_cast %23 : vector<1x32x64xf32> to vector<32x64xf32>
    %cst_11 = arith.constant dense<0.000000e+00> : vector<16x64xf32>
    %25 = tpu.matmul %22, %24, %cst_11 {dimension_numbers = #tpu.dot_dimension_numbers<[1], [0], [0], [1], [0, 0, 1, 1], [], []>} : vector<16x32xf32>, vector<32x64xf32>, vector<16x64xf32> -> vector<16x64xf32>
    %c0_12 = arith.constant 0 : index
    %c0_13 = arith.constant 0 : index
    %c0_14 = arith.constant 0 : index
    %26 = vector.load %arg5[%c0_12, %c0_13, %c0_14] : memref<2x32x64xf32, #tpu.memory_space<vmem>>, vector<1x32x64xf32>
    %27 = vector.shape_cast %26 : vector<1x32x64xf32> to vector<32x64xf32>
    %cst_15 = arith.constant dense<0.000000e+00> : vector<16x64xf32>
    %28 = tpu.matmul %22, %27, %cst_15 {dimension_numbers = #tpu.dot_dimension_numbers<[1], [0], [0], [1], [0, 0, 1, 1], [], []>} : vector<16x32xf32>, vector<32x64xf32>, vector<16x64xf32> -> vector<16x64xf32>
    %29 = vector.extract_strided_slice %25 {offsets = [0, 0], sizes = [8, 16], strides = [1, 1]} : vector<16x64xf32> to vector<8x16xf32>
    %c0_16 = arith.constant 0 : index
    %c0_17 = arith.constant 0 : index
    %c0_18 = arith.constant 0 : index
    %30 = vector.load %arg14[%c0_16, %c0_17, %c0_18] : memref<2x64x16xf32, #tpu.memory_space<vmem>>, vector<1x8x16xf32>
    %31 = vector.shape_cast %30 : vector<1x8x16xf32> to vector<8x16xf32>
    %32 = vector.shape_cast %29 : vector<8x16xf32> to vector<1x8x16xf32>
    tpu.vector_store %arg14[%c0_16, %c0_17, %c0_18], %32 {strides = array<i32>} : memref<2x64x16xf32, #tpu.memory_space<vmem>>, vector<1x8x16xf32>,
    %33 = vector.extract_strided_slice %25 {offsets = [0, 16], sizes = [8, 16], strides = [1, 1]} : vector<16x64xf32> to vector<8x16xf32>
    %c0_19 = arith.constant 0 : index
    %c8 = arith.constant 8 : index
    %c0_20 = arith.constant 0 : index
    %34 = vector.load %arg14[%c0_19, %c8, %c0_20] : memref<2x64x16xf32, #tpu.memory_space<vmem>>, vector<1x8x16xf32>
    %35 = vector.shape_cast %34 : vector<1x8x16xf32> to vector<8x16xf32>
    %36 = vector.shape_cast %33 : vector<8x16xf32> to vector<1x8x16xf32>
    tpu.vector_store %arg14[%c0_19, %c8, %c0_20], %36 {strides = array<i32>} : memref<2x64x16xf32, #tpu.memory_space<vmem>>, vector<1x8x16xf32>,
    %37 = vector.extract_strided_slice %25 {offsets = [0, 32], sizes = [8, 16], strides = [1, 1]} : vector<16x64xf32> to vector<8x16xf32>
    %c0_21 = arith.constant 0 : index
    %c16 = arith.constant 16 : index
    %c0_22 = arith.constant 0 : index
    %38 = vector.load %arg14[%c0_21, %c16, %c0_22] : memref<2x64x16xf32, #tpu.memory_space<vmem>>, vector<1x8x16xf32>
    %39 = vector.shape_cast %38 : vector<1x8x16xf32> to vector<8x16xf32>
    %40 = vector.shape_cast %37 : vector<8x16xf32> to vector<1x8x16xf32>
    tpu.vector_store %arg14[%c0_21, %c16, %c0_22], %40 {strides = array<i32>} : memref<2x64x16xf32, #tpu.memory_space<vmem>>, vector<1x8x16xf32>,
    %41 = vector.extract_strided_slice %25 {offsets = [0, 48], sizes = [8, 16], strides = [1, 1]} : vector<16x64xf32> to vector<8x16xf32>
    %c0_23 = arith.constant 0 : index
    %c24 = arith.constant 24 : index
    %c0_24 = arith.constant 0 : index
    %42 = vector.load %arg14[%c0_23, %c24, %c0_24] : memref<2x64x16xf32, #tpu.memory_space<vmem>>, vector<1x8x16xf32>
    %43 = vector.shape_cast %42 : vector<1x8x16xf32> to vector<8x16xf32>
    %44 = vector.shape_cast %41 : vector<8x16xf32> to vector<1x8x16xf32>
    tpu.vector_store %arg14[%c0_23, %c24, %c0_24], %44 {strides = array<i32>} : memref<2x64x16xf32, #tpu.memory_space<vmem>>, vector<1x8x16xf32>,
    %45 = vector.extract_strided_slice %25 {offsets = [8, 0], sizes = [8, 16], strides = [1, 1]} : vector<16x64xf32> to vector<8x16xf32>
    %c1 = arith.constant 1 : index
    %c0_25 = arith.constant 0 : index
    %c0_26 = arith.constant 0 : index
    %46 = vector.load %arg14[%c1, %c0_25, %c0_26] : memref<2x64x16xf32, #tpu.memory_space<vmem>>, vector<1x8x16xf32>
    %47 = vector.shape_cast %46 : vector<1x8x16xf32> to vector<8x16xf32>
    %48 = vector.shape_cast %45 : vector<8x16xf32> to vector<1x8x16xf32>
    tpu.vector_store %arg14[%c1, %c0_25, %c0_26], %48 {strides = array<i32>} : memref<2x64x16xf32, #tpu.memory_space<vmem>>, vector<1x8x16xf32>,
    %49 = vector.extract_strided_slice %25 {offsets = [8, 16], sizes = [8, 16], strides = [1, 1]} : vector<16x64xf32> to vector<8x16xf32>
    %c1_27 = arith.constant 1 : index
    %c8_28 = arith.constant 8 : index
    %c0_29 = arith.constant 0 : index
    %50 = vector.load %arg14[%c1_27, %c8_28, %c0_29] : memref<2x64x16xf32, #tpu.memory_space<vmem>>, vector<1x8x16xf32>
    %51 = vector.shape_cast %50 : vector<1x8x16xf32> to vector<8x16xf32>
    %52 = vector.shape_cast %49 : vector<8x16xf32> to vector<1x8x16xf32>
    tpu.vector_store %arg14[%c1_27, %c8_28, %c0_29], %52 {strides = array<i32>} : memref<2x64x16xf32, #tpu.memory_space<vmem>>, vector<1x8x16xf32>,
    %53 = vector.extract_strided_slice %25 {offsets = [8, 32], sizes = [8, 16], strides = [1, 1]} : vector<16x64xf32> to vector<8x16xf32>
    %c1_30 = arith.constant 1 : index
    %c16_31 = arith.constant 16 : index
    %c0_32 = arith.constant 0 : index
    %54 = vector.load %arg14[%c1_30, %c16_31, %c0_32] : memref<2x64x16xf32, #tpu.memory_space<vmem>>, vector<1x8x16xf32>
    %55 = vector.shape_cast %54 : vector<1x8x16xf32> to vector<8x16xf32>
    %56 = vector.shape_cast %53 : vector<8x16xf32> to vector<1x8x16xf32>
    tpu.vector_store %arg14[%c1_30, %c16_31, %c0_32], %56 {strides = array<i32>} : memref<2x64x16xf32, #tpu.memory_space<vmem>>, vector<1x8x16xf32>,
    %57 = vector.extract_strided_slice %25 {offsets = [8, 48], sizes = [8, 16], strides = [1, 1]} : vector<16x64xf32> to vector<8x16xf32>
    %c1_33 = arith.constant 1 : index
    %c24_34 = arith.constant 24 : index
    %c0_35 = arith.constant 0 : index
    %58 = vector.load %arg14[%c1_33, %c24_34, %c0_35] : memref<2x64x16xf32, #tpu.memory_space<vmem>>, vector<1x8x16xf32>
    %59 = vector.shape_cast %58 : vector<1x8x16xf32> to vector<8x16xf32>
    %60 = vector.shape_cast %57 : vector<8x16xf32> to vector<1x8x16xf32>
    tpu.vector_store %arg14[%c1_33, %c24_34, %c0_35], %60 {strides = array<i32>} : memref<2x64x16xf32, #tpu.memory_space<vmem>>, vector<1x8x16xf32>,
    %c0_36 = arith.constant 0 : index
    %c0_37 = arith.constant 0 : index
    %c0_38 = arith.constant 0 : index
    %c0_39 = arith.constant 0 : index
    %61 = vector.load %arg6[%c0_36, %c0_37, %c0_38, %c0_39] : memref<2x4x16x8xf32, #tpu.memory_space<vmem>>, vector<1x4x16x8xf32>
    %62 = vector.shape_cast %61 : vector<1x4x16x8xf32> to vector<4x16x8xf32>
    %c0_40 = arith.constant 0 : index
    %c0_41 = arith.constant 0 : index
    %c0_42 = arith.constant 0 : index
    %63 = vector.load %arg14[%c0_40, %c0_41, %c0_42] : memref<2x64x16xf32, #tpu.memory_space<vmem>>, vector<1x8x16xf32>
    %64 = vector.shape_cast %63 : vector<1x8x16xf32> to vector<8x16xf32>
    %65 = vector.extract_strided_slice %28 {offsets = [0, 0], sizes = [8, 16], strides = [1, 1]} : vector<16x64xf32> to vector<8x16xf32>
    %cst_43 = arith.constant dense<0.000000e+00> : vector<8x8xf32>
    %66 = tpu.matmul %65, %64, %cst_43 {dimension_numbers = #tpu.dot_dimension_numbers<[1], [1], [0], [0], [0, 0, 1, 0], [], []>} : vector<8x16xf32>, vector<8x16xf32>, vector<8x8xf32> -> vector<8x8xf32>
    %cst_44 = arith.constant 0.353553385 : f32
    %67 = vector.broadcast %cst_44 : f32 to vector<8x8xf32>
    %68 = arith.mulf %66, %67 : vector<8x8xf32>
    %69 = vector.extract_strided_slice %12 {offsets = [0, 0], sizes = [8, 8], strides = [1, 1]} : vector<8x64xi1> to vector<8x8xi1>
    %cst_45 = arith.constant -1.000000e+20 : f32
    %70 = vector.broadcast %cst_45 : f32 to vector<8x8xf32>
    %71 = arith.select %69, %68, %70 : vector<8x8xi1>, vector<8x8xf32>
    %cst_46 = arith.constant dense<0xFF800000> : vector<8xf32>
    %72 = vector.multi_reduction <maximumf>, %71, %cst_46 [1] : vector<8x8xf32> to vector<8xf32>
    %73 = vector.shape_cast %72 : vector<8xf32> to vector<8x1xf32>
    %74 = vector.broadcast %73 : vector<8x1xf32> to vector<8x8xf32>
    %75 = arith.subf %71, %74 : vector<8x8xf32>
    %76 = math.exp %75 : vector<8x8xf32>
    %cst_47 = arith.constant dense<0.000000e+00> : vector<8xf32>
    %77 = vector.multi_reduction <add>, %76, %cst_47 [1] : vector<8x8xf32> to vector<8xf32>
    %78 = vector.shape_cast %77 : vector<8xf32> to vector<8x1xf32>
    %79 = vector.broadcast %78 : vector<8x1xf32> to vector<8x8xf32>
    %80 = arith.divf %76, %79 : vector<8x8xf32>
    %81 = vector.extract_strided_slice %62 {offsets = [0, 0, 0], sizes = [1, 16, 8], strides = [1, 1, 1]} : vector<4x16x8xf32> to vector<1x16x8xf32>
    %82 = vector.shape_cast %81 : vector<1x16x8xf32> to vector<16x8xf32>
    %cst_48 = arith.constant dense<0.000000e+00> : vector<8x8xf32>
    %83 = tpu.matmul %64, %82, %cst_48 {dimension_numbers = #tpu.dot_dimension_numbers<[1], [0], [0], [1], [0, 0, 1, 1], [], []>} : vector<8x16xf32>, vector<16x8xf32>, vector<8x8xf32> -> vector<8x8xf32>
    %cst_49 = arith.constant dense<0.000000e+00> : vector<8x8xf32>
    %84 = tpu.matmul %80, %83, %cst_49 {dimension_numbers = #tpu.dot_dimension_numbers<[1], [0], [0], [1], [0, 0, 1, 1], [], []>} : vector<8x8xf32>, vector<8x8xf32>, vector<8x8xf32> -> vector<8x8xf32>
    %c0_50 = arith.constant 0 : index
    %c0_51 = arith.constant 0 : index
    %c0_52 = arith.constant 0 : index
    %85 = vector.load %arg14[%c0_50, %c0_51, %c0_52] : memref<2x64x16xf32, #tpu.memory_space<vmem>>, vector<1x16x16xf32>
    %86 = vector.shape_cast %85 : vector<1x16x16xf32> to vector<16x16xf32>
    %87 = vector.extract_strided_slice %28 {offsets = [0, 16], sizes = [8, 16], strides = [1, 1]} : vector<16x64xf32> to vector<8x16xf32>
    %cst_53 = arith.constant dense<0.000000e+00> : vector<8x16xf32>
    %88 = tpu.matmul %87, %86, %cst_53 {dimension_numbers = #tpu.dot_dimension_numbers<[1], [1], [0], [0], [0, 0, 1, 0], [], []>} : vector<8x16xf32>, vector<16x16xf32>, vector<8x16xf32> -> vector<8x16xf32>
    %cst_54 = arith.constant 0.353553385 : f32
    %89 = vector.broadcast %cst_54 : f32 to vector<8x16xf32>
    %90 = arith.mulf %88, %89 : vector<8x16xf32>
    %91 = vector.extract_strided_slice %12 {offsets = [0, 0], sizes = [8, 16], strides = [1, 1]} : vector<8x64xi1> to vector<8x16xi1>
    %cst_55 = arith.constant -1.000000e+20 : f32
    %92 = vector.broadcast %cst_55 : f32 to vector<8x16xf32>
    %93 = arith.select %91, %90, %92 : vector<8x16xi1>, vector<8x16xf32>
    %cst_56 = arith.constant dense<0xFF800000> : vector<8xf32>
    %94 = vector.multi_reduction <maximumf>, %93, %cst_56 [1] : vector<8x16xf32> to vector<8xf32>
    %95 = vector.shape_cast %94 : vector<8xf32> to vector<8x1xf32>
    %96 = vector.broadcast %95 : vector<8x1xf32> to vector<8x16xf32>
    %97 = arith.subf %93, %96 : vector<8x16xf32>
    %98 = math.exp %97 : vector<8x16xf32>
    %cst_57 = arith.constant dense<0.000000e+00> : vector<8xf32>
    %99 = vector.multi_reduction <add>, %98, %cst_57 [1] : vector<8x16xf32> to vector<8xf32>
    %100 = vector.shape_cast %99 : vector<8xf32> to vector<8x1xf32>
    %101 = vector.broadcast %100 : vector<8x1xf32> to vector<8x16xf32>
    %102 = arith.divf %98, %101 : vector<8x16xf32>
    %103 = vector.extract_strided_slice %62 {offsets = [1, 0, 0], sizes = [1, 16, 8], strides = [1, 1, 1]} : vector<4x16x8xf32> to vector<1x16x8xf32>
    %104 = vector.shape_cast %103 : vector<1x16x8xf32> to vector<16x8xf32>
    %cst_58 = arith.constant dense<0.000000e+00> : vector<16x8xf32>
    %105 = tpu.matmul %86, %104, %cst_58 {dimension_numbers = #tpu.dot_dimension_numbers<[1], [0], [0], [1], [0, 0, 1, 1], [], []>} : vector<16x16xf32>, vector<16x8xf32>, vector<16x8xf32> -> vector<16x8xf32>
    %cst_59 = arith.constant dense<0.000000e+00> : vector<8x8xf32>
    %106 = tpu.matmul %102, %105, %cst_59 {dimension_numbers = #tpu.dot_dimension_numbers<[1], [0], [0], [1], [0, 0, 1, 1], [], []>} : vector<8x16xf32>, vector<16x8xf32>, vector<8x8xf32> -> vector<8x8xf32>
    %c0_60 = arith.constant 0 : index
    %c0_61 = arith.constant 0 : index
    %c0_62 = arith.constant 0 : index
    %107 = vector.load %arg14[%c0_60, %c0_61, %c0_62] : memref<2x64x16xf32, #tpu.memory_space<vmem>>, vector<1x24x16xf32>
    %108 = vector.shape_cast %107 : vector<1x24x16xf32> to vector<24x16xf32>
    %109 = vector.extract_strided_slice %28 {offsets = [0, 32], sizes = [8, 16], strides = [1, 1]} : vector<16x64xf32> to vector<8x16xf32>
    %cst_63 = arith.constant dense<0.000000e+00> : vector<8x24xf32>
    %110 = tpu.matmul %109, %108, %cst_63 {dimension_numbers = #tpu.dot_dimension_numbers<[1], [1], [0], [0], [0, 0, 1, 0], [], []>} : vector<8x16xf32>, vector<24x16xf32>, vector<8x24xf32> -> vector<8x24xf32>
    %cst_64 = arith.constant 0.353553385 : f32
    %111 = vector.broadcast %cst_64 : f32 to vector<8x24xf32>
    %112 = arith.mulf %110, %111 : vector<8x24xf32>
    %113 = vector.extract_strided_slice %12 {offsets = [0, 0], sizes = [8, 24], strides = [1, 1]} : vector<8x64xi1> to vector<8x24xi1>
    %cst_65 = arith.constant -1.000000e+20 : f32
    %114 = vector.broadcast %cst_65 : f32 to vector<8x24xf32>
    %115 = arith.select %113, %112, %114 : vector<8x24xi1>, vector<8x24xf32>
    %cst_66 = arith.constant dense<0xFF800000> : vector<8xf32>
    %116 = vector.multi_reduction <maximumf>, %115, %cst_66 [1] : vector<8x24xf32> to vector<8xf32>
    %117 = vector.shape_cast %116 : vector<8xf32> to vector<8x1xf32>
    %118 = vector.broadcast %117 : vector<8x1xf32> to vector<8x24xf32>
    %119 = arith.subf %115, %118 : vector<8x24xf32>
    %120 = math.exp %119 : vector<8x24xf32>
    %cst_67 = arith.constant dense<0.000000e+00> : vector<8xf32>
    %121 = vector.multi_reduction <add>, %120, %cst_67 [1] : vector<8x24xf32> to vector<8xf32>
    %122 = vector.shape_cast %121 : vector<8xf32> to vector<8x1xf32>
    %123 = vector.broadcast %122 : vector<8x1xf32> to vector<8x24xf32>
    %124 = arith.divf %120, %123 : vector<8x24xf32>
    %125 = vector.extract_strided_slice %62 {offsets = [2, 0, 0], sizes = [1, 16, 8], strides = [1, 1, 1]} : vector<4x16x8xf32> to vector<1x16x8xf32>
    %126 = vector.shape_cast %125 : vector<1x16x8xf32> to vector<16x8xf32>
    %cst_68 = arith.constant dense<0.000000e+00> : vector<24x8xf32>
    %127 = tpu.matmul %108, %126, %cst_68 {dimension_numbers = #tpu.dot_dimension_numbers<[1], [0], [0], [1], [0, 0, 1, 1], [], []>} : vector<24x16xf32>, vector<16x8xf32>, vector<24x8xf32> -> vector<24x8xf32>
    %cst_69 = arith.constant dense<0.000000e+00> : vector<8x8xf32>
    %128 = tpu.matmul %124, %127, %cst_69 {dimension_numbers = #tpu.dot_dimension_numbers<[1], [0], [0], [1], [0, 0, 1, 1], [], []>} : vector<8x24xf32>, vector<24x8xf32>, vector<8x8xf32> -> vector<8x8xf32>
    %c0_70 = arith.constant 0 : index
    %c0_71 = arith.constant 0 : index
    %c0_72 = arith.constant 0 : index
    %129 = vector.load %arg14[%c0_70, %c0_71, %c0_72] : memref<2x64x16xf32, #tpu.memory_space<vmem>>, vector<1x32x16xf32>
    %130 = vector.shape_cast %129 : vector<1x32x16xf32> to vector<32x16xf32>
    %131 = vector.extract_strided_slice %28 {offsets = [0, 48], sizes = [8, 16], strides = [1, 1]} : vector<16x64xf32> to vector<8x16xf32>
    %cst_73 = arith.constant dense<0.000000e+00> : vector<8x32xf32>
    %132 = tpu.matmul %131, %130, %cst_73 {dimension_numbers = #tpu.dot_dimension_numbers<[1], [1], [0], [0], [0, 0, 1, 0], [], []>} : vector<8x16xf32>, vector<32x16xf32>, vector<8x32xf32> -> vector<8x32xf32>
    %cst_74 = arith.constant 0.353553385 : f32
    %133 = vector.broadcast %cst_74 : f32 to vector<8x32xf32>
    %134 = arith.mulf %132, %133 : vector<8x32xf32>
    %135 = vector.extract_strided_slice %12 {offsets = [0, 0], sizes = [8, 32], strides = [1, 1]} : vector<8x64xi1> to vector<8x32xi1>
    %cst_75 = arith.constant -1.000000e+20 : f32
    %136 = vector.broadcast %cst_75 : f32 to vector<8x32xf32>
    %137 = arith.select %135, %134, %136 : vector<8x32xi1>, vector<8x32xf32>
    %cst_76 = arith.constant dense<0xFF800000> : vector<8xf32>
    %138 = vector.multi_reduction <maximumf>, %137, %cst_76 [1] : vector<8x32xf32> to vector<8xf32>
    %139 = vector.shape_cast %138 : vector<8xf32> to vector<8x1xf32>
    %140 = vector.broadcast %139 : vector<8x1xf32> to vector<8x32xf32>
    %141 = arith.subf %137, %140 : vector<8x32xf32>
    %142 = math.exp %141 : vector<8x32xf32>
    %cst_77 = arith.constant dense<0.000000e+00> : vector<8xf32>
    %143 = vector.multi_reduction <add>, %142, %cst_77 [1] : vector<8x32xf32> to vector<8xf32>
    %144 = vector.shape_cast %143 : vector<8xf32> to vector<8x1xf32>
    %145 = vector.broadcast %144 : vector<8x1xf32> to vector<8x32xf32>
    %146 = arith.divf %142, %145 : vector<8x32xf32>
    %147 = vector.extract_strided_slice %62 {offsets = [3, 0, 0], sizes = [1, 16, 8], strides = [1, 1, 1]} : vector<4x16x8xf32> to vector<1x16x8xf32>
    %148 = vector.shape_cast %147 : vector<1x16x8xf32> to vector<16x8xf32>
    %cst_78 = arith.constant dense<0.000000e+00> : vector<32x8xf32>
    %149 = tpu.matmul %130, %148, %cst_78 {dimension_numbers = #tpu.dot_dimension_numbers<[1], [0], [0], [1], [0, 0, 1, 1], [], []>} : vector<32x16xf32>, vector<16x8xf32>, vector<32x8xf32> -> vector<32x8xf32>
    %cst_79 = arith.constant dense<0.000000e+00> : vector<8x8xf32>
    %150 = tpu.matmul %146, %149, %cst_79 {dimension_numbers = #tpu.dot_dimension_numbers<[1], [0], [0], [1], [0, 0, 1, 1], [], []>} : vector<8x32xf32>, vector<32x8xf32>, vector<8x8xf32> -> vector<8x8xf32>
    %151 = tpu.concatenate %84, %106, %128, %150 in 1 : vector<8x8xf32>, vector<8x8xf32>, vector<8x8xf32>, vector<8x8xf32> -> vector<8x32xf32>
    %c1_80 = arith.constant 1 : index
    %c0_81 = arith.constant 0 : index
    %c0_82 = arith.constant 0 : index
    %152 = vector.load %arg14[%c1_80, %c0_81, %c0_82] : memref<2x64x16xf32, #tpu.memory_space<vmem>>, vector<1x8x16xf32>
    %153 = vector.shape_cast %152 : vector<1x8x16xf32> to vector<8x16xf32>
    %154 = vector.extract_strided_slice %28 {offsets = [8, 0], sizes = [8, 16], strides = [1, 1]} : vector<16x64xf32> to vector<8x16xf32>
    %cst_83 = arith.constant dense<0.000000e+00> : vector<8x8xf32>
    %155 = tpu.matmul %154, %153, %cst_83 {dimension_numbers = #tpu.dot_dimension_numbers<[1], [1], [0], [0], [0, 0, 1, 0], [], []>} : vector<8x16xf32>, vector<8x16xf32>, vector<8x8xf32> -> vector<8x8xf32>
    %cst_84 = arith.constant 0.353553385 : f32
    %156 = vector.broadcast %cst_84 : f32 to vector<8x8xf32>
    %157 = arith.mulf %155, %156 : vector<8x8xf32>
    %158 = vector.extract_strided_slice %12 {offsets = [0, 0], sizes = [8, 8], strides = [1, 1]} : vector<8x64xi1> to vector<8x8xi1>
    %cst_85 = arith.constant -1.000000e+20 : f32
    %159 = vector.broadcast %cst_85 : f32 to vector<8x8xf32>
    %160 = arith.select %158, %157, %159 : vector<8x8xi1>, vector<8x8xf32>
    %cst_86 = arith.constant dense<0xFF800000> : vector<8xf32>
    %161 = vector.multi_reduction <maximumf>, %160, %cst_86 [1] : vector<8x8xf32> to vector<8xf32>
    %162 = vector.shape_cast %161 : vector<8xf32> to vector<8x1xf32>
    %163 = vector.broadcast %162 : vector<8x1xf32> to vector<8x8xf32>
    %164 = arith.subf %160, %163 : vector<8x8xf32>
    %165 = math.exp %164 : vector<8x8xf32>
    %cst_87 = arith.constant dense<0.000000e+00> : vector<8xf32>
    %166 = vector.multi_reduction <add>, %165, %cst_87 [1] : vector<8x8xf32> to vector<8xf32>
    %167 = vector.shape_cast %166 : vector<8xf32> to vector<8x1xf32>
    %168 = vector.broadcast %167 : vector<8x1xf32> to vector<8x8xf32>
    %169 = arith.divf %165, %168 : vector<8x8xf32>
    %170 = vector.extract_strided_slice %62 {offsets = [0, 0, 0], sizes = [1, 16, 8], strides = [1, 1, 1]} : vector<4x16x8xf32> to vector<1x16x8xf32>
    %171 = vector.shape_cast %170 : vector<1x16x8xf32> to vector<16x8xf32>
    %cst_88 = arith.constant dense<0.000000e+00> : vector<8x8xf32>
    %172 = tpu.matmul %153, %171, %cst_88 {dimension_numbers = #tpu.dot_dimension_numbers<[1], [0], [0], [1], [0, 0, 1, 1], [], []>} : vector<8x16xf32>, vector<16x8xf32>, vector<8x8xf32> -> vector<8x8xf32>
    %cst_89 = arith.constant dense<0.000000e+00> : vector<8x8xf32>
    %173 = tpu.matmul %169, %172, %cst_89 {dimension_numbers = #tpu.dot_dimension_numbers<[1], [0], [0], [1], [0, 0, 1, 1], [], []>} : vector<8x8xf32>, vector<8x8xf32>, vector<8x8xf32> -> vector<8x8xf32>
    %c1_90 = arith.constant 1 : index
    %c0_91 = arith.constant 0 : index
    %c0_92 = arith.constant 0 : index
    %174 = vector.load %arg14[%c1_90, %c0_91, %c0_92] : memref<2x64x16xf32, #tpu.memory_space<vmem>>, vector<1x16x16xf32>
    %175 = vector.shape_cast %174 : vector<1x16x16xf32> to vector<16x16xf32>
    %176 = vector.extract_strided_slice %28 {offsets = [8, 16], sizes = [8, 16], strides = [1, 1]} : vector<16x64xf32> to vector<8x16xf32>
    %cst_93 = arith.constant dense<0.000000e+00> : vector<8x16xf32>
    %177 = tpu.matmul %176, %175, %cst_93 {dimension_numbers = #tpu.dot_dimension_numbers<[1], [1], [0], [0], [0, 0, 1, 0], [], []>} : vector<8x16xf32>, vector<16x16xf32>, vector<8x16xf32> -> vector<8x16xf32>
    %cst_94 = arith.constant 0.353553385 : f32
    %178 = vector.broadcast %cst_94 : f32 to vector<8x16xf32>
    %179 = arith.mulf %177, %178 : vector<8x16xf32>
    %180 = vector.extract_strided_slice %12 {offsets = [0, 0], sizes = [8, 16], strides = [1, 1]} : vector<8x64xi1> to vector<8x16xi1>
    %cst_95 = arith.constant -1.000000e+20 : f32
    %181 = vector.broadcast %cst_95 : f32 to vector<8x16xf32>
    %182 = arith.select %180, %179, %181 : vector<8x16xi1>, vector<8x16xf32>
    %cst_96 = arith.constant dense<0xFF800000> : vector<8xf32>
    %183 = vector.multi_reduction <maximumf>, %182, %cst_96 [1] : vector<8x16xf32> to vector<8xf32>
    %184 = vector.shape_cast %183 : vector<8xf32> to vector<8x1xf32>
    %185 = vector.broadcast %184 : vector<8x1xf32> to vector<8x16xf32>
    %186 = arith.subf %182, %185 : vector<8x16xf32>
    %187 = math.exp %186 : vector<8x16xf32>
    %cst_97 = arith.constant dense<0.000000e+00> : vector<8xf32>
    %188 = vector.multi_reduction <add>, %187, %cst_97 [1] : vector<8x16xf32> to vector<8xf32>
    %189 = vector.shape_cast %188 : vector<8xf32> to vector<8x1xf32>
    %190 = vector.broadcast %189 : vector<8x1xf32> to vector<8x16xf32>
    %191 = arith.divf %187, %190 : vector<8x16xf32>
    %192 = vector.extract_strided_slice %62 {offsets = [1, 0, 0], sizes = [1, 16, 8], strides = [1, 1, 1]} : vector<4x16x8xf32> to vector<1x16x8xf32>
    %193 = vector.shape_cast %192 : vector<1x16x8xf32> to vector<16x8xf32>
    %cst_98 = arith.constant dense<0.000000e+00> : vector<16x8xf32>
    %194 = tpu.matmul %175, %193, %cst_98 {dimension_numbers = #tpu.dot_dimension_numbers<[1], [0], [0], [1], [0, 0, 1, 1], [], []>} : vector<16x16xf32>, vector<16x8xf32>, vector<16x8xf32> -> vector<16x8xf32>
    %cst_99 = arith.constant dense<0.000000e+00> : vector<8x8xf32>
    %195 = tpu.matmul %191, %194, %cst_99 {dimension_numbers = #tpu.dot_dimension_numbers<[1], [0], [0], [1], [0, 0, 1, 1], [], []>} : vector<8x16xf32>, vector<16x8xf32>, vector<8x8xf32> -> vector<8x8xf32>
    %c1_100 = arith.constant 1 : index
    %c0_101 = arith.constant 0 : index
    %c0_102 = arith.constant 0 : index
    %196 = vector.load %arg14[%c1_100, %c0_101, %c0_102] : memref<2x64x16xf32, #tpu.memory_space<vmem>>, vector<1x24x16xf32>
    %197 = vector.shape_cast %196 : vector<1x24x16xf32> to vector<24x16xf32>
    %198 = vector.extract_strided_slice %28 {offsets = [8, 32], sizes = [8, 16], strides = [1, 1]} : vector<16x64xf32> to vector<8x16xf32>
    %cst_103 = arith.constant dense<0.000000e+00> : vector<8x24xf32>
    %199 = tpu.matmul %198, %197, %cst_103 {dimension_numbers = #tpu.dot_dimension_numbers<[1], [1], [0], [0], [0, 0, 1, 0], [], []>} : vector<8x16xf32>, vector<24x16xf32>, vector<8x24xf32> -> vector<8x24xf32>
    %cst_104 = arith.constant 0.353553385 : f32
    %200 = vector.broadcast %cst_104 : f32 to vector<8x24xf32>
    %201 = arith.mulf %199, %200 : vector<8x24xf32>
    %202 = vector.extract_strided_slice %12 {offsets = [0, 0], sizes = [8, 24], strides = [1, 1]} : vector<8x64xi1> to vector<8x24xi1>
    %cst_105 = arith.constant -1.000000e+20 : f32
    %203 = vector.broadcast %cst_105 : f32 to vector<8x24xf32>
    %204 = arith.select %202, %201, %203 : vector<8x24xi1>, vector<8x24xf32>
    %cst_106 = arith.constant dense<0xFF800000> : vector<8xf32>
    %205 = vector.multi_reduction <maximumf>, %204, %cst_106 [1] : vector<8x24xf32> to vector<8xf32>
    %206 = vector.shape_cast %205 : vector<8xf32> to vector<8x1xf32>
    %207 = vector.broadcast %206 : vector<8x1xf32> to vector<8x24xf32>
    %208 = arith.subf %204, %207 : vector<8x24xf32>
    %209 = math.exp %208 : vector<8x24xf32>
    %cst_107 = arith.constant dense<0.000000e+00> : vector<8xf32>
    %210 = vector.multi_reduction <add>, %209, %cst_107 [1] : vector<8x24xf32> to vector<8xf32>
    %211 = vector.shape_cast %210 : vector<8xf32> to vector<8x1xf32>
    %212 = vector.broadcast %211 : vector<8x1xf32> to vector<8x24xf32>
    %213 = arith.divf %209, %212 : vector<8x24xf32>
    %214 = vector.extract_strided_slice %62 {offsets = [2, 0, 0], sizes = [1, 16, 8], strides = [1, 1, 1]} : vector<4x16x8xf32> to vector<1x16x8xf32>
    %215 = vector.shape_cast %214 : vector<1x16x8xf32> to vector<16x8xf32>
    %cst_108 = arith.constant dense<0.000000e+00> : vector<24x8xf32>
    %216 = tpu.matmul %197, %215, %cst_108 {dimension_numbers = #tpu.dot_dimension_numbers<[1], [0], [0], [1], [0, 0, 1, 1], [], []>} : vector<24x16xf32>, vector<16x8xf32>, vector<24x8xf32> -> vector<24x8xf32>
    %cst_109 = arith.constant dense<0.000000e+00> : vector<8x8xf32>
    %217 = tpu.matmul %213, %216, %cst_109 {dimension_numbers = #tpu.dot_dimension_numbers<[1], [0], [0], [1], [0, 0, 1, 1], [], []>} : vector<8x24xf32>, vector<24x8xf32>, vector<8x8xf32> -> vector<8x8xf32>
    %c1_110 = arith.constant 1 : index
    %c0_111 = arith.constant 0 : index
    %c0_112 = arith.constant 0 : index
    %218 = vector.load %arg14[%c1_110, %c0_111, %c0_112] : memref<2x64x16xf32, #tpu.memory_space<vmem>>, vector<1x32x16xf32>
    %219 = vector.shape_cast %218 : vector<1x32x16xf32> to vector<32x16xf32>
    %220 = vector.extract_strided_slice %28 {offsets = [8, 48], sizes = [8, 16], strides = [1, 1]} : vector<16x64xf32> to vector<8x16xf32>
    %cst_113 = arith.constant dense<0.000000e+00> : vector<8x32xf32>
    %221 = tpu.matmul %220, %219, %cst_113 {dimension_numbers = #tpu.dot_dimension_numbers<[1], [1], [0], [0], [0, 0, 1, 0], [], []>} : vector<8x16xf32>, vector<32x16xf32>, vector<8x32xf32> -> vector<8x32xf32>
    %cst_114 = arith.constant 0.353553385 : f32
    %222 = vector.broadcast %cst_114 : f32 to vector<8x32xf32>
    %223 = arith.mulf %221, %222 : vector<8x32xf32>
    %224 = vector.extract_strided_slice %12 {offsets = [0, 0], sizes = [8, 32], strides = [1, 1]} : vector<8x64xi1> to vector<8x32xi1>
    %cst_115 = arith.constant -1.000000e+20 : f32
    %225 = vector.broadcast %cst_115 : f32 to vector<8x32xf32>
    %226 = arith.select %224, %223, %225 : vector<8x32xi1>, vector<8x32xf32>
    %cst_116 = arith.constant dense<0xFF800000> : vector<8xf32>
    %227 = vector.multi_reduction <maximumf>, %226, %cst_116 [1] : vector<8x32xf32> to vector<8xf32>
    %228 = vector.shape_cast %227 : vector<8xf32> to vector<8x1xf32>
    %229 = vector.broadcast %228 : vector<8x1xf32> to vector<8x32xf32>
    %230 = arith.subf %226, %229 : vector<8x32xf32>
    %231 = math.exp %230 : vector<8x32xf32>
    %cst_117 = arith.constant dense<0.000000e+00> : vector<8xf32>
    %232 = vector.multi_reduction <add>, %231, %cst_117 [1] : vector<8x32xf32> to vector<8xf32>
    %233 = vector.shape_cast %232 : vector<8xf32> to vector<8x1xf32>
    %234 = vector.broadcast %233 : vector<8x1xf32> to vector<8x32xf32>
    %235 = arith.divf %231, %234 : vector<8x32xf32>
    %236 = vector.extract_strided_slice %62 {offsets = [3, 0, 0], sizes = [1, 16, 8], strides = [1, 1, 1]} : vector<4x16x8xf32> to vector<1x16x8xf32>
    %237 = vector.shape_cast %236 : vector<1x16x8xf32> to vector<16x8xf32>
    %cst_118 = arith.constant dense<0.000000e+00> : vector<32x8xf32>
    %238 = tpu.matmul %219, %237, %cst_118 {dimension_numbers = #tpu.dot_dimension_numbers<[1], [0], [0], [1], [0, 0, 1, 1], [], []>} : vector<32x16xf32>, vector<16x8xf32>, vector<32x8xf32> -> vector<32x8xf32>
    %cst_119 = arith.constant dense<0.000000e+00> : vector<8x8xf32>
    %239 = tpu.matmul %235, %238, %cst_119 {dimension_numbers = #tpu.dot_dimension_numbers<[1], [0], [0], [1], [0, 0, 1, 1], [], []>} : vector<8x32xf32>, vector<32x8xf32>, vector<8x8xf32> -> vector<8x8xf32>
    %240 = tpu.concatenate %173, %195, %217, %239 in 1 : vector<8x8xf32>, vector<8x8xf32>, vector<8x8xf32>, vector<8x8xf32> -> vector<8x32xf32>
    %241 = tpu.concatenate %151, %240 in 0 : vector<8x32xf32>, vector<8x32xf32> -> vector<16x32xf32>
    %c0_120 = arith.constant 0 : index
    %c0_121 = arith.constant 0 : index
    %c0_122 = arith.constant 0 : index
    %242 = vector.load %arg7[%c0_120, %c0_121, %c0_122] : memref<2x32x32xf32, #tpu.memory_space<vmem>>, vector<1x32x32xf32>
    %243 = vector.shape_cast %242 : vector<1x32x32xf32> to vector<32x32xf32>
    %cst_123 = arith.constant dense<0.000000e+00> : vector<16x32xf32>
    %244 = tpu.matmul %241, %243, %cst_123 {dimension_numbers = #tpu.dot_dimension_numbers<[1], [0], [0], [1], [0, 0, 1, 1], [], []>} : vector<16x32xf32>, vector<32x32xf32>, vector<16x32xf32> -> vector<16x32xf32>
    %245 = arith.addf %9, %244 : vector<16x32xf32>
    %246 = arith.mulf %245, %245 : vector<16x32xf32>
    %cst_124 = arith.constant dense<0.000000e+00> : vector<16xf32>
    %247 = vector.multi_reduction <add>, %246, %cst_124 [1] : vector<16x32xf32> to vector<16xf32>
    %248 = vector.shape_cast %247 : vector<16xf32> to vector<16x1xf32>
    %cst_125 = arith.constant 3.200000e+01 : f32
    %249 = vector.broadcast %cst_125 : f32 to vector<16x1xf32>
    %250 = arith.divf %248, %249 : vector<16x1xf32>
    %cst_126 = arith.constant 1.1920929E-7 : f32
    %251 = vector.broadcast %cst_126 : f32 to vector<16x1xf32>
    %252 = arith.addf %250, %251 : vector<16x1xf32>
    %253 = math.rsqrt %252 : vector<16x1xf32>
    %254 = vector.broadcast %253 : vector<16x1xf32> to vector<16x32xf32>
    %255 = arith.mulf %245, %254 : vector<16x32xf32>
    %c0_127 = arith.constant 0 : index
    %c0_128 = arith.constant 0 : index
    %c0_129 = arith.constant 0 : index
    %256 = vector.load %arg8[%c0_127, %c0_128, %c0_129] : memref<2x32x8xf32, #tpu.memory_space<vmem>>, vector<1x32x8xf32>
    %257 = vector.shape_cast %256 : vector<1x32x8xf32> to vector<32x8xf32>
    %cst_130 = arith.constant dense<0.000000e+00> : vector<16x8xf32>
    %258 = tpu.matmul %255, %257, %cst_130 {dimension_numbers = #tpu.dot_dimension_numbers<[1], [0], [0], [1], [0, 0, 1, 1], [], []>} : vector<16x32xf32>, vector<32x8xf32>, vector<16x8xf32> -> vector<16x8xf32>
    %c0_131 = arith.constant 0 : index
    %c0_132 = arith.constant 0 : index
    %c0_133 = arith.constant 0 : index
    %259 = vector.load %arg9[%c0_131, %c0_132, %c0_133] : memref<2x1x8xf32, #tpu.memory_space<vmem>>, vector<1x1x8xf32>
    %260 = vector.shape_cast %259 : vector<1x1x8xf32> to vector<1x8xf32>
    %261 = vector.broadcast %260 : vector<1x8xf32> to vector<16x8xf32>
    %262 = arith.addf %258, %261 : vector<16x8xf32>
    %cst_134 = arith.constant dense<0xFF800000> : vector<16xf32>
    %263 = vector.multi_reduction <maximumf>, %262, %cst_134 [1] : vector<16x8xf32> to vector<16xf32>
    %264 = vector.shape_cast %263 : vector<16xf32> to vector<16x1xf32>
    %265 = vector.broadcast %264 : vector<16x1xf32> to vector<16x8xf32>
    %266 = arith.cmpf oge, %262, %265 : vector<16x8xf32>
    %cst_135 = arith.constant -1.000000e+30 : f32
    %267 = vector.broadcast %cst_135 : f32 to vector<16x8xf32>
    %268 = arith.select %266, %267, %262 : vector<16x8xi1>, vector<16x8xf32>
    %cst_136 = arith.constant dense<0xFF800000> : vector<16xf32>
    %269 = vector.multi_reduction <maximumf>, %268, %cst_136 [1] : vector<16x8xf32> to vector<16xf32>
    %270 = vector.shape_cast %269 : vector<16xf32> to vector<16x1xf32>
    %271 = vector.broadcast %270 : vector<16x1xf32> to vector<16x8xf32>
    %272 = arith.cmpf oge, %262, %271 : vector<16x8xf32>
    %cst_137 = arith.constant -1.000000e+20 : f32
    %273 = vector.broadcast %cst_137 : f32 to vector<16x8xf32>
    %274 = arith.select %272, %262, %273 : vector<16x8xi1>, vector<16x8xf32>
    %275 = vector.broadcast %264 : vector<16x1xf32> to vector<16x8xf32>
    %276 = arith.subf %274, %275 : vector<16x8xf32>
    %277 = math.exp %276 : vector<16x8xf32>
    %cst_138 = arith.constant dense<0.000000e+00> : vector<16xf32>
    %278 = vector.multi_reduction <add>, %277, %cst_138 [1] : vector<16x8xf32> to vector<16xf32>
    %279 = vector.shape_cast %278 : vector<16xf32> to vector<16x1xf32>
    %280 = vector.broadcast %279 : vector<16x1xf32> to vector<16x8xf32>
    %281 = arith.divf %277, %280 : vector<16x8xf32>
    %c0_139 = arith.constant 0 : index
    %c0_140 = arith.constant 0 : index
    %c0_141 = arith.constant 0 : index
    %282 = vector.load %arg10[%c0_139, %c0_140, %c0_141] : memref<2x32x1152xf32, #tpu.memory_space<vmem>>, vector<1x32x1152xf32>
    %283 = vector.shape_cast %282 : vector<1x32x1152xf32> to vector<32x1152xf32>
    %cst_142 = arith.constant dense<0.000000e+00> : vector<16x1152xf32>
    %284 = tpu.matmul %255, %283, %cst_142 {dimension_numbers = #tpu.dot_dimension_numbers<[1], [0], [0], [1], [0, 0, 1, 1], [], []>} : vector<16x32xf32>, vector<32x1152xf32>, vector<16x1152xf32> -> vector<16x1152xf32>
    %285 = vector.extract_strided_slice %284 {offsets = [0, 0], sizes = [16, 576], strides = [1, 1]} : vector<16x1152xf32> to vector<16x576xf32>
    %286 = vector.extract_strided_slice %284 {offsets = [0, 576], sizes = [16, 576], strides = [1, 1]} : vector<16x1152xf32> to vector<16x576xf32>
    %287 = arith.negf %285 : vector<16x576xf32>
    %288 = math.exp %287 : vector<16x576xf32>
    %cst_143 = arith.constant 1.000000e+00 : f32
    %289 = vector.broadcast %cst_143 : f32 to vector<16x576xf32>
    %290 = arith.addf %289, %288 : vector<16x576xf32>
    %291 = arith.divf %289, %290 : vector<16x576xf32>
    %292 = arith.mulf %285, %291 : vector<16x576xf32>
    %293 = arith.mulf %292, %286 : vector<16x576xf32>
    %c0_144 = arith.constant 0 : index
    %c0_145 = arith.constant 0 : index
    %294 = vector.load %arg12[%c0_144, %c0_145] : memref<9x576xf32, #tpu.memory_space<vmem>>, vector<9x576xf32>
    %295 = vector.extract_strided_slice %294 {offsets = [0, 0], sizes = [8, 576], strides = [1, 1]} : vector<9x576xf32> to vector<8x576xf32>
    %cst_146 = arith.constant dense<0.000000e+00> : vector<16x576xf32>
    %296 = tpu.matmul %281, %295, %cst_146 {dimension_numbers = #tpu.dot_dimension_numbers<[1], [0], [0], [1], [0, 0, 1, 1], [], []>} : vector<16x8xf32>, vector<8x576xf32>, vector<16x576xf32> -> vector<16x576xf32>
    %297 = vector.extract_strided_slice %294 {offsets = [8, 0], sizes = [1, 576], strides = [1, 1]} : vector<9x576xf32> to vector<1x576xf32>
    %298 = vector.broadcast %297 : vector<1x576xf32> to vector<16x576xf32>
    %299 = arith.addf %296, %298 : vector<16x576xf32>
    %300 = arith.mulf %293, %299 : vector<16x576xf32>
    %c0_147 = arith.constant 0 : index
    %c0_148 = arith.constant 0 : index
    %c0_149 = arith.constant 0 : index
    %301 = vector.load %arg11[%c0_147, %c0_148, %c0_149] : memref<2x576x32xf32, #tpu.memory_space<vmem>>, vector<1x576x32xf32>
    %302 = vector.shape_cast %301 : vector<1x576x32xf32> to vector<576x32xf32>
    %cst_150 = arith.constant dense<0.000000e+00> : vector<16x32xf32>
    %303 = tpu.matmul %300, %302, %cst_150 {dimension_numbers = #tpu.dot_dimension_numbers<[1], [0], [0], [1], [0, 0, 1, 1], [], []>} : vector<16x576xf32>, vector<576x32xf32>, vector<16x32xf32> -> vector<16x32xf32>
    %304 = arith.addf %245, %303 : vector<16x32xf32>
    %305 = arith.mulf %304, %304 : vector<16x32xf32>
    %cst_151 = arith.constant dense<0.000000e+00> : vector<16xf32>
    %306 = vector.multi_reduction <add>, %305, %cst_151 [1] : vector<16x32xf32> to vector<16xf32>
    %307 = vector.shape_cast %306 : vector<16xf32> to vector<16x1xf32>
    %cst_152 = arith.constant 3.200000e+01 : f32
    %308 = vector.broadcast %cst_152 : f32 to vector<16x1xf32>
    %309 = arith.divf %307, %308 : vector<16x1xf32>
    %cst_153 = arith.constant 1.1920929E-7 : f32
    %310 = vector.broadcast %cst_153 : f32 to vector<16x1xf32>
    %311 = arith.addf %309, %310 : vector<16x1xf32>
    %312 = math.rsqrt %311 : vector<16x1xf32>
    %313 = vector.broadcast %312 : vector<16x1xf32> to vector<16x32xf32>
    %314 = arith.mulf %304, %313 : vector<16x32xf32>
    %c1_154 = arith.constant 1 : index
    %c0_155 = arith.constant 0 : index
    %c0_156 = arith.constant 0 : index
    %315 = vector.load %arg4[%c1_154, %c0_155, %c0_156] : memref<2x32x64xf32, #tpu.memory_space<vmem>>, vector<1x32x64xf32>
    %316 = vector.shape_cast %315 : vector<1x32x64xf32> to vector<32x64xf32>
    %cst_157 = arith.constant dense<0.000000e+00> : vector<16x64xf32>
    %317 = tpu.matmul %314, %316, %cst_157 {dimension_numbers = #tpu.dot_dimension_numbers<[1], [0], [0], [1], [0, 0, 1, 1], [], []>} : vector<16x32xf32>, vector<32x64xf32>, vector<16x64xf32> -> vector<16x64xf32>
    %c1_158 = arith.constant 1 : index
    %c0_159 = arith.constant 0 : index
    %c0_160 = arith.constant 0 : index
    %318 = vector.load %arg5[%c1_158, %c0_159, %c0_160] : memref<2x32x64xf32, #tpu.memory_space<vmem>>, vector<1x32x64xf32>
    %319 = vector.shape_cast %318 : vector<1x32x64xf32> to vector<32x64xf32>
    %cst_161 = arith.constant dense<0.000000e+00> : vector<16x64xf32>
    %320 = tpu.matmul %314, %319, %cst_161 {dimension_numbers = #tpu.dot_dimension_numbers<[1], [0], [0], [1], [0, 0, 1, 1], [], []>} : vector<16x32xf32>, vector<32x64xf32>, vector<16x64xf32> -> vector<16x64xf32>
    %321 = vector.extract_strided_slice %317 {offsets = [0, 0], sizes = [8, 16], strides = [1, 1]} : vector<16x64xf32> to vector<8x16xf32>
    %c0_162 = arith.constant 0 : index
    %c32 = arith.constant 32 : index
    %c0_163 = arith.constant 0 : index
    %322 = vector.load %arg14[%c0_162, %c32, %c0_163] : memref<2x64x16xf32, #tpu.memory_space<vmem>>, vector<1x8x16xf32>
    %323 = vector.shape_cast %322 : vector<1x8x16xf32> to vector<8x16xf32>
    %324 = vector.shape_cast %321 : vector<8x16xf32> to vector<1x8x16xf32>
    tpu.vector_store %arg14[%c0_162, %c32, %c0_163], %324 {strides = array<i32>} : memref<2x64x16xf32, #tpu.memory_space<vmem>>, vector<1x8x16xf32>,
    %325 = vector.extract_strided_slice %317 {offsets = [0, 16], sizes = [8, 16], strides = [1, 1]} : vector<16x64xf32> to vector<8x16xf32>
    %c0_164 = arith.constant 0 : index
    %c40 = arith.constant 40 : index
    %c0_165 = arith.constant 0 : index
    %326 = vector.load %arg14[%c0_164, %c40, %c0_165] : memref<2x64x16xf32, #tpu.memory_space<vmem>>, vector<1x8x16xf32>
    %327 = vector.shape_cast %326 : vector<1x8x16xf32> to vector<8x16xf32>
    %328 = vector.shape_cast %325 : vector<8x16xf32> to vector<1x8x16xf32>
    tpu.vector_store %arg14[%c0_164, %c40, %c0_165], %328 {strides = array<i32>} : memref<2x64x16xf32, #tpu.memory_space<vmem>>, vector<1x8x16xf32>,
    %329 = vector.extract_strided_slice %317 {offsets = [0, 32], sizes = [8, 16], strides = [1, 1]} : vector<16x64xf32> to vector<8x16xf32>
    %c0_166 = arith.constant 0 : index
    %c48 = arith.constant 48 : index
    %c0_167 = arith.constant 0 : index
    %330 = vector.load %arg14[%c0_166, %c48, %c0_167] : memref<2x64x16xf32, #tpu.memory_space<vmem>>, vector<1x8x16xf32>
    %331 = vector.shape_cast %330 : vector<1x8x16xf32> to vector<8x16xf32>
    %332 = vector.shape_cast %329 : vector<8x16xf32> to vector<1x8x16xf32>
    tpu.vector_store %arg14[%c0_166, %c48, %c0_167], %332 {strides = array<i32>} : memref<2x64x16xf32, #tpu.memory_space<vmem>>, vector<1x8x16xf32>,
    %333 = vector.extract_strided_slice %317 {offsets = [0, 48], sizes = [8, 16], strides = [1, 1]} : vector<16x64xf32> to vector<8x16xf32>
    %c0_168 = arith.constant 0 : index
    %c56 = arith.constant 56 : index
    %c0_169 = arith.constant 0 : index
    %334 = vector.load %arg14[%c0_168, %c56, %c0_169] : memref<2x64x16xf32, #tpu.memory_space<vmem>>, vector<1x8x16xf32>
    %335 = vector.shape_cast %334 : vector<1x8x16xf32> to vector<8x16xf32>
    %336 = vector.shape_cast %333 : vector<8x16xf32> to vector<1x8x16xf32>
    tpu.vector_store %arg14[%c0_168, %c56, %c0_169], %336 {strides = array<i32>} : memref<2x64x16xf32, #tpu.memory_space<vmem>>, vector<1x8x16xf32>,
    %337 = vector.extract_strided_slice %317 {offsets = [8, 0], sizes = [8, 16], strides = [1, 1]} : vector<16x64xf32> to vector<8x16xf32>
    %c1_170 = arith.constant 1 : index
    %c32_171 = arith.constant 32 : index
    %c0_172 = arith.constant 0 : index
    %338 = vector.load %arg14[%c1_170, %c32_171, %c0_172] : memref<2x64x16xf32, #tpu.memory_space<vmem>>, vector<1x8x16xf32>
    %339 = vector.shape_cast %338 : vector<1x8x16xf32> to vector<8x16xf32>
    %340 = vector.shape_cast %337 : vector<8x16xf32> to vector<1x8x16xf32>
    tpu.vector_store %arg14[%c1_170, %c32_171, %c0_172], %340 {strides = array<i32>} : memref<2x64x16xf32, #tpu.memory_space<vmem>>, vector<1x8x16xf32>,
    %341 = vector.extract_strided_slice %317 {offsets = [8, 16], sizes = [8, 16], strides = [1, 1]} : vector<16x64xf32> to vector<8x16xf32>
    %c1_173 = arith.constant 1 : index
    %c40_174 = arith.constant 40 : index
    %c0_175 = arith.constant 0 : index
    %342 = vector.load %arg14[%c1_173, %c40_174, %c0_175] : memref<2x64x16xf32, #tpu.memory_space<vmem>>, vector<1x8x16xf32>
    %343 = vector.shape_cast %342 : vector<1x8x16xf32> to vector<8x16xf32>
    %344 = vector.shape_cast %341 : vector<8x16xf32> to vector<1x8x16xf32>
    tpu.vector_store %arg14[%c1_173, %c40_174, %c0_175], %344 {strides = array<i32>} : memref<2x64x16xf32, #tpu.memory_space<vmem>>, vector<1x8x16xf32>,
    %345 = vector.extract_strided_slice %317 {offsets = [8, 32], sizes = [8, 16], strides = [1, 1]} : vector<16x64xf32> to vector<8x16xf32>
    %c1_176 = arith.constant 1 : index
    %c48_177 = arith.constant 48 : index
    %c0_178 = arith.constant 0 : index
    %346 = vector.load %arg14[%c1_176, %c48_177, %c0_178] : memref<2x64x16xf32, #tpu.memory_space<vmem>>, vector<1x8x16xf32>
    %347 = vector.shape_cast %346 : vector<1x8x16xf32> to vector<8x16xf32>
    %348 = vector.shape_cast %345 : vector<8x16xf32> to vector<1x8x16xf32>
    tpu.vector_store %arg14[%c1_176, %c48_177, %c0_178], %348 {strides = array<i32>} : memref<2x64x16xf32, #tpu.memory_space<vmem>>, vector<1x8x16xf32>,
    %349 = vector.extract_strided_slice %317 {offsets = [8, 48], sizes = [8, 16], strides = [1, 1]} : vector<16x64xf32> to vector<8x16xf32>
    %c1_179 = arith.constant 1 : index
    %c56_180 = arith.constant 56 : index
    %c0_181 = arith.constant 0 : index
    %350 = vector.load %arg14[%c1_179, %c56_180, %c0_181] : memref<2x64x16xf32, #tpu.memory_space<vmem>>, vector<1x8x16xf32>
    %351 = vector.shape_cast %350 : vector<1x8x16xf32> to vector<8x16xf32>
    %352 = vector.shape_cast %349 : vector<8x16xf32> to vector<1x8x16xf32>
    tpu.vector_store %arg14[%c1_179, %c56_180, %c0_181], %352 {strides = array<i32>} : memref<2x64x16xf32, #tpu.memory_space<vmem>>, vector<1x8x16xf32>,
    %c1_182 = arith.constant 1 : index
    %c0_183 = arith.constant 0 : index
    %c0_184 = arith.constant 0 : index
    %c0_185 = arith.constant 0 : index
    %353 = vector.load %arg6[%c1_182, %c0_183, %c0_184, %c0_185] : memref<2x4x16x8xf32, #tpu.memory_space<vmem>>, vector<1x4x16x8xf32>
    %354 = vector.shape_cast %353 : vector<1x4x16x8xf32> to vector<4x16x8xf32>
    %c0_186 = arith.constant 0 : index
    %c0_187 = arith.constant 0 : index
    %c0_188 = arith.constant 0 : index
    %355 = vector.load %arg14[%c0_186, %c0_187, %c0_188] : memref<2x64x16xf32, #tpu.memory_space<vmem>>, vector<1x40x16xf32>
    %356 = vector.shape_cast %355 : vector<1x40x16xf32> to vector<40x16xf32>
    %357 = vector.extract_strided_slice %320 {offsets = [0, 0], sizes = [8, 16], strides = [1, 1]} : vector<16x64xf32> to vector<8x16xf32>
    %cst_189 = arith.constant dense<0.000000e+00> : vector<8x40xf32>
    %358 = tpu.matmul %357, %356, %cst_189 {dimension_numbers = #tpu.dot_dimension_numbers<[1], [1], [0], [0], [0, 0, 1, 0], [], []>} : vector<8x16xf32>, vector<40x16xf32>, vector<8x40xf32> -> vector<8x40xf32>
    %cst_190 = arith.constant 0.353553385 : f32
    %359 = vector.broadcast %cst_190 : f32 to vector<8x40xf32>
    %360 = arith.mulf %358, %359 : vector<8x40xf32>
    %361 = vector.extract_strided_slice %12 {offsets = [0, 0], sizes = [8, 40], strides = [1, 1]} : vector<8x64xi1> to vector<8x40xi1>
    %cst_191 = arith.constant -1.000000e+20 : f32
    %362 = vector.broadcast %cst_191 : f32 to vector<8x40xf32>
    %363 = arith.select %361, %360, %362 : vector<8x40xi1>, vector<8x40xf32>
    %cst_192 = arith.constant dense<0xFF800000> : vector<8xf32>
    %364 = vector.multi_reduction <maximumf>, %363, %cst_192 [1] : vector<8x40xf32> to vector<8xf32>
    %365 = vector.shape_cast %364 : vector<8xf32> to vector<8x1xf32>
    %366 = vector.broadcast %365 : vector<8x1xf32> to vector<8x40xf32>
    %367 = arith.subf %363, %366 : vector<8x40xf32>
    %368 = math.exp %367 : vector<8x40xf32>
    %cst_193 = arith.constant dense<0.000000e+00> : vector<8xf32>
    %369 = vector.multi_reduction <add>, %368, %cst_193 [1] : vector<8x40xf32> to vector<8xf32>
    %370 = vector.shape_cast %369 : vector<8xf32> to vector<8x1xf32>
    %371 = vector.broadcast %370 : vector<8x1xf32> to vector<8x40xf32>
    %372 = arith.divf %368, %371 : vector<8x40xf32>
    %373 = vector.extract_strided_slice %354 {offsets = [0, 0, 0], sizes = [1, 16, 8], strides = [1, 1, 1]} : vector<4x16x8xf32> to vector<1x16x8xf32>
    %374 = vector.shape_cast %373 : vector<1x16x8xf32> to vector<16x8xf32>
    %cst_194 = arith.constant dense<0.000000e+00> : vector<40x8xf32>
    %375 = tpu.matmul %356, %374, %cst_194 {dimension_numbers = #tpu.dot_dimension_numbers<[1], [0], [0], [1], [0, 0, 1, 1], [], []>} : vector<40x16xf32>, vector<16x8xf32>, vector<40x8xf32> -> vector<40x8xf32>
    %cst_195 = arith.constant dense<0.000000e+00> : vector<8x8xf32>
    %376 = tpu.matmul %372, %375, %cst_195 {dimension_numbers = #tpu.dot_dimension_numbers<[1], [0], [0], [1], [0, 0, 1, 1], [], []>} : vector<8x40xf32>, vector<40x8xf32>, vector<8x8xf32> -> vector<8x8xf32>
    %c0_196 = arith.constant 0 : index
    %c0_197 = arith.constant 0 : index
    %c0_198 = arith.constant 0 : index
    %377 = vector.load %arg14[%c0_196, %c0_197, %c0_198] : memref<2x64x16xf32, #tpu.memory_space<vmem>>, vector<1x48x16xf32>
    %378 = vector.shape_cast %377 : vector<1x48x16xf32> to vector<48x16xf32>
    %379 = vector.extract_strided_slice %320 {offsets = [0, 16], sizes = [8, 16], strides = [1, 1]} : vector<16x64xf32> to vector<8x16xf32>
    %cst_199 = arith.constant dense<0.000000e+00> : vector<8x48xf32>
    %380 = tpu.matmul %379, %378, %cst_199 {dimension_numbers = #tpu.dot_dimension_numbers<[1], [1], [0], [0], [0, 0, 1, 0], [], []>} : vector<8x16xf32>, vector<48x16xf32>, vector<8x48xf32> -> vector<8x48xf32>
    %cst_200 = arith.constant 0.353553385 : f32
    %381 = vector.broadcast %cst_200 : f32 to vector<8x48xf32>
    %382 = arith.mulf %380, %381 : vector<8x48xf32>
    %383 = vector.extract_strided_slice %12 {offsets = [0, 0], sizes = [8, 48], strides = [1, 1]} : vector<8x64xi1> to vector<8x48xi1>
    %cst_201 = arith.constant -1.000000e+20 : f32
    %384 = vector.broadcast %cst_201 : f32 to vector<8x48xf32>
    %385 = arith.select %383, %382, %384 : vector<8x48xi1>, vector<8x48xf32>
    %cst_202 = arith.constant dense<0xFF800000> : vector<8xf32>
    %386 = vector.multi_reduction <maximumf>, %385, %cst_202 [1] : vector<8x48xf32> to vector<8xf32>
    %387 = vector.shape_cast %386 : vector<8xf32> to vector<8x1xf32>
    %388 = vector.broadcast %387 : vector<8x1xf32> to vector<8x48xf32>
    %389 = arith.subf %385, %388 : vector<8x48xf32>
    %390 = math.exp %389 : vector<8x48xf32>
    %cst_203 = arith.constant dense<0.000000e+00> : vector<8xf32>
    %391 = vector.multi_reduction <add>, %390, %cst_203 [1] : vector<8x48xf32> to vector<8xf32>
    %392 = vector.shape_cast %391 : vector<8xf32> to vector<8x1xf32>
    %393 = vector.broadcast %392 : vector<8x1xf32> to vector<8x48xf32>
    %394 = arith.divf %390, %393 : vector<8x48xf32>
    %395 = vector.extract_strided_slice %354 {offsets = [1, 0, 0], sizes = [1, 16, 8], strides = [1, 1, 1]} : vector<4x16x8xf32> to vector<1x16x8xf32>
    %396 = vector.shape_cast %395 : vector<1x16x8xf32> to vector<16x8xf32>
    %cst_204 = arith.constant dense<0.000000e+00> : vector<48x8xf32>
    %397 = tpu.matmul %378, %396, %cst_204 {dimension_numbers = #tpu.dot_dimension_numbers<[1], [0], [0], [1], [0, 0, 1, 1], [], []>} : vector<48x16xf32>, vector<16x8xf32>, vector<48x8xf32> -> vector<48x8xf32>
    %cst_205 = arith.constant dense<0.000000e+00> : vector<8x8xf32>
    %398 = tpu.matmul %394, %397, %cst_205 {dimension_numbers = #tpu.dot_dimension_numbers<[1], [0], [0], [1], [0, 0, 1, 1], [], []>} : vector<8x48xf32>, vector<48x8xf32>, vector<8x8xf32> -> vector<8x8xf32>
    %c0_206 = arith.constant 0 : index
    %c0_207 = arith.constant 0 : index
    %c0_208 = arith.constant 0 : index
    %399 = vector.load %arg14[%c0_206, %c0_207, %c0_208] : memref<2x64x16xf32, #tpu.memory_space<vmem>>, vector<1x56x16xf32>
    %400 = vector.shape_cast %399 : vector<1x56x16xf32> to vector<56x16xf32>
    %401 = vector.extract_strided_slice %320 {offsets = [0, 32], sizes = [8, 16], strides = [1, 1]} : vector<16x64xf32> to vector<8x16xf32>
    %cst_209 = arith.constant dense<0.000000e+00> : vector<8x56xf32>
    %402 = tpu.matmul %401, %400, %cst_209 {dimension_numbers = #tpu.dot_dimension_numbers<[1], [1], [0], [0], [0, 0, 1, 0], [], []>} : vector<8x16xf32>, vector<56x16xf32>, vector<8x56xf32> -> vector<8x56xf32>
    %cst_210 = arith.constant 0.353553385 : f32
    %403 = vector.broadcast %cst_210 : f32 to vector<8x56xf32>
    %404 = arith.mulf %402, %403 : vector<8x56xf32>
    %405 = vector.extract_strided_slice %12 {offsets = [0, 0], sizes = [8, 56], strides = [1, 1]} : vector<8x64xi1> to vector<8x56xi1>
    %cst_211 = arith.constant -1.000000e+20 : f32
    %406 = vector.broadcast %cst_211 : f32 to vector<8x56xf32>
    %407 = arith.select %405, %404, %406 : vector<8x56xi1>, vector<8x56xf32>
    %cst_212 = arith.constant dense<0xFF800000> : vector<8xf32>
    %408 = vector.multi_reduction <maximumf>, %407, %cst_212 [1] : vector<8x56xf32> to vector<8xf32>
    %409 = vector.shape_cast %408 : vector<8xf32> to vector<8x1xf32>
    %410 = vector.broadcast %409 : vector<8x1xf32> to vector<8x56xf32>
    %411 = arith.subf %407, %410 : vector<8x56xf32>
    %412 = math.exp %411 : vector<8x56xf32>
    %cst_213 = arith.constant dense<0.000000e+00> : vector<8xf32>
    %413 = vector.multi_reduction <add>, %412, %cst_213 [1] : vector<8x56xf32> to vector<8xf32>
    %414 = vector.shape_cast %413 : vector<8xf32> to vector<8x1xf32>
    %415 = vector.broadcast %414 : vector<8x1xf32> to vector<8x56xf32>
    %416 = arith.divf %412, %415 : vector<8x56xf32>
    %417 = vector.extract_strided_slice %354 {offsets = [2, 0, 0], sizes = [1, 16, 8], strides = [1, 1, 1]} : vector<4x16x8xf32> to vector<1x16x8xf32>
    %418 = vector.shape_cast %417 : vector<1x16x8xf32> to vector<16x8xf32>
    %cst_214 = arith.constant dense<0.000000e+00> : vector<56x8xf32>
    %419 = tpu.matmul %400, %418, %cst_214 {dimension_numbers = #tpu.dot_dimension_numbers<[1], [0], [0], [1], [0, 0, 1, 1], [], []>} : vector<56x16xf32>, vector<16x8xf32>, vector<56x8xf32> -> vector<56x8xf32>
    %cst_215 = arith.constant dense<0.000000e+00> : vector<8x8xf32>
    %420 = tpu.matmul %416, %419, %cst_215 {dimension_numbers = #tpu.dot_dimension_numbers<[1], [0], [0], [1], [0, 0, 1, 1], [], []>} : vector<8x56xf32>, vector<56x8xf32>, vector<8x8xf32> -> vector<8x8xf32>
    %c0_216 = arith.constant 0 : index
    %c0_217 = arith.constant 0 : index
    %c0_218 = arith.constant 0 : index
    %421 = vector.load %arg14[%c0_216, %c0_217, %c0_218] : memref<2x64x16xf32, #tpu.memory_space<vmem>>, vector<1x64x16xf32>
    %422 = vector.shape_cast %421 : vector<1x64x16xf32> to vector<64x16xf32>
    %423 = vector.extract_strided_slice %320 {offsets = [0, 48], sizes = [8, 16], strides = [1, 1]} : vector<16x64xf32> to vector<8x16xf32>
    %cst_219 = arith.constant dense<0.000000e+00> : vector<8x64xf32>
    %424 = tpu.matmul %423, %422, %cst_219 {dimension_numbers = #tpu.dot_dimension_numbers<[1], [1], [0], [0], [0, 0, 1, 0], [], []>} : vector<8x16xf32>, vector<64x16xf32>, vector<8x64xf32> -> vector<8x64xf32>
    %cst_220 = arith.constant 0.353553385 : f32
    %425 = vector.broadcast %cst_220 : f32 to vector<8x64xf32>
    %426 = arith.mulf %424, %425 : vector<8x64xf32>
    %cst_221 = arith.constant -1.000000e+20 : f32
    %427 = vector.broadcast %cst_221 : f32 to vector<8x64xf32>
    %428 = arith.select %12, %426, %427 : vector<8x64xi1>, vector<8x64xf32>
    %cst_222 = arith.constant dense<0xFF800000> : vector<8xf32>
    %429 = vector.multi_reduction <maximumf>, %428, %cst_222 [1] : vector<8x64xf32> to vector<8xf32>
    %430 = vector.shape_cast %429 : vector<8xf32> to vector<8x1xf32>
    %431 = vector.broadcast %430 : vector<8x1xf32> to vector<8x64xf32>
    %432 = arith.subf %428, %431 : vector<8x64xf32>
    %433 = math.exp %432 : vector<8x64xf32>
    %cst_223 = arith.constant dense<0.000000e+00> : vector<8xf32>
    %434 = vector.multi_reduction <add>, %433, %cst_223 [1] : vector<8x64xf32> to vector<8xf32>
    %435 = vector.shape_cast %434 : vector<8xf32> to vector<8x1xf32>
    %436 = vector.broadcast %435 : vector<8x1xf32> to vector<8x64xf32>
    %437 = arith.divf %433, %436 : vector<8x64xf32>
    %438 = vector.extract_strided_slice %354 {offsets = [3, 0, 0], sizes = [1, 16, 8], strides = [1, 1, 1]} : vector<4x16x8xf32> to vector<1x16x8xf32>
    %439 = vector.shape_cast %438 : vector<1x16x8xf32> to vector<16x8xf32>
    %cst_224 = arith.constant dense<0.000000e+00> : vector<64x8xf32>
    %440 = tpu.matmul %422, %439, %cst_224 {dimension_numbers = #tpu.dot_dimension_numbers<[1], [0], [0], [1], [0, 0, 1, 1], [], []>} : vector<64x16xf32>, vector<16x8xf32>, vector<64x8xf32> -> vector<64x8xf32>
    %cst_225 = arith.constant dense<0.000000e+00> : vector<8x8xf32>
    %441 = tpu.matmul %437, %440, %cst_225 {dimension_numbers = #tpu.dot_dimension_numbers<[1], [0], [0], [1], [0, 0, 1, 1], [], []>} : vector<8x64xf32>, vector<64x8xf32>, vector<8x8xf32> -> vector<8x8xf32>
    %442 = tpu.concatenate %376, %398, %420, %441 in 1 : vector<8x8xf32>, vector<8x8xf32>, vector<8x8xf32>, vector<8x8xf32> -> vector<8x32xf32>
    %c1_226 = arith.constant 1 : index
    %c0_227 = arith.constant 0 : index
    %c0_228 = arith.constant 0 : index
    %443 = vector.load %arg14[%c1_226, %c0_227, %c0_228] : memref<2x64x16xf32, #tpu.memory_space<vmem>>, vector<1x40x16xf32>
    %444 = vector.shape_cast %443 : vector<1x40x16xf32> to vector<40x16xf32>
    %445 = vector.extract_strided_slice %320 {offsets = [8, 0], sizes = [8, 16], strides = [1, 1]} : vector<16x64xf32> to vector<8x16xf32>
    %cst_229 = arith.constant dense<0.000000e+00> : vector<8x40xf32>
    %446 = tpu.matmul %445, %444, %cst_229 {dimension_numbers = #tpu.dot_dimension_numbers<[1], [1], [0], [0], [0, 0, 1, 0], [], []>} : vector<8x16xf32>, vector<40x16xf32>, vector<8x40xf32> -> vector<8x40xf32>
    %cst_230 = arith.constant 0.353553385 : f32
    %447 = vector.broadcast %cst_230 : f32 to vector<8x40xf32>
    %448 = arith.mulf %446, %447 : vector<8x40xf32>
    %449 = vector.extract_strided_slice %12 {offsets = [0, 0], sizes = [8, 40], strides = [1, 1]} : vector<8x64xi1> to vector<8x40xi1>
    %cst_231 = arith.constant -1.000000e+20 : f32
    %450 = vector.broadcast %cst_231 : f32 to vector<8x40xf32>
    %451 = arith.select %449, %448, %450 : vector<8x40xi1>, vector<8x40xf32>
    %cst_232 = arith.constant dense<0xFF800000> : vector<8xf32>
    %452 = vector.multi_reduction <maximumf>, %451, %cst_232 [1] : vector<8x40xf32> to vector<8xf32>
    %453 = vector.shape_cast %452 : vector<8xf32> to vector<8x1xf32>
    %454 = vector.broadcast %453 : vector<8x1xf32> to vector<8x40xf32>
    %455 = arith.subf %451, %454 : vector<8x40xf32>
    %456 = math.exp %455 : vector<8x40xf32>
    %cst_233 = arith.constant dense<0.000000e+00> : vector<8xf32>
    %457 = vector.multi_reduction <add>, %456, %cst_233 [1] : vector<8x40xf32> to vector<8xf32>
    %458 = vector.shape_cast %457 : vector<8xf32> to vector<8x1xf32>
    %459 = vector.broadcast %458 : vector<8x1xf32> to vector<8x40xf32>
    %460 = arith.divf %456, %459 : vector<8x40xf32>
    %461 = vector.extract_strided_slice %354 {offsets = [0, 0, 0], sizes = [1, 16, 8], strides = [1, 1, 1]} : vector<4x16x8xf32> to vector<1x16x8xf32>
    %462 = vector.shape_cast %461 : vector<1x16x8xf32> to vector<16x8xf32>
    %cst_234 = arith.constant dense<0.000000e+00> : vector<40x8xf32>
    %463 = tpu.matmul %444, %462, %cst_234 {dimension_numbers = #tpu.dot_dimension_numbers<[1], [0], [0], [1], [0, 0, 1, 1], [], []>} : vector<40x16xf32>, vector<16x8xf32>, vector<40x8xf32> -> vector<40x8xf32>
    %cst_235 = arith.constant dense<0.000000e+00> : vector<8x8xf32>
    %464 = tpu.matmul %460, %463, %cst_235 {dimension_numbers = #tpu.dot_dimension_numbers<[1], [0], [0], [1], [0, 0, 1, 1], [], []>} : vector<8x40xf32>, vector<40x8xf32>, vector<8x8xf32> -> vector<8x8xf32>
    %c1_236 = arith.constant 1 : index
    %c0_237 = arith.constant 0 : index
    %c0_238 = arith.constant 0 : index
    %465 = vector.load %arg14[%c1_236, %c0_237, %c0_238] : memref<2x64x16xf32, #tpu.memory_space<vmem>>, vector<1x48x16xf32>
    %466 = vector.shape_cast %465 : vector<1x48x16xf32> to vector<48x16xf32>
    %467 = vector.extract_strided_slice %320 {offsets = [8, 16], sizes = [8, 16], strides = [1, 1]} : vector<16x64xf32> to vector<8x16xf32>
    %cst_239 = arith.constant dense<0.000000e+00> : vector<8x48xf32>
    %468 = tpu.matmul %467, %466, %cst_239 {dimension_numbers = #tpu.dot_dimension_numbers<[1], [1], [0], [0], [0, 0, 1, 0], [], []>} : vector<8x16xf32>, vector<48x16xf32>, vector<8x48xf32> -> vector<8x48xf32>
    %cst_240 = arith.constant 0.353553385 : f32
    %469 = vector.broadcast %cst_240 : f32 to vector<8x48xf32>
    %470 = arith.mulf %468, %469 : vector<8x48xf32>
    %471 = vector.extract_strided_slice %12 {offsets = [0, 0], sizes = [8, 48], strides = [1, 1]} : vector<8x64xi1> to vector<8x48xi1>
    %cst_241 = arith.constant -1.000000e+20 : f32
    %472 = vector.broadcast %cst_241 : f32 to vector<8x48xf32>
    %473 = arith.select %471, %470, %472 : vector<8x48xi1>, vector<8x48xf32>
    %cst_242 = arith.constant dense<0xFF800000> : vector<8xf32>
    %474 = vector.multi_reduction <maximumf>, %473, %cst_242 [1] : vector<8x48xf32> to vector<8xf32>
    %475 = vector.shape_cast %474 : vector<8xf32> to vector<8x1xf32>
    %476 = vector.broadcast %475 : vector<8x1xf32> to vector<8x48xf32>
    %477 = arith.subf %473, %476 : vector<8x48xf32>
    %478 = math.exp %477 : vector<8x48xf32>
    %cst_243 = arith.constant dense<0.000000e+00> : vector<8xf32>
    %479 = vector.multi_reduction <add>, %478, %cst_243 [1] : vector<8x48xf32> to vector<8xf32>
    %480 = vector.shape_cast %479 : vector<8xf32> to vector<8x1xf32>
    %481 = vector.broadcast %480 : vector<8x1xf32> to vector<8x48xf32>
    %482 = arith.divf %478, %481 : vector<8x48xf32>
    %483 = vector.extract_strided_slice %354 {offsets = [1, 0, 0], sizes = [1, 16, 8], strides = [1, 1, 1]} : vector<4x16x8xf32> to vector<1x16x8xf32>
    %484 = vector.shape_cast %483 : vector<1x16x8xf32> to vector<16x8xf32>
    %cst_244 = arith.constant dense<0.000000e+00> : vector<48x8xf32>
    %485 = tpu.matmul %466, %484, %cst_244 {dimension_numbers = #tpu.dot_dimension_numbers<[1], [0], [0], [1], [0, 0, 1, 1], [], []>} : vector<48x16xf32>, vector<16x8xf32>, vector<48x8xf32> -> vector<48x8xf32>
    %cst_245 = arith.constant dense<0.000000e+00> : vector<8x8xf32>
    %486 = tpu.matmul %482, %485, %cst_245 {dimension_numbers = #tpu.dot_dimension_numbers<[1], [0], [0], [1], [0, 0, 1, 1], [], []>} : vector<8x48xf32>, vector<48x8xf32>, vector<8x8xf32> -> vector<8x8xf32>
    %c1_246 = arith.constant 1 : index
    %c0_247 = arith.constant 0 : index
    %c0_248 = arith.constant 0 : index
    %487 = vector.load %arg14[%c1_246, %c0_247, %c0_248] : memref<2x64x16xf32, #tpu.memory_space<vmem>>, vector<1x56x16xf32>
    %488 = vector.shape_cast %487 : vector<1x56x16xf32> to vector<56x16xf32>
    %489 = vector.extract_strided_slice %320 {offsets = [8, 32], sizes = [8, 16], strides = [1, 1]} : vector<16x64xf32> to vector<8x16xf32>
    %cst_249 = arith.constant dense<0.000000e+00> : vector<8x56xf32>
    %490 = tpu.matmul %489, %488, %cst_249 {dimension_numbers = #tpu.dot_dimension_numbers<[1], [1], [0], [0], [0, 0, 1, 0], [], []>} : vector<8x16xf32>, vector<56x16xf32>, vector<8x56xf32> -> vector<8x56xf32>
    %cst_250 = arith.constant 0.353553385 : f32
    %491 = vector.broadcast %cst_250 : f32 to vector<8x56xf32>
    %492 = arith.mulf %490, %491 : vector<8x56xf32>
    %493 = vector.extract_strided_slice %12 {offsets = [0, 0], sizes = [8, 56], strides = [1, 1]} : vector<8x64xi1> to vector<8x56xi1>
    %cst_251 = arith.constant -1.000000e+20 : f32
    %494 = vector.broadcast %cst_251 : f32 to vector<8x56xf32>
    %495 = arith.select %493, %492, %494 : vector<8x56xi1>, vector<8x56xf32>
    %cst_252 = arith.constant dense<0xFF800000> : vector<8xf32>
    %496 = vector.multi_reduction <maximumf>, %495, %cst_252 [1] : vector<8x56xf32> to vector<8xf32>
    %497 = vector.shape_cast %496 : vector<8xf32> to vector<8x1xf32>
    %498 = vector.broadcast %497 : vector<8x1xf32> to vector<8x56xf32>
    %499 = arith.subf %495, %498 : vector<8x56xf32>
    %500 = math.exp %499 : vector<8x56xf32>
    %cst_253 = arith.constant dense<0.000000e+00> : vector<8xf32>
    %501 = vector.multi_reduction <add>, %500, %cst_253 [1] : vector<8x56xf32> to vector<8xf32>
    %502 = vector.shape_cast %501 : vector<8xf32> to vector<8x1xf32>
    %503 = vector.broadcast %502 : vector<8x1xf32> to vector<8x56xf32>
    %504 = arith.divf %500, %503 : vector<8x56xf32>
    %505 = vector.extract_strided_slice %354 {offsets = [2, 0, 0], sizes = [1, 16, 8], strides = [1, 1, 1]} : vector<4x16x8xf32> to vector<1x16x8xf32>
    %506 = vector.shape_cast %505 : vector<1x16x8xf32> to vector<16x8xf32>
    %cst_254 = arith.constant dense<0.000000e+00> : vector<56x8xf32>
    %507 = tpu.matmul %488, %506, %cst_254 {dimension_numbers = #tpu.dot_dimension_numbers<[1], [0], [0], [1], [0, 0, 1, 1], [], []>} : vector<56x16xf32>, vector<16x8xf32>, vector<56x8xf32> -> vector<56x8xf32>
    %cst_255 = arith.constant dense<0.000000e+00> : vector<8x8xf32>
    %508 = tpu.matmul %504, %507, %cst_255 {dimension_numbers = #tpu.dot_dimension_numbers<[1], [0], [0], [1], [0, 0, 1, 1], [], []>} : vector<8x56xf32>, vector<56x8xf32>, vector<8x8xf32> -> vector<8x8xf32>
    %c1_256 = arith.constant 1 : index
    %c0_257 = arith.constant 0 : index
    %c0_258 = arith.constant 0 : index
    %509 = vector.load %arg14[%c1_256, %c0_257, %c0_258] : memref<2x64x16xf32, #tpu.memory_space<vmem>>, vector<1x64x16xf32>
    %510 = vector.shape_cast %509 : vector<1x64x16xf32> to vector<64x16xf32>
    %511 = vector.extract_strided_slice %320 {offsets = [8, 48], sizes = [8, 16], strides = [1, 1]} : vector<16x64xf32> to vector<8x16xf32>
    %cst_259 = arith.constant dense<0.000000e+00> : vector<8x64xf32>
    %512 = tpu.matmul %511, %510, %cst_259 {dimension_numbers = #tpu.dot_dimension_numbers<[1], [1], [0], [0], [0, 0, 1, 0], [], []>} : vector<8x16xf32>, vector<64x16xf32>, vector<8x64xf32> -> vector<8x64xf32>
    %cst_260 = arith.constant 0.353553385 : f32
    %513 = vector.broadcast %cst_260 : f32 to vector<8x64xf32>
    %514 = arith.mulf %512, %513 : vector<8x64xf32>
    %cst_261 = arith.constant -1.000000e+20 : f32
    %515 = vector.broadcast %cst_261 : f32 to vector<8x64xf32>
    %516 = arith.select %12, %514, %515 : vector<8x64xi1>, vector<8x64xf32>
    %cst_262 = arith.constant dense<0xFF800000> : vector<8xf32>
    %517 = vector.multi_reduction <maximumf>, %516, %cst_262 [1] : vector<8x64xf32> to vector<8xf32>
    %518 = vector.shape_cast %517 : vector<8xf32> to vector<8x1xf32>
    %519 = vector.broadcast %518 : vector<8x1xf32> to vector<8x64xf32>
    %520 = arith.subf %516, %519 : vector<8x64xf32>
    %521 = math.exp %520 : vector<8x64xf32>
    %cst_263 = arith.constant dense<0.000000e+00> : vector<8xf32>
    %522 = vector.multi_reduction <add>, %521, %cst_263 [1] : vector<8x64xf32> to vector<8xf32>
    %523 = vector.shape_cast %522 : vector<8xf32> to vector<8x1xf32>
    %524 = vector.broadcast %523 : vector<8x1xf32> to vector<8x64xf32>
    %525 = arith.divf %521, %524 : vector<8x64xf32>
    %526 = vector.extract_strided_slice %354 {offsets = [3, 0, 0], sizes = [1, 16, 8], strides = [1, 1, 1]} : vector<4x16x8xf32> to vector<1x16x8xf32>
    %527 = vector.shape_cast %526 : vector<1x16x8xf32> to vector<16x8xf32>
    %cst_264 = arith.constant dense<0.000000e+00> : vector<64x8xf32>
    %528 = tpu.matmul %510, %527, %cst_264 {dimension_numbers = #tpu.dot_dimension_numbers<[1], [0], [0], [1], [0, 0, 1, 1], [], []>} : vector<64x16xf32>, vector<16x8xf32>, vector<64x8xf32> -> vector<64x8xf32>
    %cst_265 = arith.constant dense<0.000000e+00> : vector<8x8xf32>
    %529 = tpu.matmul %525, %528, %cst_265 {dimension_numbers = #tpu.dot_dimension_numbers<[1], [0], [0], [1], [0, 0, 1, 1], [], []>} : vector<8x64xf32>, vector<64x8xf32>, vector<8x8xf32> -> vector<8x8xf32>
    %530 = tpu.concatenate %464, %486, %508, %529 in 1 : vector<8x8xf32>, vector<8x8xf32>, vector<8x8xf32>, vector<8x8xf32> -> vector<8x32xf32>
    %531 = tpu.concatenate %442, %530 in 0 : vector<8x32xf32>, vector<8x32xf32> -> vector<16x32xf32>
    %c1_266 = arith.constant 1 : index
    %c0_267 = arith.constant 0 : index
    %c0_268 = arith.constant 0 : index
    %532 = vector.load %arg7[%c1_266, %c0_267, %c0_268] : memref<2x32x32xf32, #tpu.memory_space<vmem>>, vector<1x32x32xf32>
    %533 = vector.shape_cast %532 : vector<1x32x32xf32> to vector<32x32xf32>
    %cst_269 = arith.constant dense<0.000000e+00> : vector<16x32xf32>
    %534 = tpu.matmul %531, %533, %cst_269 {dimension_numbers = #tpu.dot_dimension_numbers<[1], [0], [0], [1], [0, 0, 1, 1], [], []>} : vector<16x32xf32>, vector<32x32xf32>, vector<16x32xf32> -> vector<16x32xf32>
    %535 = arith.addf %304, %534 : vector<16x32xf32>
    %536 = arith.mulf %535, %535 : vector<16x32xf32>
    %cst_270 = arith.constant dense<0.000000e+00> : vector<16xf32>
    %537 = vector.multi_reduction <add>, %536, %cst_270 [1] : vector<16x32xf32> to vector<16xf32>
    %538 = vector.shape_cast %537 : vector<16xf32> to vector<16x1xf32>
    %cst_271 = arith.constant 3.200000e+01 : f32
    %539 = vector.broadcast %cst_271 : f32 to vector<16x1xf32>
    %540 = arith.divf %538, %539 : vector<16x1xf32>
    %cst_272 = arith.constant 1.1920929E-7 : f32
    %541 = vector.broadcast %cst_272 : f32 to vector<16x1xf32>
    %542 = arith.addf %540, %541 : vector<16x1xf32>
    %543 = math.rsqrt %542 : vector<16x1xf32>
    %544 = vector.broadcast %543 : vector<16x1xf32> to vector<16x32xf32>
    %545 = arith.mulf %535, %544 : vector<16x32xf32>
    %c1_273 = arith.constant 1 : index
    %c0_274 = arith.constant 0 : index
    %c0_275 = arith.constant 0 : index
    %546 = vector.load %arg8[%c1_273, %c0_274, %c0_275] : memref<2x32x8xf32, #tpu.memory_space<vmem>>, vector<1x32x8xf32>
    %547 = vector.shape_cast %546 : vector<1x32x8xf32> to vector<32x8xf32>
    %cst_276 = arith.constant dense<0.000000e+00> : vector<16x8xf32>
    %548 = tpu.matmul %545, %547, %cst_276 {dimension_numbers = #tpu.dot_dimension_numbers<[1], [0], [0], [1], [0, 0, 1, 1], [], []>} : vector<16x32xf32>, vector<32x8xf32>, vector<16x8xf32> -> vector<16x8xf32>
    %c1_277 = arith.constant 1 : index
    %c0_278 = arith.constant 0 : index
    %c0_279 = arith.constant 0 : index
    %549 = vector.load %arg9[%c1_277, %c0_278, %c0_279] : memref<2x1x8xf32, #tpu.memory_space<vmem>>, vector<1x1x8xf32>
    %550 = vector.shape_cast %549 : vector<1x1x8xf32> to vector<1x8xf32>
    %551 = vector.broadcast %550 : vector<1x8xf32> to vector<16x8xf32>
    %552 = arith.addf %548, %551 : vector<16x8xf32>
    %cst_280 = arith.constant dense<0xFF800000> : vector<16xf32>
    %553 = vector.multi_reduction <maximumf>, %552, %cst_280 [1] : vector<16x8xf32> to vector<16xf32>
    %554 = vector.shape_cast %553 : vector<16xf32> to vector<16x1xf32>
    %555 = vector.broadcast %554 : vector<16x1xf32> to vector<16x8xf32>
    %556 = arith.cmpf oge, %552, %555 : vector<16x8xf32>
    %cst_281 = arith.constant -1.000000e+30 : f32
    %557 = vector.broadcast %cst_281 : f32 to vector<16x8xf32>
    %558 = arith.select %556, %557, %552 : vector<16x8xi1>, vector<16x8xf32>
    %cst_282 = arith.constant dense<0xFF800000> : vector<16xf32>
    %559 = vector.multi_reduction <maximumf>, %558, %cst_282 [1] : vector<16x8xf32> to vector<16xf32>
    %560 = vector.shape_cast %559 : vector<16xf32> to vector<16x1xf32>
    %561 = vector.broadcast %560 : vector<16x1xf32> to vector<16x8xf32>
    %562 = arith.cmpf oge, %552, %561 : vector<16x8xf32>
    %cst_283 = arith.constant -1.000000e+20 : f32
    %563 = vector.broadcast %cst_283 : f32 to vector<16x8xf32>
    %564 = arith.select %562, %552, %563 : vector<16x8xi1>, vector<16x8xf32>
    %565 = vector.broadcast %554 : vector<16x1xf32> to vector<16x8xf32>
    %566 = arith.subf %564, %565 : vector<16x8xf32>
    %567 = math.exp %566 : vector<16x8xf32>
    %cst_284 = arith.constant dense<0.000000e+00> : vector<16xf32>
    %568 = vector.multi_reduction <add>, %567, %cst_284 [1] : vector<16x8xf32> to vector<16xf32>
    %569 = vector.shape_cast %568 : vector<16xf32> to vector<16x1xf32>
    %570 = vector.broadcast %569 : vector<16x1xf32> to vector<16x8xf32>
    %571 = arith.divf %567, %570 : vector<16x8xf32>
    %c1_285 = arith.constant 1 : index
    %c0_286 = arith.constant 0 : index
    %c0_287 = arith.constant 0 : index
    %572 = vector.load %arg10[%c1_285, %c0_286, %c0_287] : memref<2x32x1152xf32, #tpu.memory_space<vmem>>, vector<1x32x1152xf32>
    %573 = vector.shape_cast %572 : vector<1x32x1152xf32> to vector<32x1152xf32>
    %cst_288 = arith.constant dense<0.000000e+00> : vector<16x1152xf32>
    %574 = tpu.matmul %545, %573, %cst_288 {dimension_numbers = #tpu.dot_dimension_numbers<[1], [0], [0], [1], [0, 0, 1, 1], [], []>} : vector<16x32xf32>, vector<32x1152xf32>, vector<16x1152xf32> -> vector<16x1152xf32>
    %575 = vector.extract_strided_slice %574 {offsets = [0, 0], sizes = [16, 576], strides = [1, 1]} : vector<16x1152xf32> to vector<16x576xf32>
    %576 = vector.extract_strided_slice %574 {offsets = [0, 576], sizes = [16, 576], strides = [1, 1]} : vector<16x1152xf32> to vector<16x576xf32>
    %577 = arith.negf %575 : vector<16x576xf32>
    %578 = math.exp %577 : vector<16x576xf32>
    %cst_289 = arith.constant 1.000000e+00 : f32
    %579 = vector.broadcast %cst_289 : f32 to vector<16x576xf32>
    %580 = arith.addf %579, %578 : vector<16x576xf32>
    %581 = arith.divf %579, %580 : vector<16x576xf32>
    %582 = arith.mulf %575, %581 : vector<16x576xf32>
    %583 = arith.mulf %582, %576 : vector<16x576xf32>
    %c0_290 = arith.constant 0 : index
    %c0_291 = arith.constant 0 : index
    %584 = vector.load %arg12[%c0_290, %c0_291] : memref<9x576xf32, #tpu.memory_space<vmem>>, vector<9x576xf32>
    %585 = vector.extract_strided_slice %584 {offsets = [0, 0], sizes = [8, 576], strides = [1, 1]} : vector<9x576xf32> to vector<8x576xf32>
    %cst_292 = arith.constant dense<0.000000e+00> : vector<16x576xf32>
    %586 = tpu.matmul %571, %585, %cst_292 {dimension_numbers = #tpu.dot_dimension_numbers<[1], [0], [0], [1], [0, 0, 1, 1], [], []>} : vector<16x8xf32>, vector<8x576xf32>, vector<16x576xf32> -> vector<16x576xf32>
    %587 = vector.extract_strided_slice %584 {offsets = [8, 0], sizes = [1, 576], strides = [1, 1]} : vector<9x576xf32> to vector<1x576xf32>
    %588 = vector.broadcast %587 : vector<1x576xf32> to vector<16x576xf32>
    %589 = arith.addf %586, %588 : vector<16x576xf32>
    %590 = arith.mulf %583, %589 : vector<16x576xf32>
    %c1_293 = arith.constant 1 : index
    %c0_294 = arith.constant 0 : index
    %c0_295 = arith.constant 0 : index
    %591 = vector.load %arg11[%c1_293, %c0_294, %c0_295] : memref<2x576x32xf32, #tpu.memory_space<vmem>>, vector<1x576x32xf32>
    %592 = vector.shape_cast %591 : vector<1x576x32xf32> to vector<576x32xf32>
    %cst_296 = arith.constant dense<0.000000e+00> : vector<16x32xf32>
    %593 = tpu.matmul %590, %592, %cst_296 {dimension_numbers = #tpu.dot_dimension_numbers<[1], [0], [0], [1], [0, 0, 1, 1], [], []>} : vector<16x576xf32>, vector<576x32xf32>, vector<16x32xf32> -> vector<16x32xf32>
    %594 = arith.addf %535, %593 : vector<16x32xf32>
    %cst_297 = arith.constant 1.41421354 : f32
    %595 = vector.broadcast %cst_297 : f32 to vector<16x32xf32>
    %596 = arith.mulf %595, %594 : vector<16x32xf32>
    %597 = arith.mulf %596, %596 : vector<16x32xf32>
    %cst_298 = arith.constant dense<0.000000e+00> : vector<16xf32>
    %598 = vector.multi_reduction <add>, %597, %cst_298 [1] : vector<16x32xf32> to vector<16xf32>
    %599 = vector.shape_cast %598 : vector<16xf32> to vector<16x1xf32>
    %cst_299 = arith.constant 3.200000e+01 : f32
    %600 = vector.broadcast %cst_299 : f32 to vector<16x1xf32>
    %601 = arith.divf %599, %600 : vector<16x1xf32>
    %cst_300 = arith.constant 1.1920929E-7 : f32
    %602 = vector.broadcast %cst_300 : f32 to vector<16x1xf32>
    %603 = arith.addf %601, %602 : vector<16x1xf32>
    %604 = math.rsqrt %603 : vector<16x1xf32>
    %605 = vector.broadcast %604 : vector<16x1xf32> to vector<16x32xf32>
    %606 = arith.mulf %596, %605 : vector<16x32xf32>
    %c0_301 = arith.constant 0 : index
    %c0_302 = arith.constant 0 : index
    %607 = vector.load %arg2[%c0_301, %c0_302] : memref<32x64xf32, #tpu.memory_space<vmem>>, vector<32x64xf32>
    %cst_303 = arith.constant dense<0.000000e+00> : vector<16x64xf32>
    %608 = tpu.matmul %606, %607, %cst_303 {dimension_numbers = #tpu.dot_dimension_numbers<[1], [0], [0], [1], [0, 0, 1, 1], [], []>} : vector<16x32xf32>, vector<32x64xf32>, vector<16x64xf32> -> vector<16x64xf32>
    %c0_304 = arith.constant 0 : index
    %c0_305 = arith.constant 0 : index
    %609 = vector.load %arg13[%c0_304, %c0_305] : memref<16x64xf32, #tpu.memory_space<vmem>>, vector<16x64xf32>
    tpu.vector_store %arg13[%c0_304, %c0_305], %608 {strides = array<i32>} : memref<16x64xf32, #tpu.memory_space<vmem>>, vector<16x64xf32>,
    return
  }
}

</mosaic_0001>

<llo_original>
// kernel: deepseek_forward.1
$region0: #{deepseek_forward.1}
  #allocation0 [shape = 'u32[]', space=smem, size = 0x4, offset = 0x4, fixed_abs, tag = 'smem constant byte address 0x4 - core index']
  #allocation1 [shape = 'u32[144,128]{1,0:T(1,128)}', space=vmem, size = 0x12000, scoped, tag = 'internal scratch']
  #allocation2 [shape = 'f32[2,64,16]{2,1,0:T(8,128)}', space=vmem, size = 0x10000, scoped, tag = 'scratch operand']
  %s0 = inlined_call_operand.vmem [shape: s32[16,1], index: 0, kind: input, shape index: {}]
  %s1 = inlined_call_operand.vmem [shape: f32[64,32], index: 1, kind: input, shape index: {}]
  %s2 = inlined_call_operand.vmem [shape: f32[32,64], index: 2, kind: input, shape index: {}]
  %s3 = inlined_call_operand.vmem [shape: f32[16,32], index: 3, kind: input, shape index: {}]
  %s4 = inlined_call_operand.vmem [shape: f32[2,32,64], index: 4, kind: input, shape index: {}]
  %s5 = inlined_call_operand.vmem [shape: f32[2,32,64], index: 5, kind: input, shape index: {}]
  %s6 = inlined_call_operand.vmem [shape: f32[2,4,16,8], index: 6, kind: input, shape index: {}]
  %s7 = inlined_call_operand.vmem [shape: f32[2,32,32], index: 7, kind: input, shape index: {}]
  %s8 = inlined_call_operand.vmem [shape: f32[2,32,8], index: 8, kind: input, shape index: {}]
  %s9 = inlined_call_operand.vmem [shape: f32[2,1,8], index: 9, kind: input, shape index: {}]
  %s10 = inlined_call_operand.vmem [shape: f32[2,32,1152], index: 10, kind: input, shape index: {}]
  %s11 = inlined_call_operand.vmem [shape: f32[2,576,32], index: 11, kind: input, shape index: {}]
  %s12 = inlined_call_operand.vmem [shape: f32[9,576], index: 12, kind: input, shape index: {}]
  %s13 = inlined_call_operand.hbm [shape: f32[16,64], index: 13, kind: output, shape index: {}]
  %s14 = sld [smem:[#allocation0]]
  $region62: #{deepseek_forward.1} parent=0
    _
  %s16 = ssub.s32 1, %s14
  %s17 = scalar_select 0, %s16, %s14
  $region1: #{deepseek_forward.1} parent=0
    #allocation3 [shape = 'u8[8192]{0}', space=vmem, size = 0x2000, scoped, tag = 'output window, operand 0, single buffered']
    #allocation4 [shape = 's32[1]{0}', space=sflag, size = 0x4, scoped, tag = 'scoped memory for deepseek_forward.1']
    %18 = vsyncpa [#allocation4], 0
    // Predicated region
    $region2: #{deepseek_forward.1} parent=1 // pred_check
      _
    $region3: #{deepseek_forward.1} parent=1 // pred_check_branch
      %20 = sbr.rel (0) target = $region5
    $region4: #{deepseek_forward.1} parent=1 // pred_region
      _
    $region5: #{deepseek_forward.1} parent=1 // pred_fallthru
      _
    // Predicated region
    $region6: #{deepseek_forward.1} parent=1 // pred_check
      _
    $region7: #{deepseek_forward.1} parent=1 // pred_check_branch
      %22 = sbr.rel (0) target = $region9
    $region8: #{deepseek_forward.1} parent=1 // pred_region
      _
    $region9: #{deepseek_forward.1} parent=1 // pred_fallthru
      _
    // Predicated region
    $region10: #{deepseek_forward.1} parent=1 // pred_check
      _
    $region11: #{deepseek_forward.1} parent=1 // pred_check_branch
      %24 = sbr.rel (0) target = $region13
    $region12: #{deepseek_forward.1} parent=1 // pred_region
      _
    $region13: #{deepseek_forward.1} parent=1 // pred_fallthru
      _
    // Predicated region
    $region14: #{deepseek_forward.1} parent=1 // pred_check
      _
    $region15: #{deepseek_forward.1} parent=1 // pred_check_branch
      %26 = sbr.rel (0) target = $region17
    $region16: #{deepseek_forward.1} parent=1 // pred_region
      _
    $region17: #{deepseek_forward.1} parent=1 // pred_fallthru
      _
    // Predicated region
    $region18: #{deepseek_forward.1} parent=1 // pred_check
      _
    $region19: #{deepseek_forward.1} parent=1 // pred_check_branch
      %28 = sbr.rel (0) target = $region21
    $region20: #{deepseek_forward.1} parent=1 // pred_region
      _
    $region21: #{deepseek_forward.1} parent=1 // pred_fallthru
      _
    // Predicated region
    $region22: #{deepseek_forward.1} parent=1 // pred_check
      _
    $region23: #{deepseek_forward.1} parent=1 // pred_check_branch
      %30 = sbr.rel (0) target = $region25
    $region24: #{deepseek_forward.1} parent=1 // pred_region
      _
    $region25: #{deepseek_forward.1} parent=1 // pred_fallthru
      _
    // Predicated region
    $region26: #{deepseek_forward.1} parent=1 // pred_check
      _
    $region27: #{deepseek_forward.1} parent=1 // pred_check_branch
      %32 = sbr.rel (0) target = $region29
    $region28: #{deepseek_forward.1} parent=1 // pred_region
      _
    $region29: #{deepseek_forward.1} parent=1 // pred_fallthru
      _
    // Predicated region
    $region30: #{deepseek_forward.1} parent=1 // pred_check
      _
    $region31: #{deepseek_forward.1} parent=1 // pred_check_branch
      %34 = sbr.rel (0) target = $region33
    $region32: #{deepseek_forward.1} parent=1 // pred_region
      _
    $region33: #{deepseek_forward.1} parent=1 // pred_fallthru
      _
    // Predicated region
    $region34: #{deepseek_forward.1} parent=1 // pred_check
      _
    $region35: #{deepseek_forward.1} parent=1 // pred_check_branch
      %36 = sbr.rel (0) target = $region37
    $region36: #{deepseek_forward.1} parent=1 // pred_region
      _
    $region37: #{deepseek_forward.1} parent=1 // pred_fallthru
      _
    // Predicated region
    $region38: #{deepseek_forward.1} parent=1 // pred_check
      _
    $region39: #{deepseek_forward.1} parent=1 // pred_check_branch
      %38 = sbr.rel (0) target = $region41
    $region40: #{deepseek_forward.1} parent=1 // pred_region
      _
    $region41: #{deepseek_forward.1} parent=1 // pred_fallthru
      _
    // Predicated region
    $region42: #{deepseek_forward.1} parent=1 // pred_check
      _
    $region43: #{deepseek_forward.1} parent=1 // pred_check_branch
      %40 = sbr.rel (0) target = $region45
    $region44: #{deepseek_forward.1} parent=1 // pred_region
      _
    $region45: #{deepseek_forward.1} parent=1 // pred_fallthru
      _
    // Predicated region
    $region46: #{deepseek_forward.1} parent=1 // pred_check
      _
    $region47: #{deepseek_forward.1} parent=1 // pred_check_branch
      %42 = sbr.rel (0) target = $region49
    $region48: #{deepseek_forward.1} parent=1 // pred_region
      _
    $region49: #{deepseek_forward.1} parent=1 // pred_fallthru
      _
    // Predicated region
    $region50: #{deepseek_forward.1} parent=1 // pred_check
      _
    $region51: #{deepseek_forward.1} parent=1 // pred_check_branch
      %44 = sbr.rel (0) target = $region53
    $region52: #{deepseek_forward.1} parent=1 // pred_region
      _
    $region53: #{deepseek_forward.1} parent=1 // pred_fallthru
      _
    %v45 = vld [vmem:[%s0] sm:$0xff]
    %v46 = vld [vmem:[%s0 + $0x8] sm:$0xff]
    %v47 = vlaneseq
    %v48 = vand.u32 %v47, 127
    %49 = vset.pattern.permute.xlu0 0
    %50 = vperm.xlu0 %49, %v45
    %v51 = vpop.permute.xlu0 %50
    %52 = vset.pattern.permute.xlu0 0
    %53 = vperm.xlu0 %52, %v46
    %v54 = vpop.permute.xlu0 %53
    %vm55 = vcmp.eq.s32.totalorder %v51, %v48
    %vm56 = vcmp.eq.s32.totalorder %v54, %v48
    %v57 = vsel %vm55, 1, 0
    %v58 = vsel %vm56, 1, 0
    %v59 = vcvt.s32.f32 %v57
    %v60 = vcvt.s32.f32 %v58
    %v61 = vld [vmem:[%s1] sm:$0xff]
    %v62 = vld [vmem:[%s1 + $0x8] sm:$0xff]
    %v63 = vld [vmem:[%s1 + $0x10] sm:$0xff]
    %v64 = vld [vmem:[%s1 + $0x18] sm:$0xff]
    %v65 = vld [vmem:[%s1 + $0x20] sm:$0xff]
    %v66 = vld [vmem:[%s1 + $0x28] sm:$0xff]
    %v67 = vld [vmem:[%s1 + $0x30] sm:$0xff]
    %v68 = vld [vmem:[%s1 + $0x38] sm:$0xff]
    %v69 = vld [vmem:[%s3] sm:$0xff]
    %v70 = vld [vmem:[%s3 + $0x8] sm:$0xff]
    %vm71 = vcmask 523264
    %v73 = vsel %vm71, %v59, 0
    %v76 = vsel %vm71, %v60, 0
    %78 = vmatprep.subr.mxu0 0.0
    %79 = vmatpush1.msra.mxu0 %v61
    %80 = vmatprep.subr.mxu0 0.0
    %81 = vmatpush1.msra.mxu0 %v62
    %82 = vmatprep.subr.mxu0 0.0
    %83 = vmatpush1.msra.mxu0 %v63
    %84 = vmatprep.subr.mxu0 0.0
    %85 = vmatpush1.msra.mxu0 %v64
    %86 = vmatprep.subr.mxu0 0.0
    %87 = vmatpush1.msra.mxu0 %v65
    %88 = vmatprep.subr.mxu0 0.0
    %89 = vmatpush1.msra.mxu0 %v66
    %90 = vmatprep.subr.mxu0 0.0
    %91 = vmatpush1.msra.mxu0 %v67
    %92 = vmatprep.subr.mxu0 0.0
    %93 = vmatpush1.msra.mxu0 %v68
    %94 = vmatprep.subr.mxu0 0.0
    %95 = vmatpush1.msra.mxu0 0.0
    %96 = vmatprep.subr.mxu0 0.0
    %97 = vmatpush1.msra.mxu0 0.0
    %98 = vmatprep.subr.mxu0 0.0
    %99 = vmatpush1.msra.mxu0 0.0
    %100 = vmatprep.subr.mxu0 0.0
    %101 = vmatpush1.msra.mxu0 0.0
    %102 = vmatprep.subr.mxu0 0.0
    %103 = vmatpush1.msra.mxu0 0.0
    %104 = vmatprep.subr.mxu0 0.0
    %105 = vmatpush1.msra.mxu0 0.0
    %106 = vmatprep.subr.mxu0 0.0
    %107 = vmatpush1.msra.mxu0 0.0
    %108 = vmatprep.subr.mxu0 0.0
    %109 = vmatpush1.msra.mxu0 0.0
    %110 = vmatprep.subr.mxu0 0.0
    %111 = vmatpush1.msra.mxu0 0.0
    %112 = vmatprep.subr.mxu0 0.0
    %113 = vmatpush1.msra.mxu0 0.0
    %114 = vmatprep.subr.mxu0 0.0
    %115 = vmatpush1.msra.mxu0 0.0
    %116 = vmatprep.subr.mxu0 0.0
    %117 = vmatpush1.msra.mxu0 0.0
    %118 = vmatprep.subr.mxu0 0.0
    %119 = vmatpush1.msra.mxu0 0.0
    %120 = vmatprep.subr.mxu0 0.0
    %121 = vmatpush1.msra.mxu0 0.0
    %122 = vmatprep.subr.mxu0 0.0
    %123 = vmatpush1.msra.mxu0 0.0
    %124 = vmatprep.subr.mxu0 0.0
    %125 = vmatpush1.msra.mxu0 0.0
    %126 = vmatprep.subr.mxu0 0.0
    %127 = vmatpush1.msra.mxu0 0.0
    %128 = vmatprep.subr.mxu0 0.0
    %129 = vmatpush1.msra.mxu0 0.0
    %130 = vmatprep.subr.mxu0 0.0
    %131 = vmatpush1.msra.mxu0 0.0
    %132 = vmatprep.subr.mxu0 0.0
    %133 = vmatpush1.msra.mxu0 0.0
    %134 = vmatprep.subr.mxu0 0.0
    %135 = vmatpush1.msra.mxu0 0.0
    %136 = vmatprep.subr.mxu0 0.0
    %137 = vmatpush1.msra.mxu0 0.0
    %138 = vmatprep.subr.mxu0 0.0
    %139 = vmatpush1.msra.mxu0 0.0
    %140 = vmatprep.subr.mxu0 0.0
    %141 = vmatpush1.msra.mxu0 0.0
    %142 = vmatprep.mubr.f32.mxu0 0.0
    %143 = vmatmul.mubr.f32.gmra.mrb[0].mxu0 %v73
    %v144 = vpop.f32.mrb[0].mxu0
    %v145 = vadd.f32 %v69, %v144
    %v146 = vpop.f32.mrb[0].mxu0
    %147 = vmatprep.mubr.f32.mxu0 0.0
    %148 = vmatmul.mubr.f32.gmra.mrb[0].mxu0 %v76
    %v149 = vpop.f32.mrb[0].mxu0
    %v150 = vadd.f32 %v70, %v149
    %v151 = vpop.f32.mrb[0].mxu0
    %152 = vdwg.mxu0
    %v153 = vlaneseq
    %v154 = vshrl.u32 %v153, 7
    %vm155 = vcmp.le.s32.totalorder %v48, %v154
    %v156 = vmul.f32 %v145, %v145
    %v157 = vmul.f32 %v150, %v150
    %vm158 = vcmask 261120
    %v159 = vsel %vm158, %v156, 0.0
    %160 = vadd.xlane.f32.xlu0 %v159
    %v161 = vpop.xlane.xlu0 %160
    %v162 = vsel %vm158, %v157, 0.0
    %163 = vadd.xlane.f32.xlu0 %v162
    %v164 = vpop.xlane.xlu0 %163
    %v165 = vrcp.pop 32.0
    %v166 = vmul.f32 %v161, %v165
    %v167 = vmul.f32 %v164, %v165
    %v168 = vadd.f32 %v166, 1.1920929e-07
    %v169 = vadd.f32 %v167, 1.1920929e-07
    %v170 = vrsqrt.pop %v168
    %v171 = vrsqrt.pop %v169
    %v172 = vmul.f32 %v145, %v170
    %v173 = vmul.f32 %v150, %v171
    %v174 = vld [vmem:[%s4] sm:$0xff]
    %v175 = vld [vmem:[%s4 + $0x8] sm:$0xff]
    %v176 = vld [vmem:[%s4 + $0x10] sm:$0xff]
    %v177 = vld [vmem:[%s4 + $0x18] sm:$0xff]
    %v179 = vsel %vm158, %v172, 0
    %v182 = vsel %vm158, %v173, 0
    %184 = vmatprep.subr.mxu0 0.0
    %185 = vmatpush1.msra.mxu0 %v174
    %186 = vmatprep.subr.mxu0 0.0
    %187 = vmatpush1.msra.mxu0 %v175
    %188 = vmatprep.subr.mxu0 0.0
    %189 = vmatpush1.msra.mxu0 %v176
    %190 = vmatprep.subr.mxu0 0.0
    %191 = vmatpush1.msra.mxu0 %v177
    %192 = vmatprep.subr.mxu0 0.0
    %193 = vmatpush1.msra.mxu0 0.0
    %194 = vmatprep.subr.mxu0 0.0
    %195 = vmatpush1.msra.mxu0 0.0
    %196 = vmatprep.subr.mxu0 0.0
    %197 = vmatpush1.msra.mxu0 0.0
    %198 = vmatprep.subr.mxu0 0.0
    %199 = vmatpush1.msra.mxu0 0.0
    %200 = vmatprep.subr.mxu0 0.0
    %201 = vmatpush1.msra.mxu0 0.0
    %202 = vmatprep.subr.mxu0 0.0
    %203 = vmatpush1.msra.mxu0 0.0
    %204 = vmatprep.subr.mxu0 0.0
    %205 = vmatpush1.msra.mxu0 0.0
    %206 = vmatprep.subr.mxu0 0.0
    %207 = vmatpush1.msra.mxu0 0.0
    %208 = vmatprep.subr.mxu0 0.0
    %209 = vmatpush1.msra.mxu0 0.0
    %210 = vmatprep.subr.mxu0 0.0
    %211 = vmatpush1.msra.mxu0 0.0
    %212 = vmatprep.subr.mxu0 0.0
    %213 = vmatpush1.msra.mxu0 0.0
    %214 = vmatprep.subr.mxu0 0.0
    %215 = vmatpush1.msra.mxu0 0.0
    %216 = vmatprep.subr.mxu0 0.0
    %217 = vmatpush1.msra.mxu0 0.0
    %218 = vmatprep.subr.mxu0 0.0
    %219 = vmatpush1.msra.mxu0 0.0
    %220 = vmatprep.subr.mxu0 0.0
    %221 = vmatpush1.msra.mxu0 0.0
    %222 = vmatprep.subr.mxu0 0.0
    %223 = vmatpush1.msra.mxu0 0.0
    %224 = vmatprep.subr.mxu0 0.0
    %225 = vmatpush1.msra.mxu0 0.0
    %226 = vmatprep.subr.mxu0 0.0
    %227 = vmatpush1.msra.mxu0 0.0
    %228 = vmatprep.subr.mxu0 0.0
    %229 = vmatpush1.msra.mxu0 0.0
    %230 = vmatprep.subr.mxu0 0.0
    %231 = vmatpush1.msra.mxu0 0.0
    %232 = vmatprep.subr.mxu0 0.0
    %233 = vmatpush1.msra.mxu0 0.0
    %234 = vmatprep.subr.mxu0 0.0
    %235 = vmatpush1.msra.mxu0 0.0
    %236 = vmatprep.subr.mxu0 0.0
    %237 = vmatpush1.msra.mxu0 0.0
    %238 = vmatprep.subr.mxu0 0.0
    %239 = vmatpush1.msra.mxu0 0.0
    %240 = vmatprep.subr.mxu0 0.0
    %241 = vmatpush1.msra.mxu0 0.0
    %242 = vmatprep.subr.mxu0 0.0
    %243 = vmatpush1.msra.mxu0 0.0
    %244 = vmatprep.subr.mxu0 0.0
    %245 = vmatpush1.msra.mxu0 0.0
    %246 = vmatprep.subr.mxu0 0.0
    %247 = vmatpush1.msra.mxu0 0.0
    %248 = vmatprep.mubr.f32.mxu0 0.0
    %249 = vmatmul.mubr.f32.gmra.mrb[0].mxu0 %v179
    %v250 = vpop.f32.mrb[0].mxu0
    %v251 = vadd.f32 0.0, %v250
    %v252 = vpop.f32.mrb[0].mxu0
    %253 = vmatprep.mubr.f32.mxu0 0.0
    %254 = vmatmul.mubr.f32.gmra.mrb[0].mxu0 %v182
    %v255 = vpop.f32.mrb[0].mxu0
    %v256 = vadd.f32 0.0, %v255
    %v257 = vpop.f32.mrb[0].mxu0
    %258 = vdwg.mxu0
    %v259 = vld [vmem:[%s5] sm:$0xff]
    %v260 = vld [vmem:[%s5 + $0x8] sm:$0xff]
    %v261 = vld [vmem:[%s5 + $0x10] sm:$0xff]
    %v262 = vld [vmem:[%s5 + $0x18] sm:$0xff]
    %263 = vmatprep.subr.mxu0 0.0
    %264 = vmatpush1.msra.mxu0 %v259
    %265 = vmatprep.subr.mxu0 0.0
    %266 = vmatpush1.msra.mxu0 %v260
    %267 = vmatprep.subr.mxu0 0.0
    %268 = vmatpush1.msra.mxu0 %v261
    %269 = vmatprep.subr.mxu0 0.0
    %270 = vmatpush1.msra.mxu0 %v262
    %271 = vmatprep.subr.mxu0 0.0
    %272 = vmatpush1.msra.mxu0 0.0
    %273 = vmatprep.subr.mxu0 0.0
    %274 = vmatpush1.msra.mxu0 0.0
    %275 = vmatprep.subr.mxu0 0.0
    %276 = vmatpush1.msra.mxu0 0.0
    %277 = vmatprep.subr.mxu0 0.0
    %278 = vmatpush1.msra.mxu0 0.0
    %279 = vmatprep.subr.mxu0 0.0
    %280 = vmatpush1.msra.mxu0 0.0
    %281 = vmatprep.subr.mxu0 0.0
    %282 = vmatpush1.msra.mxu0 0.0
    %283 = vmatprep.subr.mxu0 0.0
    %284 = vmatpush1.msra.mxu0 0.0
    %285 = vmatprep.subr.mxu0 0.0
    %286 = vmatpush1.msra.mxu0 0.0
    %287 = vmatprep.subr.mxu0 0.0
    %288 = vmatpush1.msra.mxu0 0.0
    %289 = vmatprep.subr.mxu0 0.0
    %290 = vmatpush1.msra.mxu0 0.0
    %291 = vmatprep.subr.mxu0 0.0
    %292 = vmatpush1.msra.mxu0 0.0
    %293 = vmatprep.subr.mxu0 0.0
    %294 = vmatpush1.msra.mxu0 0.0
    %295 = vmatprep.subr.mxu0 0.0
    %296 = vmatpush1.msra.mxu0 0.0
    %297 = vmatprep.subr.mxu0 0.0
    %298 = vmatpush1.msra.mxu0 0.0
    %299 = vmatprep.subr.mxu0 0.0
    %300 = vmatpush1.msra.mxu0 0.0
    %301 = vmatprep.subr.mxu0 0.0
    %302 = vmatpush1.msra.mxu0 0.0
    %303 = vmatprep.subr.mxu0 0.0
    %304 = vmatpush1.msra.mxu0 0.0
    %305 = vmatprep.subr.mxu0 0.0
    %306 = vmatpush1.msra.mxu0 0.0
    %307 = vmatprep.subr.mxu0 0.0
    %308 = vmatpush1.msra.mxu0 0.0
    %309 = vmatprep.subr.mxu0 0.0
    %310 = vmatpush1.msra.mxu0 0.0
    %311 = vmatprep.subr.mxu0 0.0
    %312 = vmatpush1.msra.mxu0 0.0
    %313 = vmatprep.subr.mxu0 0.0
    %314 = vmatpush1.msra.mxu0 0.0
    %315 = vmatprep.subr.mxu0 0.0
    %316 = vmatpush1.msra.mxu0 0.0
    %317 = vmatprep.subr.mxu0 0.0
    %318 = vmatpush1.msra.mxu0 0.0
    %319 = vmatprep.subr.mxu0 0.0
    %320 = vmatpush1.msra.mxu0 0.0
    %321 = vmatprep.subr.mxu0 0.0
    %322 = vmatpush1.msra.mxu0 0.0
    %323 = vmatprep.subr.mxu0 0.0
    %324 = vmatpush1.msra.mxu0 0.0
    %325 = vmatprep.subr.mxu0 0.0
    %326 = vmatpush1.msra.mxu0 0.0
    %327 = vmatprep.mubr.f32.mxu0 0.0
    %328 = vmatmul.mubr.f32.gmra.mrb[0].mxu0 %v179
    %v329 = vpop.f32.mrb[0].mxu0
    %v330 = vadd.f32 0.0, %v329
    %v331 = vpop.f32.mrb[0].mxu0
    %332 = vmatprep.mubr.f32.mxu0 0.0
    %333 = vmatmul.mubr.f32.gmra.mrb[0].mxu0 %v182
    %v334 = vpop.f32.mrb[0].mxu0
    %v335 = vadd.f32 0.0, %v334
    %v336 = vpop.f32.mrb[0].mxu0
    %337 = vdwg.mxu0
    %vm338 = vcmask 130048
    %339 = vst.msk [vmem:[#allocation2] sm:$0xff] %vm338, %v251
    %341 = vrot.lane.b32.xlu0 %v251, 112
    %v342 = vpop.permute.xlu0 %341
    %344 = vst.msk [vmem:[#allocation2 + $0x8] sm:$0xff] %vm338, %v342
    %345 = vrot.lane.b32.xlu0 %v251, 96
    %v346 = vpop.permute.xlu0 %345
    %348 = vst.msk [vmem:[#allocation2 + $0x10] sm:$0xff] %vm338, %v346
    %349 = vrot.lane.b32.xlu0 %v251, 80
    %v350 = vpop.permute.xlu0 %349
    %352 = vst.msk [vmem:[#allocation2 + $0x18] sm:$0xff] %vm338, %v350
    %s353 = scalar_lea.vmem [#allocation2], 64
    %354 = vst.msk [vmem:[%s353] sm:$0xff] %vm338, %v256
    %356 = vrot.lane.b32.xlu0 %v256, 112
    %v357 = vpop.permute.xlu0 %356
    %359 = vst.msk [vmem:[%s353 + $0x8] sm:$0xff] %vm338, %v357
    %360 = vrot.lane.b32.xlu0 %v256, 96
    %v361 = vpop.permute.xlu0 %360
    %363 = vst.msk [vmem:[%s353 + $0x10] sm:$0xff] %vm338, %v361
    %364 = vrot.lane.b32.xlu0 %v256, 80
    %v365 = vpop.permute.xlu0 %364
    %367 = vst.msk [vmem:[%s353 + $0x18] sm:$0xff] %vm338, %v365
    %v368 = vld [vmem:[%s6] sm:$0xff]
    %v369 = vld [vmem:[%s6 + $0x8] sm:$0xff]
    %v370 = vld [vmem:[%s6 + $0x10] sm:$0xff]
    %v371 = vld [vmem:[%s6 + $0x18] sm:$0xff]
    %v372 = vld [vmem:[%s6 + $0x20] sm:$0xff]
    %v373 = vld [vmem:[%s6 + $0x28] sm:$0xff]
    %v374 = vld [vmem:[%s6 + $0x30] sm:$0xff]
    %v375 = vld [vmem:[%s6 + $0x38] sm:$0xff]
    %v376 = vld [vmem:[#allocation2] sm:$0xff]
    %v378 = vsel %vm338, %v330, 0
    %v381 = vsel %vm338, %v376, 0
    %383 = vmatprep.subr.mxu0 0.0
    %384 = vmatpush1.xpose.msra.mxu0 %v381
    %385 = vmatprep.subr.mxu0 0.0
    %386 = vmatpush1.xpose.msra.mxu0 0.0
    %387 = vmatprep.subr.mxu0 0.0
    %388 = vmatpush1.xpose.msra.mxu0 0.0
    %389 = vmatprep.subr.mxu0 0.0
    %390 = vmatpush1.xpose.msra.mxu0 0.0
    %391 = vmatprep.subr.mxu0 0.0
    %392 = vmatpush1.xpose.msra.mxu0 0.0
    %393 = vmatprep.subr.mxu0 0.0
    %394 = vmatpush1.xpose.msra.mxu0 0.0
    %395 = vmatprep.subr.mxu0 0.0
    %396 = vmatpush1.xpose.msra.mxu0 0.0
    %397 = vmatprep.subr.mxu0 0.0
    %398 = vmatpush1.xpose.msra.mxu0 0.0
    %399 = vmatprep.subr.mxu0 0.0
    %400 = vmatpush1.xpose.msra.mxu0 0.0
    %401 = vmatprep.subr.mxu0 0.0
    %402 = vmatpush1.xpose.msra.mxu0 0.0
    %403 = vmatprep.subr.mxu0 0.0
    %404 = vmatpush1.xpose.msra.mxu0 0.0
    %405 = vmatprep.subr.mxu0 0.0
    %406 = vmatpush1.xpose.msra.mxu0 0.0
    %407 = vmatprep.subr.mxu0 0.0
    %408 = vmatpush1.xpose.msra.mxu0 0.0
    %409 = vmatprep.subr.mxu0 0.0
    %410 = vmatpush1.xpose.msra.mxu0 0.0
    %411 = vmatprep.subr.mxu0 0.0
    %412 = vmatpush1.xpose.msra.mxu0 0.0
    %413 = vmatprep.subr.mxu0 0.0
    %414 = vmatpush1.xpose.msra.mxu0 0.0
    %415 = vmatprep.subr.mxu0 0.0
    %416 = vmatpush1.xpose.msra.mxu0 0.0
    %417 = vmatprep.subr.mxu0 0.0
    %418 = vmatpush1.xpose.msra.mxu0 0.0
    %419 = vmatprep.subr.mxu0 0.0
    %420 = vmatpush1.xpose.msra.mxu0 0.0
    %421 = vmatprep.subr.mxu0 0.0
    %422 = vmatpush1.xpose.msra.mxu0 0.0
    %423 = vmatprep.subr.mxu0 0.0
    %424 = vmatpush1.xpose.msra.mxu0 0.0
    %425 = vmatprep.subr.mxu0 0.0
    %426 = vmatpush1.xpose.msra.mxu0 0.0
    %427 = vmatprep.subr.mxu0 0.0
    %428 = vmatpush1.xpose.msra.mxu0 0.0
    %429 = vmatprep.subr.mxu0 0.0
    %430 = vmatpush1.xpose.msra.mxu0 0.0
    %431 = vmatprep.subr.mxu0 0.0
    %432 = vmatpush1.xpose.msra.mxu0 0.0
    %433 = vmatprep.subr.mxu0 0.0
    %434 = vmatpush1.xpose.msra.mxu0 0.0
    %435 = vmatprep.subr.mxu0 0.0
    %436 = vmatpush1.xpose.msra.mxu0 0.0
    %437 = vmatprep.subr.mxu0 0.0
    %438 = vmatpush1.xpose.msra.mxu0 0.0
    %439 = vmatprep.subr.mxu0 0.0
    %440 = vmatpush1.xpose.msra.mxu0 0.0
    %441 = vmatprep.subr.mxu0 0.0
    %442 = vmatpush1.xpose.msra.mxu0 0.0
    %443 = vmatprep.subr.mxu0 0.0
    %444 = vmatpush1.xpose.msra.mxu0 0.0
    %445 = vmatprep.subr.mxu0 0.0
    %446 = vmatpush1.xpose.msra.mxu0 0.0
    %447 = vmatprep.mubr.f32.mxu0 0.0
    %448 = vmatmul.mubr.f32.gmra.mrb[0].mxu0 %v378
    %v449 = vpop.f32.mrb[0].mxu0
    %v450 = vadd.f32 0.0, %v449
    %v451 = vpop.f32.mrb[0].mxu0
    %452 = vdwg.mxu0
    %v453 = vmul.f32 %v450, 0.35355338
    %v454 = vsel %vm155, %v453, -1e+20
    %vm455 = vcmask 64512
    %v456 = vsel %vm455, %v454, -inf
    %457 = vmax.xlane.f32.xlu0 %v456
    %v458 = vpop.xlane.xlu0 %457
    %v459 = vsub.f32 %v454, %v458
    %v460 = vmul.f32 %v459, 1.442695
    %v461 = vpow.pop %v460
    %v462 = vsel %vm455, %v461, 0.0
    %463 = vadd.xlane.f32.xlu0 %v462
    %v464 = vpop.xlane.xlu0 %463
    %v465 = vrcp.pop %v464
    %v466 = vmul.f32 %v461, %v465
    %467 = vmatprep.subr.mxu0 0.0
    %468 = vmatpush1.msra.mxu0 %v368
    %469 = vmatprep.subr.mxu0 0.0
    %470 = vmatpush1.msra.mxu0 %v369
    %471 = vmatprep.subr.mxu0 0.0
    %472 = vmatpush1.msra.mxu0 0.0
    %473 = vmatprep.subr.mxu0 0.0
    %474 = vmatpush1.msra.mxu0 0.0
    %475 = vmatprep.subr.mxu0 0.0
    %476 = vmatpush1.msra.mxu0 0.0
    %477 = vmatprep.subr.mxu0 0.0
    %478 = vmatpush1.msra.mxu0 0.0
    %479 = vmatprep.subr.mxu0 0.0
    %480 = vmatpush1.msra.mxu0 0.0
    %481 = vmatprep.subr.mxu0 0.0
    %482 = vmatpush1.msra.mxu0 0.0
    %483 = vmatprep.subr.mxu0 0.0
    %484 = vmatpush1.msra.mxu0 0.0
    %485 = vmatprep.subr.mxu0 0.0
    %486 = vmatpush1.msra.mxu0 0.0
    %487 = vmatprep.subr.mxu0 0.0
    %488 = vmatpush1.msra.mxu0 0.0
    %489 = vmatprep.subr.mxu0 0.0
    %490 = vmatpush1.msra.mxu0 0.0
    %491 = vmatprep.subr.mxu0 0.0
    %492 = vmatpush1.msra.mxu0 0.0
    %493 = vmatprep.subr.mxu0 0.0
    %494 = vmatpush1.msra.mxu0 0.0
    %495 = vmatprep.subr.mxu0 0.0
    %496 = vmatpush1.msra.mxu0 0.0
    %497 = vmatprep.subr.mxu0 0.0
    %498 = vmatpush1.msra.mxu0 0.0
    %499 = vmatprep.subr.mxu0 0.0
    %500 = vmatpush1.msra.mxu0 0.0
    %501 = vmatprep.subr.mxu0 0.0
    %502 = vmatpush1.msra.mxu0 0.0
    %503 = vmatprep.subr.mxu0 0.0
    %504 = vmatpush1.msra.mxu0 0.0
    %505 = vmatprep.subr.mxu0 0.0
    %506 = vmatpush1.msra.mxu0 0.0
    %507 = vmatprep.subr.mxu0 0.0
    %508 = vmatpush1.msra.mxu0 0.0
    %509 = vmatprep.subr.mxu0 0.0
    %510 = vmatpush1.msra.mxu0 0.0
    %511 = vmatprep.subr.mxu0 0.0
    %512 = vmatpush1.msra.mxu0 0.0
    %513 = vmatprep.subr.mxu0 0.0
    %514 = vmatpush1.msra.mxu0 0.0
    %515 = vmatprep.subr.mxu0 0.0
    %516 = vmatpush1.msra.mxu0 0.0
    %517 = vmatprep.subr.mxu0 0.0
    %518 = vmatpush1.msra.mxu0 0.0
    %519 = vmatprep.subr.mxu0 0.0
    %520 = vmatpush1.msra.mxu0 0.0
    %521 = vmatprep.subr.mxu0 0.0
    %522 = vmatpush1.msra.mxu0 0.0
    %523 = vmatprep.subr.mxu0 0.0
    %524 = vmatpush1.msra.mxu0 0.0
    %525 = vmatprep.subr.mxu0 0.0
    %526 = vmatpush1.msra.mxu0 0.0
    %527 = vmatprep.subr.mxu0 0.0
    %528 = vmatpush1.msra.mxu0 0.0
    %529 = vmatprep.subr.mxu0 0.0
    %530 = vmatpush1.msra.mxu0 0.0
    %531 = vmatprep.mubr.f32.mxu0 0.0
    %532 = vmatmul.mubr.f32.gmra.mrb[0].mxu0 %v381
    %v533 = vpop.f32.mrb[0].mxu0
    %v534 = vadd.f32 0.0, %v533
    %v535 = vpop.f32.mrb[0].mxu0
    %536 = vdwg.mxu0
    %v538 = vsel %vm455, %v466, 0
    %540 = vmatprep.subr.mxu0 0.0
    %541 = vmatpush1.msra.mxu0 %v534
    %542 = vmatprep.subr.mxu0 0.0
    %543 = vmatpush1.msra.mxu0 0.0
    %544 = vmatprep.subr.mxu0 0.0
    %545 = vmatpush1.msra.mxu0 0.0
    %546 = vmatprep.subr.mxu0 0.0
    %547 = vmatpush1.msra.mxu0 0.0
    %548 = vmatprep.subr.mxu0 0.0
    %549 = vmatpush1.msra.mxu0 0.0
    %550 = vmatprep.subr.mxu0 0.0
    %551 = vmatpush1.msra.mxu0 0.0
    %552 = vmatprep.subr.mxu0 0.0
    %553 = vmatpush1.msra.mxu0 0.0
    %554 = vmatprep.subr.mxu0 0.0
    %555 = vmatpush1.msra.mxu0 0.0
    %556 = vmatprep.subr.mxu0 0.0
    %557 = vmatpush1.msra.mxu0 0.0
    %558 = vmatprep.subr.mxu0 0.0
    %559 = vmatpush1.msra.mxu0 0.0
    %560 = vmatprep.subr.mxu0 0.0
    %561 = vmatpush1.msra.mxu0 0.0
    %562 = vmatprep.subr.mxu0 0.0
    %563 = vmatpush1.msra.mxu0 0.0
    %564 = vmatprep.subr.mxu0 0.0
    %565 = vmatpush1.msra.mxu0 0.0
    %566 = vmatprep.subr.mxu0 0.0
    %567 = vmatpush1.msra.mxu0 0.0
    %568 = vmatprep.subr.mxu0 0.0
    %569 = vmatpush1.msra.mxu0 0.0
    %570 = vmatprep.subr.mxu0 0.0
    %571 = vmatpush1.msra.mxu0 0.0
    %572 = vmatprep.subr.mxu0 0.0
    %573 = vmatpush1.msra.mxu0 0.0
    %574 = vmatprep.subr.mxu0 0.0
    %575 = vmatpush1.msra.mxu0 0.0
    %576 = vmatprep.subr.mxu0 0.0
    %577 = vmatpush1.msra.mxu0 0.0
    %578 = vmatprep.subr.mxu0 0.0
    %579 = vmatpush1.msra.mxu0 0.0
    %580 = vmatprep.subr.mxu0 0.0
    %581 = vmatpush1.msra.mxu0 0.0
    %582 = vmatprep.subr.mxu0 0.0
    %583 = vmatpush1.msra.mxu0 0.0
    %584 = vmatprep.subr.mxu0 0.0
    %585 = vmatpush1.msra.mxu0 0.0
    %586 = vmatprep.subr.mxu0 0.0
    %587 = vmatpush1.msra.mxu0 0.0
    %588 = vmatprep.subr.mxu0 0.0
    %589 = vmatpush1.msra.mxu0 0.0
    %590 = vmatprep.subr.mxu0 0.0
    %591 = vmatpush1.msra.mxu0 0.0
    %592 = vmatprep.subr.mxu0 0.0
    %593 = vmatpush1.msra.mxu0 0.0
    %594 = vmatprep.subr.mxu0 0.0
    %595 = vmatpush1.msra.mxu0 0.0
    %596 = vmatprep.subr.mxu0 0.0
    %597 = vmatpush1.msra.mxu0 0.0
    %598 = vmatprep.subr.mxu0 0.0
    %599 = vmatpush1.msra.mxu0 0.0
    %600 = vmatprep.subr.mxu0 0.0
    %601 = vmatpush1.msra.mxu0 0.0
    %602 = vmatprep.subr.mxu0 0.0
    %603 = vmatpush1.msra.mxu0 0.0
    %604 = vmatprep.mubr.f32.mxu0 0.0
    %605 = vmatmul.mubr.f32.gmra.mrb[0].mxu0 %v538
    %v606 = vpop.f32.mrb[0].mxu0
    %v607 = vadd.f32 0.0, %v606
    %v608 = vpop.f32.mrb[0].mxu0
    %609 = vdwg.mxu0
    %v610 = vld [vmem:[#allocation2] sm:$0xff]
    %v611 = vld [vmem:[#allocation2 + $0x8] sm:$0xff]
    %612 = vrot.lane.b32.xlu0 %v330, 112
    %v613 = vpop.permute.xlu0 %612
    %v614 = vsel %vm338, %v613, 0
    %v617 = vsel %vm338, %v610, 0
    %v620 = vsel %vm338, %v611, 0
    %622 = vmatprep.subr.mxu0 0.0
    %623 = vmatpush1.xpose.msra.mxu0 %v617
    %624 = vmatprep.subr.mxu0 0.0
    %625 = vmatpush1.xpose.msra.mxu0 %v620
    %626 = vmatprep.subr.mxu0 0.0
    %627 = vmatpush1.xpose.msra.mxu0 0.0
    %628 = vmatprep.subr.mxu0 0.0
    %629 = vmatpush1.xpose.msra.mxu0 0.0
    %630 = vmatprep.subr.mxu0 0.0
    %631 = vmatpush1.xpose.msra.mxu0 0.0
    %632 = vmatprep.subr.mxu0 0.0
    %633 = vmatpush1.xpose.msra.mxu0 0.0
    %634 = vmatprep.subr.mxu0 0.0
    %635 = vmatpush1.xpose.msra.mxu0 0.0
    %636 = vmatprep.subr.mxu0 0.0
    %637 = vmatpush1.xpose.msra.mxu0 0.0
    %638 = vmatprep.subr.mxu0 0.0
    %639 = vmatpush1.xpose.msra.mxu0 0.0
    %640 = vmatprep.subr.mxu0 0.0
    %641 = vmatpush1.xpose.msra.mxu0 0.0
    %642 = vmatprep.subr.mxu0 0.0
    %643 = vmatpush1.xpose.msra.mxu0 0.0
    %644 = vmatprep.subr.mxu0 0.0
    %645 = vmatpush1.xpose.msra.mxu0 0.0
    %646 = vmatprep.subr.mxu0 0.0
    %647 = vmatpush1.xpose.msra.mxu0 0.0
    %648 = vmatprep.subr.mxu0 0.0
    %649 = vmatpush1.xpose.msra.mxu0 0.0
    %650 = vmatprep.subr.mxu0 0.0
    %651 = vmatpush1.xpose.msra.mxu0 0.0
    %652 = vmatprep.subr.mxu0 0.0
    %653 = vmatpush1.xpose.msra.mxu0 0.0
    %654 = vmatprep.subr.mxu0 0.0
    %655 = vmatpush1.xpose.msra.mxu0 0.0
    %656 = vmatprep.subr.mxu0 0.0
    %657 = vmatpush1.xpose.msra.mxu0 0.0
    %658 = vmatprep.subr.mxu0 0.0
    %659 = vmatpush1.xpose.msra.mxu0 0.0
    %660 = vmatprep.subr.mxu0 0.0
    %661 = vmatpush1.xpose.msra.mxu0 0.0
    %662 = vmatprep.subr.mxu0 0.0
    %663 = vmatpush1.xpose.msra.mxu0 0.0
    %664 = vmatprep.subr.mxu0 0.0
    %665 = vmatpush1.xpose.msra.mxu0 0.0
    %666 = vmatprep.subr.mxu0 0.0
    %667 = vmatpush1.xpose.msra.mxu0 0.0
    %668 = vmatprep.subr.mxu0 0.0
    %669 = vmatpush1.xpose.msra.mxu0 0.0
    %670 = vmatprep.subr.mxu0 0.0
    %671 = vmatpush1.xpose.msra.mxu0 0.0
    %672 = vmatprep.subr.mxu0 0.0
    %673 = vmatpush1.xpose.msra.mxu0 0.0
    %674 = vmatprep.subr.mxu0 0.0
    %675 = vmatpush1.xpose.msra.mxu0 0.0
    %676 = vmatprep.subr.mxu0 0.0
    %677 = vmatpush1.xpose.msra.mxu0 0.0
    %678 = vmatprep.subr.mxu0 0.0
    %679 = vmatpush1.xpose.msra.mxu0 0.0
    %680 = vmatprep.subr.mxu0 0.0
    %681 = vmatpush1.xpose.msra.mxu0 0.0
    %682 = vmatprep.subr.mxu0 0.0
    %683 = vmatpush1.xpose.msra.mxu0 0.0
    %684 = vmatprep.subr.mxu0 0.0
    %685 = vmatpush1.xpose.msra.mxu0 0.0
    %686 = vmatprep.mubr.f32.mxu0 0.0
    %687 = vmatmul.mubr.f32.gmra.mrb[0].mxu0 %v614
    %v688 = vpop.f32.mrb[0].mxu0
    %v689 = vadd.f32 0.0, %v688
    %v690 = vpop.f32.mrb[0].mxu0
    %691 = vdwg.mxu0
    %v692 = vmul.f32 %v689, 0.35355338
    %v693 = vsel %vm155, %v692, -1e+20
    %v694 = vsel %vm338, %v693, -inf
    %695 = vmax.xlane.f32.xlu0 %v694
    %v696 = vpop.xlane.xlu0 %695
    %v697 = vsub.f32 %v693, %v696
    %v698 = vmul.f32 %v697, 1.442695
    %v699 = vpow.pop %v698
    %v700 = vsel %vm338, %v699, 0.0
    %701 = vadd.xlane.f32.xlu0 %v700
    %v702 = vpop.xlane.xlu0 %701
    %v703 = vrcp.pop %v702
    %v704 = vmul.f32 %v699, %v703
    %705 = vmatprep.subr.mxu0 0.0
    %706 = vmatpush1.msra.mxu0 %v370
    %707 = vmatprep.subr.mxu0 0.0
    %708 = vmatpush1.msra.mxu0 %v371
    %709 = vmatprep.subr.mxu0 0.0
    %710 = vmatpush1.msra.mxu0 0.0
    %711 = vmatprep.subr.mxu0 0.0
    %712 = vmatpush1.msra.mxu0 0.0
    %713 = vmatprep.subr.mxu0 0.0
    %714 = vmatpush1.msra.mxu0 0.0
    %715 = vmatprep.subr.mxu0 0.0
    %716 = vmatpush1.msra.mxu0 0.0
    %717 = vmatprep.subr.mxu0 0.0
    %718 = vmatpush1.msra.mxu0 0.0
    %719 = vmatprep.subr.mxu0 0.0
    %720 = vmatpush1.msra.mxu0 0.0
    %721 = vmatprep.subr.mxu0 0.0
    %722 = vmatpush1.msra.mxu0 0.0
    %723 = vmatprep.subr.mxu0 0.0
    %724 = vmatpush1.msra.mxu0 0.0
    %725 = vmatprep.subr.mxu0 0.0
    %726 = vmatpush1.msra.mxu0 0.0
    %727 = vmatprep.subr.mxu0 0.0
    %728 = vmatpush1.msra.mxu0 0.0
    %729 = vmatprep.subr.mxu0 0.0
    %730 = vmatpush1.msra.mxu0 0.0
    %731 = vmatprep.subr.mxu0 0.0
    %732 = vmatpush1.msra.mxu0 0.0
    %733 = vmatprep.subr.mxu0 0.0
    %734 = vmatpush1.msra.mxu0 0.0
    %735 = vmatprep.subr.mxu0 0.0
    %736 = vmatpush1.msra.mxu0 0.0
    %737 = vmatprep.subr.mxu0 0.0
    %738 = vmatpush1.msra.mxu0 0.0
    %739 = vmatprep.subr.mxu0 0.0
    %740 = vmatpush1.msra.mxu0 0.0
    %741 = vmatprep.subr.mxu0 0.0
    %742 = vmatpush1.msra.mxu0 0.0
    %743 = vmatprep.subr.mxu0 0.0
    %744 = vmatpush1.msra.mxu0 0.0
    %745 = vmatprep.subr.mxu0 0.0
    %746 = vmatpush1.msra.mxu0 0.0
    %747 = vmatprep.subr.mxu0 0.0
    %748 = vmatpush1.msra.mxu0 0.0
    %749 = vmatprep.subr.mxu0 0.0
    %750 = vmatpush1.msra.mxu0 0.0
    %751 = vmatprep.subr.mxu0 0.0
    %752 = vmatpush1.msra.mxu0 0.0
    %753 = vmatprep.subr.mxu0 0.0
    %754 = vmatpush1.msra.mxu0 0.0
    %755 = vmatprep.subr.mxu0 0.0
    %756 = vmatpush1.msra.mxu0 0.0
    %757 = vmatprep.subr.mxu0 0.0
    %758 = vmatpush1.msra.mxu0 0.0
    %759 = vmatprep.subr.mxu0 0.0
    %760 = vmatpush1.msra.mxu0 0.0
    %761 = vmatprep.subr.mxu0 0.0
    %762 = vmatpush1.msra.mxu0 0.0
    %763 = vmatprep.subr.mxu0 0.0
    %764 = vmatpush1.msra.mxu0 0.0
    %765 = vmatprep.subr.mxu0 0.0
    %766 = vmatpush1.msra.mxu0 0.0
    %767 = vmatprep.subr.mxu0 0.0
    %768 = vmatpush1.msra.mxu0 0.0
    %769 = vmatprep.mubr.f32.mxu0 0.0
    %770 = vmatmul.mubr.f32.gmra.mrb[0].mxu0 %v617
    %v771 = vpop.f32.mrb[0].mxu0
    %v772 = vadd.f32 0.0, %v771
    %v773 = vpop.f32.mrb[0].mxu0
    %774 = vmatprep.mubr.f32.mxu0 0.0
    %775 = vmatmul.mubr.f32.gmra.mrb[0].mxu0 %v620
    %v776 = vpop.f32.mrb[0].mxu0
    %v777 = vadd.f32 0.0, %v776
    %v778 = vpop.f32.mrb[0].mxu0
    %779 = vdwg.mxu0
    %v781 = vsel %vm338, %v704, 0
    %783 = vmatprep.subr.mxu0 0.0
    %784 = vmatpush1.msra.mxu0 %v772
    %785 = vmatprep.subr.mxu0 0.0
    %786 = vmatpush1.msra.mxu0 %v777
    %787 = vmatprep.subr.mxu0 0.0
    %788 = vmatpush1.msra.mxu0 0.0
    %789 = vmatprep.subr.mxu0 0.0
    %790 = vmatpush1.msra.mxu0 0.0
    %791 = vmatprep.subr.mxu0 0.0
    %792 = vmatpush1.msra.mxu0 0.0
    %793 = vmatprep.subr.mxu0 0.0
    %794 = vmatpush1.msra.mxu0 0.0
    %795 = vmatprep.subr.mxu0 0.0
    %796 = vmatpush1.msra.mxu0 0.0
    %797 = vmatprep.subr.mxu0 0.0
    %798 = vmatpush1.msra.mxu0 0.0
    %799 = vmatprep.subr.mxu0 0.0
    %800 = vmatpush1.msra.mxu0 0.0
    %801 = vmatprep.subr.mxu0 0.0
    %802 = vmatpush1.msra.mxu0 0.0
    %803 = vmatprep.subr.mxu0 0.0
    %804 = vmatpush1.msra.mxu0 0.0
    %805 = vmatprep.subr.mxu0 0.0
    %806 = vmatpush1.msra.mxu0 0.0
    %807 = vmatprep.subr.mxu0 0.0
    %808 = vmatpush1.msra.mxu0 0.0
    %809 = vmatprep.subr.mxu0 0.0
    %810 = vmatpush1.msra.mxu0 0.0
    %811 = vmatprep.subr.mxu0 0.0
    %812 = vmatpush1.msra.mxu0 0.0
    %813 = vmatprep.subr.mxu0 0.0
    %814 = vmatpush1.msra.mxu0 0.0
    %815 = vmatprep.subr.mxu0 0.0
    %816 = vmatpush1.msra.mxu0 0.0
    %817 = vmatprep.subr.mxu0 0.0
    %818 = vmatpush1.msra.mxu0 0.0
    %819 = vmatprep.subr.mxu0 0.0
    %820 = vmatpush1.msra.mxu0 0.0
    %821 = vmatprep.subr.mxu0 0.0
    %822 = vmatpush1.msra.mxu0 0.0
    %823 = vmatprep.subr.mxu0 0.0
    %824 = vmatpush1.msra.mxu0 0.0
    %825 = vmatprep.subr.mxu0 0.0
    %826 = vmatpush1.msra.mxu0 0.0
    %827 = vmatprep.subr.mxu0 0.0
    %828 = vmatpush1.msra.mxu0 0.0
    %829 = vmatprep.subr.mxu0 0.0
    %830 = vmatpush1.msra.mxu0 0.0
    %831 = vmatprep.subr.mxu0 0.0
    %832 = vmatpush1.msra.mxu0 0.0
    %833 = vmatprep.subr.mxu0 0.0
    %834 = vmatpush1.msra.mxu0 0.0
    %835 = vmatprep.subr.mxu0 0.0
    %836 = vmatpush1.msra.mxu0 0.0
    %837 = vmatprep.subr.mxu0 0.0
    %838 = vmatpush1.msra.mxu0 0.0
    %839 = vmatprep.subr.mxu0 0.0
    %840 = vmatpush1.msra.mxu0 0.0
    %841 = vmatprep.subr.mxu0 0.0
    %842 = vmatpush1.msra.mxu0 0.0
    %843 = vmatprep.subr.mxu0 0.0
    %844 = vmatpush1.msra.mxu0 0.0
    %845 = vmatprep.subr.mxu0 0.0
    %846 = vmatpush1.msra.mxu0 0.0
    %847 = vmatprep.mubr.f32.mxu0 0.0
    %848 = vmatmul.mubr.f32.gmra.mrb[0].mxu0 %v781
    %v849 = vpop.f32.mrb[0].mxu0
    %v850 = vadd.f32 0.0, %v849
    %v851 = vpop.f32.mrb[0].mxu0
    %852 = vdwg.mxu0
    %v853 = vld [vmem:[#allocation2] sm:$0xff]
    %v854 = vld [vmem:[#allocation2 + $0x8] sm:$0xff]
    %v855 = vld [vmem:[#allocation2 + $0x10] sm:$0xff]
    %856 = vrot.lane.b32.xlu0 %v330, 96
    %v857 = vpop.permute.xlu0 %856
    %v858 = vsel %vm338, %v857, 0
    %v861 = vsel %vm338, %v853, 0
    %v864 = vsel %vm338, %v854, 0
    %v867 = vsel %vm338, %v855, 0
    %869 = vmatprep.subr.mxu0 0.0
    %870 = vmatpush1.xpose.msra.mxu0 %v861
    %871 = vmatprep.subr.mxu0 0.0
    %872 = vmatpush1.xpose.msra.mxu0 %v864
    %873 = vmatprep.subr.mxu0 0.0
    %874 = vmatpush1.xpose.msra.mxu0 %v867
    %875 = vmatprep.subr.mxu0 0.0
    %876 = vmatpush1.xpose.msra.mxu0 0.0
    %877 = vmatprep.subr.mxu0 0.0
    %878 = vmatpush1.xpose.msra.mxu0 0.0
    %879 = vmatprep.subr.mxu0 0.0
    %880 = vmatpush1.xpose.msra.mxu0 0.0
    %881 = vmatprep.subr.mxu0 0.0
    %882 = vmatpush1.xpose.msra.mxu0 0.0
    %883 = vmatprep.subr.mxu0 0.0
    %884 = vmatpush1.xpose.msra.mxu0 0.0
    %885 = vmatprep.subr.mxu0 0.0
    %886 = vmatpush1.xpose.msra.mxu0 0.0
    %887 = vmatprep.subr.mxu0 0.0
    %888 = vmatpush1.xpose.msra.mxu0 0.0
    %889 = vmatprep.subr.mxu0 0.0
    %890 = vmatpush1.xpose.msra.mxu0 0.0
    %891 = vmatprep.subr.mxu0 0.0
    %892 = vmatpush1.xpose.msra.mxu0 0.0
    %893 = vmatprep.subr.mxu0 0.0
    %894 = vmatpush1.xpose.msra.mxu0 0.0
    %895 = vmatprep.subr.mxu0 0.0
    %896 = vmatpush1.xpose.msra.mxu0 0.0
    %897 = vmatprep.subr.mxu0 0.0
    %898 = vmatpush1.xpose.msra.mxu0 0.0
    %899 = vmatprep.subr.mxu0 0.0
    %900 = vmatpush1.xpose.msra.mxu0 0.0
    %901 = vmatprep.subr.mxu0 0.0
    %902 = vmatpush1.xpose.msra.mxu0 0.0
    %903 = vmatprep.subr.mxu0 0.0
    %904 = vmatpush1.xpose.msra.mxu0 0.0
    %905 = vmatprep.subr.mxu0 0.0
    %906 = vmatpush1.xpose.msra.mxu0 0.0
    %907 = vmatprep.subr.mxu0 0.0
    %908 = vmatpush1.xpose.msra.mxu0 0.0
    %909 = vmatprep.subr.mxu0 0.0
    %910 = vmatpush1.xpose.msra.mxu0 0.0
    %911 = vmatprep.subr.mxu0 0.0
    %912 = vmatpush1.xpose.msra.mxu0 0.0
    %913 = vmatprep.subr.mxu0 0.0
    %914 = vmatpush1.xpose.msra.mxu0 0.0
    %915 = vmatprep.subr.mxu0 0.0
    %916 = vmatpush1.xpose.msra.mxu0 0.0
    %917 = vmatprep.subr.mxu0 0.0
    %918 = vmatpush1.xpose.msra.mxu0 0.0
    %919 = vmatprep.subr.mxu0 0.0
    %920 = vmatpush1.xpose.msra.mxu0 0.0
    %921 = vmatprep.subr.mxu0 0.0
    %922 = vmatpush1.xpose.msra.mxu0 0.0
    %923 = vmatprep.subr.mxu0 0.0
    %924 = vmatpush1.xpose.msra.mxu0 0.0
    %925 = vmatprep.subr.mxu0 0.0
    %926 = vmatpush1.xpose.msra.mxu0 0.0
    %927 = vmatprep.subr.mxu0 0.0
    %928 = vmatpush1.xpose.msra.mxu0 0.0
    %929 = vmatprep.subr.mxu0 0.0
    %930 = vmatpush1.xpose.msra.mxu0 0.0
    %931 = vmatprep.subr.mxu0 0.0
    %932 = vmatpush1.xpose.msra.mxu0 0.0
    %933 = vmatprep.mubr.f32.mxu0 0.0
    %934 = vmatmul.mubr.f32.gmra.mrb[0].mxu0 %v858
    %v935 = vpop.f32.mrb[0].mxu0
    %v936 = vadd.f32 0.0, %v935
    %v937 = vpop.f32.mrb[0].mxu0
    %938 = vdwg.mxu0
    %v939 = vmul.f32 %v936, 0.35355338
    %v940 = vsel %vm155, %v939, -1e+20
    %vm941 = vcmask 195584
    %v942 = vsel %vm941, %v940, -inf
    %943 = vmax.xlane.f32.xlu0 %v942
    %v944 = vpop.xlane.xlu0 %943
    %v945 = vsub.f32 %v940, %v944
    %v946 = vmul.f32 %v945, 1.442695
    %v947 = vpow.pop %v946
    %v948 = vsel %vm941, %v947, 0.0
    %949 = vadd.xlane.f32.xlu0 %v948
    %v950 = vpop.xlane.xlu0 %949
    %v951 = vrcp.pop %v950
    %v952 = vmul.f32 %v947, %v951
    %953 = vmatprep.subr.mxu0 0.0
    %954 = vmatpush1.msra.mxu0 %v372
    %955 = vmatprep.subr.mxu0 0.0
    %956 = vmatpush1.msra.mxu0 %v373
    %957 = vmatprep.subr.mxu0 0.0
    %958 = vmatpush1.msra.mxu0 0.0
    %959 = vmatprep.subr.mxu0 0.0
    %960 = vmatpush1.msra.mxu0 0.0
    %961 = vmatprep.subr.mxu0 0.0
    %962 = vmatpush1.msra.mxu0 0.0
    %963 = vmatprep.subr.mxu0 0.0
    %964 = vmatpush1.msra.mxu0 0.0
    %965 = vmatprep.subr.mxu0 0.0
    %966 = vmatpush1.msra.mxu0 0.0
    %967 = vmatprep.subr.mxu0 0.0
    %968 = vmatpush1.msra.mxu0 0.0
    %969 = vmatprep.subr.mxu0 0.0
    %970 = vmatpush1.msra.mxu0 0.0
    %971 = vmatprep.subr.mxu0 0.0
    %972 = vmatpush1.msra.mxu0 0.0
    %973 = vmatprep.subr.mxu0 0.0
    %974 = vmatpush1.msra.mxu0 0.0
    %975 = vmatprep.subr.mxu0 0.0
    %976 = vmatpush1.msra.mxu0 0.0
    %977 = vmatprep.subr.mxu0 0.0
    %978 = vmatpush1.msra.mxu0 0.0
    %979 = vmatprep.subr.mxu0 0.0
    %980 = vmatpush1.msra.mxu0 0.0
    %981 = vmatprep.subr.mxu0 0.0
    %982 = vmatpush1.msra.mxu0 0.0
    %983 = vmatprep.subr.mxu0 0.0
    %984 = vmatpush1.msra.mxu0 0.0
    %985 = vmatprep.subr.mxu0 0.0
    %986 = vmatpush1.msra.mxu0 0.0
    %987 = vmatprep.subr.mxu0 0.0
    %988 = vmatpush1.msra.mxu0 0.0
    %989 = vmatprep.subr.mxu0 0.0
    %990 = vmatpush1.msra.mxu0 0.0
    %991 = vmatprep.subr.mxu0 0.0
    %992 = vmatpush1.msra.mxu0 0.0
    %993 = vmatprep.subr.mxu0 0.0
    %994 = vmatpush1.msra.mxu0 0.0
    %995 = vmatprep.subr.mxu0 0.0
    %996 = vmatpush1.msra.mxu0 0.0
    %997 = vmatprep.subr.mxu0 0.0
    %998 = vmatpush1.msra.mxu0 0.0
    %999 = vmatprep.subr.mxu0 0.0
    %1000 = vmatpush1.msra.mxu0 0.0
    %1001 = vmatprep.subr.mxu0 0.0
    %1002 = vmatpush1.msra.mxu0 0.0
    %1003 = vmatprep.subr.mxu0 0.0
    %1004 = vmatpush1.msra.mxu0 0.0
    %1005 = vmatprep.subr.mxu0 0.0
    %1006 = vmatpush1.msra.mxu0 0.0
    %1007 = vmatprep.subr.mxu0 0.0
    %1008 = vmatpush1.msra.mxu0 0.0
    %1009 = vmatprep.subr.mxu0 0.0
    %1010 = vmatpush1.msra.mxu0 0.0
    %1011 = vmatprep.subr.mxu0 0.0
    %1012 = vmatpush1.msra.mxu0 0.0
    %1013 = vmatprep.subr.mxu0 0.0
    %1014 = vmatpush1.msra.mxu0 0.0
    %1015 = vmatprep.subr.mxu0 0.0
    %1016 = vmatpush1.msra.mxu0 0.0
    %1017 = vmatprep.mubr.f32.mxu0 0.0
    %1018 = vmatmul.mubr.f32.gmra.mrb[0].mxu0 %v861
    %v1019 = vpop.f32.mrb[0].mxu0
    %v1020 = vadd.f32 0.0, %v1019
    %v1021 = vpop.f32.mrb[0].mxu0
    %1022 = vmatprep.mubr.f32.mxu0 0.0
    %1023 = vmatmul.mubr.f32.gmra.mrb[0].mxu0 %v864
    %v1024 = vpop.f32.mrb[0].mxu0
    %v1025 = vadd.f32 0.0, %v1024
    %v1026 = vpop.f32.mrb[0].mxu0
    %1027 = vmatprep.mubr.f32.mxu0 0.0
    %1028 = vmatmul.mubr.f32.gmra.mrb[0].mxu0 %v867
    %v1029 = vpop.f32.mrb[0].mxu0
    %v1030 = vadd.f32 0.0, %v1029
    %v1031 = vpop.f32.mrb[0].mxu0
    %1032 = vdwg.mxu0
    %v1034 = vsel %vm941, %v952, 0
    %1036 = vmatprep.subr.mxu0 0.0
    %1037 = vmatpush1.msra.mxu0 %v1020
    %1038 = vmatprep.subr.mxu0 0.0
    %1039 = vmatpush1.msra.mxu0 %v1025
    %1040 = vmatprep.subr.mxu0 0.0
    %1041 = vmatpush1.msra.mxu0 %v1030
    %1042 = vmatprep.subr.mxu0 0.0
    %1043 = vmatpush1.msra.mxu0 0.0
    %1044 = vmatprep.subr.mxu0 0.0
    %1045 = vmatpush1.msra.mxu0 0.0
    %1046 = vmatprep.subr.mxu0 0.0
    %1047 = vmatpush1.msra.mxu0 0.0
    %1048 = vmatprep.subr.mxu0 0.0
    %1049 = vmatpush1.msra.mxu0 0.0
    %1050 = vmatprep.subr.mxu0 0.0
    %1051 = vmatpush1.msra.mxu0 0.0
    %1052 = vmatprep.subr.mxu0 0.0
    %1053 = vmatpush1.msra.mxu0 0.0
    %1054 = vmatprep.subr.mxu0 0.0
    %1055 = vmatpush1.msra.mxu0 0.0
    %1056 = vmatprep.subr.mxu0 0.0
    %1057 = vmatpush1.msra.mxu0 0.0
    %1058 = vmatprep.subr.mxu0 0.0
    %1059 = vmatpush1.msra.mxu0 0.0
    %1060 = vmatprep.subr.mxu0 0.0
    %1061 = vmatpush1.msra.mxu0 0.0
    %1062 = vmatprep.subr.mxu0 0.0
    %1063 = vmatpush1.msra.mxu0 0.0
    %1064 = vmatprep.subr.mxu0 0.0
    %1065 = vmatpush1.msra.mxu0 0.0
    %1066 = vmatprep.subr.mxu0 0.0
    %1067 = vmatpush1.msra.mxu0 0.0
    %1068 = vmatprep.subr.mxu0 0.0
    %1069 = vmatpush1.msra.mxu0 0.0
    %1070 = vmatprep.subr.mxu0 0.0
    %1071 = vmatpush1.msra.mxu0 0.0
    %1072 = vmatprep.subr.mxu0 0.0
    %1073 = vmatpush1.msra.mxu0 0.0
    %1074 = vmatprep.subr.mxu0 0.0
    %1075 = vmatpush1.msra.mxu0 0.0
    %1076 = vmatprep.subr.mxu0 0.0
    %1077 = vmatpush1.msra.mxu0 0.0
    %1078 = vmatprep.subr.mxu0 0.0
    %1079 = vmatpush1.msra.mxu0 0.0
    %1080 = vmatprep.subr.mxu0 0.0
    %1081 = vmatpush1.msra.mxu0 0.0
    %1082 = vmatprep.subr.mxu0 0.0
    %1083 = vmatpush1.msra.mxu0 0.0
    %1084 = vmatprep.subr.mxu0 0.0
    %1085 = vmatpush1.msra.mxu0 0.0
    %1086 = vmatprep.subr.mxu0 0.0
    %1087 = vmatpush1.msra.mxu0 0.0
    %1088 = vmatprep.subr.mxu0 0.0
    %1089 = vmatpush1.msra.mxu0 0.0
    %1090 = vmatprep.subr.mxu0 0.0
    %1091 = vmatpush1.msra.mxu0 0.0
    %1092 = vmatprep.subr.mxu0 0.0
    %1093 = vmatpush1.msra.mxu0 0.0
    %1094 = vmatprep.subr.mxu0 0.0
    %1095 = vmatpush1.msra.mxu0 0.0
    %1096 = vmatprep.subr.mxu0 0.0
    %1097 = vmatpush1.msra.mxu0 0.0
    %1098 = vmatprep.subr.mxu0 0.0
    %1099 = vmatpush1.msra.mxu0 0.0
    %1100 = vmatprep.mubr.f32.mxu0 0.0
    %1101 = vmatmul.mubr.f32.gmra.mrb[0].mxu0 %v1034
    %v1102 = vpop.f32.mrb[0].mxu0
    %v1103 = vadd.f32 0.0, %v1102
    %v1104 = vpop.f32.mrb[0].mxu0
    %1105 = vdwg.mxu0
    %v1106 = vld [vmem:[#allocation2] sm:$0xff]
    %v1107 = vld [vmem:[#allocation2 + $0x8] sm:$0xff]
    %v1108 = vld [vmem:[#allocation2 + $0x10] sm:$0xff]
    %v1109 = vld [vmem:[#allocation2 + $0x18] sm:$0xff]
    %1110 = vrot.lane.b32.xlu0 %v330, 80
    %v1111 = vpop.permute.xlu0 %1110
    %v1112 = vsel %vm338, %v1111, 0
    %v1115 = vsel %vm338, %v1106, 0
    %v1118 = vsel %vm338, %v1107, 0
    %v1121 = vsel %vm338, %v1108, 0
    %v1124 = vsel %vm338, %v1109, 0
    %1126 = vmatprep.subr.mxu0 0.0
    %1127 = vmatpush1.xpose.msra.mxu0 %v1115
    %1128 = vmatprep.subr.mxu0 0.0
    %1129 = vmatpush1.xpose.msra.mxu0 %v1118
    %1130 = vmatprep.subr.mxu0 0.0
    %1131 = vmatpush1.xpose.msra.mxu0 %v1121
    %1132 = vmatprep.subr.mxu0 0.0
    %1133 = vmatpush1.xpose.msra.mxu0 %v1124
    %1134 = vmatprep.subr.mxu0 0.0
    %1135 = vmatpush1.xpose.msra.mxu0 0.0
    %1136 = vmatprep.subr.mxu0 0.0
    %1137 = vmatpush1.xpose.msra.mxu0 0.0
    %1138 = vmatprep.subr.mxu0 0.0
    %1139 = vmatpush1.xpose.msra.mxu0 0.0
    %1140 = vmatprep.subr.mxu0 0.0
    %1141 = vmatpush1.xpose.msra.mxu0 0.0
    %1142 = vmatprep.subr.mxu0 0.0
    %1143 = vmatpush1.xpose.msra.mxu0 0.0
    %1144 = vmatprep.subr.mxu0 0.0
    %1145 = vmatpush1.xpose.msra.mxu0 0.0
    %1146 = vmatprep.subr.mxu0 0.0
    %1147 = vmatpush1.xpose.msra.mxu0 0.0
    %1148 = vmatprep.subr.mxu0 0.0
    %1149 = vmatpush1.xpose.msra.mxu0 0.0
    %1150 = vmatprep.subr.mxu0 0.0
    %1151 = vmatpush1.xpose.msra.mxu0 0.0
    %1152 = vmatprep.subr.mxu0 0.0
    %1153 = vmatpush1.xpose.msra.mxu0 0.0
    %1154 = vmatprep.subr.mxu0 0.0
    %1155 = vmatpush1.xpose.msra.mxu0 0.0
    %1156 = vmatprep.subr.mxu0 0.0
    %1157 = vmatpush1.xpose.msra.mxu0 0.0
    %1158 = vmatprep.subr.mxu0 0.0
    %1159 = vmatpush1.xpose.msra.mxu0 0.0
    %1160 = vmatprep.subr.mxu0 0.0
    %1161 = vmatpush1.xpose.msra.mxu0 0.0
    %1162 = vmatprep.subr.mxu0 0.0
    %1163 = vmatpush1.xpose.msra.mxu0 0.0
    %1164 = vmatprep.subr.mxu0 0.0
    %1165 = vmatpush1.xpose.msra.mxu0 0.0
    %1166 = vmatprep.subr.mxu0 0.0
    %1167 = vmatpush1.xpose.msra.mxu0 0.0
    %1168 = vmatprep.subr.mxu0 0.0
    %1169 = vmatpush1.xpose.msra.mxu0 0.0
    %1170 = vmatprep.subr.mxu0 0.0
    %1171 = vmatpush1.xpose.msra.mxu0 0.0
    %1172 = vmatprep.subr.mxu0 0.0
    %1173 = vmatpush1.xpose.msra.mxu0 0.0
    %1174 = vmatprep.subr.mxu0 0.0
    %1175 = vmatpush1.xpose.msra.mxu0 0.0
    %1176 = vmatprep.subr.mxu0 0.0
    %1177 = vmatpush1.xpose.msra.mxu0 0.0
    %1178 = vmatprep.subr.mxu0 0.0
    %1179 = vmatpush1.xpose.msra.mxu0 0.0
    %1180 = vmatprep.subr.mxu0 0.0
    %1181 = vmatpush1.xpose.msra.mxu0 0.0
    %1182 = vmatprep.subr.mxu0 0.0
    %1183 = vmatpush1.xpose.msra.mxu0 0.0
    %1184 = vmatprep.subr.mxu0 0.0
    %1185 = vmatpush1.xpose.msra.mxu0 0.0
    %1186 = vmatprep.subr.mxu0 0.0
    %1187 = vmatpush1.xpose.msra.mxu0 0.0
    %1188 = vmatprep.subr.mxu0 0.0
    %1189 = vmatpush1.xpose.msra.mxu0 0.0
    %1190 = vmatprep.mubr.f32.mxu0 0.0
    %1191 = vmatmul.mubr.f32.gmra.mrb[0].mxu0 %v1112
    %v1192 = vpop.f32.mrb[0].mxu0
    %v1193 = vadd.f32 0.0, %v1192
    %v1194 = vpop.f32.mrb[0].mxu0
    %1195 = vdwg.mxu0
    %v1196 = vmul.f32 %v1193, 0.35355338
    %v1197 = vsel %vm155, %v1196, -1e+20
    %v1198 = vsel %vm158, %v1197, -inf
    %1199 = vmax.xlane.f32.xlu0 %v1198
    %v1200 = vpop.xlane.xlu0 %1199
    %v1201 = vsub.f32 %v1197, %v1200
    %v1202 = vmul.f32 %v1201, 1.442695
    %v1203 = vpow.pop %v1202
    %v1204 = vsel %vm158, %v1203, 0.0
    %1205 = vadd.xlane.f32.xlu0 %v1204
    %v1206 = vpop.xlane.xlu0 %1205
    %v1207 = vrcp.pop %v1206
    %v1208 = vmul.f32 %v1203, %v1207
    %1209 = vmatprep.subr.mxu0 0.0
    %1210 = vmatpush1.msra.mxu0 %v374
    %1211 = vmatprep.subr.mxu0 0.0
    %1212 = vmatpush1.msra.mxu0 %v375
    %1213 = vmatprep.subr.mxu0 0.0
    %1214 = vmatpush1.msra.mxu0 0.0
    %1215 = vmatprep.subr.mxu0 0.0
    %1216 = vmatpush1.msra.mxu0 0.0
    %1217 = vmatprep.subr.mxu0 0.0
    %1218 = vmatpush1.msra.mxu0 0.0
    %1219 = vmatprep.subr.mxu0 0.0
    %1220 = vmatpush1.msra.mxu0 0.0
    %1221 = vmatprep.subr.mxu0 0.0
    %1222 = vmatpush1.msra.mxu0 0.0
    %1223 = vmatprep.subr.mxu0 0.0
    %1224 = vmatpush1.msra.mxu0 0.0
    %1225 = vmatprep.subr.mxu0 0.0
    %1226 = vmatpush1.msra.mxu0 0.0
    %1227 = vmatprep.subr.mxu0 0.0
    %1228 = vmatpush1.msra.mxu0 0.0
    %1229 = vmatprep.subr.mxu0 0.0
    %1230 = vmatpush1.msra.mxu0 0.0
    %1231 = vmatprep.subr.mxu0 0.0
    %1232 = vmatpush1.msra.mxu0 0.0
    %1233 = vmatprep.subr.mxu0 0.0
    %1234 = vmatpush1.msra.mxu0 0.0
    %1235 = vmatprep.subr.mxu0 0.0
    %1236 = vmatpush1.msra.mxu0 0.0
    %1237 = vmatprep.subr.mxu0 0.0
    %1238 = vmatpush1.msra.mxu0 0.0
    %1239 = vmatprep.subr.mxu0 0.0
    %1240 = vmatpush1.msra.mxu0 0.0
    %1241 = vmatprep.subr.mxu0 0.0
    %1242 = vmatpush1.msra.mxu0 0.0
    %1243 = vmatprep.subr.mxu0 0.0
    %1244 = vmatpush1.msra.mxu0 0.0
    %1245 = vmatprep.subr.mxu0 0.0
    %1246 = vmatpush1.msra.mxu0 0.0
    %1247 = vmatprep.subr.mxu0 0.0
    %1248 = vmatpush1.msra.mxu0 0.0
    %1249 = vmatprep.subr.mxu0 0.0
    %1250 = vmatpush1.msra.mxu0 0.0
    %1251 = vmatprep.subr.mxu0 0.0
    %1252 = vmatpush1.msra.mxu0 0.0
    %1253 = vmatprep.subr.mxu0 0.0
    %1254 = vmatpush1.msra.mxu0 0.0
    %1255 = vmatprep.subr.mxu0 0.0
    %1256 = vmatpush1.msra.mxu0 0.0
    %1257 = vmatprep.subr.mxu0 0.0
    %1258 = vmatpush1.msra.mxu0 0.0
    %1259 = vmatprep.subr.mxu0 0.0
    %1260 = vmatpush1.msra.mxu0 0.0
    %1261 = vmatprep.subr.mxu0 0.0
    %1262 = vmatpush1.msra.mxu0 0.0
    %1263 = vmatprep.subr.mxu0 0.0
    %1264 = vmatpush1.msra.mxu0 0.0
    %1265 = vmatprep.subr.mxu0 0.0
    %1266 = vmatpush1.msra.mxu0 0.0
    %1267 = vmatprep.subr.mxu0 0.0
    %1268 = vmatpush1.msra.mxu0 0.0
    %1269 = vmatprep.subr.mxu0 0.0
    %1270 = vmatpush1.msra.mxu0 0.0
    %1271 = vmatprep.subr.mxu0 0.0
    %1272 = vmatpush1.msra.mxu0 0.0
    %1273 = vmatprep.mubr.f32.mxu0 0.0
    %1274 = vmatmul.mubr.f32.gmra.mrb[0].mxu0 %v1115
    %v1275 = vpop.f32.mrb[0].mxu0
    %v1276 = vadd.f32 0.0, %v1275
    %v1277 = vpop.f32.mrb[0].mxu0
    %1278 = vmatprep.mubr.f32.mxu0 0.0
    %1279 = vmatmul.mubr.f32.gmra.mrb[0].mxu0 %v1118
    %v1280 = vpop.f32.mrb[0].mxu0
    %v1281 = vadd.f32 0.0, %v1280
    %v1282 = vpop.f32.mrb[0].mxu0
    %1283 = vmatprep.mubr.f32.mxu0 0.0
    %1284 = vmatmul.mubr.f32.gmra.mrb[0].mxu0 %v1121
    %v1285 = vpop.f32.mrb[0].mxu0
    %v1286 = vadd.f32 0.0, %v1285
    %v1287 = vpop.f32.mrb[0].mxu0
    %1288 = vmatprep.mubr.f32.mxu0 0.0
    %1289 = vmatmul.mubr.f32.gmra.mrb[0].mxu0 %v1124
    %v1290 = vpop.f32.mrb[0].mxu0
    %v1291 = vadd.f32 0.0, %v1290
    %v1292 = vpop.f32.mrb[0].mxu0
    %1293 = vdwg.mxu0
    %v1295 = vsel %vm158, %v1208, 0
    %1297 = vmatprep.subr.mxu0 0.0
    %1298 = vmatpush1.msra.mxu0 %v1276
    %1299 = vmatprep.subr.mxu0 0.0
    %1300 = vmatpush1.msra.mxu0 %v1281
    %1301 = vmatprep.subr.mxu0 0.0
    %1302 = vmatpush1.msra.mxu0 %v1286
    %1303 = vmatprep.subr.mxu0 0.0
    %1304 = vmatpush1.msra.mxu0 %v1291
    %1305 = vmatprep.subr.mxu0 0.0
    %1306 = vmatpush1.msra.mxu0 0.0
    %1307 = vmatprep.subr.mxu0 0.0
    %1308 = vmatpush1.msra.mxu0 0.0
    %1309 = vmatprep.subr.mxu0 0.0
    %1310 = vmatpush1.msra.mxu0 0.0
    %1311 = vmatprep.subr.mxu0 0.0
    %1312 = vmatpush1.msra.mxu0 0.0
    %1313 = vmatprep.subr.mxu0 0.0
    %1314 = vmatpush1.msra.mxu0 0.0
    %1315 = vmatprep.subr.mxu0 0.0
    %1316 = vmatpush1.msra.mxu0 0.0
    %1317 = vmatprep.subr.mxu0 0.0
    %1318 = vmatpush1.msra.mxu0 0.0
    %1319 = vmatprep.subr.mxu0 0.0
    %1320 = vmatpush1.msra.mxu0 0.0
    %1321 = vmatprep.subr.mxu0 0.0
    %1322 = vmatpush1.msra.mxu0 0.0
    %1323 = vmatprep.subr.mxu0 0.0
    %1324 = vmatpush1.msra.mxu0 0.0
    %1325 = vmatprep.subr.mxu0 0.0
    %1326 = vmatpush1.msra.mxu0 0.0
    %1327 = vmatprep.subr.mxu0 0.0
    %1328 = vmatpush1.msra.mxu0 0.0
    %1329 = vmatprep.subr.mxu0 0.0
    %1330 = vmatpush1.msra.mxu0 0.0
    %1331 = vmatprep.subr.mxu0 0.0
    %1332 = vmatpush1.msra.mxu0 0.0
    %1333 = vmatprep.subr.mxu0 0.0
    %1334 = vmatpush1.msra.mxu0 0.0
    %1335 = vmatprep.subr.mxu0 0.0
    %1336 = vmatpush1.msra.mxu0 0.0
    %1337 = vmatprep.subr.mxu0 0.0
    %1338 = vmatpush1.msra.mxu0 0.0
    %1339 = vmatprep.subr.mxu0 0.0
    %1340 = vmatpush1.msra.mxu0 0.0
    %1341 = vmatprep.subr.mxu0 0.0
    %1342 = vmatpush1.msra.mxu0 0.0
    %1343 = vmatprep.subr.mxu0 0.0
    %1344 = vmatpush1.msra.mxu0 0.0
    %1345 = vmatprep.subr.mxu0 0.0
    %1346 = vmatpush1.msra.mxu0 0.0
    %1347 = vmatprep.subr.mxu0 0.0
    %1348 = vmatpush1.msra.mxu0 0.0
    %1349 = vmatprep.subr.mxu0 0.0
    %1350 = vmatpush1.msra.mxu0 0.0
    %1351 = vmatprep.subr.mxu0 0.0
    %1352 = vmatpush1.msra.mxu0 0.0
    %1353 = vmatprep.subr.mxu0 0.0
    %1354 = vmatpush1.msra.mxu0 0.0
    %1355 = vmatprep.subr.mxu0 0.0
    %1356 = vmatpush1.msra.mxu0 0.0
    %1357 = vmatprep.subr.mxu0 0.0
    %1358 = vmatpush1.msra.mxu0 0.0
    %1359 = vmatprep.subr.mxu0 0.0
    %1360 = vmatpush1.msra.mxu0 0.0
    %1361 = vmatprep.mubr.f32.mxu0 0.0
    %1362 = vmatmul.mubr.f32.gmra.mrb[0].mxu0 %v1295
    %v1363 = vpop.f32.mrb[0].mxu0
    %v1364 = vadd.f32 0.0, %v1363
    %v1365 = vpop.f32.mrb[0].mxu0
    %1366 = vdwg.mxu0
    %1368 = vrot.lane.b32.xlu0 %v850, 8
    %v1369 = vpop.permute.xlu0 %1368
    %1372 = vrot.lane.b32.xlu0 %v1103, 16
    %v1373 = vpop.permute.xlu0 %1372
    %1376 = vrot.lane.b32.xlu0 %v1364, 24
    %v1377 = vpop.permute.xlu0 %1376
    %v1379 = vsel %vm455, %v607, %v1369
    %v1380 = vsel %vm338, %v1379, %v1373
    %v1381 = vsel %vm941, %v1380, %v1377
    %v1382 = vld [vmem:[%s353] sm:$0xff]
    %v1384 = vsel %vm338, %v335, 0
    %v1387 = vsel %vm338, %v1382, 0
    %1389 = vmatprep.subr.mxu0 0.0
    %1390 = vmatpush1.xpose.msra.mxu0 %v1387
    %1391 = vmatprep.subr.mxu0 0.0
    %1392 = vmatpush1.xpose.msra.mxu0 0.0
    %1393 = vmatprep.subr.mxu0 0.0
    %1394 = vmatpush1.xpose.msra.mxu0 0.0
    %1395 = vmatprep.subr.mxu0 0.0
    %1396 = vmatpush1.xpose.msra.mxu0 0.0
    %1397 = vmatprep.subr.mxu0 0.0
    %1398 = vmatpush1.xpose.msra.mxu0 0.0
    %1399 = vmatprep.subr.mxu0 0.0
    %1400 = vmatpush1.xpose.msra.mxu0 0.0
    %1401 = vmatprep.subr.mxu0 0.0
    %1402 = vmatpush1.xpose.msra.mxu0 0.0
    %1403 = vmatprep.subr.mxu0 0.0
    %1404 = vmatpush1.xpose.msra.mxu0 0.0
    %1405 = vmatprep.subr.mxu0 0.0
    %1406 = vmatpush1.xpose.msra.mxu0 0.0
    %1407 = vmatprep.subr.mxu0 0.0
    %1408 = vmatpush1.xpose.msra.mxu0 0.0
    %1409 = vmatprep.subr.mxu0 0.0
    %1410 = vmatpush1.xpose.msra.mxu0 0.0
    %1411 = vmatprep.subr.mxu0 0.0
    %1412 = vmatpush1.xpose.msra.mxu0 0.0
    %1413 = vmatprep.subr.mxu0 0.0
    %1414 = vmatpush1.xpose.msra.mxu0 0.0
    %1415 = vmatprep.subr.mxu0 0.0
    %1416 = vmatpush1.xpose.msra.mxu0 0.0
    %1417 = vmatprep.subr.mxu0 0.0
    %1418 = vmatpush1.xpose.msra.mxu0 0.0
    %1419 = vmatprep.subr.mxu0 0.0
    %1420 = vmatpush1.xpose.msra.mxu0 0.0
    %1421 = vmatprep.subr.mxu0 0.0
    %1422 = vmatpush1.xpose.msra.mxu0 0.0
    %1423 = vmatprep.subr.mxu0 0.0
    %1424 = vmatpush1.xpose.msra.mxu0 0.0
    %1425 = vmatprep.subr.mxu0 0.0
    %1426 = vmatpush1.xpose.msra.mxu0 0.0
    %1427 = vmatprep.subr.mxu0 0.0
    %1428 = vmatpush1.xpose.msra.mxu0 0.0
    %1429 = vmatprep.subr.mxu0 0.0
    %1430 = vmatpush1.xpose.msra.mxu0 0.0
    %1431 = vmatprep.subr.mxu0 0.0
    %1432 = vmatpush1.xpose.msra.mxu0 0.0
    %1433 = vmatprep.subr.mxu0 0.0
    %1434 = vmatpush1.xpose.msra.mxu0 0.0
    %1435 = vmatprep.subr.mxu0 0.0
    %1436 = vmatpush1.xpose.msra.mxu0 0.0
    %1437 = vmatprep.subr.mxu0 0.0
    %1438 = vmatpush1.xpose.msra.mxu0 0.0
    %1439 = vmatprep.subr.mxu0 0.0
    %1440 = vmatpush1.xpose.msra.mxu0 0.0
    %1441 = vmatprep.subr.mxu0 0.0
    %1442 = vmatpush1.xpose.msra.mxu0 0.0
    %1443 = vmatprep.subr.mxu0 0.0
    %1444 = vmatpush1.xpose.msra.mxu0 0.0
    %1445 = vmatprep.subr.mxu0 0.0
    %1446 = vmatpush1.xpose.msra.mxu0 0.0
    %1447 = vmatprep.subr.mxu0 0.0
    %1448 = vmatpush1.xpose.msra.mxu0 0.0
    %1449 = vmatprep.subr.mxu0 0.0
    %1450 = vmatpush1.xpose.msra.mxu0 0.0
    %1451 = vmatprep.subr.mxu0 0.0
    %1452 = vmatpush1.xpose.msra.mxu0 0.0
    %1453 = vmatprep.mubr.f32.mxu0 0.0
    %1454 = vmatmul.mubr.f32.gmra.mrb[0].mxu0 %v1384
    %v1455 = vpop.f32.mrb[0].mxu0
    %v1456 = vadd.f32 0.0, %v1455
    %v1457 = vpop.f32.mrb[0].mxu0
    %1458 = vdwg.mxu0
    %v1459 = vmul.f32 %v1456, 0.35355338
    %v1460 = vsel %vm155, %v1459, -1e+20
    %v1461 = vsel %vm455, %v1460, -inf
    %1462 = vmax.xlane.f32.xlu0 %v1461
    %v1463 = vpop.xlane.xlu0 %1462
    %v1464 = vsub.f32 %v1460, %v1463
    %v1465 = vmul.f32 %v1464, 1.442695
    %v1466 = vpow.pop %v1465
    %v1467 = vsel %vm455, %v1466, 0.0
    %1468 = vadd.xlane.f32.xlu0 %v1467
    %v1469 = vpop.xlane.xlu0 %1468
    %v1470 = vrcp.pop %v1469
    %v1471 = vmul.f32 %v1466, %v1470
    %1472 = vmatprep.subr.mxu0 0.0
    %1473 = vmatpush1.msra.mxu0 %v368
    %1474 = vmatprep.subr.mxu0 0.0
    %1475 = vmatpush1.msra.mxu0 %v369
    %1476 = vmatprep.subr.mxu0 0.0
    %1477 = vmatpush1.msra.mxu0 0.0
    %1478 = vmatprep.subr.mxu0 0.0
    %1479 = vmatpush1.msra.mxu0 0.0
    %1480 = vmatprep.subr.mxu0 0.0
    %1481 = vmatpush1.msra.mxu0 0.0
    %1482 = vmatprep.subr.mxu0 0.0
    %1483 = vmatpush1.msra.mxu0 0.0
    %1484 = vmatprep.subr.mxu0 0.0
    %1485 = vmatpush1.msra.mxu0 0.0
    %1486 = vmatprep.subr.mxu0 0.0
    %1487 = vmatpush1.msra.mxu0 0.0
    %1488 = vmatprep.subr.mxu0 0.0
    %1489 = vmatpush1.msra.mxu0 0.0
    %1490 = vmatprep.subr.mxu0 0.0
    %1491 = vmatpush1.msra.mxu0 0.0
    %1492 = vmatprep.subr.mxu0 0.0
    %1493 = vmatpush1.msra.mxu0 0.0
    %1494 = vmatprep.subr.mxu0 0.0
    %1495 = vmatpush1.msra.mxu0 0.0
    %1496 = vmatprep.subr.mxu0 0.0
    %1497 = vmatpush1.msra.mxu0 0.0
    %1498 = vmatprep.subr.mxu0 0.0
    %1499 = vmatpush1.msra.mxu0 0.0
    %1500 = vmatprep.subr.mxu0 0.0
    %1501 = vmatpush1.msra.mxu0 0.0
    %1502 = vmatprep.subr.mxu0 0.0
    %1503 = vmatpush1.msra.mxu0 0.0
    %1504 = vmatprep.subr.mxu0 0.0
    %1505 = vmatpush1.msra.mxu0 0.0
    %1506 = vmatprep.subr.mxu0 0.0
    %1507 = vmatpush1.msra.mxu0 0.0
    %1508 = vmatprep.subr.mxu0 0.0
    %1509 = vmatpush1.msra.mxu0 0.0
    %1510 = vmatprep.subr.mxu0 0.0
    %1511 = vmatpush1.msra.mxu0 0.0
    %1512 = vmatprep.subr.mxu0 0.0
    %1513 = vmatpush1.msra.mxu0 0.0
    %1514 = vmatprep.subr.mxu0 0.0
    %1515 = vmatpush1.msra.mxu0 0.0
    %1516 = vmatprep.subr.mxu0 0.0
    %1517 = vmatpush1.msra.mxu0 0.0
    %1518 = vmatprep.subr.mxu0 0.0
    %1519 = vmatpush1.msra.mxu0 0.0
    %1520 = vmatprep.subr.mxu0 0.0
    %1521 = vmatpush1.msra.mxu0 0.0
    %1522 = vmatprep.subr.mxu0 0.0
    %1523 = vmatpush1.msra.mxu0 0.0
    %1524 = vmatprep.subr.mxu0 0.0
    %1525 = vmatpush1.msra.mxu0 0.0
    %1526 = vmatprep.subr.mxu0 0.0
    %1527 = vmatpush1.msra.mxu0 0.0
    %1528 = vmatprep.subr.mxu0 0.0
    %1529 = vmatpush1.msra.mxu0 0.0
    %1530 = vmatprep.subr.mxu0 0.0
    %1531 = vmatpush1.msra.mxu0 0.0
    %1532 = vmatprep.subr.mxu0 0.0
    %1533 = vmatpush1.msra.mxu0 0.0
    %1534 = vmatprep.subr.mxu0 0.0
    %1535 = vmatpush1.msra.mxu0 0.0
    %1536 = vmatprep.mubr.f32.mxu0 0.0
    %1537 = vmatmul.mubr.f32.gmra.mrb[0].mxu0 %v1387
    %v1538 = vpop.f32.mrb[0].mxu0
    %v1539 = vadd.f32 0.0, %v1538
    %v1540 = vpop.f32.mrb[0].mxu0
    %1541 = vdwg.mxu0
    %v1543 = vsel %vm455, %v1471, 0
    %1545 = vmatprep.subr.mxu0 0.0
    %1546 = vmatpush1.msra.mxu0 %v1539
    %1547 = vmatprep.subr.mxu0 0.0
    %1548 = vmatpush1.msra.mxu0 0.0
    %1549 = vmatprep.subr.mxu0 0.0
    %1550 = vmatpush1.msra.mxu0 0.0
    %1551 = vmatprep.subr.mxu0 0.0
    %1552 = vmatpush1.msra.mxu0 0.0
    %1553 = vmatprep.subr.mxu0 0.0
    %1554 = vmatpush1.msra.mxu0 0.0
    %1555 = vmatprep.subr.mxu0 0.0
    %1556 = vmatpush1.msra.mxu0 0.0
    %1557 = vmatprep.subr.mxu0 0.0
    %1558 = vmatpush1.msra.mxu0 0.0
    %1559 = vmatprep.subr.mxu0 0.0
    %1560 = vmatpush1.msra.mxu0 0.0
    %1561 = vmatprep.subr.mxu0 0.0
    %1562 = vmatpush1.msra.mxu0 0.0
    %1563 = vmatprep.subr.mxu0 0.0
    %1564 = vmatpush1.msra.mxu0 0.0
    %1565 = vmatprep.subr.mxu0 0.0
    %1566 = vmatpush1.msra.mxu0 0.0
    %1567 = vmatprep.subr.mxu0 0.0
    %1568 = vmatpush1.msra.mxu0 0.0
    %1569 = vmatprep.subr.mxu0 0.0
    %1570 = vmatpush1.msra.mxu0 0.0
    %1571 = vmatprep.subr.mxu0 0.0
    %1572 = vmatpush1.msra.mxu0 0.0
    %1573 = vmatprep.subr.mxu0 0.0
    %1574 = vmatpush1.msra.mxu0 0.0
    %1575 = vmatprep.subr.mxu0 0.0
    %1576 = vmatpush1.msra.mxu0 0.0
    %1577 = vmatprep.subr.mxu0 0.0
    %1578 = vmatpush1.msra.mxu0 0.0
    %1579 = vmatprep.subr.mxu0 0.0
    %1580 = vmatpush1.msra.mxu0 0.0
    %1581 = vmatprep.subr.mxu0 0.0
    %1582 = vmatpush1.msra.mxu0 0.0
    %1583 = vmatprep.subr.mxu0 0.0
    %1584 = vmatpush1.msra.mxu0 0.0
    %1585 = vmatprep.subr.mxu0 0.0
    %1586 = vmatpush1.msra.mxu0 0.0
    %1587 = vmatprep.subr.mxu0 0.0
    %1588 = vmatpush1.msra.mxu0 0.0
    %1589 = vmatprep.subr.mxu0 0.0
    %1590 = vmatpush1.msra.mxu0 0.0
    %1591 = vmatprep.subr.mxu0 0.0
    %1592 = vmatpush1.msra.mxu0 0.0
    %1593 = vmatprep.subr.mxu0 0.0
    %1594 = vmatpush1.msra.mxu0 0.0
    %1595 = vmatprep.subr.mxu0 0.0
    %1596 = vmatpush1.msra.mxu0 0.0
    %1597 = vmatprep.subr.mxu0 0.0
    %1598 = vmatpush1.msra.mxu0 0.0
    %1599 = vmatprep.subr.mxu0 0.0
    %1600 = vmatpush1.msra.mxu0 0.0
    %1601 = vmatprep.subr.mxu0 0.0
    %1602 = vmatpush1.msra.mxu0 0.0
    %1603 = vmatprep.subr.mxu0 0.0
    %1604 = vmatpush1.msra.mxu0 0.0
    %1605 = vmatprep.subr.mxu0 0.0
    %1606 = vmatpush1.msra.mxu0 0.0
    %1607 = vmatprep.subr.mxu0 0.0
    %1608 = vmatpush1.msra.mxu0 0.0
    %1609 = vmatprep.mubr.f32.mxu0 0.0
    %1610 = vmatmul.mubr.f32.gmra.mrb[0].mxu0 %v1543
    %v1611 = vpop.f32.mrb[0].mxu0
    %v1612 = vadd.f32 0.0, %v1611
    %v1613 = vpop.f32.mrb[0].mxu0
    %1614 = vdwg.mxu0
    %v1615 = vld [vmem:[%s353] sm:$0xff]
    %v1616 = vld [vmem:[%s353 + $0x8] sm:$0xff]
    %1617 = vrot.lane.b32.xlu0 %v335, 112
    %v1618 = vpop.permute.xlu0 %1617
    %v1619 = vsel %vm338, %v1618, 0
    %v1622 = vsel %vm338, %v1615, 0
    %v1625 = vsel %vm338, %v1616, 0
    %1627 = vmatprep.subr.mxu0 0.0
    %1628 = vmatpush1.xpose.msra.mxu0 %v1622
    %1629 = vmatprep.subr.mxu0 0.0
    %1630 = vmatpush1.xpose.msra.mxu0 %v1625
    %1631 = vmatprep.subr.mxu0 0.0
    %1632 = vmatpush1.xpose.msra.mxu0 0.0
    %1633 = vmatprep.subr.mxu0 0.0
    %1634 = vmatpush1.xpose.msra.mxu0 0.0
    %1635 = vmatprep.subr.mxu0 0.0
    %1636 = vmatpush1.xpose.msra.mxu0 0.0
    %1637 = vmatprep.subr.mxu0 0.0
    %1638 = vmatpush1.xpose.msra.mxu0 0.0
    %1639 = vmatprep.subr.mxu0 0.0
    %1640 = vmatpush1.xpose.msra.mxu0 0.0
    %1641 = vmatprep.subr.mxu0 0.0
    %1642 = vmatpush1.xpose.msra.mxu0 0.0
    %1643 = vmatprep.subr.mxu0 0.0
    %1644 = vmatpush1.xpose.msra.mxu0 0.0
    %1645 = vmatprep.subr.mxu0 0.0
    %1646 = vmatpush1.xpose.msra.mxu0 0.0
    %1647 = vmatprep.subr.mxu0 0.0
    %1648 = vmatpush1.xpose.msra.mxu0 0.0
    %1649 = vmatprep.subr.mxu0 0.0
    %1650 = vmatpush1.xpose.msra.mxu0 0.0
    %1651 = vmatprep.subr.mxu0 0.0
    %1652 = vmatpush1.xpose.msra.mxu0 0.0
    %1653 = vmatprep.subr.mxu0 0.0
    %1654 = vmatpush1.xpose.msra.mxu0 0.0
    %1655 = vmatprep.subr.mxu0 0.0
    %1656 = vmatpush1.xpose.msra.mxu0 0.0
    %1657 = vmatprep.subr.mxu0 0.0
    %1658 = vmatpush1.xpose.msra.mxu0 0.0
    %1659 = vmatprep.subr.mxu0 0.0
    %1660 = vmatpush1.xpose.msra.mxu0 0.0
    %1661 = vmatprep.subr.mxu0 0.0
    %1662 = vmatpush1.xpose.msra.mxu0 0.0
    %1663 = vmatprep.subr.mxu0 0.0
    %1664 = vmatpush1.xpose.msra.mxu0 0.0
    %1665 = vmatprep.subr.mxu0 0.0
    %1666 = vmatpush1.xpose.msra.mxu0 0.0
    %1667 = vmatprep.subr.mxu0 0.0
    %1668 = vmatpush1.xpose.msra.mxu0 0.0
    %1669 = vmatprep.subr.mxu0 0.0
    %1670 = vmatpush1.xpose.msra.mxu0 0.0
    %1671 = vmatprep.subr.mxu0 0.0
    %1672 = vmatpush1.xpose.msra.mxu0 0.0
    %1673 = vmatprep.subr.mxu0 0.0
    %1674 = vmatpush1.xpose.msra.mxu0 0.0
    %1675 = vmatprep.subr.mxu0 0.0
    %1676 = vmatpush1.xpose.msra.mxu0 0.0
    %1677 = vmatprep.subr.mxu0 0.0
    %1678 = vmatpush1.xpose.msra.mxu0 0.0
    %1679 = vmatprep.subr.mxu0 0.0
    %1680 = vmatpush1.xpose.msra.mxu0 0.0
    %1681 = vmatprep.subr.mxu0 0.0
    %1682 = vmatpush1.xpose.msra.mxu0 0.0
    %1683 = vmatprep.subr.mxu0 0.0
    %1684 = vmatpush1.xpose.msra.mxu0 0.0
    %1685 = vmatprep.subr.mxu0 0.0
    %1686 = vmatpush1.xpose.msra.mxu0 0.0
    %1687 = vmatprep.subr.mxu0 0.0
    %1688 = vmatpush1.xpose.msra.mxu0 0.0
    %1689 = vmatprep.subr.mxu0 0.0
    %1690 = vmatpush1.xpose.msra.mxu0 0.0
    %1691 = vmatprep.mubr.f32.mxu0 0.0
    %1692 = vmatmul.mubr.f32.gmra.mrb[0].mxu0 %v1619
    %v1693 = vpop.f32.mrb[0].mxu0
    %v1694 = vadd.f32 0.0, %v1693
    %v1695 = vpop.f32.mrb[0].mxu0
    %1696 = vdwg.mxu0
    %v1697 = vmul.f32 %v1694, 0.35355338
    %v1698 = vsel %vm155, %v1697, -1e+20
    %v1699 = vsel %vm338, %v1698, -inf
    %1700 = vmax.xlane.f32.xlu0 %v1699
    %v1701 = vpop.xlane.xlu0 %1700
    %v1702 = vsub.f32 %v1698, %v1701
    %v1703 = vmul.f32 %v1702, 1.442695
    %v1704 = vpow.pop %v1703
    %v1705 = vsel %vm338, %v1704, 0.0
    %1706 = vadd.xlane.f32.xlu0 %v1705
    %v1707 = vpop.xlane.xlu0 %1706
    %v1708 = vrcp.pop %v1707
    %v1709 = vmul.f32 %v1704, %v1708
    %1710 = vmatprep.subr.mxu0 0.0
    %1711 = vmatpush1.msra.mxu0 %v370
    %1712 = vmatprep.subr.mxu0 0.0
    %1713 = vmatpush1.msra.mxu0 %v371
    %1714 = vmatprep.subr.mxu0 0.0
    %1715 = vmatpush1.msra.mxu0 0.0
    %1716 = vmatprep.subr.mxu0 0.0
    %1717 = vmatpush1.msra.mxu0 0.0
    %1718 = vmatprep.subr.mxu0 0.0
    %1719 = vmatpush1.msra.mxu0 0.0
    %1720 = vmatprep.subr.mxu0 0.0
    %1721 = vmatpush1.msra.mxu0 0.0
    %1722 = vmatprep.subr.mxu0 0.0
    %1723 = vmatpush1.msra.mxu0 0.0
    %1724 = vmatprep.subr.mxu0 0.0
    %1725 = vmatpush1.msra.mxu0 0.0
    %1726 = vmatprep.subr.mxu0 0.0
    %1727 = vmatpush1.msra.mxu0 0.0
    %1728 = vmatprep.subr.mxu0 0.0
    %1729 = vmatpush1.msra.mxu0 0.0
    %1730 = vmatprep.subr.mxu0 0.0
    %1731 = vmatpush1.msra.mxu0 0.0
    %1732 = vmatprep.subr.mxu0 0.0
    %1733 = vmatpush1.msra.mxu0 0.0
    %1734 = vmatprep.subr.mxu0 0.0
    %1735 = vmatpush1.msra.mxu0 0.0
    %1736 = vmatprep.subr.mxu0 0.0
    %1737 = vmatpush1.msra.mxu0 0.0
    %1738 = vmatprep.subr.mxu0 0.0
    %1739 = vmatpush1.msra.mxu0 0.0
    %1740 = vmatprep.subr.mxu0 0.0
    %1741 = vmatpush1.msra.mxu0 0.0
    %1742 = vmatprep.subr.mxu0 0.0
    %1743 = vmatpush1.msra.mxu0 0.0
    %1744 = vmatprep.subr.mxu0 0.0
    %1745 = vmatpush1.msra.mxu0 0.0
    %1746 = vmatprep.subr.mxu0 0.0
    %1747 = vmatpush1.msra.mxu0 0.0
    %1748 = vmatprep.subr.mxu0 0.0
    %1749 = vmatpush1.msra.mxu0 0.0
    %1750 = vmatprep.subr.mxu0 0.0
    %1751 = vmatpush1.msra.mxu0 0.0
    %1752 = vmatprep.subr.mxu0 0.0
    %1753 = vmatpush1.msra.mxu0 0.0
    %1754 = vmatprep.subr.mxu0 0.0
    %1755 = vmatpush1.msra.mxu0 0.0
    %1756 = vmatprep.subr.mxu0 0.0
    %1757 = vmatpush1.msra.mxu0 0.0
    %1758 = vmatprep.subr.mxu0 0.0
    %1759 = vmatpush1.msra.mxu0 0.0
    %1760 = vmatprep.subr.mxu0 0.0
    %1761 = vmatpush1.msra.mxu0 0.0
    %1762 = vmatprep.subr.mxu0 0.0
    %1763 = vmatpush1.msra.mxu0 0.0
    %1764 = vmatprep.subr.mxu0 0.0
    %1765 = vmatpush1.msra.mxu0 0.0
    %1766 = vmatprep.subr.mxu0 0.0
    %1767 = vmatpush1.msra.mxu0 0.0
    %1768 = vmatprep.subr.mxu0 0.0
    %1769 = vmatpush1.msra.mxu0 0.0
    %1770 = vmatprep.subr.mxu0 0.0
    %1771 = vmatpush1.msra.mxu0 0.0
    %1772 = vmatprep.subr.mxu0 0.0
    %1773 = vmatpush1.msra.mxu0 0.0
    %1774 = vmatprep.mubr.f32.mxu0 0.0
    %1775 = vmatmul.mubr.f32.gmra.mrb[0].mxu0 %v1622
    %v1776 = vpop.f32.mrb[0].mxu0
    %v1777 = vadd.f32 0.0, %v1776
    %v1778 = vpop.f32.mrb[0].mxu0
    %1779 = vmatprep.mubr.f32.mxu0 0.0
    %1780 = vmatmul.mubr.f32.gmra.mrb[0].mxu0 %v1625
    %v1781 = vpop.f32.mrb[0].mxu0
    %v1782 = vadd.f32 0.0, %v1781
    %v1783 = vpop.f32.mrb[0].mxu0
    %1784 = vdwg.mxu0
    %v1786 = vsel %vm338, %v1709, 0
    %1788 = vmatprep.subr.mxu0 0.0
    %1789 = vmatpush1.msra.mxu0 %v1777
    %1790 = vmatprep.subr.mxu0 0.0
    %1791 = vmatpush1.msra.mxu0 %v1782
    %1792 = vmatprep.subr.mxu0 0.0
    %1793 = vmatpush1.msra.mxu0 0.0
    %1794 = vmatprep.subr.mxu0 0.0
    %1795 = vmatpush1.msra.mxu0 0.0
    %1796 = vmatprep.subr.mxu0 0.0
    %1797 = vmatpush1.msra.mxu0 0.0
    %1798 = vmatprep.subr.mxu0 0.0
    %1799 = vmatpush1.msra.mxu0 0.0
    %1800 = vmatprep.subr.mxu0 0.0
    %1801 = vmatpush1.msra.mxu0 0.0
    %1802 = vmatprep.subr.mxu0 0.0
    %1803 = vmatpush1.msra.mxu0 0.0
    %1804 = vmatprep.subr.mxu0 0.0
    %1805 = vmatpush1.msra.mxu0 0.0
    %1806 = vmatprep.subr.mxu0 0.0
    %1807 = vmatpush1.msra.mxu0 0.0
    %1808 = vmatprep.subr.mxu0 0.0
    %1809 = vmatpush1.msra.mxu0 0.0
    %1810 = vmatprep.subr.mxu0 0.0
    %1811 = vmatpush1.msra.mxu0 0.0
    %1812 = vmatprep.subr.mxu0 0.0
    %1813 = vmatpush1.msra.mxu0 0.0
    %1814 = vmatprep.subr.mxu0 0.0
    %1815 = vmatpush1.msra.mxu0 0.0
    %1816 = vmatprep.subr.mxu0 0.0
    %1817 = vmatpush1.msra.mxu0 0.0
    %1818 = vmatprep.subr.mxu0 0.0
    %1819 = vmatpush1.msra.mxu0 0.0
    %1820 = vmatprep.subr.mxu0 0.0
    %1821 = vmatpush1.msra.mxu0 0.0
    %1822 = vmatprep.subr.mxu0 0.0
    %1823 = vmatpush1.msra.mxu0 0.0
    %1824 = vmatprep.subr.mxu0 0.0
    %1825 = vmatpush1.msra.mxu0 0.0
    %1826 = vmatprep.subr.mxu0 0.0
    %1827 = vmatpush1.msra.mxu0 0.0
    %1828 = vmatprep.subr.mxu0 0.0
    %1829 = vmatpush1.msra.mxu0 0.0
    %1830 = vmatprep.subr.mxu0 0.0
    %1831 = vmatpush1.msra.mxu0 0.0
    %1832 = vmatprep.subr.mxu0 0.0
    %1833 = vmatpush1.msra.mxu0 0.0
    %1834 = vmatprep.subr.mxu0 0.0
    %1835 = vmatpush1.msra.mxu0 0.0
    %1836 = vmatprep.subr.mxu0 0.0
    %1837 = vmatpush1.msra.mxu0 0.0
    %1838 = vmatprep.subr.mxu0 0.0
    %1839 = vmatpush1.msra.mxu0 0.0
    %1840 = vmatprep.subr.mxu0 0.0
    %1841 = vmatpush1.msra.mxu0 0.0
    %1842 = vmatprep.subr.mxu0 0.0
    %1843 = vmatpush1.msra.mxu0 0.0
    %1844 = vmatprep.subr.mxu0 0.0
    %1845 = vmatpush1.msra.mxu0 0.0
    %1846 = vmatprep.subr.mxu0 0.0
    %1847 = vmatpush1.msra.mxu0 0.0
    %1848 = vmatprep.subr.mxu0 0.0
    %1849 = vmatpush1.msra.mxu0 0.0
    %1850 = vmatprep.subr.mxu0 0.0
    %1851 = vmatpush1.msra.mxu0 0.0
    %1852 = vmatprep.mubr.f32.mxu0 0.0
    %1853 = vmatmul.mubr.f32.gmra.mrb[0].mxu0 %v1786
    %v1854 = vpop.f32.mrb[0].mxu0
    %v1855 = vadd.f32 0.0, %v1854
    %v1856 = vpop.f32.mrb[0].mxu0
    %1857 = vdwg.mxu0
    %v1858 = vld [vmem:[%s353] sm:$0xff]
    %v1859 = vld [vmem:[%s353 + $0x8] sm:$0xff]
    %v1860 = vld [vmem:[%s353 + $0x10] sm:$0xff]
    %1861 = vrot.lane.b32.xlu0 %v335, 96
    %v1862 = vpop.permute.xlu0 %1861
    %v1863 = vsel %vm338, %v1862, 0
    %v1866 = vsel %vm338, %v1858, 0
    %v1869 = vsel %vm338, %v1859, 0
    %v1872 = vsel %vm338, %v1860, 0
    %1874 = vmatprep.subr.mxu0 0.0
    %1875 = vmatpush1.xpose.msra.mxu0 %v1866
    %1876 = vmatprep.subr.mxu0 0.0
    %1877 = vmatpush1.xpose.msra.mxu0 %v1869
    %1878 = vmatprep.subr.mxu0 0.0
    %1879 = vmatpush1.xpose.msra.mxu0 %v1872
    %1880 = vmatprep.subr.mxu0 0.0
    %1881 = vmatpush1.xpose.msra.mxu0 0.0
    %1882 = vmatprep.subr.mxu0 0.0
    %1883 = vmatpush1.xpose.msra.mxu0 0.0
    %1884 = vmatprep.subr.mxu0 0.0
    %1885 = vmatpush1.xpose.msra.mxu0 0.0
    %1886 = vmatprep.subr.mxu0 0.0
    %1887 = vmatpush1.xpose.msra.mxu0 0.0
    %1888 = vmatprep.subr.mxu0 0.0
    %1889 = vmatpush1.xpose.msra.mxu0 0.0
    %1890 = vmatprep.subr.mxu0 0.0
    %1891 = vmatpush1.xpose.msra.mxu0 0.0
    %1892 = vmatprep.subr.mxu0 0.0
    %1893 = vmatpush1.xpose.msra.mxu0 0.0
    %1894 = vmatprep.subr.mxu0 0.0
    %1895 = vmatpush1.xpose.msra.mxu0 0.0
    %1896 = vmatprep.subr.mxu0 0.0
    %1897 = vmatpush1.xpose.msra.mxu0 0.0
    %1898 = vmatprep.subr.mxu0 0.0
    %1899 = vmatpush1.xpose.msra.mxu0 0.0
    %1900 = vmatprep.subr.mxu0 0.0
    %1901 = vmatpush1.xpose.msra.mxu0 0.0
    %1902 = vmatprep.subr.mxu0 0.0
    %1903 = vmatpush1.xpose.msra.mxu0 0.0
    %1904 = vmatprep.subr.mxu0 0.0
    %1905 = vmatpush1.xpose.msra.mxu0 0.0
    %1906 = vmatprep.subr.mxu0 0.0
    %1907 = vmatpush1.xpose.msra.mxu0 0.0
    %1908 = vmatprep.subr.mxu0 0.0
    %1909 = vmatpush1.xpose.msra.mxu0 0.0
    %1910 = vmatprep.subr.mxu0 0.0
    %1911 = vmatpush1.xpose.msra.mxu0 0.0
    %1912 = vmatprep.subr.mxu0 0.0
    %1913 = vmatpush1.xpose.msra.mxu0 0.0
    %1914 = vmatprep.subr.mxu0 0.0
    %1915 = vmatpush1.xpose.msra.mxu0 0.0
    %1916 = vmatprep.subr.mxu0 0.0
    %1917 = vmatpush1.xpose.msra.mxu0 0.0
    %1918 = vmatprep.subr.mxu0 0.0
    %1919 = vmatpush1.xpose.msra.mxu0 0.0
    %1920 = vmatprep.subr.mxu0 0.0
    %1921 = vmatpush1.xpose.msra.mxu0 0.0
    %1922 = vmatprep.subr.mxu0 0.0
    %1923 = vmatpush1.xpose.msra.mxu0 0.0
    %1924 = vmatprep.subr.mxu0 0.0
    %1925 = vmatpush1.xpose.msra.mxu0 0.0
    %1926 = vmatprep.subr.mxu0 0.0
    %1927 = vmatpush1.xpose.msra.mxu0 0.0
    %1928 = vmatprep.subr.mxu0 0.0
    %1929 = vmatpush1.xpose.msra.mxu0 0.0
    %1930 = vmatprep.subr.mxu0 0.0
    %1931 = vmatpush1.xpose.msra.mxu0 0.0
    %1932 = vmatprep.subr.mxu0 0.0
    %1933 = vmatpush1.xpose.msra.mxu0 0.0
    %1934 = vmatprep.subr.mxu0 0.0
    %1935 = vmatpush1.xpose.msra.mxu0 0.0
    %1936 = vmatprep.subr.mxu0 0.0
    %1937 = vmatpush1.xpose.msra.mxu0 0.0
    %1938 = vmatprep.mubr.f32.mxu0 0.0
    %1939 = vmatmul.mubr.f32.gmra.mrb[0].mxu0 %v1863
    %v1940 = vpop.f32.mrb[0].mxu0
    %v1941 = vadd.f32 0.0, %v1940
    %v1942 = vpop.f32.mrb[0].mxu0
    %1943 = vdwg.mxu0
    %v1944 = vmul.f32 %v1941, 0.35355338
    %v1945 = vsel %vm155, %v1944, -1e+20
    %v1946 = vsel %vm941, %v1945, -inf
    %1947 = vmax.xlane.f32.xlu0 %v1946
    %v1948 = vpop.xlane.xlu0 %1947
    %v1949 = vsub.f32 %v1945, %v1948
    %v1950 = vmul.f32 %v1949, 1.442695
    %v1951 = vpow.pop %v1950
    %v1952 = vsel %vm941, %v1951, 0.0
    %1953 = vadd.xlane.f32.xlu0 %v1952
    %v1954 = vpop.xlane.xlu0 %1953
    %v1955 = vrcp.pop %v1954
    %v1956 = vmul.f32 %v1951, %v1955
    %1957 = vmatprep.subr.mxu0 0.0
    %1958 = vmatpush1.msra.mxu0 %v372
    %1959 = vmatprep.subr.mxu0 0.0
    %1960 = vmatpush1.msra.mxu0 %v373
    %1961 = vmatprep.subr.mxu0 0.0
    %1962 = vmatpush1.msra.mxu0 0.0
    %1963 = vmatprep.subr.mxu0 0.0
    %1964 = vmatpush1.msra.mxu0 0.0
    %1965 = vmatprep.subr.mxu0 0.0
    %1966 = vmatpush1.msra.mxu0 0.0
    %1967 = vmatprep.subr.mxu0 0.0
    %1968 = vmatpush1.msra.mxu0 0.0
    %1969 = vmatprep.subr.mxu0 0.0
    %1970 = vmatpush1.msra.mxu0 0.0
    %1971 = vmatprep.subr.mxu0 0.0
    %1972 = vmatpush1.msra.mxu0 0.0
    %1973 = vmatprep.subr.mxu0 0.0
    %1974 = vmatpush1.msra.mxu0 0.0
    %1975 = vmatprep.subr.mxu0 0.0
    %1976 = vmatpush1.msra.mxu0 0.0
    %1977 = vmatprep.subr.mxu0 0.0
    %1978 = vmatpush1.msra.mxu0 0.0
    %1979 = vmatprep.subr.mxu0 0.0
    %1980 = vmatpush1.msra.mxu0 0.0
    %1981 = vmatprep.subr.mxu0 0.0
    %1982 = vmatpush1.msra.mxu0 0.0
    %1983 = vmatprep.subr.mxu0 0.0
    %1984 = vmatpush1.msra.mxu0 0.0
    %1985 = vmatprep.subr.mxu0 0.0
    %1986 = vmatpush1.msra.mxu0 0.0
    %1987 = vmatprep.subr.mxu0 0.0
    %1988 = vmatpush1.msra.mxu0 0.0
    %1989 = vmatprep.subr.mxu0 0.0
    %1990 = vmatpush1.msra.mxu0 0.0
    %1991 = vmatprep.subr.mxu0 0.0
    %1992 = vmatpush1.msra.mxu0 0.0
    %1993 = vmatprep.subr.mxu0 0.0
    %1994 = vmatpush1.msra.mxu0 0.0
    %1995 = vmatprep.subr.mxu0 0.0
    %1996 = vmatpush1.msra.mxu0 0.0
    %1997 = vmatprep.subr.mxu0 0.0
    %1998 = vmatpush1.msra.mxu0 0.0
    %1999 = vmatprep.subr.mxu0 0.0
    %2000 = vmatpush1.msra.mxu0 0.0
    %2001 = vmatprep.subr.mxu0 0.0
    %2002 = vmatpush1.msra.mxu0 0.0
    %2003 = vmatprep.subr.mxu0 0.0
    %2004 = vmatpush1.msra.mxu0 0.0
    %2005 = vmatprep.subr.mxu0 0.0
    %2006 = vmatpush1.msra.mxu0 0.0
    %2007 = vmatprep.subr.mxu0 0.0
    %2008 = vmatpush1.msra.mxu0 0.0
    %2009 = vmatprep.subr.mxu0 0.0
    %2010 = vmatpush1.msra.mxu0 0.0
    %2011 = vmatprep.subr.mxu0 0.0
    %2012 = vmatpush1.msra.mxu0 0.0
    %2013 = vmatprep.subr.mxu0 0.0
    %2014 = vmatpush1.msra.mxu0 0.0
    %2015 = vmatprep.subr.mxu0 0.0
    %2016 = vmatpush1.msra.mxu0 0.0
    %2017 = vmatprep.subr.mxu0 0.0
    %2018 = vmatpush1.msra.mxu0 0.0
    %2019 = vmatprep.subr.mxu0 0.0
    %2020 = vmatpush1.msra.mxu0 0.0
    %2021 = vmatprep.mubr.f32.mxu0 0.0
    %2022 = vmatmul.mubr.f32.gmra.mrb[0].mxu0 %v1866
    %v2023 = vpop.f32.mrb[0].mxu0
    %v2024 = vadd.f32 0.0, %v2023
    %v2025 = vpop.f32.mrb[0].mxu0
    %2026 = vmatprep.mubr.f32.mxu0 0.0
    %2027 = vmatmul.mubr.f32.gmra.mrb[0].mxu0 %v1869
    %v2028 = vpop.f32.mrb[0].mxu0
    %v2029 = vadd.f32 0.0, %v2028
    %v2030 = vpop.f32.mrb[0].mxu0
    %2031 = vmatprep.mubr.f32.mxu0 0.0
    %2032 = vmatmul.mubr.f32.gmra.mrb[0].mxu0 %v1872
    %v2033 = vpop.f32.mrb[0].mxu0
    %v2034 = vadd.f32 0.0, %v2033
    %v2035 = vpop.f32.mrb[0].mxu0
    %2036 = vdwg.mxu0
    %v2038 = vsel %vm941, %v1956, 0
    %2040 = vmatprep.subr.mxu0 0.0
    %2041 = vmatpush1.msra.mxu0 %v2024
    %2042 = vmatprep.subr.mxu0 0.0
    %2043 = vmatpush1.msra.mxu0 %v2029
    %2044 = vmatprep.subr.mxu0 0.0
    %2045 = vmatpush1.msra.mxu0 %v2034
    %2046 = vmatprep.subr.mxu0 0.0
    %2047 = vmatpush1.msra.mxu0 0.0
    %2048 = vmatprep.subr.mxu0 0.0
    %2049 = vmatpush1.msra.mxu0 0.0
    %2050 = vmatprep.subr.mxu0 0.0
    %2051 = vmatpush1.msra.mxu0 0.0
    %2052 = vmatprep.subr.mxu0 0.0
    %2053 = vmatpush1.msra.mxu0 0.0
    %2054 = vmatprep.subr.mxu0 0.0
    %2055 = vmatpush1.msra.mxu0 0.0
    %2056 = vmatprep.subr.mxu0 0.0
    %2057 = vmatpush1.msra.mxu0 0.0
    %2058 = vmatprep.subr.mxu0 0.0
    %2059 = vmatpush1.msra.mxu0 0.0
    %2060 = vmatprep.subr.mxu0 0.0
    %2061 = vmatpush1.msra.mxu0 0.0
    %2062 = vmatprep.subr.mxu0 0.0
    %2063 = vmatpush1.msra.mxu0 0.0
    %2064 = vmatprep.subr.mxu0 0.0
    %2065 = vmatpush1.msra.mxu0 0.0
    %2066 = vmatprep.subr.mxu0 0.0
    %2067 = vmatpush1.msra.mxu0 0.0
    %2068 = vmatprep.subr.mxu0 0.0
    %2069 = vmatpush1.msra.mxu0 0.0
    %2070 = vmatprep.subr.mxu0 0.0
    %2071 = vmatpush1.msra.mxu0 0.0
    %2072 = vmatprep.subr.mxu0 0.0
    %2073 = vmatpush1.msra.mxu0 0.0
    %2074 = vmatprep.subr.mxu0 0.0
    %2075 = vmatpush1.msra.mxu0 0.0
    %2076 = vmatprep.subr.mxu0 0.0
    %2077 = vmatpush1.msra.mxu0 0.0
    %2078 = vmatprep.subr.mxu0 0.0
    %2079 = vmatpush1.msra.mxu0 0.0
    %2080 = vmatprep.subr.mxu0 0.0
    %2081 = vmatpush1.msra.mxu0 0.0
    %2082 = vmatprep.subr.mxu0 0.0
    %2083 = vmatpush1.msra.mxu0 0.0
    %2084 = vmatprep.subr.mxu0 0.0
    %2085 = vmatpush1.msra.mxu0 0.0
    %2086 = vmatprep.subr.mxu0 0.0
    %2087 = vmatpush1.msra.mxu0 0.0
    %2088 = vmatprep.subr.mxu0 0.0
    %2089 = vmatpush1.msra.mxu0 0.0
    %2090 = vmatprep.subr.mxu0 0.0
    %2091 = vmatpush1.msra.mxu0 0.0
    %2092 = vmatprep.subr.mxu0 0.0
    %2093 = vmatpush1.msra.mxu0 0.0
    %2094 = vmatprep.subr.mxu0 0.0
    %2095 = vmatpush1.msra.mxu0 0.0
    %2096 = vmatprep.subr.mxu0 0.0
    %2097 = vmatpush1.msra.mxu0 0.0
    %2098 = vmatprep.subr.mxu0 0.0
    %2099 = vmatpush1.msra.mxu0 0.0
    %2100 = vmatprep.subr.mxu0 0.0
    %2101 = vmatpush1.msra.mxu0 0.0
    %2102 = vmatprep.subr.mxu0 0.0
    %2103 = vmatpush1.msra.mxu0 0.0
    %2104 = vmatprep.mubr.f32.mxu0 0.0
    %2105 = vmatmul.mubr.f32.gmra.mrb[0].mxu0 %v2038
    %v2106 = vpop.f32.mrb[0].mxu0
    %v2107 = vadd.f32 0.0, %v2106
    %v2108 = vpop.f32.mrb[0].mxu0
    %2109 = vdwg.mxu0
    %v2110 = vld [vmem:[%s353] sm:$0xff]
    %v2111 = vld [vmem:[%s353 + $0x8] sm:$0xff]
    %v2112 = vld [vmem:[%s353 + $0x10] sm:$0xff]
    %v2113 = vld [vmem:[%s353 + $0x18] sm:$0xff]
    %2114 = vrot.lane.b32.xlu0 %v335, 80
    %v2115 = vpop.permute.xlu0 %2114
    %v2116 = vsel %vm338, %v2115, 0
    %v2119 = vsel %vm338, %v2110, 0
    %v2122 = vsel %vm338, %v2111, 0
    %v2125 = vsel %vm338, %v2112, 0
    %v2128 = vsel %vm338, %v2113, 0
    %2130 = vmatprep.subr.mxu0 0.0
    %2131 = vmatpush1.xpose.msra.mxu0 %v2119
    %2132 = vmatprep.subr.mxu0 0.0
    %2133 = vmatpush1.xpose.msra.mxu0 %v2122
    %2134 = vmatprep.subr.mxu0 0.0
    %2135 = vmatpush1.xpose.msra.mxu0 %v2125
    %2136 = vmatprep.subr.mxu0 0.0
    %2137 = vmatpush1.xpose.msra.mxu0 %v2128
    %2138 = vmatprep.subr.mxu0 0.0
    %2139 = vmatpush1.xpose.msra.mxu0 0.0
    %2140 = vmatprep.subr.mxu0 0.0
    %2141 = vmatpush1.xpose.msra.mxu0 0.0
    %2142 = vmatprep.subr.mxu0 0.0
    %2143 = vmatpush1.xpose.msra.mxu0 0.0
    %2144 = vmatprep.subr.mxu0 0.0
    %2145 = vmatpush1.xpose.msra.mxu0 0.0
    %2146 = vmatprep.subr.mxu0 0.0
    %2147 = vmatpush1.xpose.msra.mxu0 0.0
    %2148 = vmatprep.subr.mxu0 0.0
    %2149 = vmatpush1.xpose.msra.mxu0 0.0
    %2150 = vmatprep.subr.mxu0 0.0
    %2151 = vmatpush1.xpose.msra.mxu0 0.0
    %2152 = vmatprep.subr.mxu0 0.0
    %2153 = vmatpush1.xpose.msra.mxu0 0.0
    %2154 = vmatprep.subr.mxu0 0.0
    %2155 = vmatpush1.xpose.msra.mxu0 0.0
    %2156 = vmatprep.subr.mxu0 0.0
    %2157 = vmatpush1.xpose.msra.mxu0 0.0
    %2158 = vmatprep.subr.mxu0 0.0
    %2159 = vmatpush1.xpose.msra.mxu0 0.0
    %2160 = vmatprep.subr.mxu0 0.0
    %2161 = vmatpush1.xpose.msra.mxu0 0.0
    %2162 = vmatprep.subr.mxu0 0.0
    %2163 = vmatpush1.xpose.msra.mxu0 0.0
    %2164 = vmatprep.subr.mxu0 0.0
    %2165 = vmatpush1.xpose.msra.mxu0 0.0
    %2166 = vmatprep.subr.mxu0 0.0
    %2167 = vmatpush1.xpose.msra.mxu0 0.0
    %2168 = vmatprep.subr.mxu0 0.0
    %2169 = vmatpush1.xpose.msra.mxu0 0.0
    %2170 = vmatprep.subr.mxu0 0.0
    %2171 = vmatpush1.xpose.msra.mxu0 0.0
    %2172 = vmatprep.subr.mxu0 0.0
    %2173 = vmatpush1.xpose.msra.mxu0 0.0
    %2174 = vmatprep.subr.mxu0 0.0
    %2175 = vmatpush1.xpose.msra.mxu0 0.0
    %2176 = vmatprep.subr.mxu0 0.0
    %2177 = vmatpush1.xpose.msra.mxu0 0.0
    %2178 = vmatprep.subr.mxu0 0.0
    %2179 = vmatpush1.xpose.msra.mxu0 0.0
    %2180 = vmatprep.subr.mxu0 0.0
    %2181 = vmatpush1.xpose.msra.mxu0 0.0
    %2182 = vmatprep.subr.mxu0 0.0
    %2183 = vmatpush1.xpose.msra.mxu0 0.0
    %2184 = vmatprep.subr.mxu0 0.0
    %2185 = vmatpush1.xpose.msra.mxu0 0.0
    %2186 = vmatprep.subr.mxu0 0.0
    %2187 = vmatpush1.xpose.msra.mxu0 0.0
    %2188 = vmatprep.subr.mxu0 0.0
    %2189 = vmatpush1.xpose.msra.mxu0 0.0
    %2190 = vmatprep.subr.mxu0 0.0
    %2191 = vmatpush1.xpose.msra.mxu0 0.0
    %2192 = vmatprep.subr.mxu0 0.0
    %2193 = vmatpush1.xpose.msra.mxu0 0.0
    %2194 = vmatprep.mubr.f32.mxu0 0.0
    %2195 = vmatmul.mubr.f32.gmra.mrb[0].mxu0 %v2116
    %v2196 = vpop.f32.mrb[0].mxu0
    %v2197 = vadd.f32 0.0, %v2196
    %v2198 = vpop.f32.mrb[0].mxu0
    %2199 = vdwg.mxu0
    %v2200 = vmul.f32 %v2197, 0.35355338
    %v2201 = vsel %vm155, %v2200, -1e+20
    %v2202 = vsel %vm158, %v2201, -inf
    %2203 = vmax.xlane.f32.xlu0 %v2202
    %v2204 = vpop.xlane.xlu0 %2203
    %v2205 = vsub.f32 %v2201, %v2204
    %v2206 = vmul.f32 %v2205, 1.442695
    %v2207 = vpow.pop %v2206
    %v2208 = vsel %vm158, %v2207, 0.0
    %2209 = vadd.xlane.f32.xlu0 %v2208
    %v2210 = vpop.xlane.xlu0 %2209
    %v2211 = vrcp.pop %v2210
    %v2212 = vmul.f32 %v2207, %v2211
    %2213 = vmatprep.subr.mxu0 0.0
    %2214 = vmatpush1.msra.mxu0 %v374
    %2215 = vmatprep.subr.mxu0 0.0
    %2216 = vmatpush1.msra.mxu0 %v375
    %2217 = vmatprep.subr.mxu0 0.0
    %2218 = vmatpush1.msra.mxu0 0.0
    %2219 = vmatprep.subr.mxu0 0.0
    %2220 = vmatpush1.msra.mxu0 0.0
    %2221 = vmatprep.subr.mxu0 0.0
    %2222 = vmatpush1.msra.mxu0 0.0
    %2223 = vmatprep.subr.mxu0 0.0
    %2224 = vmatpush1.msra.mxu0 0.0
    %2225 = vmatprep.subr.mxu0 0.0
    %2226 = vmatpush1.msra.mxu0 0.0
    %2227 = vmatprep.subr.mxu0 0.0
    %2228 = vmatpush1.msra.mxu0 0.0
    %2229 = vmatprep.subr.mxu0 0.0
    %2230 = vmatpush1.msra.mxu0 0.0
    %2231 = vmatprep.subr.mxu0 0.0
    %2232 = vmatpush1.msra.mxu0 0.0
    %2233 = vmatprep.subr.mxu0 0.0
    %2234 = vmatpush1.msra.mxu0 0.0
    %2235 = vmatprep.subr.mxu0 0.0
    %2236 = vmatpush1.msra.mxu0 0.0
    %2237 = vmatprep.subr.mxu0 0.0
    %2238 = vmatpush1.msra.mxu0 0.0
    %2239 = vmatprep.subr.mxu0 0.0
    %2240 = vmatpush1.msra.mxu0 0.0
    %2241 = vmatprep.subr.mxu0 0.0
    %2242 = vmatpush1.msra.mxu0 0.0
    %2243 = vmatprep.subr.mxu0 0.0
    %2244 = vmatpush1.msra.mxu0 0.0
    %2245 = vmatprep.subr.mxu0 0.0
    %2246 = vmatpush1.msra.mxu0 0.0
    %2247 = vmatprep.subr.mxu0 0.0
    %2248 = vmatpush1.msra.mxu0 0.0
    %2249 = vmatprep.subr.mxu0 0.0
    %2250 = vmatpush1.msra.mxu0 0.0
    %2251 = vmatprep.subr.mxu0 0.0
    %2252 = vmatpush1.msra.mxu0 0.0
    %2253 = vmatprep.subr.mxu0 0.0
    %2254 = vmatpush1.msra.mxu0 0.0
    %2255 = vmatprep.subr.mxu0 0.0
    %2256 = vmatpush1.msra.mxu0 0.0
    %2257 = vmatprep.subr.mxu0 0.0
    %2258 = vmatpush1.msra.mxu0 0.0
    %2259 = vmatprep.subr.mxu0 0.0
    %2260 = vmatpush1.msra.mxu0 0.0
    %2261 = vmatprep.subr.mxu0 0.0
    %2262 = vmatpush1.msra.mxu0 0.0
    %2263 = vmatprep.subr.mxu0 0.0
    %2264 = vmatpush1.msra.mxu0 0.0
    %2265 = vmatprep.subr.mxu0 0.0
    %2266 = vmatpush1.msra.mxu0 0.0
    %2267 = vmatprep.subr.mxu0 0.0
    %2268 = vmatpush1.msra.mxu0 0.0
    %2269 = vmatprep.subr.mxu0 0.0
    %2270 = vmatpush1.msra.mxu0 0.0
    %2271 = vmatprep.subr.mxu0 0.0
    %2272 = vmatpush1.msra.mxu0 0.0
    %2273 = vmatprep.subr.mxu0 0.0
    %2274 = vmatpush1.msra.mxu0 0.0
    %2275 = vmatprep.subr.mxu0 0.0
    %2276 = vmatpush1.msra.mxu0 0.0
    %2277 = vmatprep.mubr.f32.mxu0 0.0
    %2278 = vmatmul.mubr.f32.gmra.mrb[0].mxu0 %v2119
    %v2279 = vpop.f32.mrb[0].mxu0
    %v2280 = vadd.f32 0.0, %v2279
    %v2281 = vpop.f32.mrb[0].mxu0
    %2282 = vmatprep.mubr.f32.mxu0 0.0
    %2283 = vmatmul.mubr.f32.gmra.mrb[0].mxu0 %v2122
    %v2284 = vpop.f32.mrb[0].mxu0
    %v2285 = vadd.f32 0.0, %v2284
    %v2286 = vpop.f32.mrb[0].mxu0
    %2287 = vmatprep.mubr.f32.mxu0 0.0
    %2288 = vmatmul.mubr.f32.gmra.mrb[0].mxu0 %v2125
    %v2289 = vpop.f32.mrb[0].mxu0
    %v2290 = vadd.f32 0.0, %v2289
    %v2291 = vpop.f32.mrb[0].mxu0
    %2292 = vmatprep.mubr.f32.mxu0 0.0
    %2293 = vmatmul.mubr.f32.gmra.mrb[0].mxu0 %v2128
    %v2294 = vpop.f32.mrb[0].mxu0
    %v2295 = vadd.f32 0.0, %v2294
    %v2296 = vpop.f32.mrb[0].mxu0
    %2297 = vdwg.mxu0
    %v2299 = vsel %vm158, %v2212, 0
    %2301 = vmatprep.subr.mxu0 0.0
    %2302 = vmatpush1.msra.mxu0 %v2280
    %2303 = vmatprep.subr.mxu0 0.0
    %2304 = vmatpush1.msra.mxu0 %v2285
    %2305 = vmatprep.subr.mxu0 0.0
    %2306 = vmatpush1.msra.mxu0 %v2290
    %2307 = vmatprep.subr.mxu0 0.0
    %2308 = vmatpush1.msra.mxu0 %v2295
    %2309 = vmatprep.subr.mxu0 0.0
    %2310 = vmatpush1.msra.mxu0 0.0
    %2311 = vmatprep.subr.mxu0 0.0
    %2312 = vmatpush1.msra.mxu0 0.0
    %2313 = vmatprep.subr.mxu0 0.0
    %2314 = vmatpush1.msra.mxu0 0.0
    %2315 = vmatprep.subr.mxu0 0.0
    %2316 = vmatpush1.msra.mxu0 0.0
    %2317 = vmatprep.subr.mxu0 0.0
    %2318 = vmatpush1.msra.mxu0 0.0
    %2319 = vmatprep.subr.mxu0 0.0
    %2320 = vmatpush1.msra.mxu0 0.0
    %2321 = vmatprep.subr.mxu0 0.0
    %2322 = vmatpush1.msra.mxu0 0.0
    %2323 = vmatprep.subr.mxu0 0.0
    %2324 = vmatpush1.msra.mxu0 0.0
    %2325 = vmatprep.subr.mxu0 0.0
    %2326 = vmatpush1.msra.mxu0 0.0
    %2327 = vmatprep.subr.mxu0 0.0
    %2328 = vmatpush1.msra.mxu0 0.0
    %2329 = vmatprep.subr.mxu0 0.0
    %2330 = vmatpush1.msra.mxu0 0.0
    %2331 = vmatprep.subr.mxu0 0.0
    %2332 = vmatpush1.msra.mxu0 0.0
    %2333 = vmatprep.subr.mxu0 0.0
    %2334 = vmatpush1.msra.mxu0 0.0
    %2335 = vmatprep.subr.mxu0 0.0
    %2336 = vmatpush1.msra.mxu0 0.0
    %2337 = vmatprep.subr.mxu0 0.0
    %2338 = vmatpush1.msra.mxu0 0.0
    %2339 = vmatprep.subr.mxu0 0.0
    %2340 = vmatpush1.msra.mxu0 0.0
    %2341 = vmatprep.subr.mxu0 0.0
    %2342 = vmatpush1.msra.mxu0 0.0
    %2343 = vmatprep.subr.mxu0 0.0
    %2344 = vmatpush1.msra.mxu0 0.0
    %2345 = vmatprep.subr.mxu0 0.0
    %2346 = vmatpush1.msra.mxu0 0.0
    %2347 = vmatprep.subr.mxu0 0.0
    %2348 = vmatpush1.msra.mxu0 0.0
    %2349 = vmatprep.subr.mxu0 0.0
    %2350 = vmatpush1.msra.mxu0 0.0
    %2351 = vmatprep.subr.mxu0 0.0
    %2352 = vmatpush1.msra.mxu0 0.0
    %2353 = vmatprep.subr.mxu0 0.0
    %2354 = vmatpush1.msra.mxu0 0.0
    %2355 = vmatprep.subr.mxu0 0.0
    %2356 = vmatpush1.msra.mxu0 0.0
    %2357 = vmatprep.subr.mxu0 0.0
    %2358 = vmatpush1.msra.mxu0 0.0
    %2359 = vmatprep.subr.mxu0 0.0
    %2360 = vmatpush1.msra.mxu0 0.0
    %2361 = vmatprep.subr.mxu0 0.0
    %2362 = vmatpush1.msra.mxu0 0.0
    %2363 = vmatprep.subr.mxu0 0.0
    %2364 = vmatpush1.msra.mxu0 0.0
    %2365 = vmatprep.mubr.f32.mxu0 0.0
    %2366 = vmatmul.mubr.f32.gmra.mrb[0].mxu0 %v2299
    %v2367 = vpop.f32.mrb[0].mxu0
    %v2368 = vadd.f32 0.0, %v2367
    %v2369 = vpop.f32.mrb[0].mxu0
    %2370 = vdwg.mxu0
    %2372 = vrot.lane.b32.xlu0 %v1855, 8
    %v2373 = vpop.permute.xlu0 %2372
    %2376 = vrot.lane.b32.xlu0 %v2107, 16
    %v2377 = vpop.permute.xlu0 %2376
    %2380 = vrot.lane.b32.xlu0 %v2368, 24
    %v2381 = vpop.permute.xlu0 %2380
    %v2383 = vsel %vm455, %v1612, %v2373
    %v2384 = vsel %vm338, %v2383, %v2377
    %v2385 = vsel %vm941, %v2384, %v2381
    %v2386 = vld [vmem:[%s7] sm:$0xff]
    %v2387 = vld [vmem:[%s7 + $0x8] sm:$0xff]
    %v2388 = vld [vmem:[%s7 + $0x10] sm:$0xff]
    %v2389 = vld [vmem:[%s7 + $0x18] sm:$0xff]
    %v2391 = vsel %vm158, %v1381, 0
    %v2394 = vsel %vm158, %v2385, 0
    %2396 = vmatprep.subr.mxu0 0.0
    %2397 = vmatpush1.msra.mxu0 %v2386
    %2398 = vmatprep.subr.mxu0 0.0
    %2399 = vmatpush1.msra.mxu0 %v2387
    %2400 = vmatprep.subr.mxu0 0.0
    %2401 = vmatpush1.msra.mxu0 %v2388
    %2402 = vmatprep.subr.mxu0 0.0
    %2403 = vmatpush1.msra.mxu0 %v2389
    %2404 = vmatprep.subr.mxu0 0.0
    %2405 = vmatpush1.msra.mxu0 0.0
    %2406 = vmatprep.subr.mxu0 0.0
    %2407 = vmatpush1.msra.mxu0 0.0
    %2408 = vmatprep.subr.mxu0 0.0
    %2409 = vmatpush1.msra.mxu0 0.0
    %2410 = vmatprep.subr.mxu0 0.0
    %2411 = vmatpush1.msra.mxu0 0.0
    %2412 = vmatprep.subr.mxu0 0.0
    %2413 = vmatpush1.msra.mxu0 0.0
    %2414 = vmatprep.subr.mxu0 0.0
    %2415 = vmatpush1.msra.mxu0 0.0
    %2416 = vmatprep.subr.mxu0 0.0
    %2417 = vmatpush1.msra.mxu0 0.0
    %2418 = vmatprep.subr.mxu0 0.0
    %2419 = vmatpush1.msra.mxu0 0.0
    %2420 = vmatprep.subr.mxu0 0.0
    %2421 = vmatpush1.msra.mxu0 0.0
    %2422 = vmatprep.subr.mxu0 0.0
    %2423 = vmatpush1.msra.mxu0 0.0
    %2424 = vmatprep.subr.mxu0 0.0
    %2425 = vmatpush1.msra.mxu0 0.0
    %2426 = vmatprep.subr.mxu0 0.0
    %2427 = vmatpush1.msra.mxu0 0.0
    %2428 = vmatprep.subr.mxu0 0.0
    %2429 = vmatpush1.msra.mxu0 0.0
    %2430 = vmatprep.subr.mxu0 0.0
    %2431 = vmatpush1.msra.mxu0 0.0
    %2432 = vmatprep.subr.mxu0 0.0
    %2433 = vmatpush1.msra.mxu0 0.0
    %2434 = vmatprep.subr.mxu0 0.0
    %2435 = vmatpush1.msra.mxu0 0.0
    %2436 = vmatprep.subr.mxu0 0.0
    %2437 = vmatpush1.msra.mxu0 0.0
    %2438 = vmatprep.subr.mxu0 0.0
    %2439 = vmatpush1.msra.mxu0 0.0
    %2440 = vmatprep.subr.mxu0 0.0
    %2441 = vmatpush1.msra.mxu0 0.0
    %2442 = vmatprep.subr.mxu0 0.0
    %2443 = vmatpush1.msra.mxu0 0.0
    %2444 = vmatprep.subr.mxu0 0.0
    %2445 = vmatpush1.msra.mxu0 0.0
    %2446 = vmatprep.subr.mxu0 0.0
    %2447 = vmatpush1.msra.mxu0 0.0
    %2448 = vmatprep.subr.mxu0 0.0
    %2449 = vmatpush1.msra.mxu0 0.0
    %2450 = vmatprep.subr.mxu0 0.0
    %2451 = vmatpush1.msra.mxu0 0.0
    %2452 = vmatprep.subr.mxu0 0.0
    %2453 = vmatpush1.msra.mxu0 0.0
    %2454 = vmatprep.subr.mxu0 0.0
    %2455 = vmatpush1.msra.mxu0 0.0
    %2456 = vmatprep.subr.mxu0 0.0
    %2457 = vmatpush1.msra.mxu0 0.0
    %2458 = vmatprep.subr.mxu0 0.0
    %2459 = vmatpush1.msra.mxu0 0.0
    %2460 = vmatprep.mubr.f32.mxu0 0.0
    %2461 = vmatmul.mubr.f32.gmra.mrb[0].mxu0 %v2391
    %v2462 = vpop.f32.mrb[0].mxu0
    %v2463 = vadd.f32 0.0, %v2462
    %v2464 = vpop.f32.mrb[0].mxu0
    %2465 = vmatprep.mubr.f32.mxu0 0.0
    %2466 = vmatmul.mubr.f32.gmra.mrb[0].mxu0 %v2394
    %v2467 = vpop.f32.mrb[0].mxu0
    %v2468 = vadd.f32 0.0, %v2467
    %v2469 = vpop.f32.mrb[0].mxu0
    %2470 = vdwg.mxu0
    %v2471 = vadd.f32 %v145, %v2463
    %v2472 = vadd.f32 %v150, %v2468
    %v2473 = vmul.f32 %v2471, %v2471
    %v2474 = vmul.f32 %v2472, %v2472
    %v2475 = vsel %vm158, %v2473, 0.0
    %2476 = vadd.xlane.f32.xlu0 %v2475
    %v2477 = vpop.xlane.xlu0 %2476
    %v2478 = vsel %vm158, %v2474, 0.0
    %2479 = vadd.xlane.f32.xlu0 %v2478
    %v2480 = vpop.xlane.xlu0 %2479
    %v2481 = vmul.f32 %v2477, %v165
    %v2482 = vmul.f32 %v2480, %v165
    %v2483 = vadd.f32 %v2481, 1.1920929e-07
    %v2484 = vadd.f32 %v2482, 1.1920929e-07
    %v2485 = vrsqrt.pop %v2483
    %v2486 = vrsqrt.pop %v2484
    %v2487 = vmul.f32 %v2471, %v2485
    %v2488 = vmul.f32 %v2472, %v2486
    %v2489 = vld [vmem:[%s8] sm:$0xff]
    %v2490 = vld [vmem:[%s8 + $0x8] sm:$0xff]
    %v2491 = vld [vmem:[%s8 + $0x10] sm:$0xff]
    %v2492 = vld [vmem:[%s8 + $0x18] sm:$0xff]
    %v2493 = vld [vmem:[%s9] sm:$0x1]
    %v2495 = vlaneseq
    %v2496 = vshrl.u32 %v2495, 7
    %v2497 = vsub.s32 0, %v2496
    %v2498 = vrot.slane %v2493, %v2497
    %v2501 = vsel %vm158, %v2487, 0
    %v2504 = vsel %vm158, %v2488, 0
    %2506 = vmatprep.subr.mxu0 0.0
    %2507 = vmatpush1.msra.mxu0 %v2489
    %2508 = vmatprep.subr.mxu0 0.0
    %2509 = vmatpush1.msra.mxu0 %v2490
    %2510 = vmatprep.subr.mxu0 0.0
    %2511 = vmatpush1.msra.mxu0 %v2491
    %2512 = vmatprep.subr.mxu0 0.0
    %2513 = vmatpush1.msra.mxu0 %v2492
    %2514 = vmatprep.subr.mxu0 0.0
    %2515 = vmatpush1.msra.mxu0 0.0
    %2516 = vmatprep.subr.mxu0 0.0
    %2517 = vmatpush1.msra.mxu0 0.0
    %2518 = vmatprep.subr.mxu0 0.0
    %2519 = vmatpush1.msra.mxu0 0.0
    %2520 = vmatprep.subr.mxu0 0.0
    %2521 = vmatpush1.msra.mxu0 0.0
    %2522 = vmatprep.subr.mxu0 0.0
    %2523 = vmatpush1.msra.mxu0 0.0
    %2524 = vmatprep.subr.mxu0 0.0
    %2525 = vmatpush1.msra.mxu0 0.0
    %2526 = vmatprep.subr.mxu0 0.0
    %2527 = vmatpush1.msra.mxu0 0.0
    %2528 = vmatprep.subr.mxu0 0.0
    %2529 = vmatpush1.msra.mxu0 0.0
    %2530 = vmatprep.subr.mxu0 0.0
    %2531 = vmatpush1.msra.mxu0 0.0
    %2532 = vmatprep.subr.mxu0 0.0
    %2533 = vmatpush1.msra.mxu0 0.0
    %2534 = vmatprep.subr.mxu0 0.0
    %2535 = vmatpush1.msra.mxu0 0.0
    %2536 = vmatprep.subr.mxu0 0.0
    %2537 = vmatpush1.msra.mxu0 0.0
    %2538 = vmatprep.subr.mxu0 0.0
    %2539 = vmatpush1.msra.mxu0 0.0
    %2540 = vmatprep.subr.mxu0 0.0
    %2541 = vmatpush1.msra.mxu0 0.0
    %2542 = vmatprep.subr.mxu0 0.0
    %2543 = vmatpush1.msra.mxu0 0.0
    %2544 = vmatprep.subr.mxu0 0.0
    %2545 = vmatpush1.msra.mxu0 0.0
    %2546 = vmatprep.subr.mxu0 0.0
    %2547 = vmatpush1.msra.mxu0 0.0
    %2548 = vmatprep.subr.mxu0 0.0
    %2549 = vmatpush1.msra.mxu0 0.0
    %2550 = vmatprep.subr.mxu0 0.0
    %2551 = vmatpush1.msra.mxu0 0.0
    %2552 = vmatprep.subr.mxu0 0.0
    %2553 = vmatpush1.msra.mxu0 0.0
    %2554 = vmatprep.subr.mxu0 0.0
    %2555 = vmatpush1.msra.mxu0 0.0
    %2556 = vmatprep.subr.mxu0 0.0
    %2557 = vmatpush1.msra.mxu0 0.0
    %2558 = vmatprep.subr.mxu0 0.0
    %2559 = vmatpush1.msra.mxu0 0.0
    %2560 = vmatprep.subr.mxu0 0.0
    %2561 = vmatpush1.msra.mxu0 0.0
    %2562 = vmatprep.subr.mxu0 0.0
    %2563 = vmatpush1.msra.mxu0 0.0
    %2564 = vmatprep.subr.mxu0 0.0
    %2565 = vmatpush1.msra.mxu0 0.0
    %2566 = vmatprep.subr.mxu0 0.0
    %2567 = vmatpush1.msra.mxu0 0.0
    %2568 = vmatprep.subr.mxu0 0.0
    %2569 = vmatpush1.msra.mxu0 0.0
    %2570 = vmatprep.mubr.f32.mxu0 0.0
    %2571 = vmatmul.mubr.f32.gmra.mrb[0].mxu0 %v2501
    %v2572 = vpop.f32.mrb[0].mxu0
    %v2573 = vadd.f32 %v2498, %v2572
    %v2574 = vpop.f32.mrb[0].mxu0
    %2575 = vmatprep.mubr.f32.mxu0 0.0
    %2576 = vmatmul.mubr.f32.gmra.mrb[0].mxu0 %v2504
    %v2577 = vpop.f32.mrb[0].mxu0
    %v2578 = vadd.f32 %v2498, %v2577
    %v2579 = vpop.f32.mrb[0].mxu0
    %2580 = vdwg.mxu0
    %v2581 = vsel %vm455, %v2573, -inf
    %2582 = vmax.xlane.f32.xlu0 %v2581
    %v2583 = vpop.xlane.xlu0 %2582
    %v2584 = vsel %vm455, %v2578, -inf
    %2585 = vmax.xlane.f32.xlu0 %v2584
    %v2586 = vpop.xlane.xlu0 %2585
    %vm2587 = vcmp.ge.f32.partialorder %v2573, %v2583
    %vm2588 = vcmp.ge.f32.partialorder %v2578, %v2586
    %v2589 = vsel %vm2587, -1e+30, %v2573
    %v2590 = vsel %vm2588, -1e+30, %v2578
    %v2591 = vsel %vm455, %v2589, -inf
    %2592 = vmax.xlane.f32.xlu0 %v2591
    %v2593 = vpop.xlane.xlu0 %2592
    %v2594 = vsel %vm455, %v2590, -inf
    %2595 = vmax.xlane.f32.xlu0 %v2594
    %v2596 = vpop.xlane.xlu0 %2595
    %vm2597 = vcmp.ge.f32.partialorder %v2573, %v2593
    %vm2598 = vcmp.ge.f32.partialorder %v2578, %v2596
    %v2599 = vsel %vm2597, %v2573, -1e+20
    %v2600 = vsel %vm2598, %v2578, -1e+20
    %v2601 = vsub.f32 %v2599, %v2583
    %v2602 = vsub.f32 %v2600, %v2586
    %v2603 = vmul.f32 %v2601, 1.442695
    %v2604 = vpow.pop %v2603
    %v2605 = vmul.f32 %v2602, 1.442695
    %v2606 = vpow.pop %v2605
    %v2607 = vsel %vm455, %v2604, 0.0
    %2608 = vadd.xlane.f32.xlu0 %v2607
    %v2609 = vpop.xlane.xlu0 %2608
    %v2610 = vsel %vm455, %v2606, 0.0
    %2611 = vadd.xlane.f32.xlu0 %v2610
    %v2612 = vpop.xlane.xlu0 %2611
    %v2613 = vrcp.pop %v2609
    %v2614 = vmul.f32 %v2604, %v2613
    %v2615 = vrcp.pop %v2612
    %v2616 = vmul.f32 %v2606, %v2615
    %v2617 = vld [vmem:[%s10] sm:$0xff]
    %v2618 = vld [vmem:[%s10 + $0x8] sm:$0xff]
    %v2619 = vld [vmem:[%s10 + $0x10] sm:$0xff]
    %v2620 = vld [vmem:[%s10 + $0x18] sm:$0xff]
    %v2621 = vld [vmem:[%s10 + $0x20] sm:$0xff]
    %v2622 = vld [vmem:[%s10 + $0x28] sm:$0xff]
    %v2623 = vld [vmem:[%s10 + $0x30] sm:$0xff]
    %v2624 = vld [vmem:[%s10 + $0x38] sm:$0xff]
    %v2625 = vld [vmem:[%s10 + $0x40] sm:$0xff]
    %v2626 = vld [vmem:[%s10 + $0x48] sm:$0xff]
    %v2627 = vld [vmem:[%s10 + $0x50] sm:$0xff]
    %v2628 = vld [vmem:[%s10 + $0x58] sm:$0xff]
    %v2629 = vld [vmem:[%s10 + $0x60] sm:$0xff]
    %v2630 = vld [vmem:[%s10 + $0x68] sm:$0xff]
    %v2631 = vld [vmem:[%s10 + $0x70] sm:$0xff]
    %v2632 = vld [vmem:[%s10 + $0x78] sm:$0xff]
    %v2633 = vld [vmem:[%s10 + $0x80] sm:$0xff]
    %v2634 = vld [vmem:[%s10 + $0x88] sm:$0xff]
    %v2635 = vld [vmem:[%s10 + $0x90] sm:$0xff]
    %v2636 = vld [vmem:[%s10 + $0x98] sm:$0xff]
    %v2637 = vld [vmem:[%s10 + $0xa0] sm:$0xff]
    %v2638 = vld [vmem:[%s10 + $0xa8] sm:$0xff]
    %v2639 = vld [vmem:[%s10 + $0xb0] sm:$0xff]
    %v2640 = vld [vmem:[%s10 + $0xb8] sm:$0xff]
    %v2641 = vld [vmem:[%s10 + $0xc0] sm:$0xff]
    %v2642 = vld [vmem:[%s10 + $0xc8] sm:$0xff]
    %v2643 = vld [vmem:[%s10 + $0xd0] sm:$0xff]
    %v2644 = vld [vmem:[%s10 + $0xd8] sm:$0xff]
    %v2645 = vld [vmem:[%s10 + $0xe0] sm:$0xff]
    %v2646 = vld [vmem:[%s10 + $0xe8] sm:$0xff]
    %v2647 = vld [vmem:[%s10 + $0xf0] sm:$0xff]
    %v2648 = vld [vmem:[%s10 + $0xf8] sm:$0xff]
    %v2649 = vld [vmem:[%s10 + $0x100] sm:$0xff]
    %v2650 = vld [vmem:[%s10 + $0x108] sm:$0xff]
    %v2651 = vld [vmem:[%s10 + $0x110] sm:$0xff]
    %v2652 = vld [vmem:[%s10 + $0x118] sm:$0xff]
    %2653 = vmatprep.subr.mxu0 %v2618
    %2654 = vmatpush1.msra.mxu0 %v2617
    %2655 = vmatprep.subr.mxu0 %v2627
    %2656 = vmatpush1.msra.mxu0 %v2626
    %2657 = vmatprep.subr.mxu0 %v2636
    %2658 = vmatpush1.msra.mxu0 %v2635
    %2659 = vmatprep.subr.mxu0 %v2645
    %2660 = vmatpush1.msra.mxu0 %v2644
    %2661 = vmatprep.subr.mxu0 0.0
    %2662 = vmatpush1.msra.mxu0 0.0
    %2663 = vmatprep.subr.mxu0 0.0
    %2664 = vmatpush1.msra.mxu0 0.0
    %2665 = vmatprep.subr.mxu0 0.0
    %2666 = vmatpush1.msra.mxu0 0.0
    %2667 = vmatprep.subr.mxu0 0.0
    %2668 = vmatpush1.msra.mxu0 0.0
    %2669 = vmatprep.subr.mxu0 0.0
    %2670 = vmatpush1.msra.mxu0 0.0
    %2671 = vmatprep.subr.mxu0 0.0
    %2672 = vmatpush1.msra.mxu0 0.0
    %2673 = vmatprep.subr.mxu0 0.0
    %2674 = vmatpush1.msra.mxu0 0.0
    %2675 = vmatprep.subr.mxu0 0.0
    %2676 = vmatpush1.msra.mxu0 0.0
    %2677 = vmatprep.subr.mxu0 0.0
    %2678 = vmatpush1.msra.mxu0 0.0
    %2679 = vmatprep.subr.mxu0 0.0
    %2680 = vmatpush1.msra.mxu0 0.0
    %2681 = vmatprep.subr.mxu0 0.0
    %2682 = vmatpush1.msra.mxu0 0.0
    %2683 = vmatprep.subr.mxu0 0.0
    %2684 = vmatpush1.msra.mxu0 0.0
    %2685 = vmatprep.subr.mxu0 0.0
    %2686 = vmatpush1.msra.mxu0 0.0
    %2687 = vmatprep.subr.mxu0 0.0
    %2688 = vmatpush1.msra.mxu0 0.0
    %2689 = vmatprep.subr.mxu0 0.0
    %2690 = vmatpush1.msra.mxu0 0.0
    %2691 = vmatprep.subr.mxu0 0.0
    %2692 = vmatpush1.msra.mxu0 0.0
    %2693 = vmatprep.subr.mxu0 0.0
    %2694 = vmatpush1.msra.mxu0 0.0
    %2695 = vmatprep.subr.mxu0 0.0
    %2696 = vmatpush1.msra.mxu0 0.0
    %2697 = vmatprep.subr.mxu0 0.0
    %2698 = vmatpush1.msra.mxu0 0.0
    %2699 = vmatprep.subr.mxu0 0.0
    %2700 = vmatpush1.msra.mxu0 0.0
    %2701 = vmatprep.subr.mxu0 0.0
    %2702 = vmatpush1.msra.mxu0 0.0
    %2703 = vmatprep.subr.mxu0 0.0
    %2704 = vmatpush1.msra.mxu0 0.0
    %2705 = vmatprep.subr.mxu0 0.0
    %2706 = vmatpush1.msra.mxu0 0.0
    %2707 = vmatprep.subr.mxu0 0.0
    %2708 = vmatpush1.msra.mxu0 0.0
    %2709 = vmatprep.subr.mxu0 0.0
    %2710 = vmatpush1.msra.mxu0 0.0
    %2711 = vmatprep.subr.mxu0 0.0
    %2712 = vmatpush1.msra.mxu0 0.0
    %2713 = vmatprep.subr.mxu0 0.0
    %2714 = vmatpush1.msra.mxu0 0.0
    %2715 = vmatprep.subr.mxu0 0.0
    %2716 = vmatpush1.msra.mxu0 0.0
    %2717 = vmatprep.mubr.f32.mxu0 0.0
    %2718 = vmatmul.mubr.f32.gmra.mrb[0].mxu0 %v2501
    %v2719 = vpop.f32.mrb[0].mxu0
    %v2720 = vadd.f32 0.0, %v2719
    %v2721 = vpop.f32.mrb[0].mxu0
    %v2722 = vadd.f32 0.0, %v2721
    %2723 = vmatprep.mubr.f32.mxu0 0.0
    %2724 = vmatmul.mubr.f32.gmra.mrb[0].mxu0 %v2504
    %v2725 = vpop.f32.mrb[0].mxu0
    %v2726 = vadd.f32 0.0, %v2725
    %v2727 = vpop.f32.mrb[0].mxu0
    %v2728 = vadd.f32 0.0, %v2727
    %2729 = vdwg.mxu0
    %2730 = vmatprep.subr.mxu0 %v2620
    %2731 = vmatpush1.msra.mxu0 %v2619
    %2732 = vmatprep.subr.mxu0 %v2629
    %2733 = vmatpush1.msra.mxu0 %v2628
    %2734 = vmatprep.subr.mxu0 %v2638
    %2735 = vmatpush1.msra.mxu0 %v2637
    %2736 = vmatprep.subr.mxu0 %v2647
    %2737 = vmatpush1.msra.mxu0 %v2646
    %2738 = vmatprep.subr.mxu0 0.0
    %2739 = vmatpush1.msra.mxu0 0.0
    %2740 = vmatprep.subr.mxu0 0.0
    %2741 = vmatpush1.msra.mxu0 0.0
    %2742 = vmatprep.subr.mxu0 0.0
    %2743 = vmatpush1.msra.mxu0 0.0
    %2744 = vmatprep.subr.mxu0 0.0
    %2745 = vmatpush1.msra.mxu0 0.0
    %2746 = vmatprep.subr.mxu0 0.0
    %2747 = vmatpush1.msra.mxu0 0.0
    %2748 = vmatprep.subr.mxu0 0.0
    %2749 = vmatpush1.msra.mxu0 0.0
    %2750 = vmatprep.subr.mxu0 0.0
    %2751 = vmatpush1.msra.mxu0 0.0
    %2752 = vmatprep.subr.mxu0 0.0
    %2753 = vmatpush1.msra.mxu0 0.0
    %2754 = vmatprep.subr.mxu0 0.0
    %2755 = vmatpush1.msra.mxu0 0.0
    %2756 = vmatprep.subr.mxu0 0.0
    %2757 = vmatpush1.msra.mxu0 0.0
    %2758 = vmatprep.subr.mxu0 0.0
    %2759 = vmatpush1.msra.mxu0 0.0
    %2760 = vmatprep.subr.mxu0 0.0
    %2761 = vmatpush1.msra.mxu0 0.0
    %2762 = vmatprep.subr.mxu0 0.0
    %2763 = vmatpush1.msra.mxu0 0.0
    %2764 = vmatprep.subr.mxu0 0.0
    %2765 = vmatpush1.msra.mxu0 0.0
    %2766 = vmatprep.subr.mxu0 0.0
    %2767 = vmatpush1.msra.mxu0 0.0
    %2768 = vmatprep.subr.mxu0 0.0
    %2769 = vmatpush1.msra.mxu0 0.0
    %2770 = vmatprep.subr.mxu0 0.0
    %2771 = vmatpush1.msra.mxu0 0.0
    %2772 = vmatprep.subr.mxu0 0.0
    %2773 = vmatpush1.msra.mxu0 0.0
    %2774 = vmatprep.subr.mxu0 0.0
    %2775 = vmatpush1.msra.mxu0 0.0
    %2776 = vmatprep.subr.mxu0 0.0
    %2777 = vmatpush1.msra.mxu0 0.0
    %2778 = vmatprep.subr.mxu0 0.0
    %2779 = vmatpush1.msra.mxu0 0.0
    %2780 = vmatprep.subr.mxu0 0.0
    %2781 = vmatpush1.msra.mxu0 0.0
    %2782 = vmatprep.subr.mxu0 0.0
    %2783 = vmatpush1.msra.mxu0 0.0
    %2784 = vmatprep.subr.mxu0 0.0
    %2785 = vmatpush1.msra.mxu0 0.0
    %2786 = vmatprep.subr.mxu0 0.0
    %2787 = vmatpush1.msra.mxu0 0.0
    %2788 = vmatprep.subr.mxu0 0.0
    %2789 = vmatpush1.msra.mxu0 0.0
    %2790 = vmatprep.subr.mxu0 0.0
    %2791 = vmatpush1.msra.mxu0 0.0
    %2792 = vmatprep.subr.mxu0 0.0
    %2793 = vmatpush1.msra.mxu0 0.0
    %2794 = vmatprep.mubr.f32.mxu0 0.0
    %2795 = vmatmul.mubr.f32.gmra.mrb[0].mxu0 %v2501
    %v2796 = vpop.f32.mrb[0].mxu0
    %v2797 = vadd.f32 0.0, %v2796
    %v2798 = vpop.f32.mrb[0].mxu0
    %v2799 = vadd.f32 0.0, %v2798
    %2800 = vmatprep.mubr.f32.mxu0 0.0
    %2801 = vmatmul.mubr.f32.gmra.mrb[0].mxu0 %v2504
    %v2802 = vpop.f32.mrb[0].mxu0
    %v2803 = vadd.f32 0.0, %v2802
    %v2804 = vpop.f32.mrb[0].mxu0
    %v2805 = vadd.f32 0.0, %v2804
    %2806 = vdwg.mxu0
    %2807 = vmatprep.subr.mxu0 %v2622
    %2808 = vmatpush1.msra.mxu0 %v2621
    %2809 = vmatprep.subr.mxu0 %v2631
    %2810 = vmatpush1.msra.mxu0 %v2630
    %2811 = vmatprep.subr.mxu0 %v2640
    %2812 = vmatpush1.msra.mxu0 %v2639
    %2813 = vmatprep.subr.mxu0 %v2649
    %2814 = vmatpush1.msra.mxu0 %v2648
    %2815 = vmatprep.subr.mxu0 0.0
    %2816 = vmatpush1.msra.mxu0 0.0
    %2817 = vmatprep.subr.mxu0 0.0
    %2818 = vmatpush1.msra.mxu0 0.0
    %2819 = vmatprep.subr.mxu0 0.0
    %2820 = vmatpush1.msra.mxu0 0.0
    %2821 = vmatprep.subr.mxu0 0.0
    %2822 = vmatpush1.msra.mxu0 0.0
    %2823 = vmatprep.subr.mxu0 0.0
    %2824 = vmatpush1.msra.mxu0 0.0
    %2825 = vmatprep.subr.mxu0 0.0
    %2826 = vmatpush1.msra.mxu0 0.0
    %2827 = vmatprep.subr.mxu0 0.0
    %2828 = vmatpush1.msra.mxu0 0.0
    %2829 = vmatprep.subr.mxu0 0.0
    %2830 = vmatpush1.msra.mxu0 0.0
    %2831 = vmatprep.subr.mxu0 0.0
    %2832 = vmatpush1.msra.mxu0 0.0
    %2833 = vmatprep.subr.mxu0 0.0
    %2834 = vmatpush1.msra.mxu0 0.0
    %2835 = vmatprep.subr.mxu0 0.0
    %2836 = vmatpush1.msra.mxu0 0.0
    %2837 = vmatprep.subr.mxu0 0.0
    %2838 = vmatpush1.msra.mxu0 0.0
    %2839 = vmatprep.subr.mxu0 0.0
    %2840 = vmatpush1.msra.mxu0 0.0
    %2841 = vmatprep.subr.mxu0 0.0
    %2842 = vmatpush1.msra.mxu0 0.0
    %2843 = vmatprep.subr.mxu0 0.0
    %2844 = vmatpush1.msra.mxu0 0.0
    %2845 = vmatprep.subr.mxu0 0.0
    %2846 = vmatpush1.msra.mxu0 0.0
    %2847 = vmatprep.subr.mxu0 0.0
    %2848 = vmatpush1.msra.mxu0 0.0
    %2849 = vmatprep.subr.mxu0 0.0
    %2850 = vmatpush1.msra.mxu0 0.0
    %2851 = vmatprep.subr.mxu0 0.0
    %2852 = vmatpush1.msra.mxu0 0.0
    %2853 = vmatprep.subr.mxu0 0.0
    %2854 = vmatpush1.msra.mxu0 0.0
    %2855 = vmatprep.subr.mxu0 0.0
    %2856 = vmatpush1.msra.mxu0 0.0
    %2857 = vmatprep.subr.mxu0 0.0
    %2858 = vmatpush1.msra.mxu0 0.0
    %2859 = vmatprep.subr.mxu0 0.0
    %2860 = vmatpush1.msra.mxu0 0.0
    %2861 = vmatprep.subr.mxu0 0.0
    %2862 = vmatpush1.msra.mxu0 0.0
    %2863 = vmatprep.subr.mxu0 0.0
    %2864 = vmatpush1.msra.mxu0 0.0
    %2865 = vmatprep.subr.mxu0 0.0
    %2866 = vmatpush1.msra.mxu0 0.0
    %2867 = vmatprep.subr.mxu0 0.0
    %2868 = vmatpush1.msra.mxu0 0.0
    %2869 = vmatprep.subr.mxu0 0.0
    %2870 = vmatpush1.msra.mxu0 0.0
    %2871 = vmatprep.mubr.f32.mxu0 0.0
    %2872 = vmatmul.mubr.f32.gmra.mrb[0].mxu0 %v2501
    %v2873 = vpop.f32.mrb[0].mxu0
    %v2874 = vadd.f32 0.0, %v2873
    %v2875 = vpop.f32.mrb[0].mxu0
    %v2876 = vadd.f32 0.0, %v2875
    %2877 = vmatprep.mubr.f32.mxu0 0.0
    %2878 = vmatmul.mubr.f32.gmra.mrb[0].mxu0 %v2504
    %v2879 = vpop.f32.mrb[0].mxu0
    %v2880 = vadd.f32 0.0, %v2879
    %v2881 = vpop.f32.mrb[0].mxu0
    %v2882 = vadd.f32 0.0, %v2881
    %2883 = vdwg.mxu0
    %2884 = vmatprep.subr.mxu0 %v2624
    %2885 = vmatpush1.msra.mxu0 %v2623
    %2886 = vmatprep.subr.mxu0 %v2633
    %2887 = vmatpush1.msra.mxu0 %v2632
    %2888 = vmatprep.subr.mxu0 %v2642
    %2889 = vmatpush1.msra.mxu0 %v2641
    %2890 = vmatprep.subr.mxu0 %v2651
    %2891 = vmatpush1.msra.mxu0 %v2650
    %2892 = vmatprep.subr.mxu0 0.0
    %2893 = vmatpush1.msra.mxu0 0.0
    %2894 = vmatprep.subr.mxu0 0.0
    %2895 = vmatpush1.msra.mxu0 0.0
    %2896 = vmatprep.subr.mxu0 0.0
    %2897 = vmatpush1.msra.mxu0 0.0
    %2898 = vmatprep.subr.mxu0 0.0
    %2899 = vmatpush1.msra.mxu0 0.0
    %2900 = vmatprep.subr.mxu0 0.0
    %2901 = vmatpush1.msra.mxu0 0.0
    %2902 = vmatprep.subr.mxu0 0.0
    %2903 = vmatpush1.msra.mxu0 0.0
    %2904 = vmatprep.subr.mxu0 0.0
    %2905 = vmatpush1.msra.mxu0 0.0
    %2906 = vmatprep.subr.mxu0 0.0
    %2907 = vmatpush1.msra.mxu0 0.0
    %2908 = vmatprep.subr.mxu0 0.0
    %2909 = vmatpush1.msra.mxu0 0.0
    %2910 = vmatprep.subr.mxu0 0.0
    %2911 = vmatpush1.msra.mxu0 0.0
    %2912 = vmatprep.subr.mxu0 0.0
    %2913 = vmatpush1.msra.mxu0 0.0
    %2914 = vmatprep.subr.mxu0 0.0
    %2915 = vmatpush1.msra.mxu0 0.0
    %2916 = vmatprep.subr.mxu0 0.0
    %2917 = vmatpush1.msra.mxu0 0.0
    %2918 = vmatprep.subr.mxu0 0.0
    %2919 = vmatpush1.msra.mxu0 0.0
    %2920 = vmatprep.subr.mxu0 0.0
    %2921 = vmatpush1.msra.mxu0 0.0
    %2922 = vmatprep.subr.mxu0 0.0
    %2923 = vmatpush1.msra.mxu0 0.0
    %2924 = vmatprep.subr.mxu0 0.0
    %2925 = vmatpush1.msra.mxu0 0.0
    %2926 = vmatprep.subr.mxu0 0.0
    %2927 = vmatpush1.msra.mxu0 0.0
    %2928 = vmatprep.subr.mxu0 0.0
    %2929 = vmatpush1.msra.mxu0 0.0
    %2930 = vmatprep.subr.mxu0 0.0
    %2931 = vmatpush1.msra.mxu0 0.0
    %2932 = vmatprep.subr.mxu0 0.0
    %2933 = vmatpush1.msra.mxu0 0.0
    %2934 = vmatprep.subr.mxu0 0.0
    %2935 = vmatpush1.msra.mxu0 0.0
    %2936 = vmatprep.subr.mxu0 0.0
    %2937 = vmatpush1.msra.mxu0 0.0
    %2938 = vmatprep.subr.mxu0 0.0
    %2939 = vmatpush1.msra.mxu0 0.0
    %2940 = vmatprep.subr.mxu0 0.0
    %2941 = vmatpush1.msra.mxu0 0.0
    %2942 = vmatprep.subr.mxu0 0.0
    %2943 = vmatpush1.msra.mxu0 0.0
    %2944 = vmatprep.subr.mxu0 0.0
    %2945 = vmatpush1.msra.mxu0 0.0
    %2946 = vmatprep.subr.mxu0 0.0
    %2947 = vmatpush1.msra.mxu0 0.0
    %2948 = vmatprep.mubr.f32.mxu0 0.0
    %2949 = vmatmul.mubr.f32.gmra.mrb[0].mxu0 %v2501
    %v2950 = vpop.f32.mrb[0].mxu0
    %v2951 = vadd.f32 0.0, %v2950
    %v2952 = vpop.f32.mrb[0].mxu0
    %v2953 = vadd.f32 0.0, %v2952
    %2954 = vmatprep.mubr.f32.mxu0 0.0
    %2955 = vmatmul.mubr.f32.gmra.mrb[0].mxu0 %v2504
    %v2956 = vpop.f32.mrb[0].mxu0
    %v2957 = vadd.f32 0.0, %v2956
    %v2958 = vpop.f32.mrb[0].mxu0
    %v2959 = vadd.f32 0.0, %v2958
    %2960 = vdwg.mxu0
    %2961 = vmatprep.subr.mxu0 0.0
    %2962 = vmatpush1.msra.mxu0 %v2625
    %2963 = vmatprep.subr.mxu0 0.0
    %2964 = vmatpush1.msra.mxu0 %v2634
    %2965 = vmatprep.subr.mxu0 0.0
    %2966 = vmatpush1.msra.mxu0 %v2643
    %2967 = vmatprep.subr.mxu0 0.0
    %2968 = vmatpush1.msra.mxu0 %v2652
    %2969 = vmatprep.subr.mxu0 0.0
    %2970 = vmatpush1.msra.mxu0 0.0
    %2971 = vmatprep.subr.mxu0 0.0
    %2972 = vmatpush1.msra.mxu0 0.0
    %2973 = vmatprep.subr.mxu0 0.0
    %2974 = vmatpush1.msra.mxu0 0.0
    %2975 = vmatprep.subr.mxu0 0.0
    %2976 = vmatpush1.msra.mxu0 0.0
    %2977 = vmatprep.subr.mxu0 0.0
    %2978 = vmatpush1.msra.mxu0 0.0
    %2979 = vmatprep.subr.mxu0 0.0
    %2980 = vmatpush1.msra.mxu0 0.0
    %2981 = vmatprep.subr.mxu0 0.0
    %2982 = vmatpush1.msra.mxu0 0.0
    %2983 = vmatprep.subr.mxu0 0.0
    %2984 = vmatpush1.msra.mxu0 0.0
    %2985 = vmatprep.subr.mxu0 0.0
    %2986 = vmatpush1.msra.mxu0 0.0
    %2987 = vmatprep.subr.mxu0 0.0
    %2988 = vmatpush1.msra.mxu0 0.0
    %2989 = vmatprep.subr.mxu0 0.0
    %2990 = vmatpush1.msra.mxu0 0.0
    %2991 = vmatprep.subr.mxu0 0.0
    %2992 = vmatpush1.msra.mxu0 0.0
    %2993 = vmatprep.subr.mxu0 0.0
    %2994 = vmatpush1.msra.mxu0 0.0
    %2995 = vmatprep.subr.mxu0 0.0
    %2996 = vmatpush1.msra.mxu0 0.0
    %2997 = vmatprep.subr.mxu0 0.0
    %2998 = vmatpush1.msra.mxu0 0.0
    %2999 = vmatprep.subr.mxu0 0.0
    %3000 = vmatpush1.msra.mxu0 0.0
    %3001 = vmatprep.subr.mxu0 0.0
    %3002 = vmatpush1.msra.mxu0 0.0
    %3003 = vmatprep.subr.mxu0 0.0
    %3004 = vmatpush1.msra.mxu0 0.0
    %3005 = vmatprep.subr.mxu0 0.0
    %3006 = vmatpush1.msra.mxu0 0.0
    %3007 = vmatprep.subr.mxu0 0.0
    %3008 = vmatpush1.msra.mxu0 0.0
    %3009 = vmatprep.subr.mxu0 0.0
    %3010 = vmatpush1.msra.mxu0 0.0
    %3011 = vmatprep.subr.mxu0 0.0
    %3012 = vmatpush1.msra.mxu0 0.0
    %3013 = vmatprep.subr.mxu0 0.0
    %3014 = vmatpush1.msra.mxu0 0.0
    %3015 = vmatprep.subr.mxu0 0.0
    %3016 = vmatpush1.msra.mxu0 0.0
    %3017 = vmatprep.subr.mxu0 0.0
    %3018 = vmatpush1.msra.mxu0 0.0
    %3019 = vmatprep.subr.mxu0 0.0
    %3020 = vmatpush1.msra.mxu0 0.0
    %3021 = vmatprep.subr.mxu0 0.0
    %3022 = vmatpush1.msra.mxu0 0.0
    %3023 = vmatprep.subr.mxu0 0.0
    %3024 = vmatpush1.msra.mxu0 0.0
    %3025 = vmatprep.mubr.f32.mxu0 0.0
    %3026 = vmatmul.mubr.f32.gmra.mrb[0].mxu0 %v2501
    %v3027 = vpop.f32.mrb[0].mxu0
    %v3028 = vadd.f32 0.0, %v3027
    %v3029 = vpop.f32.mrb[0].mxu0
    %3030 = vmatprep.mubr.f32.mxu0 0.0
    %3031 = vmatmul.mubr.f32.gmra.mrb[0].mxu0 %v2504
    %v3032 = vpop.f32.mrb[0].mxu0
    %v3033 = vadd.f32 0.0, %v3032
    %v3034 = vpop.f32.mrb[0].mxu0
    %3035 = vdwg.mxu0
    %v3036 = vxor.u32 %v2720, 2147483648
    %v3037 = vxor.u32 %v2722, 2147483648
    %v3038 = vxor.u32 %v2797, 2147483648
    %v3039 = vxor.u32 %v2799, 2147483648
    %v3040 = vxor.u32 %v2874, 2147483648
    %v3041 = vxor.u32 %v2726, 2147483648
    %v3042 = vxor.u32 %v2728, 2147483648
    %v3043 = vxor.u32 %v2803, 2147483648
    %v3044 = vxor.u32 %v2805, 2147483648
    %v3045 = vxor.u32 %v2880, 2147483648
    %v3046 = vmul.f32 %v3036, 1.442695
    %v3047 = vpow.pop %v3046
    %v3048 = vmul.f32 %v3037, 1.442695
    %v3049 = vpow.pop %v3048
    %v3050 = vmul.f32 %v3038, 1.442695
    %v3051 = vpow.pop %v3050
    %v3052 = vmul.f32 %v3039, 1.442695
    %v3053 = vpow.pop %v3052
    %v3054 = vmul.f32 %v3040, 1.442695
    %v3055 = vpow.pop %v3054
    %v3056 = vmul.f32 %v3041, 1.442695
    %v3057 = vpow.pop %v3056
    %v3058 = vmul.f32 %v3042, 1.442695
    %v3059 = vpow.pop %v3058
    %v3060 = vmul.f32 %v3043, 1.442695
    %v3061 = vpow.pop %v3060
    %v3062 = vmul.f32 %v3044, 1.442695
    %v3063 = vpow.pop %v3062
    %v3064 = vmul.f32 %v3045, 1.442695
    %v3065 = vpow.pop %v3064
    %v3066 = vadd.f32 %v3047, 1.0
    %v3067 = vadd.f32 %v3049, 1.0
    %v3068 = vadd.f32 %v3051, 1.0
    %v3069 = vadd.f32 %v3053, 1.0
    %v3070 = vadd.f32 %v3055, 1.0
    %v3071 = vadd.f32 %v3057, 1.0
    %v3072 = vadd.f32 %v3059, 1.0
    %v3073 = vadd.f32 %v3061, 1.0
    %v3074 = vadd.f32 %v3063, 1.0
    %v3075 = vadd.f32 %v3065, 1.0
    %v3076 = vrcp.pop %v3066
    %v3077 = vmul.f32 1.0, %v3076
    %v3078 = vrcp.pop %v3067
    %v3079 = vmul.f32 1.0, %v3078
    %v3080 = vrcp.pop %v3068
    %v3081 = vmul.f32 1.0, %v3080
    %v3082 = vrcp.pop %v3069
    %v3083 = vmul.f32 1.0, %v3082
    %v3084 = vrcp.pop %v3070
    %v3085 = vmul.f32 1.0, %v3084
    %v3086 = vrcp.pop %v3071
    %v3087 = vmul.f32 1.0, %v3086
    %v3088 = vrcp.pop %v3072
    %v3089 = vmul.f32 1.0, %v3088
    %v3090 = vrcp.pop %v3073
    %v3091 = vmul.f32 1.0, %v3090
    %v3092 = vrcp.pop %v3074
    %v3093 = vmul.f32 1.0, %v3092
    %v3094 = vrcp.pop %v3075
    %v3095 = vmul.f32 1.0, %v3094
    %v3096 = vmul.f32 %v2720, %v3077
    %v3097 = vmul.f32 %v2722, %v3079
    %v3098 = vmul.f32 %v2797, %v3081
    %v3099 = vmul.f32 %v2799, %v3083
    %v3100 = vmul.f32 %v2874, %v3085
    %v3101 = vmul.f32 %v2726, %v3087
    %v3102 = vmul.f32 %v2728, %v3089
    %v3103 = vmul.f32 %v2803, %v3091
    %v3104 = vmul.f32 %v2805, %v3093
    %v3105 = vmul.f32 %v2880, %v3095
    %3116 = vrot.lane.b32.xlu0 %v2874, 64
    %v3117 = vpop.permute.xlu0 %3116
    %3118 = vrot.lane.b32.xlu0 %v2876, 64
    %v3119 = vpop.permute.xlu0 %3118
    %3120 = vrot.lane.b32.xlu0 %v2951, 64
    %v3121 = vpop.permute.xlu0 %3120
    %3122 = vrot.lane.b32.xlu0 %v2953, 64
    %v3123 = vpop.permute.xlu0 %3122
    %3124 = vrot.lane.b32.xlu0 %v3028, 64
    %v3125 = vpop.permute.xlu0 %3124
    %3126 = vrot.lane.b32.xlu0 %v2880, 64
    %v3127 = vpop.permute.xlu0 %3126
    %3128 = vrot.lane.b32.xlu0 %v2882, 64
    %v3129 = vpop.permute.xlu0 %3128
    %3130 = vrot.lane.b32.xlu0 %v2957, 64
    %v3131 = vpop.permute.xlu0 %3130
    %3132 = vrot.lane.b32.xlu0 %v2959, 64
    %v3133 = vpop.permute.xlu0 %3132
    %3134 = vrot.lane.b32.xlu0 %v3033, 64
    %v3135 = vpop.permute.xlu0 %3134
    %v3136 = vsel %vm71, %v3117, %v3119
    %v3137 = vsel %vm71, %v3119, %v3121
    %v3138 = vsel %vm71, %v3121, %v3123
    %v3139 = vsel %vm71, %v3123, %v3125
    %v3140 = vsel %vm71, %v3127, %v3129
    %v3141 = vsel %vm71, %v3129, %v3131
    %v3142 = vsel %vm71, %v3131, %v3133
    %v3143 = vsel %vm71, %v3133, %v3135
    %v3154 = vmul.f32 %v3096, %v3136
    %v3155 = vmul.f32 %v3097, %v3137
    %v3156 = vmul.f32 %v3098, %v3138
    %v3157 = vmul.f32 %v3099, %v3139
    %v3158 = vmul.f32 %v3100, %v3125
    %v3159 = vmul.f32 %v3101, %v3140
    %v3160 = vmul.f32 %v3102, %v3141
    %v3161 = vmul.f32 %v3103, %v3142
    %v3162 = vmul.f32 %v3104, %v3143
    %v3163 = vmul.f32 %v3105, %v3135
    %v3164 = vld [vmem:[%s12] sm:$0xff]
    %v3165 = vld [vmem:[%s12 + $0x8] sm:$0xff]
    %v3166 = vld [vmem:[%s12 + $0x10] sm:$0xff]
    %v3167 = vld [vmem:[%s12 + $0x18] sm:$0xff]
    %v3168 = vld [vmem:[%s12 + $0x20] sm:$0xff]
    %v3169 = vld [vmem:[%s12 + $0x28] sm:$0x1]
    %v3170 = vld [vmem:[%s12 + $0x30] sm:$0x1]
    %v3171 = vld [vmem:[%s12 + $0x38] sm:$0x1]
    %v3172 = vld [vmem:[%s12 + $0x40] sm:$0x1]
    %v3173 = vld [vmem:[%s12 + $0x48] sm:$0x1]
    %v3174 = vlaneseq
    %v3175 = vshrl.u32 %v3174, 7
    %v3176 = vsub.s32 0, %v3175
    %v3177 = vrot.slane %v3169, %v3176
    %v3178 = vlaneseq
    %v3179 = vshrl.u32 %v3178, 7
    %v3180 = vsub.s32 0, %v3179
    %v3181 = vrot.slane %v3170, %v3180
    %v3182 = vlaneseq
    %v3183 = vshrl.u32 %v3182, 7
    %v3184 = vsub.s32 0, %v3183
    %v3185 = vrot.slane %v3171, %v3184
    %v3186 = vlaneseq
    %v3187 = vshrl.u32 %v3186, 7
    %v3188 = vsub.s32 0, %v3187
    %v3189 = vrot.slane %v3172, %v3188
    %v3190 = vlaneseq
    %v3191 = vshrl.u32 %v3190, 7
    %v3192 = vsub.s32 0, %v3191
    %v3193 = vrot.slane %v3173, %v3192
    %v3195 = vsel %vm455, %v2614, 0
    %v3198 = vsel %vm455, %v2616, 0
    %3200 = vmatprep.subr.mxu0 %v3165
    %3201 = vmatpush1.msra.mxu0 %v3164
    %3202 = vmatprep.subr.mxu0 0.0
    %3203 = vmatpush1.msra.mxu0 0.0
    %3204 = vmatprep.subr.mxu0 0.0
    %3205 = vmatpush1.msra.mxu0 0.0
    %3206 = vmatprep.subr.mxu0 0.0
    %3207 = vmatpush1.msra.mxu0 0.0
    %3208 = vmatprep.subr.mxu0 0.0
    %3209 = vmatpush1.msra.mxu0 0.0
    %3210 = vmatprep.subr.mxu0 0.0
    %3211 = vmatpush1.msra.mxu0 0.0
    %3212 = vmatprep.subr.mxu0 0.0
    %3213 = vmatpush1.msra.mxu0 0.0
    %3214 = vmatprep.subr.mxu0 0.0
    %3215 = vmatpush1.msra.mxu0 0.0
    %3216 = vmatprep.subr.mxu0 0.0
    %3217 = vmatpush1.msra.mxu0 0.0
    %3218 = vmatprep.subr.mxu0 0.0
    %3219 = vmatpush1.msra.mxu0 0.0
    %3220 = vmatprep.subr.mxu0 0.0
    %3221 = vmatpush1.msra.mxu0 0.0
    %3222 = vmatprep.subr.mxu0 0.0
    %3223 = vmatpush1.msra.mxu0 0.0
    %3224 = vmatprep.subr.mxu0 0.0
    %3225 = vmatpush1.msra.mxu0 0.0
    %3226 = vmatprep.subr.mxu0 0.0
    %3227 = vmatpush1.msra.mxu0 0.0
    %3228 = vmatprep.subr.mxu0 0.0
    %3229 = vmatpush1.msra.mxu0 0.0
    %3230 = vmatprep.subr.mxu0 0.0
    %3231 = vmatpush1.msra.mxu0 0.0
    %3232 = vmatprep.subr.mxu0 0.0
    %3233 = vmatpush1.msra.mxu0 0.0
    %3234 = vmatprep.subr.mxu0 0.0
    %3235 = vmatpush1.msra.mxu0 0.0
    %3236 = vmatprep.subr.mxu0 0.0
    %3237 = vmatpush1.msra.mxu0 0.0
    %3238 = vmatprep.subr.mxu0 0.0
    %3239 = vmatpush1.msra.mxu0 0.0
    %3240 = vmatprep.subr.mxu0 0.0
    %3241 = vmatpush1.msra.mxu0 0.0
    %3242 = vmatprep.subr.mxu0 0.0
    %3243 = vmatpush1.msra.mxu0 0.0
    %3244 = vmatprep.subr.mxu0 0.0
    %3245 = vmatpush1.msra.mxu0 0.0
    %3246 = vmatprep.subr.mxu0 0.0
    %3247 = vmatpush1.msra.mxu0 0.0
    %3248 = vmatprep.subr.mxu0 0.0
    %3249 = vmatpush1.msra.mxu0 0.0
    %3250 = vmatprep.subr.mxu0 0.0
    %3251 = vmatpush1.msra.mxu0 0.0
    %3252 = vmatprep.subr.mxu0 0.0
    %3253 = vmatpush1.msra.mxu0 0.0
    %3254 = vmatprep.subr.mxu0 0.0
    %3255 = vmatpush1.msra.mxu0 0.0
    %3256 = vmatprep.subr.mxu0 0.0
    %3257 = vmatpush1.msra.mxu0 0.0
    %3258 = vmatprep.subr.mxu0 0.0
    %3259 = vmatpush1.msra.mxu0 0.0
    %3260 = vmatprep.subr.mxu0 0.0
    %3261 = vmatpush1.msra.mxu0 0.0
    %3262 = vmatprep.subr.mxu0 0.0
    %3263 = vmatpush1.msra.mxu0 0.0
    %3264 = vmatprep.mubr.f32.mxu0 0.0
    %3265 = vmatmul.mubr.f32.gmra.mrb[0].mxu0 %v3195
    %v3266 = vpop.f32.mrb[0].mxu0
    %v3267 = vadd.f32 %v3177, %v3266
    %v3268 = vpop.f32.mrb[0].mxu0
    %v3269 = vadd.f32 %v3181, %v3268
    %3270 = vmatprep.mubr.f32.mxu0 0.0
    %3271 = vmatmul.mubr.f32.gmra.mrb[0].mxu0 %v3198
    %v3272 = vpop.f32.mrb[0].mxu0
    %v3273 = vadd.f32 %v3177, %v3272
    %v3274 = vpop.f32.mrb[0].mxu0
    %v3275 = vadd.f32 %v3181, %v3274
    %3276 = vdwg.mxu0
    %3277 = vmatprep.subr.mxu0 %v3167
    %3278 = vmatpush1.msra.mxu0 %v3166
    %3279 = vmatprep.subr.mxu0 0.0
    %3280 = vmatpush1.msra.mxu0 0.0
    %3281 = vmatprep.subr.mxu0 0.0
    %3282 = vmatpush1.msra.mxu0 0.0
    %3283 = vmatprep.subr.mxu0 0.0
    %3284 = vmatpush1.msra.mxu0 0.0
    %3285 = vmatprep.subr.mxu0 0.0
    %3286 = vmatpush1.msra.mxu0 0.0
    %3287 = vmatprep.subr.mxu0 0.0
    %3288 = vmatpush1.msra.mxu0 0.0
    %3289 = vmatprep.subr.mxu0 0.0
    %3290 = vmatpush1.msra.mxu0 0.0
    %3291 = vmatprep.subr.mxu0 0.0
    %3292 = vmatpush1.msra.mxu0 0.0
    %3293 = vmatprep.subr.mxu0 0.0
    %3294 = vmatpush1.msra.mxu0 0.0
    %3295 = vmatprep.subr.mxu0 0.0
    %3296 = vmatpush1.msra.mxu0 0.0
    %3297 = vmatprep.subr.mxu0 0.0
    %3298 = vmatpush1.msra.mxu0 0.0
    %3299 = vmatprep.subr.mxu0 0.0
    %3300 = vmatpush1.msra.mxu0 0.0
    %3301 = vmatprep.subr.mxu0 0.0
    %3302 = vmatpush1.msra.mxu0 0.0
    %3303 = vmatprep.subr.mxu0 0.0
    %3304 = vmatpush1.msra.mxu0 0.0
    %3305 = vmatprep.subr.mxu0 0.0
    %3306 = vmatpush1.msra.mxu0 0.0
    %3307 = vmatprep.subr.mxu0 0.0
    %3308 = vmatpush1.msra.mxu0 0.0
    %3309 = vmatprep.subr.mxu0 0.0
    %3310 = vmatpush1.msra.mxu0 0.0
    %3311 = vmatprep.subr.mxu0 0.0
    %3312 = vmatpush1.msra.mxu0 0.0
    %3313 = vmatprep.subr.mxu0 0.0
    %3314 = vmatpush1.msra.mxu0 0.0
    %3315 = vmatprep.subr.mxu0 0.0
    %3316 = vmatpush1.msra.mxu0 0.0
    %3317 = vmatprep.subr.mxu0 0.0
    %3318 = vmatpush1.msra.mxu0 0.0
    %3319 = vmatprep.subr.mxu0 0.0
    %3320 = vmatpush1.msra.mxu0 0.0
    %3321 = vmatprep.subr.mxu0 0.0
    %3322 = vmatpush1.msra.mxu0 0.0
    %3323 = vmatprep.subr.mxu0 0.0
    %3324 = vmatpush1.msra.mxu0 0.0
    %3325 = vmatprep.subr.mxu0 0.0
    %3326 = vmatpush1.msra.mxu0 0.0
    %3327 = vmatprep.subr.mxu0 0.0
    %3328 = vmatpush1.msra.mxu0 0.0
    %3329 = vmatprep.subr.mxu0 0.0
    %3330 = vmatpush1.msra.mxu0 0.0
    %3331 = vmatprep.subr.mxu0 0.0
    %3332 = vmatpush1.msra.mxu0 0.0
    %3333 = vmatprep.subr.mxu0 0.0
    %3334 = vmatpush1.msra.mxu0 0.0
    %3335 = vmatprep.subr.mxu0 0.0
    %3336 = vmatpush1.msra.mxu0 0.0
    %3337 = vmatprep.subr.mxu0 0.0
    %3338 = vmatpush1.msra.mxu0 0.0
    %3339 = vmatprep.subr.mxu0 0.0
    %3340 = vmatpush1.msra.mxu0 0.0
    %3341 = vmatprep.mubr.f32.mxu0 0.0
    %3342 = vmatmul.mubr.f32.gmra.mrb[0].mxu0 %v3195
    %v3343 = vpop.f32.mrb[0].mxu0
    %v3344 = vadd.f32 %v3185, %v3343
    %v3345 = vpop.f32.mrb[0].mxu0
    %v3346 = vadd.f32 %v3189, %v3345
    %3347 = vmatprep.mubr.f32.mxu0 0.0
    %3348 = vmatmul.mubr.f32.gmra.mrb[0].mxu0 %v3198
    %v3349 = vpop.f32.mrb[0].mxu0
    %v3350 = vadd.f32 %v3185, %v3349
    %v3351 = vpop.f32.mrb[0].mxu0
    %v3352 = vadd.f32 %v3189, %v3351
    %3353 = vdwg.mxu0
    %3354 = vmatprep.subr.mxu0 0.0
    %3355 = vmatpush1.msra.mxu0 %v3168
    %3356 = vmatprep.subr.mxu0 0.0
    %3357 = vmatpush1.msra.mxu0 0.0
    %3358 = vmatprep.subr.mxu0 0.0
    %3359 = vmatpush1.msra.mxu0 0.0
    %3360 = vmatprep.subr.mxu0 0.0
    %3361 = vmatpush1.msra.mxu0 0.0
    %3362 = vmatprep.subr.mxu0 0.0
    %3363 = vmatpush1.msra.mxu0 0.0
    %3364 = vmatprep.subr.mxu0 0.0
    %3365 = vmatpush1.msra.mxu0 0.0
    %3366 = vmatprep.subr.mxu0 0.0
    %3367 = vmatpush1.msra.mxu0 0.0
    %3368 = vmatprep.subr.mxu0 0.0
    %3369 = vmatpush1.msra.mxu0 0.0
    %3370 = vmatprep.subr.mxu0 0.0
    %3371 = vmatpush1.msra.mxu0 0.0
    %3372 = vmatprep.subr.mxu0 0.0
    %3373 = vmatpush1.msra.mxu0 0.0
    %3374 = vmatprep.subr.mxu0 0.0
    %3375 = vmatpush1.msra.mxu0 0.0
    %3376 = vmatprep.subr.mxu0 0.0
    %3377 = vmatpush1.msra.mxu0 0.0
    %3378 = vmatprep.subr.mxu0 0.0
    %3379 = vmatpush1.msra.mxu0 0.0
    %3380 = vmatprep.subr.mxu0 0.0
    %3381 = vmatpush1.msra.mxu0 0.0
    %3382 = vmatprep.subr.mxu0 0.0
    %3383 = vmatpush1.msra.mxu0 0.0
    %3384 = vmatprep.subr.mxu0 0.0
    %3385 = vmatpush1.msra.mxu0 0.0
    %3386 = vmatprep.subr.mxu0 0.0
    %3387 = vmatpush1.msra.mxu0 0.0
    %3388 = vmatprep.subr.mxu0 0.0
    %3389 = vmatpush1.msra.mxu0 0.0
    %3390 = vmatprep.subr.mxu0 0.0
    %3391 = vmatpush1.msra.mxu0 0.0
    %3392 = vmatprep.subr.mxu0 0.0
    %3393 = vmatpush1.msra.mxu0 0.0
    %3394 = vmatprep.subr.mxu0 0.0
    %3395 = vmatpush1.msra.mxu0 0.0
    %3396 = vmatprep.subr.mxu0 0.0
    %3397 = vmatpush1.msra.mxu0 0.0
    %3398 = vmatprep.subr.mxu0 0.0
    %3399 = vmatpush1.msra.mxu0 0.0
    %3400 = vmatprep.subr.mxu0 0.0
    %3401 = vmatpush1.msra.mxu0 0.0
    %3402 = vmatprep.subr.mxu0 0.0
    %3403 = vmatpush1.msra.mxu0 0.0
    %3404 = vmatprep.subr.mxu0 0.0
    %3405 = vmatpush1.msra.mxu0 0.0
    %3406 = vmatprep.subr.mxu0 0.0
    %3407 = vmatpush1.msra.mxu0 0.0
    %3408 = vmatprep.subr.mxu0 0.0
    %3409 = vmatpush1.msra.mxu0 0.0
    %3410 = vmatprep.subr.mxu0 0.0
    %3411 = vmatpush1.msra.mxu0 0.0
    %3412 = vmatprep.subr.mxu0 0.0
    %3413 = vmatpush1.msra.mxu0 0.0
    %3414 = vmatprep.subr.mxu0 0.0
    %3415 = vmatpush1.msra.mxu0 0.0
    %3416 = vmatprep.subr.mxu0 0.0
    %3417 = vmatpush1.msra.mxu0 0.0
    %3418 = vmatprep.mubr.f32.mxu0 0.0
    %3419 = vmatmul.mubr.f32.gmra.mrb[0].mxu0 %v3195
    %v3420 = vpop.f32.mrb[0].mxu0
    %v3421 = vadd.f32 %v3193, %v3420
    %v3422 = vpop.f32.mrb[0].mxu0
    %3423 = vmatprep.mubr.f32.mxu0 0.0
    %3424 = vmatmul.mubr.f32.gmra.mrb[0].mxu0 %v3198
    %v3425 = vpop.f32.mrb[0].mxu0
    %v3426 = vadd.f32 %v3193, %v3425
    %v3427 = vpop.f32.mrb[0].mxu0
    %3428 = vdwg.mxu0
    %v3429 = vmul.f32 %v3154, %v3267
    %v3430 = vmul.f32 %v3155, %v3269
    %v3431 = vmul.f32 %v3156, %v3344
    %v3432 = vmul.f32 %v3157, %v3346
    %v3433 = vmul.f32 %v3158, %v3421
    %v3434 = vmul.f32 %v3159, %v3273
    %v3435 = vmul.f32 %v3160, %v3275
    %v3436 = vmul.f32 %v3161, %v3350
    %v3437 = vmul.f32 %v3162, %v3352
    %v3438 = vmul.f32 %v3163, %v3426
    %v3439 = vld [vmem:[%s11] sm:$0xff]
    %v3440 = vld [vmem:[%s11 + $0x8] sm:$0xff]
    %v3441 = vld [vmem:[%s11 + $0x10] sm:$0xff]
    %v3442 = vld [vmem:[%s11 + $0x18] sm:$0xff]
    %v3443 = vld [vmem:[%s11 + $0x20] sm:$0xff]
    %v3444 = vld [vmem:[%s11 + $0x28] sm:$0xff]
    %v3445 = vld [vmem:[%s11 + $0x30] sm:$0xff]
    %v3446 = vld [vmem:[%s11 + $0x38] sm:$0xff]
    %v3447 = vld [vmem:[%s11 + $0x40] sm:$0xff]
    %v3448 = vld [vmem:[%s11 + $0x48] sm:$0xff]
    %v3449 = vld [vmem:[%s11 + $0x50] sm:$0xff]
    %v3450 = vld [vmem:[%s11 + $0x58] sm:$0xff]
    %v3451 = vld [vmem:[%s11 + $0x60] sm:$0xff]
    %v3452 = vld [vmem:[%s11 + $0x68] sm:$0xff]
    %v3453 = vld [vmem:[%s11 + $0x70] sm:$0xff]
    %v3454 = vld [vmem:[%s11 + $0x78] sm:$0xff]
    %v3455 = vld [vmem:[%s11 + $0x80] sm:$0xff]
    %v3456 = vld [vmem:[%s11 + $0x88] sm:$0xff]
    %v3457 = vld [vmem:[%s11 + $0x90] sm:$0xff]
    %v3458 = vld [vmem:[%s11 + $0x98] sm:$0xff]
    %v3459 = vld [vmem:[%s11 + $0xa0] sm:$0xff]
    %v3460 = vld [vmem:[%s11 + $0xa8] sm:$0xff]
    %v3461 = vld [vmem:[%s11 + $0xb0] sm:$0xff]
    %v3462 = vld [vmem:[%s11 + $0xb8] sm:$0xff]
    %v3463 = vld [vmem:[%s11 + $0xc0] sm:$0xff]
    %v3464 = vld [vmem:[%s11 + $0xc8] sm:$0xff]
    %v3465 = vld [vmem:[%s11 + $0xd0] sm:$0xff]
    %v3466 = vld [vmem:[%s11 + $0xd8] sm:$0xff]
    %v3467 = vld [vmem:[%s11 + $0xe0] sm:$0xff]
    %v3468 = vld [vmem:[%s11 + $0xe8] sm:$0xff]
    %v3469 = vld [vmem:[%s11 + $0xf0] sm:$0xff]
    %v3470 = vld [vmem:[%s11 + $0xf8] sm:$0xff]
    %v3471 = vld [vmem:[%s11 + $0x100] sm:$0xff]
    %v3472 = vld [vmem:[%s11 + $0x108] sm:$0xff]
    %v3473 = vld [vmem:[%s11 + $0x110] sm:$0xff]
    %v3474 = vld [vmem:[%s11 + $0x118] sm:$0xff]
    %v3475 = vld [vmem:[%s11 + $0x120] sm:$0xff]
    %v3476 = vld [vmem:[%s11 + $0x128] sm:$0xff]
    %v3477 = vld [vmem:[%s11 + $0x130] sm:$0xff]
    %v3478 = vld [vmem:[%s11 + $0x138] sm:$0xff]
    %v3479 = vld [vmem:[%s11 + $0x140] sm:$0xff]
    %v3480 = vld [vmem:[%s11 + $0x148] sm:$0xff]
    %v3481 = vld [vmem:[%s11 + $0x150] sm:$0xff]
    %v3482 = vld [vmem:[%s11 + $0x158] sm:$0xff]
    %v3483 = vld [vmem:[%s11 + $0x160] sm:$0xff]
    %v3484 = vld [vmem:[%s11 + $0x168] sm:$0xff]
    %v3485 = vld [vmem:[%s11 + $0x170] sm:$0xff]
    %v3486 = vld [vmem:[%s11 + $0x178] sm:$0xff]
    %v3487 = vld [vmem:[%s11 + $0x180] sm:$0xff]
    %v3488 = vld [vmem:[%s11 + $0x188] sm:$0xff]
    %v3489 = vld [vmem:[%s11 + $0x190] sm:$0xff]
    %v3490 = vld [vmem:[%s11 + $0x198] sm:$0xff]
    %v3491 = vld [vmem:[%s11 + $0x1a0] sm:$0xff]
    %v3492 = vld [vmem:[%s11 + $0x1a8] sm:$0xff]
    %v3493 = vld [vmem:[%s11 + $0x1b0] sm:$0xff]
    %v3494 = vld [vmem:[%s11 + $0x1b8] sm:$0xff]
    %v3495 = vld [vmem:[%s11 + $0x1c0] sm:$0xff]
    %v3496 = vld [vmem:[%s11 + $0x1c8] sm:$0xff]
    %v3497 = vld [vmem:[%s11 + $0x1d0] sm:$0xff]
    %v3498 = vld [vmem:[%s11 + $0x1d8] sm:$0xff]
    %v3499 = vld [vmem:[%s11 + $0x1e0] sm:$0xff]
    %v3500 = vld [vmem:[%s11 + $0x1e8] sm:$0xff]
    %v3501 = vld [vmem:[%s11 + $0x1f0] sm:$0xff]
    %v3502 = vld [vmem:[%s11 + $0x1f8] sm:$0xff]
    %v3503 = vld [vmem:[%s11 + $0x200] sm:$0xff]
    %v3504 = vld [vmem:[%s11 + $0x208] sm:$0xff]
    %v3505 = vld [vmem:[%s11 + $0x210] sm:$0xff]
    %v3506 = vld [vmem:[%s11 + $0x218] sm:$0xff]
    %v3507 = vld [vmem:[%s11 + $0x220] sm:$0xff]
    %v3508 = vld [vmem:[%s11 + $0x228] sm:$0xff]
    %v3509 = vld [vmem:[%s11 + $0x230] sm:$0xff]
    %v3510 = vld [vmem:[%s11 + $0x238] sm:$0xff]
    %v3512 = vsel %vm71, %v3433, 0
    %v3515 = vsel %vm71, %v3438, 0
    %3517 = vmatprep.subr.mxu0 0.0
    %3518 = vmatpush1.msra.mxu0 %v3439
    %3519 = vmatprep.subr.mxu0 0.0
    %3520 = vmatpush1.msra.mxu0 %v3440
    %3521 = vmatprep.subr.mxu0 0.0
    %3522 = vmatpush1.msra.mxu0 %v3441
    %3523 = vmatprep.subr.mxu0 0.0
    %3524 = vmatpush1.msra.mxu0 %v3442
    %3525 = vmatprep.subr.mxu0 0.0
    %3526 = vmatpush1.msra.mxu0 %v3443
    %3527 = vmatprep.subr.mxu0 0.0
    %3528 = vmatpush1.msra.mxu0 %v3444
    %3529 = vmatprep.subr.mxu0 0.0
    %3530 = vmatpush1.msra.mxu0 %v3445
    %3531 = vmatprep.subr.mxu0 0.0
    %3532 = vmatpush1.msra.mxu0 %v3446
    %3533 = vmatprep.subr.mxu0 0.0
    %3534 = vmatpush1.msra.mxu0 %v3447
    %3535 = vmatprep.subr.mxu0 0.0
    %3536 = vmatpush1.msra.mxu0 %v3448
    %3537 = vmatprep.subr.mxu0 0.0
    %3538 = vmatpush1.msra.mxu0 %v3449
    %3539 = vmatprep.subr.mxu0 0.0
    %3540 = vmatpush1.msra.mxu0 %v3450
    %3541 = vmatprep.subr.mxu0 0.0
    %3542 = vmatpush1.msra.mxu0 %v3451
    %3543 = vmatprep.subr.mxu0 0.0
    %3544 = vmatpush1.msra.mxu0 %v3452
    %3545 = vmatprep.subr.mxu0 0.0
    %3546 = vmatpush1.msra.mxu0 %v3453
    %3547 = vmatprep.subr.mxu0 0.0
    %3548 = vmatpush1.msra.mxu0 %v3454
    %3549 = vmatprep.subr.mxu0 0.0
    %3550 = vmatpush1.msra.mxu0 %v3455
    %3551 = vmatprep.subr.mxu0 0.0
    %3552 = vmatpush1.msra.mxu0 %v3456
    %3553 = vmatprep.subr.mxu0 0.0
    %3554 = vmatpush1.msra.mxu0 %v3457
    %3555 = vmatprep.subr.mxu0 0.0
    %3556 = vmatpush1.msra.mxu0 %v3458
    %3557 = vmatprep.subr.mxu0 0.0
    %3558 = vmatpush1.msra.mxu0 %v3459
    %3559 = vmatprep.subr.mxu0 0.0
    %3560 = vmatpush1.msra.mxu0 %v3460
    %3561 = vmatprep.subr.mxu0 0.0
    %3562 = vmatpush1.msra.mxu0 %v3461
    %3563 = vmatprep.subr.mxu0 0.0
    %3564 = vmatpush1.msra.mxu0 %v3462
    %3565 = vmatprep.subr.mxu0 0.0
    %3566 = vmatpush1.msra.mxu0 %v3463
    %3567 = vmatprep.subr.mxu0 0.0
    %3568 = vmatpush1.msra.mxu0 %v3464
    %3569 = vmatprep.subr.mxu0 0.0
    %3570 = vmatpush1.msra.mxu0 %v3465
    %3571 = vmatprep.subr.mxu0 0.0
    %3572 = vmatpush1.msra.mxu0 %v3466
    %3573 = vmatprep.subr.mxu0 0.0
    %3574 = vmatpush1.msra.mxu0 %v3467
    %3575 = vmatprep.subr.mxu0 0.0
    %3576 = vmatpush1.msra.mxu0 %v3468
    %3577 = vmatprep.subr.mxu0 0.0
    %3578 = vmatpush1.msra.mxu0 %v3469
    %3579 = vmatprep.subr.mxu0 0.0
    %3580 = vmatpush1.msra.mxu0 %v3470
    %3581 = vmatprep.mubr.f32.mxu0 %v3430
    %3582 = vmatmul.mubr.f32.gmra.mrb[0].mxu0 %v3429
    %v3583 = vpop.f32.mrb[0].mxu0
    %v3584 = vadd.f32 0.0, %v3583
    %v3585 = vpop.f32.mrb[0].mxu0
    %3586 = vmatprep.mubr.f32.mxu0 %v3435
    %3587 = vmatmul.mubr.f32.gmra.mrb[0].mxu0 %v3434
    %v3588 = vpop.f32.mrb[0].mxu0
    %v3589 = vadd.f32 0.0, %v3588
    %v3590 = vpop.f32.mrb[0].mxu0
    %3591 = vdwg.mxu0
    %3592 = vmatprep.subr.mxu0 0.0
    %3593 = vmatpush1.msra.mxu0 %v3471
    %3594 = vmatprep.subr.mxu0 0.0
    %3595 = vmatpush1.msra.mxu0 %v3472
    %3596 = vmatprep.subr.mxu0 0.0
    %3597 = vmatpush1.msra.mxu0 %v3473
    %3598 = vmatprep.subr.mxu0 0.0
    %3599 = vmatpush1.msra.mxu0 %v3474
    %3600 = vmatprep.subr.mxu0 0.0
    %3601 = vmatpush1.msra.mxu0 %v3475
    %3602 = vmatprep.subr.mxu0 0.0
    %3603 = vmatpush1.msra.mxu0 %v3476
    %3604 = vmatprep.subr.mxu0 0.0
    %3605 = vmatpush1.msra.mxu0 %v3477
    %3606 = vmatprep.subr.mxu0 0.0
    %3607 = vmatpush1.msra.mxu0 %v3478
    %3608 = vmatprep.subr.mxu0 0.0
    %3609 = vmatpush1.msra.mxu0 %v3479
    %3610 = vmatprep.subr.mxu0 0.0
    %3611 = vmatpush1.msra.mxu0 %v3480
    %3612 = vmatprep.subr.mxu0 0.0
    %3613 = vmatpush1.msra.mxu0 %v3481
    %3614 = vmatprep.subr.mxu0 0.0
    %3615 = vmatpush1.msra.mxu0 %v3482
    %3616 = vmatprep.subr.mxu0 0.0
    %3617 = vmatpush1.msra.mxu0 %v3483
    %3618 = vmatprep.subr.mxu0 0.0
    %3619 = vmatpush1.msra.mxu0 %v3484
    %3620 = vmatprep.subr.mxu0 0.0
    %3621 = vmatpush1.msra.mxu0 %v3485
    %3622 = vmatprep.subr.mxu0 0.0
    %3623 = vmatpush1.msra.mxu0 %v3486
    %3624 = vmatprep.subr.mxu0 0.0
    %3625 = vmatpush1.msra.mxu0 %v3487
    %3626 = vmatprep.subr.mxu0 0.0
    %3627 = vmatpush1.msra.mxu0 %v3488
    %3628 = vmatprep.subr.mxu0 0.0
    %3629 = vmatpush1.msra.mxu0 %v3489
    %3630 = vmatprep.subr.mxu0 0.0
    %3631 = vmatpush1.msra.mxu0 %v3490
    %3632 = vmatprep.subr.mxu0 0.0
    %3633 = vmatpush1.msra.mxu0 %v3491
    %3634 = vmatprep.subr.mxu0 0.0
    %3635 = vmatpush1.msra.mxu0 %v3492
    %3636 = vmatprep.subr.mxu0 0.0
    %3637 = vmatpush1.msra.mxu0 %v3493
    %3638 = vmatprep.subr.mxu0 0.0
    %3639 = vmatpush1.msra.mxu0 %v3494
    %3640 = vmatprep.subr.mxu0 0.0
    %3641 = vmatpush1.msra.mxu0 %v3495
    %3642 = vmatprep.subr.mxu0 0.0
    %3643 = vmatpush1.msra.mxu0 %v3496
    %3644 = vmatprep.subr.mxu0 0.0
    %3645 = vmatpush1.msra.mxu0 %v3497
    %3646 = vmatprep.subr.mxu0 0.0
    %3647 = vmatpush1.msra.mxu0 %v3498
    %3648 = vmatprep.subr.mxu0 0.0
    %3649 = vmatpush1.msra.mxu0 %v3499
    %3650 = vmatprep.subr.mxu0 0.0
    %3651 = vmatpush1.msra.mxu0 %v3500
    %3652 = vmatprep.subr.mxu0 0.0
    %3653 = vmatpush1.msra.mxu0 %v3501
    %3654 = vmatprep.subr.mxu0 0.0
    %3655 = vmatpush1.msra.mxu0 %v3502
    %3656 = vmatprep.mubr.f32.mxu0 %v3432
    %3657 = vmatmul.mubr.f32.gmra.mrb[0].mxu0 %v3431
    %v3658 = vpop.f32.mrb[0].mxu0
    %v3659 = vadd.f32 %v3584, %v3658
    %v3660 = vpop.f32.mrb[0].mxu0
    %3661 = vmatprep.mubr.f32.mxu0 %v3437
    %3662 = vmatmul.mubr.f32.gmra.mrb[0].mxu0 %v3436
    %v3663 = vpop.f32.mrb[0].mxu0
    %v3664 = vadd.f32 %v3589, %v3663
    %v3665 = vpop.f32.mrb[0].mxu0
    %3666 = vdwg.mxu0
    %3667 = vmatprep.subr.mxu0 0.0
    %3668 = vmatpush1.msra.mxu0 %v3503
    %3669 = vmatprep.subr.mxu0 0.0
    %3670 = vmatpush1.msra.mxu0 %v3504
    %3671 = vmatprep.subr.mxu0 0.0
    %3672 = vmatpush1.msra.mxu0 %v3505
    %3673 = vmatprep.subr.mxu0 0.0
    %3674 = vmatpush1.msra.mxu0 %v3506
    %3675 = vmatprep.subr.mxu0 0.0
    %3676 = vmatpush1.msra.mxu0 %v3507
    %3677 = vmatprep.subr.mxu0 0.0
    %3678 = vmatpush1.msra.mxu0 %v3508
    %3679 = vmatprep.subr.mxu0 0.0
    %3680 = vmatpush1.msra.mxu0 %v3509
    %3681 = vmatprep.subr.mxu0 0.0
    %3682 = vmatpush1.msra.mxu0 %v3510
    %3683 = vmatprep.subr.mxu0 0.0
    %3684 = vmatpush1.msra.mxu0 0.0
    %3685 = vmatprep.subr.mxu0 0.0
    %3686 = vmatpush1.msra.mxu0 0.0
    %3687 = vmatprep.subr.mxu0 0.0
    %3688 = vmatpush1.msra.mxu0 0.0
    %3689 = vmatprep.subr.mxu0 0.0
    %3690 = vmatpush1.msra.mxu0 0.0
    %3691 = vmatprep.subr.mxu0 0.0
    %3692 = vmatpush1.msra.mxu0 0.0
    %3693 = vmatprep.subr.mxu0 0.0
    %3694 = vmatpush1.msra.mxu0 0.0
    %3695 = vmatprep.subr.mxu0 0.0
    %3696 = vmatpush1.msra.mxu0 0.0
    %3697 = vmatprep.subr.mxu0 0.0
    %3698 = vmatpush1.msra.mxu0 0.0
    %3699 = vmatprep.subr.mxu0 0.0
    %3700 = vmatpush1.msra.mxu0 0.0
    %3701 = vmatprep.subr.mxu0 0.0
    %3702 = vmatpush1.msra.mxu0 0.0
    %3703 = vmatprep.subr.mxu0 0.0
    %3704 = vmatpush1.msra.mxu0 0.0
    %3705 = vmatprep.subr.mxu0 0.0
    %3706 = vmatpush1.msra.mxu0 0.0
    %3707 = vmatprep.subr.mxu0 0.0
    %3708 = vmatpush1.msra.mxu0 0.0
    %3709 = vmatprep.subr.mxu0 0.0
    %3710 = vmatpush1.msra.mxu0 0.0
    %3711 = vmatprep.subr.mxu0 0.0
    %3712 = vmatpush1.msra.mxu0 0.0
    %3713 = vmatprep.subr.mxu0 0.0
    %3714 = vmatpush1.msra.mxu0 0.0
    %3715 = vmatprep.subr.mxu0 0.0
    %3716 = vmatpush1.msra.mxu0 0.0
    %3717 = vmatprep.subr.mxu0 0.0
    %3718 = vmatpush1.msra.mxu0 0.0
    %3719 = vmatprep.subr.mxu0 0.0
    %3720 = vmatpush1.msra.mxu0 0.0
    %3721 = vmatprep.subr.mxu0 0.0
    %3722 = vmatpush1.msra.mxu0 0.0
    %3723 = vmatprep.subr.mxu0 0.0
    %3724 = vmatpush1.msra.mxu0 0.0
    %3725 = vmatprep.subr.mxu0 0.0
    %3726 = vmatpush1.msra.mxu0 0.0
    %3727 = vmatprep.subr.mxu0 0.0
    %3728 = vmatpush1.msra.mxu0 0.0
    %3729 = vmatprep.subr.mxu0 0.0
    %3730 = vmatpush1.msra.mxu0 0.0
    %3731 = vmatprep.mubr.f32.mxu0 0.0
    %3732 = vmatmul.mubr.f32.gmra.mrb[0].mxu0 %v3512
    %v3733 = vpop.f32.mrb[0].mxu0
    %v3734 = vadd.f32 %v3659, %v3733
    %v3735 = vpop.f32.mrb[0].mxu0
    %3736 = vmatprep.mubr.f32.mxu0 0.0
    %3737 = vmatmul.mubr.f32.gmra.mrb[0].mxu0 %v3515
    %v3738 = vpop.f32.mrb[0].mxu0
    %v3739 = vadd.f32 %v3664, %v3738
    %v3740 = vpop.f32.mrb[0].mxu0
    %3741 = vdwg.mxu0
    %v3742 = vadd.f32 %v2471, %v3734
    %v3743 = vadd.f32 %v2472, %v3739
    %v3744 = vmul.f32 %v3742, %v3742
    %v3745 = vmul.f32 %v3743, %v3743
    %v3746 = vsel %vm158, %v3744, 0.0
    %3747 = vadd.xlane.f32.xlu0 %v3746
    %v3748 = vpop.xlane.xlu0 %3747
    %v3749 = vsel %vm158, %v3745, 0.0
    %3750 = vadd.xlane.f32.xlu0 %v3749
    %v3751 = vpop.xlane.xlu0 %3750
    %v3752 = vmul.f32 %v3748, %v165
    %v3753 = vmul.f32 %v3751, %v165
    %v3754 = vadd.f32 %v3752, 1.1920929e-07
    %v3755 = vadd.f32 %v3753, 1.1920929e-07
    %v3756 = vrsqrt.pop %v3754
    %v3757 = vrsqrt.pop %v3755
    %v3758 = vmul.f32 %v3742, %v3756
    %v3759 = vmul.f32 %v3743, %v3757
    %s3760 = scalar_lea.vmem %s4, 32
    %v3761 = vld [vmem:[%s3760] sm:$0xff]
    %v3762 = vld [vmem:[%s3760 + $0x8] sm:$0xff]
    %v3763 = vld [vmem:[%s3760 + $0x10] sm:$0xff]
    %v3764 = vld [vmem:[%s3760 + $0x18] sm:$0xff]
    %v3766 = vsel %vm158, %v3758, 0
    %v3769 = vsel %vm158, %v3759, 0
    %3771 = vmatprep.subr.mxu0 0.0
    %3772 = vmatpush1.msra.mxu0 %v3761
    %3773 = vmatprep.subr.mxu0 0.0
    %3774 = vmatpush1.msra.mxu0 %v3762
    %3775 = vmatprep.subr.mxu0 0.0
    %3776 = vmatpush1.msra.mxu0 %v3763
    %3777 = vmatprep.subr.mxu0 0.0
    %3778 = vmatpush1.msra.mxu0 %v3764
    %3779 = vmatprep.subr.mxu0 0.0
    %3780 = vmatpush1.msra.mxu0 0.0
    %3781 = vmatprep.subr.mxu0 0.0
    %3782 = vmatpush1.msra.mxu0 0.0
    %3783 = vmatprep.subr.mxu0 0.0
    %3784 = vmatpush1.msra.mxu0 0.0
    %3785 = vmatprep.subr.mxu0 0.0
    %3786 = vmatpush1.msra.mxu0 0.0
    %3787 = vmatprep.subr.mxu0 0.0
    %3788 = vmatpush1.msra.mxu0 0.0
    %3789 = vmatprep.subr.mxu0 0.0
    %3790 = vmatpush1.msra.mxu0 0.0
    %3791 = vmatprep.subr.mxu0 0.0
    %3792 = vmatpush1.msra.mxu0 0.0
    %3793 = vmatprep.subr.mxu0 0.0
    %3794 = vmatpush1.msra.mxu0 0.0
    %3795 = vmatprep.subr.mxu0 0.0
    %3796 = vmatpush1.msra.mxu0 0.0
    %3797 = vmatprep.subr.mxu0 0.0
    %3798 = vmatpush1.msra.mxu0 0.0
    %3799 = vmatprep.subr.mxu0 0.0
    %3800 = vmatpush1.msra.mxu0 0.0
    %3801 = vmatprep.subr.mxu0 0.0
    %3802 = vmatpush1.msra.mxu0 0.0
    %3803 = vmatprep.subr.mxu0 0.0
    %3804 = vmatpush1.msra.mxu0 0.0
    %3805 = vmatprep.subr.mxu0 0.0
    %3806 = vmatpush1.msra.mxu0 0.0
    %3807 = vmatprep.subr.mxu0 0.0
    %3808 = vmatpush1.msra.mxu0 0.0
    %3809 = vmatprep.subr.mxu0 0.0
    %3810 = vmatpush1.msra.mxu0 0.0
    %3811 = vmatprep.subr.mxu0 0.0
    %3812 = vmatpush1.msra.mxu0 0.0
    %3813 = vmatprep.subr.mxu0 0.0
    %3814 = vmatpush1.msra.mxu0 0.0
    %3815 = vmatprep.subr.mxu0 0.0
    %3816 = vmatpush1.msra.mxu0 0.0
    %3817 = vmatprep.subr.mxu0 0.0
    %3818 = vmatpush1.msra.mxu0 0.0
    %3819 = vmatprep.subr.mxu0 0.0
    %3820 = vmatpush1.msra.mxu0 0.0
    %3821 = vmatprep.subr.mxu0 0.0
    %3822 = vmatpush1.msra.mxu0 0.0
    %3823 = vmatprep.subr.mxu0 0.0
    %3824 = vmatpush1.msra.mxu0 0.0
    %3825 = vmatprep.subr.mxu0 0.0
    %3826 = vmatpush1.msra.mxu0 0.0
    %3827 = vmatprep.subr.mxu0 0.0
    %3828 = vmatpush1.msra.mxu0 0.0
    %3829 = vmatprep.subr.mxu0 0.0
    %3830 = vmatpush1.msra.mxu0 0.0
    %3831 = vmatprep.subr.mxu0 0.0
    %3832 = vmatpush1.msra.mxu0 0.0
    %3833 = vmatprep.subr.mxu0 0.0
    %3834 = vmatpush1.msra.mxu0 0.0
    %3835 = vmatprep.mubr.f32.mxu0 0.0
    %3836 = vmatmul.mubr.f32.gmra.mrb[0].mxu0 %v3766
    %v3837 = vpop.f32.mrb[0].mxu0
    %v3838 = vadd.f32 0.0, %v3837
    %v3839 = vpop.f32.mrb[0].mxu0
    %3840 = vmatprep.mubr.f32.mxu0 0.0
    %3841 = vmatmul.mubr.f32.gmra.mrb[0].mxu0 %v3769
    %v3842 = vpop.f32.mrb[0].mxu0
    %v3843 = vadd.f32 0.0, %v3842
    %v3844 = vpop.f32.mrb[0].mxu0
    %3845 = vdwg.mxu0
    %s3846 = scalar_lea.vmem %s5, 32
    %v3847 = vld [vmem:[%s3846] sm:$0xff]
    %v3848 = vld [vmem:[%s3846 + $0x8] sm:$0xff]
    %v3849 = vld [vmem:[%s3846 + $0x10] sm:$0xff]
    %v3850 = vld [vmem:[%s3846 + $0x18] sm:$0xff]
    %3851 = vmatprep.subr.mxu0 0.0
    %3852 = vmatpush1.msra.mxu0 %v3847
    %3853 = vmatprep.subr.mxu0 0.0
    %3854 = vmatpush1.msra.mxu0 %v3848
    %3855 = vmatprep.subr.mxu0 0.0
    %3856 = vmatpush1.msra.mxu0 %v3849
    %3857 = vmatprep.subr.mxu0 0.0
    %3858 = vmatpush1.msra.mxu0 %v3850
    %3859 = vmatprep.subr.mxu0 0.0
    %3860 = vmatpush1.msra.mxu0 0.0
    %3861 = vmatprep.subr.mxu0 0.0
    %3862 = vmatpush1.msra.mxu0 0.0
    %3863 = vmatprep.subr.mxu0 0.0
    %3864 = vmatpush1.msra.mxu0 0.0
    %3865 = vmatprep.subr.mxu0 0.0
    %3866 = vmatpush1.msra.mxu0 0.0
    %3867 = vmatprep.subr.mxu0 0.0
    %3868 = vmatpush1.msra.mxu0 0.0
    %3869 = vmatprep.subr.mxu0 0.0
    %3870 = vmatpush1.msra.mxu0 0.0
    %3871 = vmatprep.subr.mxu0 0.0
    %3872 = vmatpush1.msra.mxu0 0.0
    %3873 = vmatprep.subr.mxu0 0.0
    %3874 = vmatpush1.msra.mxu0 0.0
    %3875 = vmatprep.subr.mxu0 0.0
    %3876 = vmatpush1.msra.mxu0 0.0
    %3877 = vmatprep.subr.mxu0 0.0
    %3878 = vmatpush1.msra.mxu0 0.0
    %3879 = vmatprep.subr.mxu0 0.0
    %3880 = vmatpush1.msra.mxu0 0.0
    %3881 = vmatprep.subr.mxu0 0.0
    %3882 = vmatpush1.msra.mxu0 0.0
    %3883 = vmatprep.subr.mxu0 0.0
    %3884 = vmatpush1.msra.mxu0 0.0
    %3885 = vmatprep.subr.mxu0 0.0
    %3886 = vmatpush1.msra.mxu0 0.0
    %3887 = vmatprep.subr.mxu0 0.0
    %3888 = vmatpush1.msra.mxu0 0.0
    %3889 = vmatprep.subr.mxu0 0.0
    %3890 = vmatpush1.msra.mxu0 0.0
    %3891 = vmatprep.subr.mxu0 0.0
    %3892 = vmatpush1.msra.mxu0 0.0
    %3893 = vmatprep.subr.mxu0 0.0
    %3894 = vmatpush1.msra.mxu0 0.0
    %3895 = vmatprep.subr.mxu0 0.0
    %3896 = vmatpush1.msra.mxu0 0.0
    %3897 = vmatprep.subr.mxu0 0.0
    %3898 = vmatpush1.msra.mxu0 0.0
    %3899 = vmatprep.subr.mxu0 0.0
    %3900 = vmatpush1.msra.mxu0 0.0
    %3901 = vmatprep.subr.mxu0 0.0
    %3902 = vmatpush1.msra.mxu0 0.0
    %3903 = vmatprep.subr.mxu0 0.0
    %3904 = vmatpush1.msra.mxu0 0.0
    %3905 = vmatprep.subr.mxu0 0.0
    %3906 = vmatpush1.msra.mxu0 0.0
    %3907 = vmatprep.subr.mxu0 0.0
    %3908 = vmatpush1.msra.mxu0 0.0
    %3909 = vmatprep.subr.mxu0 0.0
    %3910 = vmatpush1.msra.mxu0 0.0
    %3911 = vmatprep.subr.mxu0 0.0
    %3912 = vmatpush1.msra.mxu0 0.0
    %3913 = vmatprep.subr.mxu0 0.0
    %3914 = vmatpush1.msra.mxu0 0.0
    %3915 = vmatprep.mubr.f32.mxu0 0.0
    %3916 = vmatmul.mubr.f32.gmra.mrb[0].mxu0 %v3766
    %v3917 = vpop.f32.mrb[0].mxu0
    %v3918 = vadd.f32 0.0, %v3917
    %v3919 = vpop.f32.mrb[0].mxu0
    %3920 = vmatprep.mubr.f32.mxu0 0.0
    %3921 = vmatmul.mubr.f32.gmra.mrb[0].mxu0 %v3769
    %v3922 = vpop.f32.mrb[0].mxu0
    %v3923 = vadd.f32 0.0, %v3922
    %v3924 = vpop.f32.mrb[0].mxu0
    %3925 = vdwg.mxu0
    %3926 = vst.msk [vmem:[#allocation2 + $0x20] sm:$0xff] %vm338, %v3838
    %3928 = vrot.lane.b32.xlu0 %v3838, 112
    %v3929 = vpop.permute.xlu0 %3928
    %3931 = vst.msk [vmem:[#allocation2 + $0x28] sm:$0xff] %vm338, %v3929
    %3932 = vrot.lane.b32.xlu0 %v3838, 96
    %v3933 = vpop.permute.xlu0 %3932
    %3935 = vst.msk [vmem:[#allocation2 + $0x30] sm:$0xff] %vm338, %v3933
    %3936 = vrot.lane.b32.xlu0 %v3838, 80
    %v3937 = vpop.permute.xlu0 %3936
    %3939 = vst.msk [vmem:[#allocation2 + $0x38] sm:$0xff] %vm338, %v3937
    %3940 = vst.msk [vmem:[%s353 + $0x20] sm:$0xff] %vm338, %v3843
    %3942 = vrot.lane.b32.xlu0 %v3843, 112
    %v3943 = vpop.permute.xlu0 %3942
    %3945 = vst.msk [vmem:[%s353 + $0x28] sm:$0xff] %vm338, %v3943
    %3946 = vrot.lane.b32.xlu0 %v3843, 96
    %v3947 = vpop.permute.xlu0 %3946
    %3949 = vst.msk [vmem:[%s353 + $0x30] sm:$0xff] %vm338, %v3947
    %3950 = vrot.lane.b32.xlu0 %v3843, 80
    %v3951 = vpop.permute.xlu0 %3950
    %3953 = vst.msk [vmem:[%s353 + $0x38] sm:$0xff] %vm338, %v3951
    %s3954 = scalar_lea.vmem %s6, 64
    %v3955 = vld [vmem:[%s3954] sm:$0xff]
    %v3956 = vld [vmem:[%s3954 + $0x8] sm:$0xff]
    %v3957 = vld [vmem:[%s3954 + $0x10] sm:$0xff]
    %v3958 = vld [vmem:[%s3954 + $0x18] sm:$0xff]
    %v3959 = vld [vmem:[%s3954 + $0x20] sm:$0xff]
    %v3960 = vld [vmem:[%s3954 + $0x28] sm:$0xff]
    %v3961 = vld [vmem:[%s3954 + $0x30] sm:$0xff]
    %v3962 = vld [vmem:[%s3954 + $0x38] sm:$0xff]
    %v3963 = vld [vmem:[#allocation2] sm:$0xff]
    %v3964 = vld [vmem:[#allocation2 + $0x8] sm:$0xff]
    %v3965 = vld [vmem:[#allocation2 + $0x10] sm:$0xff]
    %v3966 = vld [vmem:[#allocation2 + $0x18] sm:$0xff]
    %v3967 = vld [vmem:[#allocation2 + $0x20] sm:$0xff]
    %v3969 = vsel %vm338, %v3918, 0
    %v3972 = vsel %vm338, %v3963, 0
    %v3975 = vsel %vm338, %v3964, 0
    %v3978 = vsel %vm338, %v3965, 0
    %v3981 = vsel %vm338, %v3966, 0
    %v3984 = vsel %vm338, %v3967, 0
    %3986 = vmatprep.subr.mxu0 0.0
    %3987 = vmatpush1.xpose.msra.mxu0 %v3972
    %3988 = vmatprep.subr.mxu0 0.0
    %3989 = vmatpush1.xpose.msra.mxu0 %v3975
    %3990 = vmatprep.subr.mxu0 0.0
    %3991 = vmatpush1.xpose.msra.mxu0 %v3978
    %3992 = vmatprep.subr.mxu0 0.0
    %3993 = vmatpush1.xpose.msra.mxu0 %v3981
    %3994 = vmatprep.subr.mxu0 0.0
    %3995 = vmatpush1.xpose.msra.mxu0 %v3984
    %3996 = vmatprep.subr.mxu0 0.0
    %3997 = vmatpush1.xpose.msra.mxu0 0.0
    %3998 = vmatprep.subr.mxu0 0.0
    %3999 = vmatpush1.xpose.msra.mxu0 0.0
    %4000 = vmatprep.subr.mxu0 0.0
    %4001 = vmatpush1.xpose.msra.mxu0 0.0
    %4002 = vmatprep.subr.mxu0 0.0
    %4003 = vmatpush1.xpose.msra.mxu0 0.0
    %4004 = vmatprep.subr.mxu0 0.0
    %4005 = vmatpush1.xpose.msra.mxu0 0.0
    %4006 = vmatprep.subr.mxu0 0.0
    %4007 = vmatpush1.xpose.msra.mxu0 0.0
    %4008 = vmatprep.subr.mxu0 0.0
    %4009 = vmatpush1.xpose.msra.mxu0 0.0
    %4010 = vmatprep.subr.mxu0 0.0
    %4011 = vmatpush1.xpose.msra.mxu0 0.0
    %4012 = vmatprep.subr.mxu0 0.0
    %4013 = vmatpush1.xpose.msra.mxu0 0.0
    %4014 = vmatprep.subr.mxu0 0.0
    %4015 = vmatpush1.xpose.msra.mxu0 0.0
    %4016 = vmatprep.subr.mxu0 0.0
    %4017 = vmatpush1.xpose.msra.mxu0 0.0
    %4018 = vmatprep.subr.mxu0 0.0
    %4019 = vmatpush1.xpose.msra.mxu0 0.0
    %4020 = vmatprep.subr.mxu0 0.0
    %4021 = vmatpush1.xpose.msra.mxu0 0.0
    %4022 = vmatprep.subr.mxu0 0.0
    %4023 = vmatpush1.xpose.msra.mxu0 0.0
    %4024 = vmatprep.subr.mxu0 0.0
    %4025 = vmatpush1.xpose.msra.mxu0 0.0
    %4026 = vmatprep.subr.mxu0 0.0
    %4027 = vmatpush1.xpose.msra.mxu0 0.0
    %4028 = vmatprep.subr.mxu0 0.0
    %4029 = vmatpush1.xpose.msra.mxu0 0.0
    %4030 = vmatprep.subr.mxu0 0.0
    %4031 = vmatpush1.xpose.msra.mxu0 0.0
    %4032 = vmatprep.subr.mxu0 0.0
    %4033 = vmatpush1.xpose.msra.mxu0 0.0
    %4034 = vmatprep.subr.mxu0 0.0
    %4035 = vmatpush1.xpose.msra.mxu0 0.0
    %4036 = vmatprep.subr.mxu0 0.0
    %4037 = vmatpush1.xpose.msra.mxu0 0.0
    %4038 = vmatprep.subr.mxu0 0.0
    %4039 = vmatpush1.xpose.msra.mxu0 0.0
    %4040 = vmatprep.subr.mxu0 0.0
    %4041 = vmatpush1.xpose.msra.mxu0 0.0
    %4042 = vmatprep.subr.mxu0 0.0
    %4043 = vmatpush1.xpose.msra.mxu0 0.0
    %4044 = vmatprep.subr.mxu0 0.0
    %4045 = vmatpush1.xpose.msra.mxu0 0.0
    %4046 = vmatprep.subr.mxu0 0.0
    %4047 = vmatpush1.xpose.msra.mxu0 0.0
    %4048 = vmatprep.subr.mxu0 0.0
    %4049 = vmatpush1.xpose.msra.mxu0 0.0
    %4050 = vmatprep.mubr.f32.mxu0 0.0
    %4051 = vmatmul.mubr.f32.gmra.mrb[0].mxu0 %v3969
    %v4052 = vpop.f32.mrb[0].mxu0
    %v4053 = vadd.f32 0.0, %v4052
    %v4054 = vpop.f32.mrb[0].mxu0
    %4055 = vdwg.mxu0
    %v4056 = vmul.f32 %v4053, 0.35355338
    %v4057 = vsel %vm155, %v4056, -1e+20
    %vm4058 = vcmask 326656
    %v4059 = vsel %vm4058, %v4057, -inf
    %4060 = vmax.xlane.f32.xlu0 %v4059
    %v4061 = vpop.xlane.xlu0 %4060
    %v4062 = vsub.f32 %v4057, %v4061
    %v4063 = vmul.f32 %v4062, 1.442695
    %v4064 = vpow.pop %v4063
    %v4065 = vsel %vm4058, %v4064, 0.0
    %4066 = vadd.xlane.f32.xlu0 %v4065
    %v4067 = vpop.xlane.xlu0 %4066
    %v4068 = vrcp.pop %v4067
    %v4069 = vmul.f32 %v4064, %v4068
    %4070 = vmatprep.subr.mxu0 0.0
    %4071 = vmatpush1.msra.mxu0 %v3955
    %4072 = vmatprep.subr.mxu0 0.0
    %4073 = vmatpush1.msra.mxu0 %v3956
    %4074 = vmatprep.subr.mxu0 0.0
    %4075 = vmatpush1.msra.mxu0 0.0
    %4076 = vmatprep.subr.mxu0 0.0
    %4077 = vmatpush1.msra.mxu0 0.0
    %4078 = vmatprep.subr.mxu0 0.0
    %4079 = vmatpush1.msra.mxu0 0.0
    %4080 = vmatprep.subr.mxu0 0.0
    %4081 = vmatpush1.msra.mxu0 0.0
    %4082 = vmatprep.subr.mxu0 0.0
    %4083 = vmatpush1.msra.mxu0 0.0
    %4084 = vmatprep.subr.mxu0 0.0
    %4085 = vmatpush1.msra.mxu0 0.0
    %4086 = vmatprep.subr.mxu0 0.0
    %4087 = vmatpush1.msra.mxu0 0.0
    %4088 = vmatprep.subr.mxu0 0.0
    %4089 = vmatpush1.msra.mxu0 0.0
    %4090 = vmatprep.subr.mxu0 0.0
    %4091 = vmatpush1.msra.mxu0 0.0
    %4092 = vmatprep.subr.mxu0 0.0
    %4093 = vmatpush1.msra.mxu0 0.0
    %4094 = vmatprep.subr.mxu0 0.0
    %4095 = vmatpush1.msra.mxu0 0.0
    %4096 = vmatprep.subr.mxu0 0.0
    %4097 = vmatpush1.msra.mxu0 0.0
    %4098 = vmatprep.subr.mxu0 0.0
    %4099 = vmatpush1.msra.mxu0 0.0
    %4100 = vmatprep.subr.mxu0 0.0
    %4101 = vmatpush1.msra.mxu0 0.0
    %4102 = vmatprep.subr.mxu0 0.0
    %4103 = vmatpush1.msra.mxu0 0.0
    %4104 = vmatprep.subr.mxu0 0.0
    %4105 = vmatpush1.msra.mxu0 0.0
    %4106 = vmatprep.subr.mxu0 0.0
    %4107 = vmatpush1.msra.mxu0 0.0
    %4108 = vmatprep.subr.mxu0 0.0
    %4109 = vmatpush1.msra.mxu0 0.0
    %4110 = vmatprep.subr.mxu0 0.0
    %4111 = vmatpush1.msra.mxu0 0.0
    %4112 = vmatprep.subr.mxu0 0.0
    %4113 = vmatpush1.msra.mxu0 0.0
    %4114 = vmatprep.subr.mxu0 0.0
    %4115 = vmatpush1.msra.mxu0 0.0
    %4116 = vmatprep.subr.mxu0 0.0
    %4117 = vmatpush1.msra.mxu0 0.0
    %4118 = vmatprep.subr.mxu0 0.0
    %4119 = vmatpush1.msra.mxu0 0.0
    %4120 = vmatprep.subr.mxu0 0.0
    %4121 = vmatpush1.msra.mxu0 0.0
    %4122 = vmatprep.subr.mxu0 0.0
    %4123 = vmatpush1.msra.mxu0 0.0
    %4124 = vmatprep.subr.mxu0 0.0
    %4125 = vmatpush1.msra.mxu0 0.0
    %4126 = vmatprep.subr.mxu0 0.0
    %4127 = vmatpush1.msra.mxu0 0.0
    %4128 = vmatprep.subr.mxu0 0.0
    %4129 = vmatpush1.msra.mxu0 0.0
    %4130 = vmatprep.subr.mxu0 0.0
    %4131 = vmatpush1.msra.mxu0 0.0
    %4132 = vmatprep.subr.mxu0 0.0
    %4133 = vmatpush1.msra.mxu0 0.0
    %4134 = vmatprep.mubr.f32.mxu0 0.0
    %4135 = vmatmul.mubr.f32.gmra.mrb[0].mxu0 %v3972
    %v4136 = vpop.f32.mrb[0].mxu0
    %v4137 = vadd.f32 0.0, %v4136
    %v4138 = vpop.f32.mrb[0].mxu0
    %4139 = vmatprep.mubr.f32.mxu0 0.0
    %4140 = vmatmul.mubr.f32.gmra.mrb[0].mxu0 %v3975
    %v4141 = vpop.f32.mrb[0].mxu0
    %v4142 = vadd.f32 0.0, %v4141
    %v4143 = vpop.f32.mrb[0].mxu0
    %4144 = vmatprep.mubr.f32.mxu0 0.0
    %4145 = vmatmul.mubr.f32.gmra.mrb[0].mxu0 %v3978
    %v4146 = vpop.f32.mrb[0].mxu0
    %v4147 = vadd.f32 0.0, %v4146
    %v4148 = vpop.f32.mrb[0].mxu0
    %4149 = vmatprep.mubr.f32.mxu0 0.0
    %4150 = vmatmul.mubr.f32.gmra.mrb[0].mxu0 %v3981
    %v4151 = vpop.f32.mrb[0].mxu0
    %v4152 = vadd.f32 0.0, %v4151
    %v4153 = vpop.f32.mrb[0].mxu0
    %4154 = vmatprep.mubr.f32.mxu0 0.0
    %4155 = vmatmul.mubr.f32.gmra.mrb[0].mxu0 %v3984
    %v4156 = vpop.f32.mrb[0].mxu0
    %v4157 = vadd.f32 0.0, %v4156
    %v4158 = vpop.f32.mrb[0].mxu0
    %4159 = vdwg.mxu0
    %v4161 = vsel %vm4058, %v4069, 0
    %4163 = vmatprep.subr.mxu0 0.0
    %4164 = vmatpush1.msra.mxu0 %v4137
    %4165 = vmatprep.subr.mxu0 0.0
    %4166 = vmatpush1.msra.mxu0 %v4142
    %4167 = vmatprep.subr.mxu0 0.0
    %4168 = vmatpush1.msra.mxu0 %v4147
    %4169 = vmatprep.subr.mxu0 0.0
    %4170 = vmatpush1.msra.mxu0 %v4152
    %4171 = vmatprep.subr.mxu0 0.0
    %4172 = vmatpush1.msra.mxu0 %v4157
    %4173 = vmatprep.subr.mxu0 0.0
    %4174 = vmatpush1.msra.mxu0 0.0
    %4175 = vmatprep.subr.mxu0 0.0
    %4176 = vmatpush1.msra.mxu0 0.0
    %4177 = vmatprep.subr.mxu0 0.0
    %4178 = vmatpush1.msra.mxu0 0.0
    %4179 = vmatprep.subr.mxu0 0.0
    %4180 = vmatpush1.msra.mxu0 0.0
    %4181 = vmatprep.subr.mxu0 0.0
    %4182 = vmatpush1.msra.mxu0 0.0
    %4183 = vmatprep.subr.mxu0 0.0
    %4184 = vmatpush1.msra.mxu0 0.0
    %4185 = vmatprep.subr.mxu0 0.0
    %4186 = vmatpush1.msra.mxu0 0.0
    %4187 = vmatprep.subr.mxu0 0.0
    %4188 = vmatpush1.msra.mxu0 0.0
    %4189 = vmatprep.subr.mxu0 0.0
    %4190 = vmatpush1.msra.mxu0 0.0
    %4191 = vmatprep.subr.mxu0 0.0
    %4192 = vmatpush1.msra.mxu0 0.0
    %4193 = vmatprep.subr.mxu0 0.0
    %4194 = vmatpush1.msra.mxu0 0.0
    %4195 = vmatprep.subr.mxu0 0.0
    %4196 = vmatpush1.msra.mxu0 0.0
    %4197 = vmatprep.subr.mxu0 0.0
    %4198 = vmatpush1.msra.mxu0 0.0
    %4199 = vmatprep.subr.mxu0 0.0
    %4200 = vmatpush1.msra.mxu0 0.0
    %4201 = vmatprep.subr.mxu0 0.0
    %4202 = vmatpush1.msra.mxu0 0.0
    %4203 = vmatprep.subr.mxu0 0.0
    %4204 = vmatpush1.msra.mxu0 0.0
    %4205 = vmatprep.subr.mxu0 0.0
    %4206 = vmatpush1.msra.mxu0 0.0
    %4207 = vmatprep.subr.mxu0 0.0
    %4208 = vmatpush1.msra.mxu0 0.0
    %4209 = vmatprep.subr.mxu0 0.0
    %4210 = vmatpush1.msra.mxu0 0.0
    %4211 = vmatprep.subr.mxu0 0.0
    %4212 = vmatpush1.msra.mxu0 0.0
    %4213 = vmatprep.subr.mxu0 0.0
    %4214 = vmatpush1.msra.mxu0 0.0
    %4215 = vmatprep.subr.mxu0 0.0
    %4216 = vmatpush1.msra.mxu0 0.0
    %4217 = vmatprep.subr.mxu0 0.0
    %4218 = vmatpush1.msra.mxu0 0.0
    %4219 = vmatprep.subr.mxu0 0.0
    %4220 = vmatpush1.msra.mxu0 0.0
    %4221 = vmatprep.subr.mxu0 0.0
    %4222 = vmatpush1.msra.mxu0 0.0
    %4223 = vmatprep.subr.mxu0 0.0
    %4224 = vmatpush1.msra.mxu0 0.0
    %4225 = vmatprep.subr.mxu0 0.0
    %4226 = vmatpush1.msra.mxu0 0.0
    %4227 = vmatprep.mubr.f32.mxu0 0.0
    %4228 = vmatmul.mubr.f32.gmra.mrb[0].mxu0 %v4161
    %v4229 = vpop.f32.mrb[0].mxu0
    %v4230 = vadd.f32 0.0, %v4229
    %v4231 = vpop.f32.mrb[0].mxu0
    %4232 = vdwg.mxu0
    %v4233 = vld [vmem:[#allocation2] sm:$0xff]
    %v4234 = vld [vmem:[#allocation2 + $0x8] sm:$0xff]
    %v4235 = vld [vmem:[#allocation2 + $0x10] sm:$0xff]
    %v4236 = vld [vmem:[#allocation2 + $0x18] sm:$0xff]
    %v4237 = vld [vmem:[#allocation2 + $0x20] sm:$0xff]
    %v4238 = vld [vmem:[#allocation2 + $0x28] sm:$0xff]
    %4239 = vrot.lane.b32.xlu0 %v3918, 112
    %v4240 = vpop.permute.xlu0 %4239
    %v4241 = vsel %vm338, %v4240, 0
    %v4244 = vsel %vm338, %v4233, 0
    %v4247 = vsel %vm338, %v4234, 0
    %v4250 = vsel %vm338, %v4235, 0
    %v4253 = vsel %vm338, %v4236, 0
    %v4256 = vsel %vm338, %v4237, 0
    %v4259 = vsel %vm338, %v4238, 0
    %4261 = vmatprep.subr.mxu0 0.0
    %4262 = vmatpush1.xpose.msra.mxu0 %v4244
    %4263 = vmatprep.subr.mxu0 0.0
    %4264 = vmatpush1.xpose.msra.mxu0 %v4247
    %4265 = vmatprep.subr.mxu0 0.0
    %4266 = vmatpush1.xpose.msra.mxu0 %v4250
    %4267 = vmatprep.subr.mxu0 0.0
    %4268 = vmatpush1.xpose.msra.mxu0 %v4253
    %4269 = vmatprep.subr.mxu0 0.0
    %4270 = vmatpush1.xpose.msra.mxu0 %v4256
    %4271 = vmatprep.subr.mxu0 0.0
    %4272 = vmatpush1.xpose.msra.mxu0 %v4259
    %4273 = vmatprep.subr.mxu0 0.0
    %4274 = vmatpush1.xpose.msra.mxu0 0.0
    %4275 = vmatprep.subr.mxu0 0.0
    %4276 = vmatpush1.xpose.msra.mxu0 0.0
    %4277 = vmatprep.subr.mxu0 0.0
    %4278 = vmatpush1.xpose.msra.mxu0 0.0
    %4279 = vmatprep.subr.mxu0 0.0
    %4280 = vmatpush1.xpose.msra.mxu0 0.0
    %4281 = vmatprep.subr.mxu0 0.0
    %4282 = vmatpush1.xpose.msra.mxu0 0.0
    %4283 = vmatprep.subr.mxu0 0.0
    %4284 = vmatpush1.xpose.msra.mxu0 0.0
    %4285 = vmatprep.subr.mxu0 0.0
    %4286 = vmatpush1.xpose.msra.mxu0 0.0
    %4287 = vmatprep.subr.mxu0 0.0
    %4288 = vmatpush1.xpose.msra.mxu0 0.0
    %4289 = vmatprep.subr.mxu0 0.0
    %4290 = vmatpush1.xpose.msra.mxu0 0.0
    %4291 = vmatprep.subr.mxu0 0.0
    %4292 = vmatpush1.xpose.msra.mxu0 0.0
    %4293 = vmatprep.subr.mxu0 0.0
    %4294 = vmatpush1.xpose.msra.mxu0 0.0
    %4295 = vmatprep.subr.mxu0 0.0
    %4296 = vmatpush1.xpose.msra.mxu0 0.0
    %4297 = vmatprep.subr.mxu0 0.0
    %4298 = vmatpush1.xpose.msra.mxu0 0.0
    %4299 = vmatprep.subr.mxu0 0.0
    %4300 = vmatpush1.xpose.msra.mxu0 0.0
    %4301 = vmatprep.subr.mxu0 0.0
    %4302 = vmatpush1.xpose.msra.mxu0 0.0
    %4303 = vmatprep.subr.mxu0 0.0
    %4304 = vmatpush1.xpose.msra.mxu0 0.0
    %4305 = vmatprep.subr.mxu0 0.0
    %4306 = vmatpush1.xpose.msra.mxu0 0.0
    %4307 = vmatprep.subr.mxu0 0.0
    %4308 = vmatpush1.xpose.msra.mxu0 0.0
    %4309 = vmatprep.subr.mxu0 0.0
    %4310 = vmatpush1.xpose.msra.mxu0 0.0
    %4311 = vmatprep.subr.mxu0 0.0
    %4312 = vmatpush1.xpose.msra.mxu0 0.0
    %4313 = vmatprep.subr.mxu0 0.0
    %4314 = vmatpush1.xpose.msra.mxu0 0.0
    %4315 = vmatprep.subr.mxu0 0.0
    %4316 = vmatpush1.xpose.msra.mxu0 0.0
    %4317 = vmatprep.subr.mxu0 0.0
    %4318 = vmatpush1.xpose.msra.mxu0 0.0
    %4319 = vmatprep.subr.mxu0 0.0
    %4320 = vmatpush1.xpose.msra.mxu0 0.0
    %4321 = vmatprep.subr.mxu0 0.0
    %4322 = vmatpush1.xpose.msra.mxu0 0.0
    %4323 = vmatprep.subr.mxu0 0.0
    %4324 = vmatpush1.xpose.msra.mxu0 0.0
    %4325 = vmatprep.mubr.f32.mxu0 0.0
    %4326 = vmatmul.mubr.f32.gmra.mrb[0].mxu0 %v4241
    %v4327 = vpop.f32.mrb[0].mxu0
    %v4328 = vadd.f32 0.0, %v4327
    %v4329 = vpop.f32.mrb[0].mxu0
    %4330 = vdwg.mxu0
    %v4331 = vmul.f32 %v4328, 0.35355338
    %v4332 = vsel %vm155, %v4331, -1e+20
    %vm4333 = vcmask 392192
    %v4334 = vsel %vm4333, %v4332, -inf
    %4335 = vmax.xlane.f32.xlu0 %v4334
    %v4336 = vpop.xlane.xlu0 %4335
    %v4337 = vsub.f32 %v4332, %v4336
    %v4338 = vmul.f32 %v4337, 1.442695
    %v4339 = vpow.pop %v4338
    %v4340 = vsel %vm4333, %v4339, 0.0
    %4341 = vadd.xlane.f32.xlu0 %v4340
    %v4342 = vpop.xlane.xlu0 %4341
    %v4343 = vrcp.pop %v4342
    %v4344 = vmul.f32 %v4339, %v4343
    %4345 = vmatprep.subr.mxu0 0.0
    %4346 = vmatpush1.msra.mxu0 %v3957
    %4347 = vmatprep.subr.mxu0 0.0
    %4348 = vmatpush1.msra.mxu0 %v3958
    %4349 = vmatprep.subr.mxu0 0.0
    %4350 = vmatpush1.msra.mxu0 0.0
    %4351 = vmatprep.subr.mxu0 0.0
    %4352 = vmatpush1.msra.mxu0 0.0
    %4353 = vmatprep.subr.mxu0 0.0
    %4354 = vmatpush1.msra.mxu0 0.0
    %4355 = vmatprep.subr.mxu0 0.0
    %4356 = vmatpush1.msra.mxu0 0.0
    %4357 = vmatprep.subr.mxu0 0.0
    %4358 = vmatpush1.msra.mxu0 0.0
    %4359 = vmatprep.subr.mxu0 0.0
    %4360 = vmatpush1.msra.mxu0 0.0
    %4361 = vmatprep.subr.mxu0 0.0
    %4362 = vmatpush1.msra.mxu0 0.0
    %4363 = vmatprep.subr.mxu0 0.0
    %4364 = vmatpush1.msra.mxu0 0.0
    %4365 = vmatprep.subr.mxu0 0.0
    %4366 = vmatpush1.msra.mxu0 0.0
    %4367 = vmatprep.subr.mxu0 0.0
    %4368 = vmatpush1.msra.mxu0 0.0
    %4369 = vmatprep.subr.mxu0 0.0
    %4370 = vmatpush1.msra.mxu0 0.0
    %4371 = vmatprep.subr.mxu0 0.0
    %4372 = vmatpush1.msra.mxu0 0.0
    %4373 = vmatprep.subr.mxu0 0.0
    %4374 = vmatpush1.msra.mxu0 0.0
    %4375 = vmatprep.subr.mxu0 0.0
    %4376 = vmatpush1.msra.mxu0 0.0
    %4377 = vmatprep.subr.mxu0 0.0
    %4378 = vmatpush1.msra.mxu0 0.0
    %4379 = vmatprep.subr.mxu0 0.0
    %4380 = vmatpush1.msra.mxu0 0.0
    %4381 = vmatprep.subr.mxu0 0.0
    %4382 = vmatpush1.msra.mxu0 0.0
    %4383 = vmatprep.subr.mxu0 0.0
    %4384 = vmatpush1.msra.mxu0 0.0
    %4385 = vmatprep.subr.mxu0 0.0
    %4386 = vmatpush1.msra.mxu0 0.0
    %4387 = vmatprep.subr.mxu0 0.0
    %4388 = vmatpush1.msra.mxu0 0.0
    %4389 = vmatprep.subr.mxu0 0.0
    %4390 = vmatpush1.msra.mxu0 0.0
    %4391 = vmatprep.subr.mxu0 0.0
    %4392 = vmatpush1.msra.mxu0 0.0
    %4393 = vmatprep.subr.mxu0 0.0
    %4394 = vmatpush1.msra.mxu0 0.0
    %4395 = vmatprep.subr.mxu0 0.0
    %4396 = vmatpush1.msra.mxu0 0.0
    %4397 = vmatprep.subr.mxu0 0.0
    %4398 = vmatpush1.msra.mxu0 0.0
    %4399 = vmatprep.subr.mxu0 0.0
    %4400 = vmatpush1.msra.mxu0 0.0
    %4401 = vmatprep.subr.mxu0 0.0
    %4402 = vmatpush1.msra.mxu0 0.0
    %4403 = vmatprep.subr.mxu0 0.0
    %4404 = vmatpush1.msra.mxu0 0.0
    %4405 = vmatprep.subr.mxu0 0.0
    %4406 = vmatpush1.msra.mxu0 0.0
    %4407 = vmatprep.subr.mxu0 0.0
    %4408 = vmatpush1.msra.mxu0 0.0
    %4409 = vmatprep.mubr.f32.mxu0 0.0
    %4410 = vmatmul.mubr.f32.gmra.mrb[0].mxu0 %v4244
    %v4411 = vpop.f32.mrb[0].mxu0
    %v4412 = vadd.f32 0.0, %v4411
    %v4413 = vpop.f32.mrb[0].mxu0
    %4414 = vmatprep.mubr.f32.mxu0 0.0
    %4415 = vmatmul.mubr.f32.gmra.mrb[0].mxu0 %v4247
    %v4416 = vpop.f32.mrb[0].mxu0
    %v4417 = vadd.f32 0.0, %v4416
    %v4418 = vpop.f32.mrb[0].mxu0
    %4419 = vmatprep.mubr.f32.mxu0 0.0
    %4420 = vmatmul.mubr.f32.gmra.mrb[0].mxu0 %v4250
    %v4421 = vpop.f32.mrb[0].mxu0
    %v4422 = vadd.f32 0.0, %v4421
    %v4423 = vpop.f32.mrb[0].mxu0
    %4424 = vmatprep.mubr.f32.mxu0 0.0
    %4425 = vmatmul.mubr.f32.gmra.mrb[0].mxu0 %v4253
    %v4426 = vpop.f32.mrb[0].mxu0
    %v4427 = vadd.f32 0.0, %v4426
    %v4428 = vpop.f32.mrb[0].mxu0
    %4429 = vmatprep.mubr.f32.mxu0 0.0
    %4430 = vmatmul.mubr.f32.gmra.mrb[0].mxu0 %v4256
    %v4431 = vpop.f32.mrb[0].mxu0
    %v4432 = vadd.f32 0.0, %v4431
    %v4433 = vpop.f32.mrb[0].mxu0
    %4434 = vmatprep.mubr.f32.mxu0 0.0
    %4435 = vmatmul.mubr.f32.gmra.mrb[0].mxu0 %v4259
    %v4436 = vpop.f32.mrb[0].mxu0
    %v4437 = vadd.f32 0.0, %v4436
    %v4438 = vpop.f32.mrb[0].mxu0
    %4439 = vdwg.mxu0
    %v4441 = vsel %vm4333, %v4344, 0
    %4443 = vmatprep.subr.mxu0 0.0
    %4444 = vmatpush1.msra.mxu0 %v4412
    %4445 = vmatprep.subr.mxu0 0.0
    %4446 = vmatpush1.msra.mxu0 %v4417
    %4447 = vmatprep.subr.mxu0 0.0
    %4448 = vmatpush1.msra.mxu0 %v4422
    %4449 = vmatprep.subr.mxu0 0.0
    %4450 = vmatpush1.msra.mxu0 %v4427
    %4451 = vmatprep.subr.mxu0 0.0
    %4452 = vmatpush1.msra.mxu0 %v4432
    %4453 = vmatprep.subr.mxu0 0.0
    %4454 = vmatpush1.msra.mxu0 %v4437
    %4455 = vmatprep.subr.mxu0 0.0
    %4456 = vmatpush1.msra.mxu0 0.0
    %4457 = vmatprep.subr.mxu0 0.0
    %4458 = vmatpush1.msra.mxu0 0.0
    %4459 = vmatprep.subr.mxu0 0.0
    %4460 = vmatpush1.msra.mxu0 0.0
    %4461 = vmatprep.subr.mxu0 0.0
    %4462 = vmatpush1.msra.mxu0 0.0
    %4463 = vmatprep.subr.mxu0 0.0
    %4464 = vmatpush1.msra.mxu0 0.0
    %4465 = vmatprep.subr.mxu0 0.0
    %4466 = vmatpush1.msra.mxu0 0.0
    %4467 = vmatprep.subr.mxu0 0.0
    %4468 = vmatpush1.msra.mxu0 0.0
    %4469 = vmatprep.subr.mxu0 0.0
    %4470 = vmatpush1.msra.mxu0 0.0
    %4471 = vmatprep.subr.mxu0 0.0
    %4472 = vmatpush1.msra.mxu0 0.0
    %4473 = vmatprep.subr.mxu0 0.0
    %4474 = vmatpush1.msra.mxu0 0.0
    %4475 = vmatprep.subr.mxu0 0.0
    %4476 = vmatpush1.msra.mxu0 0.0
    %4477 = vmatprep.subr.mxu0 0.0
    %4478 = vmatpush1.msra.mxu0 0.0
    %4479 = vmatprep.subr.mxu0 0.0
    %4480 = vmatpush1.msra.mxu0 0.0
    %4481 = vmatprep.subr.mxu0 0.0
    %4482 = vmatpush1.msra.mxu0 0.0
    %4483 = vmatprep.subr.mxu0 0.0
    %4484 = vmatpush1.msra.mxu0 0.0
    %4485 = vmatprep.subr.mxu0 0.0
    %4486 = vmatpush1.msra.mxu0 0.0
    %4487 = vmatprep.subr.mxu0 0.0
    %4488 = vmatpush1.msra.mxu0 0.0
    %4489 = vmatprep.subr.mxu0 0.0
    %4490 = vmatpush1.msra.mxu0 0.0
    %4491 = vmatprep.subr.mxu0 0.0
    %4492 = vmatpush1.msra.mxu0 0.0
    %4493 = vmatprep.subr.mxu0 0.0
    %4494 = vmatpush1.msra.mxu0 0.0
    %4495 = vmatprep.subr.mxu0 0.0
    %4496 = vmatpush1.msra.mxu0 0.0
    %4497 = vmatprep.subr.mxu0 0.0
    %4498 = vmatpush1.msra.mxu0 0.0
    %4499 = vmatprep.subr.mxu0 0.0
    %4500 = vmatpush1.msra.mxu0 0.0
    %4501 = vmatprep.subr.mxu0 0.0
    %4502 = vmatpush1.msra.mxu0 0.0
    %4503 = vmatprep.subr.mxu0 0.0
    %4504 = vmatpush1.msra.mxu0 0.0
    %4505 = vmatprep.subr.mxu0 0.0
    %4506 = vmatpush1.msra.mxu0 0.0
    %4507 = vmatprep.mubr.f32.mxu0 0.0
    %4508 = vmatmul.mubr.f32.gmra.mrb[0].mxu0 %v4441
    %v4509 = vpop.f32.mrb[0].mxu0
    %v4510 = vadd.f32 0.0, %v4509
    %v4511 = vpop.f32.mrb[0].mxu0
    %4512 = vdwg.mxu0
    %v4513 = vld [vmem:[#allocation2] sm:$0xff]
    %v4514 = vld [vmem:[#allocation2 + $0x8] sm:$0xff]
    %v4515 = vld [vmem:[#allocation2 + $0x10] sm:$0xff]
    %v4516 = vld [vmem:[#allocation2 + $0x18] sm:$0xff]
    %v4517 = vld [vmem:[#allocation2 + $0x20] sm:$0xff]
    %v4518 = vld [vmem:[#allocation2 + $0x28] sm:$0xff]
    %v4519 = vld [vmem:[#allocation2 + $0x30] sm:$0xff]
    %4520 = vrot.lane.b32.xlu0 %v3918, 96
    %v4521 = vpop.permute.xlu0 %4520
    %v4522 = vsel %vm338, %v4521, 0
    %v4525 = vsel %vm338, %v4513, 0
    %v4528 = vsel %vm338, %v4514, 0
    %v4531 = vsel %vm338, %v4515, 0
    %v4534 = vsel %vm338, %v4516, 0
    %v4537 = vsel %vm338, %v4517, 0
    %v4540 = vsel %vm338, %v4518, 0
    %v4543 = vsel %vm338, %v4519, 0
    %4545 = vmatprep.subr.mxu0 0.0
    %4546 = vmatpush1.xpose.msra.mxu0 %v4525
    %4547 = vmatprep.subr.mxu0 0.0
    %4548 = vmatpush1.xpose.msra.mxu0 %v4528
    %4549 = vmatprep.subr.mxu0 0.0
    %4550 = vmatpush1.xpose.msra.mxu0 %v4531
    %4551 = vmatprep.subr.mxu0 0.0
    %4552 = vmatpush1.xpose.msra.mxu0 %v4534
    %4553 = vmatprep.subr.mxu0 0.0
    %4554 = vmatpush1.xpose.msra.mxu0 %v4537
    %4555 = vmatprep.subr.mxu0 0.0
    %4556 = vmatpush1.xpose.msra.mxu0 %v4540
    %4557 = vmatprep.subr.mxu0 0.0
    %4558 = vmatpush1.xpose.msra.mxu0 %v4543
    %4559 = vmatprep.subr.mxu0 0.0
    %4560 = vmatpush1.xpose.msra.mxu0 0.0
    %4561 = vmatprep.subr.mxu0 0.0
    %4562 = vmatpush1.xpose.msra.mxu0 0.0
    %4563 = vmatprep.subr.mxu0 0.0
    %4564 = vmatpush1.xpose.msra.mxu0 0.0
    %4565 = vmatprep.subr.mxu0 0.0
    %4566 = vmatpush1.xpose.msra.mxu0 0.0
    %4567 = vmatprep.subr.mxu0 0.0
    %4568 = vmatpush1.xpose.msra.mxu0 0.0
    %4569 = vmatprep.subr.mxu0 0.0
    %4570 = vmatpush1.xpose.msra.mxu0 0.0
    %4571 = vmatprep.subr.mxu0 0.0
    %4572 = vmatpush1.xpose.msra.mxu0 0.0
    %4573 = vmatprep.subr.mxu0 0.0
    %4574 = vmatpush1.xpose.msra.mxu0 0.0
    %4575 = vmatprep.subr.mxu0 0.0
    %4576 = vmatpush1.xpose.msra.mxu0 0.0
    %4577 = vmatprep.subr.mxu0 0.0
    %4578 = vmatpush1.xpose.msra.mxu0 0.0
    %4579 = vmatprep.subr.mxu0 0.0
    %4580 = vmatpush1.xpose.msra.mxu0 0.0
    %4581 = vmatprep.subr.mxu0 0.0
    %4582 = vmatpush1.xpose.msra.mxu0 0.0
    %4583 = vmatprep.subr.mxu0 0.0
    %4584 = vmatpush1.xpose.msra.mxu0 0.0
    %4585 = vmatprep.subr.mxu0 0.0
    %4586 = vmatpush1.xpose.msra.mxu0 0.0
    %4587 = vmatprep.subr.mxu0 0.0
    %4588 = vmatpush1.xpose.msra.mxu0 0.0
    %4589 = vmatprep.subr.mxu0 0.0
    %4590 = vmatpush1.xpose.msra.mxu0 0.0
    %4591 = vmatprep.subr.mxu0 0.0
    %4592 = vmatpush1.xpose.msra.mxu0 0.0
    %4593 = vmatprep.subr.mxu0 0.0
    %4594 = vmatpush1.xpose.msra.mxu0 0.0
    %4595 = vmatprep.subr.mxu0 0.0
    %4596 = vmatpush1.xpose.msra.mxu0 0.0
    %4597 = vmatprep.subr.mxu0 0.0
    %4598 = vmatpush1.xpose.msra.mxu0 0.0
    %4599 = vmatprep.subr.mxu0 0.0
    %4600 = vmatpush1.xpose.msra.mxu0 0.0
    %4601 = vmatprep.subr.mxu0 0.0
    %4602 = vmatpush1.xpose.msra.mxu0 0.0
    %4603 = vmatprep.subr.mxu0 0.0
    %4604 = vmatpush1.xpose.msra.mxu0 0.0
    %4605 = vmatprep.subr.mxu0 0.0
    %4606 = vmatpush1.xpose.msra.mxu0 0.0
    %4607 = vmatprep.subr.mxu0 0.0
    %4608 = vmatpush1.xpose.msra.mxu0 0.0
    %4609 = vmatprep.mubr.f32.mxu0 0.0
    %4610 = vmatmul.mubr.f32.gmra.mrb[0].mxu0 %v4522
    %v4611 = vpop.f32.mrb[0].mxu0
    %v4612 = vadd.f32 0.0, %v4611
    %v4613 = vpop.f32.mrb[0].mxu0
    %4614 = vdwg.mxu0
    %v4615 = vmul.f32 %v4612, 0.35355338
    %v4616 = vsel %vm155, %v4615, -1e+20
    %vm4617 = vcmask 457728
    %v4618 = vsel %vm4617, %v4616, -inf
    %4619 = vmax.xlane.f32.xlu0 %v4618
    %v4620 = vpop.xlane.xlu0 %4619
    %v4621 = vsub.f32 %v4616, %v4620
    %v4622 = vmul.f32 %v4621, 1.442695
    %v4623 = vpow.pop %v4622
    %v4624 = vsel %vm4617, %v4623, 0.0
    %4625 = vadd.xlane.f32.xlu0 %v4624
    %v4626 = vpop.xlane.xlu0 %4625
    %v4627 = vrcp.pop %v4626
    %v4628 = vmul.f32 %v4623, %v4627
    %4629 = vmatprep.subr.mxu0 0.0
    %4630 = vmatpush1.msra.mxu0 %v3959
    %4631 = vmatprep.subr.mxu0 0.0
    %4632 = vmatpush1.msra.mxu0 %v3960
    %4633 = vmatprep.subr.mxu0 0.0
    %4634 = vmatpush1.msra.mxu0 0.0
    %4635 = vmatprep.subr.mxu0 0.0
    %4636 = vmatpush1.msra.mxu0 0.0
    %4637 = vmatprep.subr.mxu0 0.0
    %4638 = vmatpush1.msra.mxu0 0.0
    %4639 = vmatprep.subr.mxu0 0.0
    %4640 = vmatpush1.msra.mxu0 0.0
    %4641 = vmatprep.subr.mxu0 0.0
    %4642 = vmatpush1.msra.mxu0 0.0
    %4643 = vmatprep.subr.mxu0 0.0
    %4644 = vmatpush1.msra.mxu0 0.0
    %4645 = vmatprep.subr.mxu0 0.0
    %4646 = vmatpush1.msra.mxu0 0.0
    %4647 = vmatprep.subr.mxu0 0.0
    %4648 = vmatpush1.msra.mxu0 0.0
    %4649 = vmatprep.subr.mxu0 0.0
    %4650 = vmatpush1.msra.mxu0 0.0
    %4651 = vmatprep.subr.mxu0 0.0
    %4652 = vmatpush1.msra.mxu0 0.0
    %4653 = vmatprep.subr.mxu0 0.0
    %4654 = vmatpush1.msra.mxu0 0.0
    %4655 = vmatprep.subr.mxu0 0.0
    %4656 = vmatpush1.msra.mxu0 0.0
    %4657 = vmatprep.subr.mxu0 0.0
    %4658 = vmatpush1.msra.mxu0 0.0
    %4659 = vmatprep.subr.mxu0 0.0
    %4660 = vmatpush1.msra.mxu0 0.0
    %4661 = vmatprep.subr.mxu0 0.0
    %4662 = vmatpush1.msra.mxu0 0.0
    %4663 = vmatprep.subr.mxu0 0.0
    %4664 = vmatpush1.msra.mxu0 0.0
    %4665 = vmatprep.subr.mxu0 0.0
    %4666 = vmatpush1.msra.mxu0 0.0
    %4667 = vmatprep.subr.mxu0 0.0
    %4668 = vmatpush1.msra.mxu0 0.0
    %4669 = vmatprep.subr.mxu0 0.0
    %4670 = vmatpush1.msra.mxu0 0.0
    %4671 = vmatprep.subr.mxu0 0.0
    %4672 = vmatpush1.msra.mxu0 0.0
    %4673 = vmatprep.subr.mxu0 0.0
    %4674 = vmatpush1.msra.mxu0 0.0
    %4675 = vmatprep.subr.mxu0 0.0
    %4676 = vmatpush1.msra.mxu0 0.0
    %4677 = vmatprep.subr.mxu0 0.0
    %4678 = vmatpush1.msra.mxu0 0.0
    %4679 = vmatprep.subr.mxu0 0.0
    %4680 = vmatpush1.msra.mxu0 0.0
    %4681 = vmatprep.subr.mxu0 0.0
    %4682 = vmatpush1.msra.mxu0 0.0
    %4683 = vmatprep.subr.mxu0 0.0
    %4684 = vmatpush1.msra.mxu0 0.0
    %4685 = vmatprep.subr.mxu0 0.0
    %4686 = vmatpush1.msra.mxu0 0.0
    %4687 = vmatprep.subr.mxu0 0.0
    %4688 = vmatpush1.msra.mxu0 0.0
    %4689 = vmatprep.subr.mxu0 0.0
    %4690 = vmatpush1.msra.mxu0 0.0
    %4691 = vmatprep.subr.mxu0 0.0
    %4692 = vmatpush1.msra.mxu0 0.0
    %4693 = vmatprep.mubr.f32.mxu0 0.0
    %4694 = vmatmul.mubr.f32.gmra.mrb[0].mxu0 %v4525
    %v4695 = vpop.f32.mrb[0].mxu0
    %v4696 = vadd.f32 0.0, %v4695
    %v4697 = vpop.f32.mrb[0].mxu0
    %4698 = vmatprep.mubr.f32.mxu0 0.0
    %4699 = vmatmul.mubr.f32.gmra.mrb[0].mxu0 %v4528
    %v4700 = vpop.f32.mrb[0].mxu0
    %v4701 = vadd.f32 0.0, %v4700
    %v4702 = vpop.f32.mrb[0].mxu0
    %4703 = vmatprep.mubr.f32.mxu0 0.0
    %4704 = vmatmul.mubr.f32.gmra.mrb[0].mxu0 %v4531
    %v4705 = vpop.f32.mrb[0].mxu0
    %v4706 = vadd.f32 0.0, %v4705
    %v4707 = vpop.f32.mrb[0].mxu0
    %4708 = vmatprep.mubr.f32.mxu0 0.0
    %4709 = vmatmul.mubr.f32.gmra.mrb[0].mxu0 %v4534
    %v4710 = vpop.f32.mrb[0].mxu0
    %v4711 = vadd.f32 0.0, %v4710
    %v4712 = vpop.f32.mrb[0].mxu0
    %4713 = vmatprep.mubr.f32.mxu0 0.0
    %4714 = vmatmul.mubr.f32.gmra.mrb[0].mxu0 %v4537
    %v4715 = vpop.f32.mrb[0].mxu0
    %v4716 = vadd.f32 0.0, %v4715
    %v4717 = vpop.f32.mrb[0].mxu0
    %4718 = vmatprep.mubr.f32.mxu0 0.0
    %4719 = vmatmul.mubr.f32.gmra.mrb[0].mxu0 %v4540
    %v4720 = vpop.f32.mrb[0].mxu0
    %v4721 = vadd.f32 0.0, %v4720
    %v4722 = vpop.f32.mrb[0].mxu0
    %4723 = vmatprep.mubr.f32.mxu0 0.0
    %4724 = vmatmul.mubr.f32.gmra.mrb[0].mxu0 %v4543
    %v4725 = vpop.f32.mrb[0].mxu0
    %v4726 = vadd.f32 0.0, %v4725
    %v4727 = vpop.f32.mrb[0].mxu0
    %4728 = vdwg.mxu0
    %v4730 = vsel %vm4617, %v4628, 0
    %4732 = vmatprep.subr.mxu0 0.0
    %4733 = vmatpush1.msra.mxu0 %v4696
    %4734 = vmatprep.subr.mxu0 0.0
    %4735 = vmatpush1.msra.mxu0 %v4701
    %4736 = vmatprep.subr.mxu0 0.0
    %4737 = vmatpush1.msra.mxu0 %v4706
    %4738 = vmatprep.subr.mxu0 0.0
    %4739 = vmatpush1.msra.mxu0 %v4711
    %4740 = vmatprep.subr.mxu0 0.0
    %4741 = vmatpush1.msra.mxu0 %v4716
    %4742 = vmatprep.subr.mxu0 0.0
    %4743 = vmatpush1.msra.mxu0 %v4721
    %4744 = vmatprep.subr.mxu0 0.0
    %4745 = vmatpush1.msra.mxu0 %v4726
    %4746 = vmatprep.subr.mxu0 0.0
    %4747 = vmatpush1.msra.mxu0 0.0
    %4748 = vmatprep.subr.mxu0 0.0
    %4749 = vmatpush1.msra.mxu0 0.0
    %4750 = vmatprep.subr.mxu0 0.0
    %4751 = vmatpush1.msra.mxu0 0.0
    %4752 = vmatprep.subr.mxu0 0.0
    %4753 = vmatpush1.msra.mxu0 0.0
    %4754 = vmatprep.subr.mxu0 0.0
    %4755 = vmatpush1.msra.mxu0 0.0
    %4756 = vmatprep.subr.mxu0 0.0
    %4757 = vmatpush1.msra.mxu0 0.0
    %4758 = vmatprep.subr.mxu0 0.0
    %4759 = vmatpush1.msra.mxu0 0.0
    %4760 = vmatprep.subr.mxu0 0.0
    %4761 = vmatpush1.msra.mxu0 0.0
    %4762 = vmatprep.subr.mxu0 0.0
    %4763 = vmatpush1.msra.mxu0 0.0
    %4764 = vmatprep.subr.mxu0 0.0
    %4765 = vmatpush1.msra.mxu0 0.0
    %4766 = vmatprep.subr.mxu0 0.0
    %4767 = vmatpush1.msra.mxu0 0.0
    %4768 = vmatprep.subr.mxu0 0.0
    %4769 = vmatpush1.msra.mxu0 0.0
    %4770 = vmatprep.subr.mxu0 0.0
    %4771 = vmatpush1.msra.mxu0 0.0
    %4772 = vmatprep.subr.mxu0 0.0
    %4773 = vmatpush1.msra.mxu0 0.0
    %4774 = vmatprep.subr.mxu0 0.0
    %4775 = vmatpush1.msra.mxu0 0.0
    %4776 = vmatprep.subr.mxu0 0.0
    %4777 = vmatpush1.msra.mxu0 0.0
    %4778 = vmatprep.subr.mxu0 0.0
    %4779 = vmatpush1.msra.mxu0 0.0
    %4780 = vmatprep.subr.mxu0 0.0
    %4781 = vmatpush1.msra.mxu0 0.0
    %4782 = vmatprep.subr.mxu0 0.0
    %4783 = vmatpush1.msra.mxu0 0.0
    %4784 = vmatprep.subr.mxu0 0.0
    %4785 = vmatpush1.msra.mxu0 0.0
    %4786 = vmatprep.subr.mxu0 0.0
    %4787 = vmatpush1.msra.mxu0 0.0
    %4788 = vmatprep.subr.mxu0 0.0
    %4789 = vmatpush1.msra.mxu0 0.0
    %4790 = vmatprep.subr.mxu0 0.0
    %4791 = vmatpush1.msra.mxu0 0.0
    %4792 = vmatprep.subr.mxu0 0.0
    %4793 = vmatpush1.msra.mxu0 0.0
    %4794 = vmatprep.subr.mxu0 0.0
    %4795 = vmatpush1.msra.mxu0 0.0
    %4796 = vmatprep.mubr.f32.mxu0 0.0
    %4797 = vmatmul.mubr.f32.gmra.mrb[0].mxu0 %v4730
    %v4798 = vpop.f32.mrb[0].mxu0
    %v4799 = vadd.f32 0.0, %v4798
    %v4800 = vpop.f32.mrb[0].mxu0
    %4801 = vdwg.mxu0
    %v4802 = vld [vmem:[#allocation2] sm:$0xff]
    %v4803 = vld [vmem:[#allocation2 + $0x8] sm:$0xff]
    %v4804 = vld [vmem:[#allocation2 + $0x10] sm:$0xff]
    %v4805 = vld [vmem:[#allocation2 + $0x18] sm:$0xff]
    %v4806 = vld [vmem:[#allocation2 + $0x20] sm:$0xff]
    %v4807 = vld [vmem:[#allocation2 + $0x28] sm:$0xff]
    %v4808 = vld [vmem:[#allocation2 + $0x30] sm:$0xff]
    %v4809 = vld [vmem:[#allocation2 + $0x38] sm:$0xff]
    %4810 = vrot.lane.b32.xlu0 %v3918, 80
    %v4811 = vpop.permute.xlu0 %4810
    %v4812 = vsel %vm338, %v4811, 0
    %v4815 = vsel %vm338, %v4802, 0
    %v4818 = vsel %vm338, %v4803, 0
    %v4821 = vsel %vm338, %v4804, 0
    %v4824 = vsel %vm338, %v4805, 0
    %v4827 = vsel %vm338, %v4806, 0
    %v4830 = vsel %vm338, %v4807, 0
    %v4833 = vsel %vm338, %v4808, 0
    %v4836 = vsel %vm338, %v4809, 0
    %4838 = vmatprep.subr.mxu0 0.0
    %4839 = vmatpush1.xpose.msra.mxu0 %v4815
    %4840 = vmatprep.subr.mxu0 0.0
    %4841 = vmatpush1.xpose.msra.mxu0 %v4818
    %4842 = vmatprep.subr.mxu0 0.0
    %4843 = vmatpush1.xpose.msra.mxu0 %v4821
    %4844 = vmatprep.subr.mxu0 0.0
    %4845 = vmatpush1.xpose.msra.mxu0 %v4824
    %4846 = vmatprep.subr.mxu0 0.0
    %4847 = vmatpush1.xpose.msra.mxu0 %v4827
    %4848 = vmatprep.subr.mxu0 0.0
    %4849 = vmatpush1.xpose.msra.mxu0 %v4830
    %4850 = vmatprep.subr.mxu0 0.0
    %4851 = vmatpush1.xpose.msra.mxu0 %v4833
    %4852 = vmatprep.subr.mxu0 0.0
    %4853 = vmatpush1.xpose.msra.mxu0 %v4836
    %4854 = vmatprep.subr.mxu0 0.0
    %4855 = vmatpush1.xpose.msra.mxu0 0.0
    %4856 = vmatprep.subr.mxu0 0.0
    %4857 = vmatpush1.xpose.msra.mxu0 0.0
    %4858 = vmatprep.subr.mxu0 0.0
    %4859 = vmatpush1.xpose.msra.mxu0 0.0
    %4860 = vmatprep.subr.mxu0 0.0
    %4861 = vmatpush1.xpose.msra.mxu0 0.0
    %4862 = vmatprep.subr.mxu0 0.0
    %4863 = vmatpush1.xpose.msra.mxu0 0.0
    %4864 = vmatprep.subr.mxu0 0.0
    %4865 = vmatpush1.xpose.msra.mxu0 0.0
    %4866 = vmatprep.subr.mxu0 0.0
    %4867 = vmatpush1.xpose.msra.mxu0 0.0
    %4868 = vmatprep.subr.mxu0 0.0
    %4869 = vmatpush1.xpose.msra.mxu0 0.0
    %4870 = vmatprep.subr.mxu0 0.0
    %4871 = vmatpush1.xpose.msra.mxu0 0.0
    %4872 = vmatprep.subr.mxu0 0.0
    %4873 = vmatpush1.xpose.msra.mxu0 0.0
    %4874 = vmatprep.subr.mxu0 0.0
    %4875 = vmatpush1.xpose.msra.mxu0 0.0
    %4876 = vmatprep.subr.mxu0 0.0
    %4877 = vmatpush1.xpose.msra.mxu0 0.0
    %4878 = vmatprep.subr.mxu0 0.0
    %4879 = vmatpush1.xpose.msra.mxu0 0.0
    %4880 = vmatprep.subr.mxu0 0.0
    %4881 = vmatpush1.xpose.msra.mxu0 0.0
    %4882 = vmatprep.subr.mxu0 0.0
    %4883 = vmatpush1.xpose.msra.mxu0 0.0
    %4884 = vmatprep.subr.mxu0 0.0
    %4885 = vmatpush1.xpose.msra.mxu0 0.0
    %4886 = vmatprep.subr.mxu0 0.0
    %4887 = vmatpush1.xpose.msra.mxu0 0.0
    %4888 = vmatprep.subr.mxu0 0.0
    %4889 = vmatpush1.xpose.msra.mxu0 0.0
    %4890 = vmatprep.subr.mxu0 0.0
    %4891 = vmatpush1.xpose.msra.mxu0 0.0
    %4892 = vmatprep.subr.mxu0 0.0
    %4893 = vmatpush1.xpose.msra.mxu0 0.0
    %4894 = vmatprep.subr.mxu0 0.0
    %4895 = vmatpush1.xpose.msra.mxu0 0.0
    %4896 = vmatprep.subr.mxu0 0.0
    %4897 = vmatpush1.xpose.msra.mxu0 0.0
    %4898 = vmatprep.subr.mxu0 0.0
    %4899 = vmatpush1.xpose.msra.mxu0 0.0
    %4900 = vmatprep.subr.mxu0 0.0
    %4901 = vmatpush1.xpose.msra.mxu0 0.0
    %4902 = vmatprep.mubr.f32.mxu0 0.0
    %4903 = vmatmul.mubr.f32.gmra.mrb[0].mxu0 %v4812
    %v4904 = vpop.f32.mrb[0].mxu0
    %v4905 = vadd.f32 0.0, %v4904
    %v4906 = vpop.f32.mrb[0].mxu0
    %4907 = vdwg.mxu0
    %v4908 = vmul.f32 %v4905, 0.35355338
    %v4909 = vsel %vm155, %v4908, -1e+20
    %v4910 = vsel %vm71, %v4909, -inf
    %4911 = vmax.xlane.f32.xlu0 %v4910
    %v4912 = vpop.xlane.xlu0 %4911
    %v4913 = vsub.f32 %v4909, %v4912
    %v4914 = vmul.f32 %v4913, 1.442695
    %v4915 = vpow.pop %v4914
    %v4916 = vsel %vm71, %v4915, 0.0
    %4917 = vadd.xlane.f32.xlu0 %v4916
    %v4918 = vpop.xlane.xlu0 %4917
    %v4919 = vrcp.pop %v4918
    %v4920 = vmul.f32 %v4915, %v4919
    %4921 = vmatprep.subr.mxu0 0.0
    %4922 = vmatpush1.msra.mxu0 %v3961
    %4923 = vmatprep.subr.mxu0 0.0
    %4924 = vmatpush1.msra.mxu0 %v3962
    %4925 = vmatprep.subr.mxu0 0.0
    %4926 = vmatpush1.msra.mxu0 0.0
    %4927 = vmatprep.subr.mxu0 0.0
    %4928 = vmatpush1.msra.mxu0 0.0
    %4929 = vmatprep.subr.mxu0 0.0
    %4930 = vmatpush1.msra.mxu0 0.0
    %4931 = vmatprep.subr.mxu0 0.0
    %4932 = vmatpush1.msra.mxu0 0.0
    %4933 = vmatprep.subr.mxu0 0.0
    %4934 = vmatpush1.msra.mxu0 0.0
    %4935 = vmatprep.subr.mxu0 0.0
    %4936 = vmatpush1.msra.mxu0 0.0
    %4937 = vmatprep.subr.mxu0 0.0
    %4938 = vmatpush1.msra.mxu0 0.0
    %4939 = vmatprep.subr.mxu0 0.0
    %4940 = vmatpush1.msra.mxu0 0.0
    %4941 = vmatprep.subr.mxu0 0.0
    %4942 = vmatpush1.msra.mxu0 0.0
    %4943 = vmatprep.subr.mxu0 0.0
    %4944 = vmatpush1.msra.mxu0 0.0
    %4945 = vmatprep.subr.mxu0 0.0
    %4946 = vmatpush1.msra.mxu0 0.0
    %4947 = vmatprep.subr.mxu0 0.0
    %4948 = vmatpush1.msra.mxu0 0.0
    %4949 = vmatprep.subr.mxu0 0.0
    %4950 = vmatpush1.msra.mxu0 0.0
    %4951 = vmatprep.subr.mxu0 0.0
    %4952 = vmatpush1.msra.mxu0 0.0
    %4953 = vmatprep.subr.mxu0 0.0
    %4954 = vmatpush1.msra.mxu0 0.0
    %4955 = vmatprep.subr.mxu0 0.0
    %4956 = vmatpush1.msra.mxu0 0.0
    %4957 = vmatprep.subr.mxu0 0.0
    %4958 = vmatpush1.msra.mxu0 0.0
    %4959 = vmatprep.subr.mxu0 0.0
    %4960 = vmatpush1.msra.mxu0 0.0
    %4961 = vmatprep.subr.mxu0 0.0
    %4962 = vmatpush1.msra.mxu0 0.0
    %4963 = vmatprep.subr.mxu0 0.0
    %4964 = vmatpush1.msra.mxu0 0.0
    %4965 = vmatprep.subr.mxu0 0.0
    %4966 = vmatpush1.msra.mxu0 0.0
    %4967 = vmatprep.subr.mxu0 0.0
    %4968 = vmatpush1.msra.mxu0 0.0
    %4969 = vmatprep.subr.mxu0 0.0
    %4970 = vmatpush1.msra.mxu0 0.0
    %4971 = vmatprep.subr.mxu0 0.0
    %4972 = vmatpush1.msra.mxu0 0.0
    %4973 = vmatprep.subr.mxu0 0.0
    %4974 = vmatpush1.msra.mxu0 0.0
    %4975 = vmatprep.subr.mxu0 0.0
    %4976 = vmatpush1.msra.mxu0 0.0
    %4977 = vmatprep.subr.mxu0 0.0
    %4978 = vmatpush1.msra.mxu0 0.0
    %4979 = vmatprep.subr.mxu0 0.0
    %4980 = vmatpush1.msra.mxu0 0.0
    %4981 = vmatprep.subr.mxu0 0.0
    %4982 = vmatpush1.msra.mxu0 0.0
    %4983 = vmatprep.subr.mxu0 0.0
    %4984 = vmatpush1.msra.mxu0 0.0
    %4985 = vmatprep.mubr.f32.mxu0 0.0
    %4986 = vmatmul.mubr.f32.gmra.mrb[0].mxu0 %v4815
    %v4987 = vpop.f32.mrb[0].mxu0
    %v4988 = vadd.f32 0.0, %v4987
    %v4989 = vpop.f32.mrb[0].mxu0
    %4990 = vmatprep.mubr.f32.mxu0 0.0
    %4991 = vmatmul.mubr.f32.gmra.mrb[0].mxu0 %v4818
    %v4992 = vpop.f32.mrb[0].mxu0
    %v4993 = vadd.f32 0.0, %v4992
    %v4994 = vpop.f32.mrb[0].mxu0
    %4995 = vmatprep.mubr.f32.mxu0 0.0
    %4996 = vmatmul.mubr.f32.gmra.mrb[0].mxu0 %v4821
    %v4997 = vpop.f32.mrb[0].mxu0
    %v4998 = vadd.f32 0.0, %v4997
    %v4999 = vpop.f32.mrb[0].mxu0
    %5000 = vmatprep.mubr.f32.mxu0 0.0
    %5001 = vmatmul.mubr.f32.gmra.mrb[0].mxu0 %v4824
    %v5002 = vpop.f32.mrb[0].mxu0
    %v5003 = vadd.f32 0.0, %v5002
    %v5004 = vpop.f32.mrb[0].mxu0
    %5005 = vmatprep.mubr.f32.mxu0 0.0
    %5006 = vmatmul.mubr.f32.gmra.mrb[0].mxu0 %v4827
    %v5007 = vpop.f32.mrb[0].mxu0
    %v5008 = vadd.f32 0.0, %v5007
    %v5009 = vpop.f32.mrb[0].mxu0
    %5010 = vmatprep.mubr.f32.mxu0 0.0
    %5011 = vmatmul.mubr.f32.gmra.mrb[0].mxu0 %v4830
    %v5012 = vpop.f32.mrb[0].mxu0
    %v5013 = vadd.f32 0.0, %v5012
    %v5014 = vpop.f32.mrb[0].mxu0
    %5015 = vmatprep.mubr.f32.mxu0 0.0
    %5016 = vmatmul.mubr.f32.gmra.mrb[0].mxu0 %v4833
    %v5017 = vpop.f32.mrb[0].mxu0
    %v5018 = vadd.f32 0.0, %v5017
    %v5019 = vpop.f32.mrb[0].mxu0
    %5020 = vmatprep.mubr.f32.mxu0 0.0
    %5021 = vmatmul.mubr.f32.gmra.mrb[0].mxu0 %v4836
    %v5022 = vpop.f32.mrb[0].mxu0
    %v5023 = vadd.f32 0.0, %v5022
    %v5024 = vpop.f32.mrb[0].mxu0
    %5025 = vdwg.mxu0
    %v5027 = vsel %vm71, %v4920, 0
    %5029 = vmatprep.subr.mxu0 0.0
    %5030 = vmatpush1.msra.mxu0 %v4988
    %5031 = vmatprep.subr.mxu0 0.0
    %5032 = vmatpush1.msra.mxu0 %v4993
    %5033 = vmatprep.subr.mxu0 0.0
    %5034 = vmatpush1.msra.mxu0 %v4998
    %5035 = vmatprep.subr.mxu0 0.0
    %5036 = vmatpush1.msra.mxu0 %v5003
    %5037 = vmatprep.subr.mxu0 0.0
    %5038 = vmatpush1.msra.mxu0 %v5008
    %5039 = vmatprep.subr.mxu0 0.0
    %5040 = vmatpush1.msra.mxu0 %v5013
    %5041 = vmatprep.subr.mxu0 0.0
    %5042 = vmatpush1.msra.mxu0 %v5018
    %5043 = vmatprep.subr.mxu0 0.0
    %5044 = vmatpush1.msra.mxu0 %v5023
    %5045 = vmatprep.subr.mxu0 0.0
    %5046 = vmatpush1.msra.mxu0 0.0
    %5047 = vmatprep.subr.mxu0 0.0
    %5048 = vmatpush1.msra.mxu0 0.0
    %5049 = vmatprep.subr.mxu0 0.0
    %5050 = vmatpush1.msra.mxu0 0.0
    %5051 = vmatprep.subr.mxu0 0.0
    %5052 = vmatpush1.msra.mxu0 0.0
    %5053 = vmatprep.subr.mxu0 0.0
    %5054 = vmatpush1.msra.mxu0 0.0
    %5055 = vmatprep.subr.mxu0 0.0
    %5056 = vmatpush1.msra.mxu0 0.0
    %5057 = vmatprep.subr.mxu0 0.0
    %5058 = vmatpush1.msra.mxu0 0.0
    %5059 = vmatprep.subr.mxu0 0.0
    %5060 = vmatpush1.msra.mxu0 0.0
    %5061 = vmatprep.subr.mxu0 0.0
    %5062 = vmatpush1.msra.mxu0 0.0
    %5063 = vmatprep.subr.mxu0 0.0
    %5064 = vmatpush1.msra.mxu0 0.0
    %5065 = vmatprep.subr.mxu0 0.0
    %5066 = vmatpush1.msra.mxu0 0.0
    %5067 = vmatprep.subr.mxu0 0.0
    %5068 = vmatpush1.msra.mxu0 0.0
    %5069 = vmatprep.subr.mxu0 0.0
    %5070 = vmatpush1.msra.mxu0 0.0
    %5071 = vmatprep.subr.mxu0 0.0
    %5072 = vmatpush1.msra.mxu0 0.0
    %5073 = vmatprep.subr.mxu0 0.0
    %5074 = vmatpush1.msra.mxu0 0.0
    %5075 = vmatprep.subr.mxu0 0.0
    %5076 = vmatpush1.msra.mxu0 0.0
    %5077 = vmatprep.subr.mxu0 0.0
    %5078 = vmatpush1.msra.mxu0 0.0
    %5079 = vmatprep.subr.mxu0 0.0
    %5080 = vmatpush1.msra.mxu0 0.0
    %5081 = vmatprep.subr.mxu0 0.0
    %5082 = vmatpush1.msra.mxu0 0.0
    %5083 = vmatprep.subr.mxu0 0.0
    %5084 = vmatpush1.msra.mxu0 0.0
    %5085 = vmatprep.subr.mxu0 0.0
    %5086 = vmatpush1.msra.mxu0 0.0
    %5087 = vmatprep.subr.mxu0 0.0
    %5088 = vmatpush1.msra.mxu0 0.0
    %5089 = vmatprep.subr.mxu0 0.0
    %5090 = vmatpush1.msra.mxu0 0.0
    %5091 = vmatprep.subr.mxu0 0.0
    %5092 = vmatpush1.msra.mxu0 0.0
    %5093 = vmatprep.mubr.f32.mxu0 0.0
    %5094 = vmatmul.mubr.f32.gmra.mrb[0].mxu0 %v5027
    %v5095 = vpop.f32.mrb[0].mxu0
    %v5096 = vadd.f32 0.0, %v5095
    %v5097 = vpop.f32.mrb[0].mxu0
    %5098 = vdwg.mxu0
    %5100 = vrot.lane.b32.xlu0 %v4510, 8
    %v5101 = vpop.permute.xlu0 %5100
    %5104 = vrot.lane.b32.xlu0 %v4799, 16
    %v5105 = vpop.permute.xlu0 %5104
    %5108 = vrot.lane.b32.xlu0 %v5096, 24
    %v5109 = vpop.permute.xlu0 %5108
    %v5111 = vsel %vm455, %v4230, %v5101
    %v5112 = vsel %vm338, %v5111, %v5105
    %v5113 = vsel %vm941, %v5112, %v5109
    %v5114 = vld [vmem:[%s353] sm:$0xff]
    %v5115 = vld [vmem:[%s353 + $0x8] sm:$0xff]
    %v5116 = vld [vmem:[%s353 + $0x10] sm:$0xff]
    %v5117 = vld [vmem:[%s353 + $0x18] sm:$0xff]
    %v5118 = vld [vmem:[%s353 + $0x20] sm:$0xff]
    %v5120 = vsel %vm338, %v3923, 0
    %v5123 = vsel %vm338, %v5114, 0
    %v5126 = vsel %vm338, %v5115, 0
    %v5129 = vsel %vm338, %v5116, 0
    %v5132 = vsel %vm338, %v5117, 0
    %v5135 = vsel %vm338, %v5118, 0
    %5137 = vmatprep.subr.mxu0 0.0
    %5138 = vmatpush1.xpose.msra.mxu0 %v5123
    %5139 = vmatprep.subr.mxu0 0.0
    %5140 = vmatpush1.xpose.msra.mxu0 %v5126
    %5141 = vmatprep.subr.mxu0 0.0
    %5142 = vmatpush1.xpose.msra.mxu0 %v5129
    %5143 = vmatprep.subr.mxu0 0.0
    %5144 = vmatpush1.xpose.msra.mxu0 %v5132
    %5145 = vmatprep.subr.mxu0 0.0
    %5146 = vmatpush1.xpose.msra.mxu0 %v5135
    %5147 = vmatprep.subr.mxu0 0.0
    %5148 = vmatpush1.xpose.msra.mxu0 0.0
    %5149 = vmatprep.subr.mxu0 0.0
    %5150 = vmatpush1.xpose.msra.mxu0 0.0
    %5151 = vmatprep.subr.mxu0 0.0
    %5152 = vmatpush1.xpose.msra.mxu0 0.0
    %5153 = vmatprep.subr.mxu0 0.0
    %5154 = vmatpush1.xpose.msra.mxu0 0.0
    %5155 = vmatprep.subr.mxu0 0.0
    %5156 = vmatpush1.xpose.msra.mxu0 0.0
    %5157 = vmatprep.subr.mxu0 0.0
    %5158 = vmatpush1.xpose.msra.mxu0 0.0
    %5159 = vmatprep.subr.mxu0 0.0
    %5160 = vmatpush1.xpose.msra.mxu0 0.0
    %5161 = vmatprep.subr.mxu0 0.0
    %5162 = vmatpush1.xpose.msra.mxu0 0.0
    %5163 = vmatprep.subr.mxu0 0.0
    %5164 = vmatpush1.xpose.msra.mxu0 0.0
    %5165 = vmatprep.subr.mxu0 0.0
    %5166 = vmatpush1.xpose.msra.mxu0 0.0
    %5167 = vmatprep.subr.mxu0 0.0
    %5168 = vmatpush1.xpose.msra.mxu0 0.0
    %5169 = vmatprep.subr.mxu0 0.0
    %5170 = vmatpush1.xpose.msra.mxu0 0.0
    %5171 = vmatprep.subr.mxu0 0.0
    %5172 = vmatpush1.xpose.msra.mxu0 0.0
    %5173 = vmatprep.subr.mxu0 0.0
    %5174 = vmatpush1.xpose.msra.mxu0 0.0
    %5175 = vmatprep.subr.mxu0 0.0
    %5176 = vmatpush1.xpose.msra.mxu0 0.0
    %5177 = vmatprep.subr.mxu0 0.0
    %5178 = vmatpush1.xpose.msra.mxu0 0.0
    %5179 = vmatprep.subr.mxu0 0.0
    %5180 = vmatpush1.xpose.msra.mxu0 0.0
    %5181 = vmatprep.subr.mxu0 0.0
    %5182 = vmatpush1.xpose.msra.mxu0 0.0
    %5183 = vmatprep.subr.mxu0 0.0
    %5184 = vmatpush1.xpose.msra.mxu0 0.0
    %5185 = vmatprep.subr.mxu0 0.0
    %5186 = vmatpush1.xpose.msra.mxu0 0.0
    %5187 = vmatprep.subr.mxu0 0.0
    %5188 = vmatpush1.xpose.msra.mxu0 0.0
    %5189 = vmatprep.subr.mxu0 0.0
    %5190 = vmatpush1.xpose.msra.mxu0 0.0
    %5191 = vmatprep.subr.mxu0 0.0
    %5192 = vmatpush1.xpose.msra.mxu0 0.0
    %5193 = vmatprep.subr.mxu0 0.0
    %5194 = vmatpush1.xpose.msra.mxu0 0.0
    %5195 = vmatprep.subr.mxu0 0.0
    %5196 = vmatpush1.xpose.msra.mxu0 0.0
    %5197 = vmatprep.subr.mxu0 0.0
    %5198 = vmatpush1.xpose.msra.mxu0 0.0
    %5199 = vmatprep.subr.mxu0 0.0
    %5200 = vmatpush1.xpose.msra.mxu0 0.0
    %5201 = vmatprep.mubr.f32.mxu0 0.0
    %5202 = vmatmul.mubr.f32.gmra.mrb[0].mxu0 %v5120
    %v5203 = vpop.f32.mrb[0].mxu0
    %v5204 = vadd.f32 0.0, %v5203
    %v5205 = vpop.f32.mrb[0].mxu0
    %5206 = vdwg.mxu0
    %v5207 = vmul.f32 %v5204, 0.35355338
    %v5208 = vsel %vm155, %v5207, -1e+20
    %v5209 = vsel %vm4058, %v5208, -inf
    %5210 = vmax.xlane.f32.xlu0 %v5209
    %v5211 = vpop.xlane.xlu0 %5210
    %v5212 = vsub.f32 %v5208, %v5211
    %v5213 = vmul.f32 %v5212, 1.442695
    %v5214 = vpow.pop %v5213
    %v5215 = vsel %vm4058, %v5214, 0.0
    %5216 = vadd.xlane.f32.xlu0 %v5215
    %v5217 = vpop.xlane.xlu0 %5216
    %v5218 = vrcp.pop %v5217
    %v5219 = vmul.f32 %v5214, %v5218
    %5220 = vmatprep.subr.mxu0 0.0
    %5221 = vmatpush1.msra.mxu0 %v3955
    %5222 = vmatprep.subr.mxu0 0.0
    %5223 = vmatpush1.msra.mxu0 %v3956
    %5224 = vmatprep.subr.mxu0 0.0
    %5225 = vmatpush1.msra.mxu0 0.0
    %5226 = vmatprep.subr.mxu0 0.0
    %5227 = vmatpush1.msra.mxu0 0.0
    %5228 = vmatprep.subr.mxu0 0.0
    %5229 = vmatpush1.msra.mxu0 0.0
    %5230 = vmatprep.subr.mxu0 0.0
    %5231 = vmatpush1.msra.mxu0 0.0
    %5232 = vmatprep.subr.mxu0 0.0
    %5233 = vmatpush1.msra.mxu0 0.0
    %5234 = vmatprep.subr.mxu0 0.0
    %5235 = vmatpush1.msra.mxu0 0.0
    %5236 = vmatprep.subr.mxu0 0.0
    %5237 = vmatpush1.msra.mxu0 0.0
    %5238 = vmatprep.subr.mxu0 0.0
    %5239 = vmatpush1.msra.mxu0 0.0
    %5240 = vmatprep.subr.mxu0 0.0
    %5241 = vmatpush1.msra.mxu0 0.0
    %5242 = vmatprep.subr.mxu0 0.0
    %5243 = vmatpush1.msra.mxu0 0.0
    %5244 = vmatprep.subr.mxu0 0.0
    %5245 = vmatpush1.msra.mxu0 0.0
    %5246 = vmatprep.subr.mxu0 0.0
    %5247 = vmatpush1.msra.mxu0 0.0
    %5248 = vmatprep.subr.mxu0 0.0
    %5249 = vmatpush1.msra.mxu0 0.0
    %5250 = vmatprep.subr.mxu0 0.0
    %5251 = vmatpush1.msra.mxu0 0.0
    %5252 = vmatprep.subr.mxu0 0.0
    %5253 = vmatpush1.msra.mxu0 0.0
    %5254 = vmatprep.subr.mxu0 0.0
    %5255 = vmatpush1.msra.mxu0 0.0
    %5256 = vmatprep.subr.mxu0 0.0
    %5257 = vmatpush1.msra.mxu0 0.0
    %5258 = vmatprep.subr.mxu0 0.0
    %5259 = vmatpush1.msra.mxu0 0.0
    %5260 = vmatprep.subr.mxu0 0.0
    %5261 = vmatpush1.msra.mxu0 0.0
    %5262 = vmatprep.subr.mxu0 0.0
    %5263 = vmatpush1.msra.mxu0 0.0
    %5264 = vmatprep.subr.mxu0 0.0
    %5265 = vmatpush1.msra.mxu0 0.0
    %5266 = vmatprep.subr.mxu0 0.0
    %5267 = vmatpush1.msra.mxu0 0.0
    %5268 = vmatprep.subr.mxu0 0.0
    %5269 = vmatpush1.msra.mxu0 0.0
    %5270 = vmatprep.subr.mxu0 0.0
    %5271 = vmatpush1.msra.mxu0 0.0
    %5272 = vmatprep.subr.mxu0 0.0
    %5273 = vmatpush1.msra.mxu0 0.0
    %5274 = vmatprep.subr.mxu0 0.0
    %5275 = vmatpush1.msra.mxu0 0.0
    %5276 = vmatprep.subr.mxu0 0.0
    %5277 = vmatpush1.msra.mxu0 0.0
    %5278 = vmatprep.subr.mxu0 0.0
    %5279 = vmatpush1.msra.mxu0 0.0
    %5280 = vmatprep.subr.mxu0 0.0
    %5281 = vmatpush1.msra.mxu0 0.0
    %5282 = vmatprep.subr.mxu0 0.0
    %5283 = vmatpush1.msra.mxu0 0.0
    %5284 = vmatprep.mubr.f32.mxu0 0.0
    %5285 = vmatmul.mubr.f32.gmra.mrb[0].mxu0 %v5123
    %v5286 = vpop.f32.mrb[0].mxu0
    %v5287 = vadd.f32 0.0, %v5286
    %v5288 = vpop.f32.mrb[0].mxu0
    %5289 = vmatprep.mubr.f32.mxu0 0.0
    %5290 = vmatmul.mubr.f32.gmra.mrb[0].mxu0 %v5126
    %v5291 = vpop.f32.mrb[0].mxu0
    %v5292 = vadd.f32 0.0, %v5291
    %v5293 = vpop.f32.mrb[0].mxu0
    %5294 = vmatprep.mubr.f32.mxu0 0.0
    %5295 = vmatmul.mubr.f32.gmra.mrb[0].mxu0 %v5129
    %v5296 = vpop.f32.mrb[0].mxu0
    %v5297 = vadd.f32 0.0, %v5296
    %v5298 = vpop.f32.mrb[0].mxu0
    %5299 = vmatprep.mubr.f32.mxu0 0.0
    %5300 = vmatmul.mubr.f32.gmra.mrb[0].mxu0 %v5132
    %v5301 = vpop.f32.mrb[0].mxu0
    %v5302 = vadd.f32 0.0, %v5301
    %v5303 = vpop.f32.mrb[0].mxu0
    %5304 = vmatprep.mubr.f32.mxu0 0.0
    %5305 = vmatmul.mubr.f32.gmra.mrb[0].mxu0 %v5135
    %v5306 = vpop.f32.mrb[0].mxu0
    %v5307 = vadd.f32 0.0, %v5306
    %v5308 = vpop.f32.mrb[0].mxu0
    %5309 = vdwg.mxu0
    %v5311 = vsel %vm4058, %v5219, 0
    %5313 = vmatprep.subr.mxu0 0.0
    %5314 = vmatpush1.msra.mxu0 %v5287
    %5315 = vmatprep.subr.mxu0 0.0
    %5316 = vmatpush1.msra.mxu0 %v5292
    %5317 = vmatprep.subr.mxu0 0.0
    %5318 = vmatpush1.msra.mxu0 %v5297
    %5319 = vmatprep.subr.mxu0 0.0
    %5320 = vmatpush1.msra.mxu0 %v5302
    %5321 = vmatprep.subr.mxu0 0.0
    %5322 = vmatpush1.msra.mxu0 %v5307
    %5323 = vmatprep.subr.mxu0 0.0
    %5324 = vmatpush1.msra.mxu0 0.0
    %5325 = vmatprep.subr.mxu0 0.0
    %5326 = vmatpush1.msra.mxu0 0.0
    %5327 = vmatprep.subr.mxu0 0.0
    %5328 = vmatpush1.msra.mxu0 0.0
    %5329 = vmatprep.subr.mxu0 0.0
    %5330 = vmatpush1.msra.mxu0 0.0
    %5331 = vmatprep.subr.mxu0 0.0
    %5332 = vmatpush1.msra.mxu0 0.0
    %5333 = vmatprep.subr.mxu0 0.0
    %5334 = vmatpush1.msra.mxu0 0.0
    %5335 = vmatprep.subr.mxu0 0.0
    %5336 = vmatpush1.msra.mxu0 0.0
    %5337 = vmatprep.subr.mxu0 0.0
    %5338 = vmatpush1.msra.mxu0 0.0
    %5339 = vmatprep.subr.mxu0 0.0
    %5340 = vmatpush1.msra.mxu0 0.0
    %5341 = vmatprep.subr.mxu0 0.0
    %5342 = vmatpush1.msra.mxu0 0.0
    %5343 = vmatprep.subr.mxu0 0.0
    %5344 = vmatpush1.msra.mxu0 0.0
    %5345 = vmatprep.subr.mxu0 0.0
    %5346 = vmatpush1.msra.mxu0 0.0
    %5347 = vmatprep.subr.mxu0 0.0
    %5348 = vmatpush1.msra.mxu0 0.0
    %5349 = vmatprep.subr.mxu0 0.0
    %5350 = vmatpush1.msra.mxu0 0.0
    %5351 = vmatprep.subr.mxu0 0.0
    %5352 = vmatpush1.msra.mxu0 0.0
    %5353 = vmatprep.subr.mxu0 0.0
    %5354 = vmatpush1.msra.mxu0 0.0
    %5355 = vmatprep.subr.mxu0 0.0
    %5356 = vmatpush1.msra.mxu0 0.0
    %5357 = vmatprep.subr.mxu0 0.0
    %5358 = vmatpush1.msra.mxu0 0.0
    %5359 = vmatprep.subr.mxu0 0.0
    %5360 = vmatpush1.msra.mxu0 0.0
    %5361 = vmatprep.subr.mxu0 0.0
    %5362 = vmatpush1.msra.mxu0 0.0
    %5363 = vmatprep.subr.mxu0 0.0
    %5364 = vmatpush1.msra.mxu0 0.0
    %5365 = vmatprep.subr.mxu0 0.0
    %5366 = vmatpush1.msra.mxu0 0.0
    %5367 = vmatprep.subr.mxu0 0.0
    %5368 = vmatpush1.msra.mxu0 0.0
    %5369 = vmatprep.subr.mxu0 0.0
    %5370 = vmatpush1.msra.mxu0 0.0
    %5371 = vmatprep.subr.mxu0 0.0
    %5372 = vmatpush1.msra.mxu0 0.0
    %5373 = vmatprep.subr.mxu0 0.0
    %5374 = vmatpush1.msra.mxu0 0.0
    %5375 = vmatprep.subr.mxu0 0.0
    %5376 = vmatpush1.msra.mxu0 0.0
    %5377 = vmatprep.mubr.f32.mxu0 0.0
    %5378 = vmatmul.mubr.f32.gmra.mrb[0].mxu0 %v5311
    %v5379 = vpop.f32.mrb[0].mxu0
    %v5380 = vadd.f32 0.0, %v5379
    %v5381 = vpop.f32.mrb[0].mxu0
    %5382 = vdwg.mxu0
    %v5383 = vld [vmem:[%s353] sm:$0xff]
    %v5384 = vld [vmem:[%s353 + $0x8] sm:$0xff]
    %v5385 = vld [vmem:[%s353 + $0x10] sm:$0xff]
    %v5386 = vld [vmem:[%s353 + $0x18] sm:$0xff]
    %v5387 = vld [vmem:[%s353 + $0x20] sm:$0xff]
    %v5388 = vld [vmem:[%s353 + $0x28] sm:$0xff]
    %5389 = vrot.lane.b32.xlu0 %v3923, 112
    %v5390 = vpop.permute.xlu0 %5389
    %v5391 = vsel %vm338, %v5390, 0
    %v5394 = vsel %vm338, %v5383, 0
    %v5397 = vsel %vm338, %v5384, 0
    %v5400 = vsel %vm338, %v5385, 0
    %v5403 = vsel %vm338, %v5386, 0
    %v5406 = vsel %vm338, %v5387, 0
    %v5409 = vsel %vm338, %v5388, 0
    %5411 = vmatprep.subr.mxu0 0.0
    %5412 = vmatpush1.xpose.msra.mxu0 %v5394
    %5413 = vmatprep.subr.mxu0 0.0
    %5414 = vmatpush1.xpose.msra.mxu0 %v5397
    %5415 = vmatprep.subr.mxu0 0.0
    %5416 = vmatpush1.xpose.msra.mxu0 %v5400
    %5417 = vmatprep.subr.mxu0 0.0
    %5418 = vmatpush1.xpose.msra.mxu0 %v5403
    %5419 = vmatprep.subr.mxu0 0.0
    %5420 = vmatpush1.xpose.msra.mxu0 %v5406
    %5421 = vmatprep.subr.mxu0 0.0
    %5422 = vmatpush1.xpose.msra.mxu0 %v5409
    %5423 = vmatprep.subr.mxu0 0.0
    %5424 = vmatpush1.xpose.msra.mxu0 0.0
    %5425 = vmatprep.subr.mxu0 0.0
    %5426 = vmatpush1.xpose.msra.mxu0 0.0
    %5427 = vmatprep.subr.mxu0 0.0
    %5428 = vmatpush1.xpose.msra.mxu0 0.0
    %5429 = vmatprep.subr.mxu0 0.0
    %5430 = vmatpush1.xpose.msra.mxu0 0.0
    %5431 = vmatprep.subr.mxu0 0.0
    %5432 = vmatpush1.xpose.msra.mxu0 0.0
    %5433 = vmatprep.subr.mxu0 0.0
    %5434 = vmatpush1.xpose.msra.mxu0 0.0
    %5435 = vmatprep.subr.mxu0 0.0
    %5436 = vmatpush1.xpose.msra.mxu0 0.0
    %5437 = vmatprep.subr.mxu0 0.0
    %5438 = vmatpush1.xpose.msra.mxu0 0.0
    %5439 = vmatprep.subr.mxu0 0.0
    %5440 = vmatpush1.xpose.msra.mxu0 0.0
    %5441 = vmatprep.subr.mxu0 0.0
    %5442 = vmatpush1.xpose.msra.mxu0 0.0
    %5443 = vmatprep.subr.mxu0 0.0
    %5444 = vmatpush1.xpose.msra.mxu0 0.0
    %5445 = vmatprep.subr.mxu0 0.0
    %5446 = vmatpush1.xpose.msra.mxu0 0.0
    %5447 = vmatprep.subr.mxu0 0.0
    %5448 = vmatpush1.xpose.msra.mxu0 0.0
    %5449 = vmatprep.subr.mxu0 0.0
    %5450 = vmatpush1.xpose.msra.mxu0 0.0
    %5451 = vmatprep.subr.mxu0 0.0
    %5452 = vmatpush1.xpose.msra.mxu0 0.0
    %5453 = vmatprep.subr.mxu0 0.0
    %5454 = vmatpush1.xpose.msra.mxu0 0.0
    %5455 = vmatprep.subr.mxu0 0.0
    %5456 = vmatpush1.xpose.msra.mxu0 0.0
    %5457 = vmatprep.subr.mxu0 0.0
    %5458 = vmatpush1.xpose.msra.mxu0 0.0
    %5459 = vmatprep.subr.mxu0 0.0
    %5460 = vmatpush1.xpose.msra.mxu0 0.0
    %5461 = vmatprep.subr.mxu0 0.0
    %5462 = vmatpush1.xpose.msra.mxu0 0.0
    %5463 = vmatprep.subr.mxu0 0.0
    %5464 = vmatpush1.xpose.msra.mxu0 0.0
    %5465 = vmatprep.subr.mxu0 0.0
    %5466 = vmatpush1.xpose.msra.mxu0 0.0
    %5467 = vmatprep.subr.mxu0 0.0
    %5468 = vmatpush1.xpose.msra.mxu0 0.0
    %5469 = vmatprep.subr.mxu0 0.0
    %5470 = vmatpush1.xpose.msra.mxu0 0.0
    %5471 = vmatprep.subr.mxu0 0.0
    %5472 = vmatpush1.xpose.msra.mxu0 0.0
    %5473 = vmatprep.subr.mxu0 0.0
    %5474 = vmatpush1.xpose.msra.mxu0 0.0
    %5475 = vmatprep.mubr.f32.mxu0 0.0
    %5476 = vmatmul.mubr.f32.gmra.mrb[0].mxu0 %v5391
    %v5477 = vpop.f32.mrb[0].mxu0
    %v5478 = vadd.f32 0.0, %v5477
    %v5479 = vpop.f32.mrb[0].mxu0
    %5480 = vdwg.mxu0
    %v5481 = vmul.f32 %v5478, 0.35355338
    %v5482 = vsel %vm155, %v5481, -1e+20
    %v5483 = vsel %vm4333, %v5482, -inf
    %5484 = vmax.xlane.f32.xlu0 %v5483
    %v5485 = vpop.xlane.xlu0 %5484
    %v5486 = vsub.f32 %v5482, %v5485
    %v5487 = vmul.f32 %v5486, 1.442695
    %v5488 = vpow.pop %v5487
    %v5489 = vsel %vm4333, %v5488, 0.0
    %5490 = vadd.xlane.f32.xlu0 %v5489
    %v5491 = vpop.xlane.xlu0 %5490
    %v5492 = vrcp.pop %v5491
    %v5493 = vmul.f32 %v5488, %v5492
    %5494 = vmatprep.subr.mxu0 0.0
    %5495 = vmatpush1.msra.mxu0 %v3957
    %5496 = vmatprep.subr.mxu0 0.0
    %5497 = vmatpush1.msra.mxu0 %v3958
    %5498 = vmatprep.subr.mxu0 0.0
    %5499 = vmatpush1.msra.mxu0 0.0
    %5500 = vmatprep.subr.mxu0 0.0
    %5501 = vmatpush1.msra.mxu0 0.0
    %5502 = vmatprep.subr.mxu0 0.0
    %5503 = vmatpush1.msra.mxu0 0.0
    %5504 = vmatprep.subr.mxu0 0.0
    %5505 = vmatpush1.msra.mxu0 0.0
    %5506 = vmatprep.subr.mxu0 0.0
    %5507 = vmatpush1.msra.mxu0 0.0
    %5508 = vmatprep.subr.mxu0 0.0
    %5509 = vmatpush1.msra.mxu0 0.0
    %5510 = vmatprep.subr.mxu0 0.0
    %5511 = vmatpush1.msra.mxu0 0.0
    %5512 = vmatprep.subr.mxu0 0.0
    %5513 = vmatpush1.msra.mxu0 0.0
    %5514 = vmatprep.subr.mxu0 0.0
    %5515 = vmatpush1.msra.mxu0 0.0
    %5516 = vmatprep.subr.mxu0 0.0
    %5517 = vmatpush1.msra.mxu0 0.0
    %5518 = vmatprep.subr.mxu0 0.0
    %5519 = vmatpush1.msra.mxu0 0.0
    %5520 = vmatprep.subr.mxu0 0.0
    %5521 = vmatpush1.msra.mxu0 0.0
    %5522 = vmatprep.subr.mxu0 0.0
    %5523 = vmatpush1.msra.mxu0 0.0
    %5524 = vmatprep.subr.mxu0 0.0
    %5525 = vmatpush1.msra.mxu0 0.0
    %5526 = vmatprep.subr.mxu0 0.0
    %5527 = vmatpush1.msra.mxu0 0.0
    %5528 = vmatprep.subr.mxu0 0.0
    %5529 = vmatpush1.msra.mxu0 0.0
    %5530 = vmatprep.subr.mxu0 0.0
    %5531 = vmatpush1.msra.mxu0 0.0
    %5532 = vmatprep.subr.mxu0 0.0
    %5533 = vmatpush1.msra.mxu0 0.0
    %5534 = vmatprep.subr.mxu0 0.0
    %5535 = vmatpush1.msra.mxu0 0.0
    %5536 = vmatprep.subr.mxu0 0.0
    %5537 = vmatpush1.msra.mxu0 0.0
    %5538 = vmatprep.subr.mxu0 0.0
    %5539 = vmatpush1.msra.mxu0 0.0
    %5540 = vmatprep.subr.mxu0 0.0
    %5541 = vmatpush1.msra.mxu0 0.0
    %5542 = vmatprep.subr.mxu0 0.0
    %5543 = vmatpush1.msra.mxu0 0.0
    %5544 = vmatprep.subr.mxu0 0.0
    %5545 = vmatpush1.msra.mxu0 0.0
    %5546 = vmatprep.subr.mxu0 0.0
    %5547 = vmatpush1.msra.mxu0 0.0
    %5548 = vmatprep.subr.mxu0 0.0
    %5549 = vmatpush1.msra.mxu0 0.0
    %5550 = vmatprep.subr.mxu0 0.0
    %5551 = vmatpush1.msra.mxu0 0.0
    %5552 = vmatprep.subr.mxu0 0.0
    %5553 = vmatpush1.msra.mxu0 0.0
    %5554 = vmatprep.subr.mxu0 0.0
    %5555 = vmatpush1.msra.mxu0 0.0
    %5556 = vmatprep.subr.mxu0 0.0
    %5557 = vmatpush1.msra.mxu0 0.0
    %5558 = vmatprep.mubr.f32.mxu0 0.0
    %5559 = vmatmul.mubr.f32.gmra.mrb[0].mxu0 %v5394
    %v5560 = vpop.f32.mrb[0].mxu0
    %v5561 = vadd.f32 0.0, %v5560
    %v5562 = vpop.f32.mrb[0].mxu0
    %5563 = vmatprep.mubr.f32.mxu0 0.0
    %5564 = vmatmul.mubr.f32.gmra.mrb[0].mxu0 %v5397
    %v5565 = vpop.f32.mrb[0].mxu0
    %v5566 = vadd.f32 0.0, %v5565
    %v5567 = vpop.f32.mrb[0].mxu0
    %5568 = vmatprep.mubr.f32.mxu0 0.0
    %5569 = vmatmul.mubr.f32.gmra.mrb[0].mxu0 %v5400
    %v5570 = vpop.f32.mrb[0].mxu0
    %v5571 = vadd.f32 0.0, %v5570
    %v5572 = vpop.f32.mrb[0].mxu0
    %5573 = vmatprep.mubr.f32.mxu0 0.0
    %5574 = vmatmul.mubr.f32.gmra.mrb[0].mxu0 %v5403
    %v5575 = vpop.f32.mrb[0].mxu0
    %v5576 = vadd.f32 0.0, %v5575
    %v5577 = vpop.f32.mrb[0].mxu0
    %5578 = vmatprep.mubr.f32.mxu0 0.0
    %5579 = vmatmul.mubr.f32.gmra.mrb[0].mxu0 %v5406
    %v5580 = vpop.f32.mrb[0].mxu0
    %v5581 = vadd.f32 0.0, %v5580
    %v5582 = vpop.f32.mrb[0].mxu0
    %5583 = vmatprep.mubr.f32.mxu0 0.0
    %5584 = vmatmul.mubr.f32.gmra.mrb[0].mxu0 %v5409
    %v5585 = vpop.f32.mrb[0].mxu0
    %v5586 = vadd.f32 0.0, %v5585
    %v5587 = vpop.f32.mrb[0].mxu0
    %5588 = vdwg.mxu0
    %v5590 = vsel %vm4333, %v5493, 0
    %5592 = vmatprep.subr.mxu0 0.0
    %5593 = vmatpush1.msra.mxu0 %v5561
    %5594 = vmatprep.subr.mxu0 0.0
    %5595 = vmatpush1.msra.mxu0 %v5566
    %5596 = vmatprep.subr.mxu0 0.0
    %5597 = vmatpush1.msra.mxu0 %v5571
    %5598 = vmatprep.subr.mxu0 0.0
    %5599 = vmatpush1.msra.mxu0 %v5576
    %5600 = vmatprep.subr.mxu0 0.0
    %5601 = vmatpush1.msra.mxu0 %v5581
    %5602 = vmatprep.subr.mxu0 0.0
    %5603 = vmatpush1.msra.mxu0 %v5586
    %5604 = vmatprep.subr.mxu0 0.0
    %5605 = vmatpush1.msra.mxu0 0.0
    %5606 = vmatprep.subr.mxu0 0.0
    %5607 = vmatpush1.msra.mxu0 0.0
    %5608 = vmatprep.subr.mxu0 0.0
    %5609 = vmatpush1.msra.mxu0 0.0
    %5610 = vmatprep.subr.mxu0 0.0
    %5611 = vmatpush1.msra.mxu0 0.0
    %5612 = vmatprep.subr.mxu0 0.0
    %5613 = vmatpush1.msra.mxu0 0.0
    %5614 = vmatprep.subr.mxu0 0.0
    %5615 = vmatpush1.msra.mxu0 0.0
    %5616 = vmatprep.subr.mxu0 0.0
    %5617 = vmatpush1.msra.mxu0 0.0
    %5618 = vmatprep.subr.mxu0 0.0
    %5619 = vmatpush1.msra.mxu0 0.0
    %5620 = vmatprep.subr.mxu0 0.0
    %5621 = vmatpush1.msra.mxu0 0.0
    %5622 = vmatprep.subr.mxu0 0.0
    %5623 = vmatpush1.msra.mxu0 0.0
    %5624 = vmatprep.subr.mxu0 0.0
    %5625 = vmatpush1.msra.mxu0 0.0
    %5626 = vmatprep.subr.mxu0 0.0
    %5627 = vmatpush1.msra.mxu0 0.0
    %5628 = vmatprep.subr.mxu0 0.0
    %5629 = vmatpush1.msra.mxu0 0.0
    %5630 = vmatprep.subr.mxu0 0.0
    %5631 = vmatpush1.msra.mxu0 0.0
    %5632 = vmatprep.subr.mxu0 0.0
    %5633 = vmatpush1.msra.mxu0 0.0
    %5634 = vmatprep.subr.mxu0 0.0
    %5635 = vmatpush1.msra.mxu0 0.0
    %5636 = vmatprep.subr.mxu0 0.0
    %5637 = vmatpush1.msra.mxu0 0.0
    %5638 = vmatprep.subr.mxu0 0.0
    %5639 = vmatpush1.msra.mxu0 0.0
    %5640 = vmatprep.subr.mxu0 0.0
    %5641 = vmatpush1.msra.mxu0 0.0
    %5642 = vmatprep.subr.mxu0 0.0
    %5643 = vmatpush1.msra.mxu0 0.0
    %5644 = vmatprep.subr.mxu0 0.0
    %5645 = vmatpush1.msra.mxu0 0.0
    %5646 = vmatprep.subr.mxu0 0.0
    %5647 = vmatpush1.msra.mxu0 0.0
    %5648 = vmatprep.subr.mxu0 0.0
    %5649 = vmatpush1.msra.mxu0 0.0
    %5650 = vmatprep.subr.mxu0 0.0
    %5651 = vmatpush1.msra.mxu0 0.0
    %5652 = vmatprep.subr.mxu0 0.0
    %5653 = vmatpush1.msra.mxu0 0.0
    %5654 = vmatprep.subr.mxu0 0.0
    %5655 = vmatpush1.msra.mxu0 0.0
    %5656 = vmatprep.mubr.f32.mxu0 0.0
    %5657 = vmatmul.mubr.f32.gmra.mrb[0].mxu0 %v5590
    %v5658 = vpop.f32.mrb[0].mxu0
    %v5659 = vadd.f32 0.0, %v5658
    %v5660 = vpop.f32.mrb[0].mxu0
    %5661 = vdwg.mxu0
    %v5662 = vld [vmem:[%s353] sm:$0xff]
    %v5663 = vld [vmem:[%s353 + $0x8] sm:$0xff]
    %v5664 = vld [vmem:[%s353 + $0x10] sm:$0xff]
    %v5665 = vld [vmem:[%s353 + $0x18] sm:$0xff]
    %v5666 = vld [vmem:[%s353 + $0x20] sm:$0xff]
    %v5667 = vld [vmem:[%s353 + $0x28] sm:$0xff]
    %v5668 = vld [vmem:[%s353 + $0x30] sm:$0xff]
    %5669 = vrot.lane.b32.xlu0 %v3923, 96
    %v5670 = vpop.permute.xlu0 %5669
    %v5671 = vsel %vm338, %v5670, 0
    %v5674 = vsel %vm338, %v5662, 0
    %v5677 = vsel %vm338, %v5663, 0
    %v5680 = vsel %vm338, %v5664, 0
    %v5683 = vsel %vm338, %v5665, 0
    %v5686 = vsel %vm338, %v5666, 0
    %v5689 = vsel %vm338, %v5667, 0
    %v5692 = vsel %vm338, %v5668, 0
    %5694 = vmatprep.subr.mxu0 0.0
    %5695 = vmatpush1.xpose.msra.mxu0 %v5674
    %5696 = vmatprep.subr.mxu0 0.0
    %5697 = vmatpush1.xpose.msra.mxu0 %v5677
    %5698 = vmatprep.subr.mxu0 0.0
    %5699 = vmatpush1.xpose.msra.mxu0 %v5680
    %5700 = vmatprep.subr.mxu0 0.0
    %5701 = vmatpush1.xpose.msra.mxu0 %v5683
    %5702 = vmatprep.subr.mxu0 0.0
    %5703 = vmatpush1.xpose.msra.mxu0 %v5686
    %5704 = vmatprep.subr.mxu0 0.0
    %5705 = vmatpush1.xpose.msra.mxu0 %v5689
    %5706 = vmatprep.subr.mxu0 0.0
    %5707 = vmatpush1.xpose.msra.mxu0 %v5692
    %5708 = vmatprep.subr.mxu0 0.0
    %5709 = vmatpush1.xpose.msra.mxu0 0.0
    %5710 = vmatprep.subr.mxu0 0.0
    %5711 = vmatpush1.xpose.msra.mxu0 0.0
    %5712 = vmatprep.subr.mxu0 0.0
    %5713 = vmatpush1.xpose.msra.mxu0 0.0
    %5714 = vmatprep.subr.mxu0 0.0
    %5715 = vmatpush1.xpose.msra.mxu0 0.0
    %5716 = vmatprep.subr.mxu0 0.0
    %5717 = vmatpush1.xpose.msra.mxu0 0.0
    %5718 = vmatprep.subr.mxu0 0.0
    %5719 = vmatpush1.xpose.msra.mxu0 0.0
    %5720 = vmatprep.subr.mxu0 0.0
    %5721 = vmatpush1.xpose.msra.mxu0 0.0
    %5722 = vmatprep.subr.mxu0 0.0
    %5723 = vmatpush1.xpose.msra.mxu0 0.0
    %5724 = vmatprep.subr.mxu0 0.0
    %5725 = vmatpush1.xpose.msra.mxu0 0.0
    %5726 = vmatprep.subr.mxu0 0.0
    %5727 = vmatpush1.xpose.msra.mxu0 0.0
    %5728 = vmatprep.subr.mxu0 0.0
    %5729 = vmatpush1.xpose.msra.mxu0 0.0
    %5730 = vmatprep.subr.mxu0 0.0
    %5731 = vmatpush1.xpose.msra.mxu0 0.0
    %5732 = vmatprep.subr.mxu0 0.0
    %5733 = vmatpush1.xpose.msra.mxu0 0.0
    %5734 = vmatprep.subr.mxu0 0.0
    %5735 = vmatpush1.xpose.msra.mxu0 0.0
    %5736 = vmatprep.subr.mxu0 0.0
    %5737 = vmatpush1.xpose.msra.mxu0 0.0
    %5738 = vmatprep.subr.mxu0 0.0
    %5739 = vmatpush1.xpose.msra.mxu0 0.0
    %5740 = vmatprep.subr.mxu0 0.0
    %5741 = vmatpush1.xpose.msra.mxu0 0.0
    %5742 = vmatprep.subr.mxu0 0.0
    %5743 = vmatpush1.xpose.msra.mxu0 0.0
    %5744 = vmatprep.subr.mxu0 0.0
    %5745 = vmatpush1.xpose.msra.mxu0 0.0
    %5746 = vmatprep.subr.mxu0 0.0
    %5747 = vmatpush1.xpose.msra.mxu0 0.0
    %5748 = vmatprep.subr.mxu0 0.0
    %5749 = vmatpush1.xpose.msra.mxu0 0.0
    %5750 = vmatprep.subr.mxu0 0.0
    %5751 = vmatpush1.xpose.msra.mxu0 0.0
    %5752 = vmatprep.subr.mxu0 0.0
    %5753 = vmatpush1.xpose.msra.mxu0 0.0
    %5754 = vmatprep.subr.mxu0 0.0
    %5755 = vmatpush1.xpose.msra.mxu0 0.0
    %5756 = vmatprep.subr.mxu0 0.0
    %5757 = vmatpush1.xpose.msra.mxu0 0.0
    %5758 = vmatprep.mubr.f32.mxu0 0.0
    %5759 = vmatmul.mubr.f32.gmra.mrb[0].mxu0 %v5671
    %v5760 = vpop.f32.mrb[0].mxu0
    %v5761 = vadd.f32 0.0, %v5760
    %v5762 = vpop.f32.mrb[0].mxu0
    %5763 = vdwg.mxu0
    %v5764 = vmul.f32 %v5761, 0.35355338
    %v5765 = vsel %vm155, %v5764, -1e+20
    %v5766 = vsel %vm4617, %v5765, -inf
    %5767 = vmax.xlane.f32.xlu0 %v5766
    %v5768 = vpop.xlane.xlu0 %5767
    %v5769 = vsub.f32 %v5765, %v5768
    %v5770 = vmul.f32 %v5769, 1.442695
    %v5771 = vpow.pop %v5770
    %v5772 = vsel %vm4617, %v5771, 0.0
    %5773 = vadd.xlane.f32.xlu0 %v5772
    %v5774 = vpop.xlane.xlu0 %5773
    %v5775 = vrcp.pop %v5774
    %v5776 = vmul.f32 %v5771, %v5775
    %5777 = vmatprep.subr.mxu0 0.0
    %5778 = vmatpush1.msra.mxu0 %v3959
    %5779 = vmatprep.subr.mxu0 0.0
    %5780 = vmatpush1.msra.mxu0 %v3960
    %5781 = vmatprep.subr.mxu0 0.0
    %5782 = vmatpush1.msra.mxu0 0.0
    %5783 = vmatprep.subr.mxu0 0.0
    %5784 = vmatpush1.msra.mxu0 0.0
    %5785 = vmatprep.subr.mxu0 0.0
    %5786 = vmatpush1.msra.mxu0 0.0
    %5787 = vmatprep.subr.mxu0 0.0
    %5788 = vmatpush1.msra.mxu0 0.0
    %5789 = vmatprep.subr.mxu0 0.0
    %5790 = vmatpush1.msra.mxu0 0.0
    %5791 = vmatprep.subr.mxu0 0.0
    %5792 = vmatpush1.msra.mxu0 0.0
    %5793 = vmatprep.subr.mxu0 0.0
    %5794 = vmatpush1.msra.mxu0 0.0
    %5795 = vmatprep.subr.mxu0 0.0
    %5796 = vmatpush1.msra.mxu0 0.0
    %5797 = vmatprep.subr.mxu0 0.0
    %5798 = vmatpush1.msra.mxu0 0.0
    %5799 = vmatprep.subr.mxu0 0.0
    %5800 = vmatpush1.msra.mxu0 0.0
    %5801 = vmatprep.subr.mxu0 0.0
    %5802 = vmatpush1.msra.mxu0 0.0
    %5803 = vmatprep.subr.mxu0 0.0
    %5804 = vmatpush1.msra.mxu0 0.0
    %5805 = vmatprep.subr.mxu0 0.0
    %5806 = vmatpush1.msra.mxu0 0.0
    %5807 = vmatprep.subr.mxu0 0.0
    %5808 = vmatpush1.msra.mxu0 0.0
    %5809 = vmatprep.subr.mxu0 0.0
    %5810 = vmatpush1.msra.mxu0 0.0
    %5811 = vmatprep.subr.mxu0 0.0
    %5812 = vmatpush1.msra.mxu0 0.0
    %5813 = vmatprep.subr.mxu0 0.0
    %5814 = vmatpush1.msra.mxu0 0.0
    %5815 = vmatprep.subr.mxu0 0.0
    %5816 = vmatpush1.msra.mxu0 0.0
    %5817 = vmatprep.subr.mxu0 0.0
    %5818 = vmatpush1.msra.mxu0 0.0
    %5819 = vmatprep.subr.mxu0 0.0
    %5820 = vmatpush1.msra.mxu0 0.0
    %5821 = vmatprep.subr.mxu0 0.0
    %5822 = vmatpush1.msra.mxu0 0.0
    %5823 = vmatprep.subr.mxu0 0.0
    %5824 = vmatpush1.msra.mxu0 0.0
    %5825 = vmatprep.subr.mxu0 0.0
    %5826 = vmatpush1.msra.mxu0 0.0
    %5827 = vmatprep.subr.mxu0 0.0
    %5828 = vmatpush1.msra.mxu0 0.0
    %5829 = vmatprep.subr.mxu0 0.0
    %5830 = vmatpush1.msra.mxu0 0.0
    %5831 = vmatprep.subr.mxu0 0.0
    %5832 = vmatpush1.msra.mxu0 0.0
    %5833 = vmatprep.subr.mxu0 0.0
    %5834 = vmatpush1.msra.mxu0 0.0
    %5835 = vmatprep.subr.mxu0 0.0
    %5836 = vmatpush1.msra.mxu0 0.0
    %5837 = vmatprep.subr.mxu0 0.0
    %5838 = vmatpush1.msra.mxu0 0.0
    %5839 = vmatprep.subr.mxu0 0.0
    %5840 = vmatpush1.msra.mxu0 0.0
    %5841 = vmatprep.mubr.f32.mxu0 0.0
    %5842 = vmatmul.mubr.f32.gmra.mrb[0].mxu0 %v5674
    %v5843 = vpop.f32.mrb[0].mxu0
    %v5844 = vadd.f32 0.0, %v5843
    %v5845 = vpop.f32.mrb[0].mxu0
    %5846 = vmatprep.mubr.f32.mxu0 0.0
    %5847 = vmatmul.mubr.f32.gmra.mrb[0].mxu0 %v5677
    %v5848 = vpop.f32.mrb[0].mxu0
    %v5849 = vadd.f32 0.0, %v5848
    %v5850 = vpop.f32.mrb[0].mxu0
    %5851 = vmatprep.mubr.f32.mxu0 0.0
    %5852 = vmatmul.mubr.f32.gmra.mrb[0].mxu0 %v5680
    %v5853 = vpop.f32.mrb[0].mxu0
    %v5854 = vadd.f32 0.0, %v5853
    %v5855 = vpop.f32.mrb[0].mxu0
    %5856 = vmatprep.mubr.f32.mxu0 0.0
    %5857 = vmatmul.mubr.f32.gmra.mrb[0].mxu0 %v5683
    %v5858 = vpop.f32.mrb[0].mxu0
    %v5859 = vadd.f32 0.0, %v5858
    %v5860 = vpop.f32.mrb[0].mxu0
    %5861 = vmatprep.mubr.f32.mxu0 0.0
    %5862 = vmatmul.mubr.f32.gmra.mrb[0].mxu0 %v5686
    %v5863 = vpop.f32.mrb[0].mxu0
    %v5864 = vadd.f32 0.0, %v5863
    %v5865 = vpop.f32.mrb[0].mxu0
    %5866 = vmatprep.mubr.f32.mxu0 0.0
    %5867 = vmatmul.mubr.f32.gmra.mrb[0].mxu0 %v5689
    %v5868 = vpop.f32.mrb[0].mxu0
    %v5869 = vadd.f32 0.0, %v5868
    %v5870 = vpop.f32.mrb[0].mxu0
    %5871 = vmatprep.mubr.f32.mxu0 0.0
    %5872 = vmatmul.mubr.f32.gmra.mrb[0].mxu0 %v5692
    %v5873 = vpop.f32.mrb[0].mxu0
    %v5874 = vadd.f32 0.0, %v5873
    %v5875 = vpop.f32.mrb[0].mxu0
    %5876 = vdwg.mxu0
    %v5878 = vsel %vm4617, %v5776, 0
    %5880 = vmatprep.subr.mxu0 0.0
    %5881 = vmatpush1.msra.mxu0 %v5844
    %5882 = vmatprep.subr.mxu0 0.0
    %5883 = vmatpush1.msra.mxu0 %v5849
    %5884 = vmatprep.subr.mxu0 0.0
    %5885 = vmatpush1.msra.mxu0 %v5854
    %5886 = vmatprep.subr.mxu0 0.0
    %5887 = vmatpush1.msra.mxu0 %v5859
    %5888 = vmatprep.subr.mxu0 0.0
    %5889 = vmatpush1.msra.mxu0 %v5864
    %5890 = vmatprep.subr.mxu0 0.0
    %5891 = vmatpush1.msra.mxu0 %v5869
    %5892 = vmatprep.subr.mxu0 0.0
    %5893 = vmatpush1.msra.mxu0 %v5874
    %5894 = vmatprep.subr.mxu0 0.0
    %5895 = vmatpush1.msra.mxu0 0.0
    %5896 = vmatprep.subr.mxu0 0.0
    %5897 = vmatpush1.msra.mxu0 0.0
    %5898 = vmatprep.subr.mxu0 0.0
    %5899 = vmatpush1.msra.mxu0 0.0
    %5900 = vmatprep.subr.mxu0 0.0
    %5901 = vmatpush1.msra.mxu0 0.0
    %5902 = vmatprep.subr.mxu0 0.0
    %5903 = vmatpush1.msra.mxu0 0.0
    %5904 = vmatprep.subr.mxu0 0.0
    %5905 = vmatpush1.msra.mxu0 0.0
    %5906 = vmatprep.subr.mxu0 0.0
    %5907 = vmatpush1.msra.mxu0 0.0
    %5908 = vmatprep.subr.mxu0 0.0
    %5909 = vmatpush1.msra.mxu0 0.0
    %5910 = vmatprep.subr.mxu0 0.0
    %5911 = vmatpush1.msra.mxu0 0.0
    %5912 = vmatprep.subr.mxu0 0.0
    %5913 = vmatpush1.msra.mxu0 0.0
    %5914 = vmatprep.subr.mxu0 0.0
    %5915 = vmatpush1.msra.mxu0 0.0
    %5916 = vmatprep.subr.mxu0 0.0
    %5917 = vmatpush1.msra.mxu0 0.0
    %5918 = vmatprep.subr.mxu0 0.0
    %5919 = vmatpush1.msra.mxu0 0.0
    %5920 = vmatprep.subr.mxu0 0.0
    %5921 = vmatpush1.msra.mxu0 0.0
    %5922 = vmatprep.subr.mxu0 0.0
    %5923 = vmatpush1.msra.mxu0 0.0
    %5924 = vmatprep.subr.mxu0 0.0
    %5925 = vmatpush1.msra.mxu0 0.0
    %5926 = vmatprep.subr.mxu0 0.0
    %5927 = vmatpush1.msra.mxu0 0.0
    %5928 = vmatprep.subr.mxu0 0.0
    %5929 = vmatpush1.msra.mxu0 0.0
    %5930 = vmatprep.subr.mxu0 0.0
    %5931 = vmatpush1.msra.mxu0 0.0
    %5932 = vmatprep.subr.mxu0 0.0
    %5933 = vmatpush1.msra.mxu0 0.0
    %5934 = vmatprep.subr.mxu0 0.0
    %5935 = vmatpush1.msra.mxu0 0.0
    %5936 = vmatprep.subr.mxu0 0.0
    %5937 = vmatpush1.msra.mxu0 0.0
    %5938 = vmatprep.subr.mxu0 0.0
    %5939 = vmatpush1.msra.mxu0 0.0
    %5940 = vmatprep.subr.mxu0 0.0
    %5941 = vmatpush1.msra.mxu0 0.0
    %5942 = vmatprep.subr.mxu0 0.0
    %5943 = vmatpush1.msra.mxu0 0.0
    %5944 = vmatprep.mubr.f32.mxu0 0.0
    %5945 = vmatmul.mubr.f32.gmra.mrb[0].mxu0 %v5878
    %v5946 = vpop.f32.mrb[0].mxu0
    %v5947 = vadd.f32 0.0, %v5946
    %v5948 = vpop.f32.mrb[0].mxu0
    %5949 = vdwg.mxu0
    %v5950 = vld [vmem:[%s353] sm:$0xff]
    %v5951 = vld [vmem:[%s353 + $0x8] sm:$0xff]
    %v5952 = vld [vmem:[%s353 + $0x10] sm:$0xff]
    %v5953 = vld [vmem:[%s353 + $0x18] sm:$0xff]
    %v5954 = vld [vmem:[%s353 + $0x20] sm:$0xff]
    %v5955 = vld [vmem:[%s353 + $0x28] sm:$0xff]
    %v5956 = vld [vmem:[%s353 + $0x30] sm:$0xff]
    %v5957 = vld [vmem:[%s353 + $0x38] sm:$0xff]
    %5958 = vrot.lane.b32.xlu0 %v3923, 80
    %v5959 = vpop.permute.xlu0 %5958
    %v5960 = vsel %vm338, %v5959, 0
    %v5963 = vsel %vm338, %v5950, 0
    %v5966 = vsel %vm338, %v5951, 0
    %v5969 = vsel %vm338, %v5952, 0
    %v5972 = vsel %vm338, %v5953, 0
    %v5975 = vsel %vm338, %v5954, 0
    %v5978 = vsel %vm338, %v5955, 0
    %v5981 = vsel %vm338, %v5956, 0
    %v5984 = vsel %vm338, %v5957, 0
    %5986 = vmatprep.subr.mxu0 0.0
    %5987 = vmatpush1.xpose.msra.mxu0 %v5963
    %5988 = vmatprep.subr.mxu0 0.0
    %5989 = vmatpush1.xpose.msra.mxu0 %v5966
    %5990 = vmatprep.subr.mxu0 0.0
    %5991 = vmatpush1.xpose.msra.mxu0 %v5969
    %5992 = vmatprep.subr.mxu0 0.0
    %5993 = vmatpush1.xpose.msra.mxu0 %v5972
    %5994 = vmatprep.subr.mxu0 0.0
    %5995 = vmatpush1.xpose.msra.mxu0 %v5975
    %5996 = vmatprep.subr.mxu0 0.0
    %5997 = vmatpush1.xpose.msra.mxu0 %v5978
    %5998 = vmatprep.subr.mxu0 0.0
    %5999 = vmatpush1.xpose.msra.mxu0 %v5981
    %6000 = vmatprep.subr.mxu0 0.0
    %6001 = vmatpush1.xpose.msra.mxu0 %v5984
    %6002 = vmatprep.subr.mxu0 0.0
    %6003 = vmatpush1.xpose.msra.mxu0 0.0
    %6004 = vmatprep.subr.mxu0 0.0
    %6005 = vmatpush1.xpose.msra.mxu0 0.0
    %6006 = vmatprep.subr.mxu0 0.0
    %6007 = vmatpush1.xpose.msra.mxu0 0.0
    %6008 = vmatprep.subr.mxu0 0.0
    %6009 = vmatpush1.xpose.msra.mxu0 0.0
    %6010 = vmatprep.subr.mxu0 0.0
    %6011 = vmatpush1.xpose.msra.mxu0 0.0
    %6012 = vmatprep.subr.mxu0 0.0
    %6013 = vmatpush1.xpose.msra.mxu0 0.0
    %6014 = vmatprep.subr.mxu0 0.0
    %6015 = vmatpush1.xpose.msra.mxu0 0.0
    %6016 = vmatprep.subr.mxu0 0.0
    %6017 = vmatpush1.xpose.msra.mxu0 0.0
    %6018 = vmatprep.subr.mxu0 0.0
    %6019 = vmatpush1.xpose.msra.mxu0 0.0
    %6020 = vmatprep.subr.mxu0 0.0
    %6021 = vmatpush1.xpose.msra.mxu0 0.0
    %6022 = vmatprep.subr.mxu0 0.0
    %6023 = vmatpush1.xpose.msra.mxu0 0.0
    %6024 = vmatprep.subr.mxu0 0.0
    %6025 = vmatpush1.xpose.msra.mxu0 0.0
    %6026 = vmatprep.subr.mxu0 0.0
    %6027 = vmatpush1.xpose.msra.mxu0 0.0
    %6028 = vmatprep.subr.mxu0 0.0
    %6029 = vmatpush1.xpose.msra.mxu0 0.0
    %6030 = vmatprep.subr.mxu0 0.0
    %6031 = vmatpush1.xpose.msra.mxu0 0.0
    %6032 = vmatprep.subr.mxu0 0.0
    %6033 = vmatpush1.xpose.msra.mxu0 0.0
    %6034 = vmatprep.subr.mxu0 0.0
    %6035 = vmatpush1.xpose.msra.mxu0 0.0
    %6036 = vmatprep.subr.mxu0 0.0
    %6037 = vmatpush1.xpose.msra.mxu0 0.0
    %6038 = vmatprep.subr.mxu0 0.0
    %6039 = vmatpush1.xpose.msra.mxu0 0.0
    %6040 = vmatprep.subr.mxu0 0.0
    %6041 = vmatpush1.xpose.msra.mxu0 0.0
    %6042 = vmatprep.subr.mxu0 0.0
    %6043 = vmatpush1.xpose.msra.mxu0 0.0
    %6044 = vmatprep.subr.mxu0 0.0
    %6045 = vmatpush1.xpose.msra.mxu0 0.0
    %6046 = vmatprep.subr.mxu0 0.0
    %6047 = vmatpush1.xpose.msra.mxu0 0.0
    %6048 = vmatprep.subr.mxu0 0.0
    %6049 = vmatpush1.xpose.msra.mxu0 0.0
    %6050 = vmatprep.mubr.f32.mxu0 0.0
    %6051 = vmatmul.mubr.f32.gmra.mrb[0].mxu0 %v5960
    %v6052 = vpop.f32.mrb[0].mxu0
    %v6053 = vadd.f32 0.0, %v6052
    %v6054 = vpop.f32.mrb[0].mxu0
    %6055 = vdwg.mxu0
    %v6056 = vmul.f32 %v6053, 0.35355338
    %v6057 = vsel %vm155, %v6056, -1e+20
    %v6058 = vsel %vm71, %v6057, -inf
    %6059 = vmax.xlane.f32.xlu0 %v6058
    %v6060 = vpop.xlane.xlu0 %6059
    %v6061 = vsub.f32 %v6057, %v6060
    %v6062 = vmul.f32 %v6061, 1.442695
    %v6063 = vpow.pop %v6062
    %v6064 = vsel %vm71, %v6063, 0.0
    %6065 = vadd.xlane.f32.xlu0 %v6064
    %v6066 = vpop.xlane.xlu0 %6065
    %v6067 = vrcp.pop %v6066
    %v6068 = vmul.f32 %v6063, %v6067
    %6069 = vmatprep.subr.mxu0 0.0
    %6070 = vmatpush1.msra.mxu0 %v3961
    %6071 = vmatprep.subr.mxu0 0.0
    %6072 = vmatpush1.msra.mxu0 %v3962
    %6073 = vmatprep.subr.mxu0 0.0
    %6074 = vmatpush1.msra.mxu0 0.0
    %6075 = vmatprep.subr.mxu0 0.0
    %6076 = vmatpush1.msra.mxu0 0.0
    %6077 = vmatprep.subr.mxu0 0.0
    %6078 = vmatpush1.msra.mxu0 0.0
    %6079 = vmatprep.subr.mxu0 0.0
    %6080 = vmatpush1.msra.mxu0 0.0
    %6081 = vmatprep.subr.mxu0 0.0
    %6082 = vmatpush1.msra.mxu0 0.0
    %6083 = vmatprep.subr.mxu0 0.0
    %6084 = vmatpush1.msra.mxu0 0.0
    %6085 = vmatprep.subr.mxu0 0.0
    %6086 = vmatpush1.msra.mxu0 0.0
    %6087 = vmatprep.subr.mxu0 0.0
    %6088 = vmatpush1.msra.mxu0 0.0
    %6089 = vmatprep.subr.mxu0 0.0
    %6090 = vmatpush1.msra.mxu0 0.0
    %6091 = vmatprep.subr.mxu0 0.0
    %6092 = vmatpush1.msra.mxu0 0.0
    %6093 = vmatprep.subr.mxu0 0.0
    %6094 = vmatpush1.msra.mxu0 0.0
    %6095 = vmatprep.subr.mxu0 0.0
    %6096 = vmatpush1.msra.mxu0 0.0
    %6097 = vmatprep.subr.mxu0 0.0
    %6098 = vmatpush1.msra.mxu0 0.0
    %6099 = vmatprep.subr.mxu0 0.0
    %6100 = vmatpush1.msra.mxu0 0.0
    %6101 = vmatprep.subr.mxu0 0.0
    %6102 = vmatpush1.msra.mxu0 0.0
    %6103 = vmatprep.subr.mxu0 0.0
    %6104 = vmatpush1.msra.mxu0 0.0
    %6105 = vmatprep.subr.mxu0 0.0
    %6106 = vmatpush1.msra.mxu0 0.0
    %6107 = vmatprep.subr.mxu0 0.0
    %6108 = vmatpush1.msra.mxu0 0.0
    %6109 = vmatprep.subr.mxu0 0.0
    %6110 = vmatpush1.msra.mxu0 0.0
    %6111 = vmatprep.subr.mxu0 0.0
    %6112 = vmatpush1.msra.mxu0 0.0
    %6113 = vmatprep.subr.mxu0 0.0
    %6114 = vmatpush1.msra.mxu0 0.0
    %6115 = vmatprep.subr.mxu0 0.0
    %6116 = vmatpush1.msra.mxu0 0.0
    %6117 = vmatprep.subr.mxu0 0.0
    %6118 = vmatpush1.msra.mxu0 0.0
    %6119 = vmatprep.subr.mxu0 0.0
    %6120 = vmatpush1.msra.mxu0 0.0
    %6121 = vmatprep.subr.mxu0 0.0
    %6122 = vmatpush1.msra.mxu0 0.0
    %6123 = vmatprep.subr.mxu0 0.0
    %6124 = vmatpush1.msra.mxu0 0.0
    %6125 = vmatprep.subr.mxu0 0.0
    %6126 = vmatpush1.msra.mxu0 0.0
    %6127 = vmatprep.subr.mxu0 0.0
    %6128 = vmatpush1.msra.mxu0 0.0
    %6129 = vmatprep.subr.mxu0 0.0
    %6130 = vmatpush1.msra.mxu0 0.0
    %6131 = vmatprep.subr.mxu0 0.0
    %6132 = vmatpush1.msra.mxu0 0.0
    %6133 = vmatprep.mubr.f32.mxu0 0.0
    %6134 = vmatmul.mubr.f32.gmra.mrb[0].mxu0 %v5963
    %v6135 = vpop.f32.mrb[0].mxu0
    %v6136 = vadd.f32 0.0, %v6135
    %v6137 = vpop.f32.mrb[0].mxu0
    %6138 = vmatprep.mubr.f32.mxu0 0.0
    %6139 = vmatmul.mubr.f32.gmra.mrb[0].mxu0 %v5966
    %v6140 = vpop.f32.mrb[0].mxu0
    %v6141 = vadd.f32 0.0, %v6140
    %v6142 = vpop.f32.mrb[0].mxu0
    %6143 = vmatprep.mubr.f32.mxu0 0.0
    %6144 = vmatmul.mubr.f32.gmra.mrb[0].mxu0 %v5969
    %v6145 = vpop.f32.mrb[0].mxu0
    %v6146 = vadd.f32 0.0, %v6145
    %v6147 = vpop.f32.mrb[0].mxu0
    %6148 = vmatprep.mubr.f32.mxu0 0.0
    %6149 = vmatmul.mubr.f32.gmra.mrb[0].mxu0 %v5972
    %v6150 = vpop.f32.mrb[0].mxu0
    %v6151 = vadd.f32 0.0, %v6150
    %v6152 = vpop.f32.mrb[0].mxu0
    %6153 = vmatprep.mubr.f32.mxu0 0.0
    %6154 = vmatmul.mubr.f32.gmra.mrb[0].mxu0 %v5975
    %v6155 = vpop.f32.mrb[0].mxu0
    %v6156 = vadd.f32 0.0, %v6155
    %v6157 = vpop.f32.mrb[0].mxu0
    %6158 = vmatprep.mubr.f32.mxu0 0.0
    %6159 = vmatmul.mubr.f32.gmra.mrb[0].mxu0 %v5978
    %v6160 = vpop.f32.mrb[0].mxu0
    %v6161 = vadd.f32 0.0, %v6160
    %v6162 = vpop.f32.mrb[0].mxu0
    %6163 = vmatprep.mubr.f32.mxu0 0.0
    %6164 = vmatmul.mubr.f32.gmra.mrb[0].mxu0 %v5981
    %v6165 = vpop.f32.mrb[0].mxu0
    %v6166 = vadd.f32 0.0, %v6165
    %v6167 = vpop.f32.mrb[0].mxu0
    %6168 = vmatprep.mubr.f32.mxu0 0.0
    %6169 = vmatmul.mubr.f32.gmra.mrb[0].mxu0 %v5984
    %v6170 = vpop.f32.mrb[0].mxu0
    %v6171 = vadd.f32 0.0, %v6170
    %v6172 = vpop.f32.mrb[0].mxu0
    %6173 = vdwg.mxu0
    %v6175 = vsel %vm71, %v6068, 0
    %6177 = vmatprep.subr.mxu0 0.0
    %6178 = vmatpush1.msra.mxu0 %v6136
    %6179 = vmatprep.subr.mxu0 0.0
    %6180 = vmatpush1.msra.mxu0 %v6141
    %6181 = vmatprep.subr.mxu0 0.0
    %6182 = vmatpush1.msra.mxu0 %v6146
    %6183 = vmatprep.subr.mxu0 0.0
    %6184 = vmatpush1.msra.mxu0 %v6151
    %6185 = vmatprep.subr.mxu0 0.0
    %6186 = vmatpush1.msra.mxu0 %v6156
    %6187 = vmatprep.subr.mxu0 0.0
    %6188 = vmatpush1.msra.mxu0 %v6161
    %6189 = vmatprep.subr.mxu0 0.0
    %6190 = vmatpush1.msra.mxu0 %v6166
    %6191 = vmatprep.subr.mxu0 0.0
    %6192 = vmatpush1.msra.mxu0 %v6171
    %6193 = vmatprep.subr.mxu0 0.0
    %6194 = vmatpush1.msra.mxu0 0.0
    %6195 = vmatprep.subr.mxu0 0.0
    %6196 = vmatpush1.msra.mxu0 0.0
    %6197 = vmatprep.subr.mxu0 0.0
    %6198 = vmatpush1.msra.mxu0 0.0
    %6199 = vmatprep.subr.mxu0 0.0
    %6200 = vmatpush1.msra.mxu0 0.0
    %6201 = vmatprep.subr.mxu0 0.0
    %6202 = vmatpush1.msra.mxu0 0.0
    %6203 = vmatprep.subr.mxu0 0.0
    %6204 = vmatpush1.msra.mxu0 0.0
    %6205 = vmatprep.subr.mxu0 0.0
    %6206 = vmatpush1.msra.mxu0 0.0
    %6207 = vmatprep.subr.mxu0 0.0
    %6208 = vmatpush1.msra.mxu0 0.0
    %6209 = vmatprep.subr.mxu0 0.0
    %6210 = vmatpush1.msra.mxu0 0.0
    %6211 = vmatprep.subr.mxu0 0.0
    %6212 = vmatpush1.msra.mxu0 0.0
    %6213 = vmatprep.subr.mxu0 0.0
    %6214 = vmatpush1.msra.mxu0 0.0
    %6215 = vmatprep.subr.mxu0 0.0
    %6216 = vmatpush1.msra.mxu0 0.0
    %6217 = vmatprep.subr.mxu0 0.0
    %6218 = vmatpush1.msra.mxu0 0.0
    %6219 = vmatprep.subr.mxu0 0.0
    %6220 = vmatpush1.msra.mxu0 0.0
    %6221 = vmatprep.subr.mxu0 0.0
    %6222 = vmatpush1.msra.mxu0 0.0
    %6223 = vmatprep.subr.mxu0 0.0
    %6224 = vmatpush1.msra.mxu0 0.0
    %6225 = vmatprep.subr.mxu0 0.0
    %6226 = vmatpush1.msra.mxu0 0.0
    %6227 = vmatprep.subr.mxu0 0.0
    %6228 = vmatpush1.msra.mxu0 0.0
    %6229 = vmatprep.subr.mxu0 0.0
    %6230 = vmatpush1.msra.mxu0 0.0
    %6231 = vmatprep.subr.mxu0 0.0
    %6232 = vmatpush1.msra.mxu0 0.0
    %6233 = vmatprep.subr.mxu0 0.0
    %6234 = vmatpush1.msra.mxu0 0.0
    %6235 = vmatprep.subr.mxu0 0.0
    %6236 = vmatpush1.msra.mxu0 0.0
    %6237 = vmatprep.subr.mxu0 0.0
    %6238 = vmatpush1.msra.mxu0 0.0
    %6239 = vmatprep.subr.mxu0 0.0
    %6240 = vmatpush1.msra.mxu0 0.0
    %6241 = vmatprep.mubr.f32.mxu0 0.0
    %6242 = vmatmul.mubr.f32.gmra.mrb[0].mxu0 %v6175
    %v6243 = vpop.f32.mrb[0].mxu0
    %v6244 = vadd.f32 0.0, %v6243
    %v6245 = vpop.f32.mrb[0].mxu0
    %6246 = vdwg.mxu0
    %6248 = vrot.lane.b32.xlu0 %v5659, 8
    %v6249 = vpop.permute.xlu0 %6248
    %6252 = vrot.lane.b32.xlu0 %v5947, 16
    %v6253 = vpop.permute.xlu0 %6252
    %6256 = vrot.lane.b32.xlu0 %v6244, 24
    %v6257 = vpop.permute.xlu0 %6256
    %v6259 = vsel %vm455, %v5380, %v6249
    %v6260 = vsel %vm338, %v6259, %v6253
    %v6261 = vsel %vm941, %v6260, %v6257
    %s6262 = scalar_lea.vmem %s7, 32
    %v6263 = vld [vmem:[%s6262] sm:$0xff]
    %v6264 = vld [vmem:[%s6262 + $0x8] sm:$0xff]
    %v6265 = vld [vmem:[%s6262 + $0x10] sm:$0xff]
    %v6266 = vld [vmem:[%s6262 + $0x18] sm:$0xff]
    %v6268 = vsel %vm158, %v5113, 0
    %v6271 = vsel %vm158, %v6261, 0
    %6273 = vmatprep.subr.mxu0 0.0
    %6274 = vmatpush1.msra.mxu0 %v6263
    %6275 = vmatprep.subr.mxu0 0.0
    %6276 = vmatpush1.msra.mxu0 %v6264
    %6277 = vmatprep.subr.mxu0 0.0
    %6278 = vmatpush1.msra.mxu0 %v6265
    %6279 = vmatprep.subr.mxu0 0.0
    %6280 = vmatpush1.msra.mxu0 %v6266
    %6281 = vmatprep.subr.mxu0 0.0
    %6282 = vmatpush1.msra.mxu0 0.0
    %6283 = vmatprep.subr.mxu0 0.0
    %6284 = vmatpush1.msra.mxu0 0.0
    %6285 = vmatprep.subr.mxu0 0.0
    %6286 = vmatpush1.msra.mxu0 0.0
    %6287 = vmatprep.subr.mxu0 0.0
    %6288 = vmatpush1.msra.mxu0 0.0
    %6289 = vmatprep.subr.mxu0 0.0
    %6290 = vmatpush1.msra.mxu0 0.0
    %6291 = vmatprep.subr.mxu0 0.0
    %6292 = vmatpush1.msra.mxu0 0.0
    %6293 = vmatprep.subr.mxu0 0.0
    %6294 = vmatpush1.msra.mxu0 0.0
    %6295 = vmatprep.subr.mxu0 0.0
    %6296 = vmatpush1.msra.mxu0 0.0
    %6297 = vmatprep.subr.mxu0 0.0
    %6298 = vmatpush1.msra.mxu0 0.0
    %6299 = vmatprep.subr.mxu0 0.0
    %6300 = vmatpush1.msra.mxu0 0.0
    %6301 = vmatprep.subr.mxu0 0.0
    %6302 = vmatpush1.msra.mxu0 0.0
    %6303 = vmatprep.subr.mxu0 0.0
    %6304 = vmatpush1.msra.mxu0 0.0
    %6305 = vmatprep.subr.mxu0 0.0
    %6306 = vmatpush1.msra.mxu0 0.0
    %6307 = vmatprep.subr.mxu0 0.0
    %6308 = vmatpush1.msra.mxu0 0.0
    %6309 = vmatprep.subr.mxu0 0.0
    %6310 = vmatpush1.msra.mxu0 0.0
    %6311 = vmatprep.subr.mxu0 0.0
    %6312 = vmatpush1.msra.mxu0 0.0
    %6313 = vmatprep.subr.mxu0 0.0
    %6314 = vmatpush1.msra.mxu0 0.0
    %6315 = vmatprep.subr.mxu0 0.0
    %6316 = vmatpush1.msra.mxu0 0.0
    %6317 = vmatprep.subr.mxu0 0.0
    %6318 = vmatpush1.msra.mxu0 0.0
    %6319 = vmatprep.subr.mxu0 0.0
    %6320 = vmatpush1.msra.mxu0 0.0
    %6321 = vmatprep.subr.mxu0 0.0
    %6322 = vmatpush1.msra.mxu0 0.0
    %6323 = vmatprep.subr.mxu0 0.0
    %6324 = vmatpush1.msra.mxu0 0.0
    %6325 = vmatprep.subr.mxu0 0.0
    %6326 = vmatpush1.msra.mxu0 0.0
    %6327 = vmatprep.subr.mxu0 0.0
    %6328 = vmatpush1.msra.mxu0 0.0
    %6329 = vmatprep.subr.mxu0 0.0
    %6330 = vmatpush1.msra.mxu0 0.0
    %6331 = vmatprep.subr.mxu0 0.0
    %6332 = vmatpush1.msra.mxu0 0.0
    %6333 = vmatprep.subr.mxu0 0.0
    %6334 = vmatpush1.msra.mxu0 0.0
    %6335 = vmatprep.subr.mxu0 0.0
    %6336 = vmatpush1.msra.mxu0 0.0
    %6337 = vmatprep.mubr.f32.mxu0 0.0
    %6338 = vmatmul.mubr.f32.gmra.mrb[0].mxu0 %v6268
    %v6339 = vpop.f32.mrb[0].mxu0
    %v6340 = vadd.f32 0.0, %v6339
    %v6341 = vpop.f32.mrb[0].mxu0
    %6342 = vmatprep.mubr.f32.mxu0 0.0
    %6343 = vmatmul.mubr.f32.gmra.mrb[0].mxu0 %v6271
    %v6344 = vpop.f32.mrb[0].mxu0
    %v6345 = vadd.f32 0.0, %v6344
    %v6346 = vpop.f32.mrb[0].mxu0
    %6347 = vdwg.mxu0
    %v6348 = vadd.f32 %v3742, %v6340
    %v6349 = vadd.f32 %v3743, %v6345
    %v6350 = vmul.f32 %v6348, %v6348
    %v6351 = vmul.f32 %v6349, %v6349
    %v6352 = vsel %vm158, %v6350, 0.0
    %6353 = vadd.xlane.f32.xlu0 %v6352
    %v6354 = vpop.xlane.xlu0 %6353
    %v6355 = vsel %vm158, %v6351, 0.0
    %6356 = vadd.xlane.f32.xlu0 %v6355
    %v6357 = vpop.xlane.xlu0 %6356
    %v6358 = vmul.f32 %v6354, %v165
    %v6359 = vmul.f32 %v6357, %v165
    %v6360 = vadd.f32 %v6358, 1.1920929e-07
    %v6361 = vadd.f32 %v6359, 1.1920929e-07
    %v6362 = vrsqrt.pop %v6360
    %v6363 = vrsqrt.pop %v6361
    %v6364 = vmul.f32 %v6348, %v6362
    %v6365 = vmul.f32 %v6349, %v6363
    %s6366 = scalar_lea.vmem %s8, 32
    %v6367 = vld [vmem:[%s6366] sm:$0xff]
    %v6368 = vld [vmem:[%s6366 + $0x8] sm:$0xff]
    %v6369 = vld [vmem:[%s6366 + $0x10] sm:$0xff]
    %v6370 = vld [vmem:[%s6366 + $0x18] sm:$0xff]
    %s6371 = scalar_lea.vmem %s9, 1
    %v6372 = vld [vmem:[%s6371] sm:$0x1]
    %v6374 = vlaneseq
    %v6375 = vshrl.u32 %v6374, 7
    %v6376 = vsub.s32 0, %v6375
    %v6377 = vrot.slane %v6372, %v6376
    %v6380 = vsel %vm158, %v6364, 0
    %v6383 = vsel %vm158, %v6365, 0
    %6385 = vmatprep.subr.mxu0 0.0
    %6386 = vmatpush1.msra.mxu0 %v6367
    %6387 = vmatprep.subr.mxu0 0.0
    %6388 = vmatpush1.msra.mxu0 %v6368
    %6389 = vmatprep.subr.mxu0 0.0
    %6390 = vmatpush1.msra.mxu0 %v6369
    %6391 = vmatprep.subr.mxu0 0.0
    %6392 = vmatpush1.msra.mxu0 %v6370
    %6393 = vmatprep.subr.mxu0 0.0
    %6394 = vmatpush1.msra.mxu0 0.0
    %6395 = vmatprep.subr.mxu0 0.0
    %6396 = vmatpush1.msra.mxu0 0.0
    %6397 = vmatprep.subr.mxu0 0.0
    %6398 = vmatpush1.msra.mxu0 0.0
    %6399 = vmatprep.subr.mxu0 0.0
    %6400 = vmatpush1.msra.mxu0 0.0
    %6401 = vmatprep.subr.mxu0 0.0
    %6402 = vmatpush1.msra.mxu0 0.0
    %6403 = vmatprep.subr.mxu0 0.0
    %6404 = vmatpush1.msra.mxu0 0.0
    %6405 = vmatprep.subr.mxu0 0.0
    %6406 = vmatpush1.msra.mxu0 0.0
    %6407 = vmatprep.subr.mxu0 0.0
    %6408 = vmatpush1.msra.mxu0 0.0
    %6409 = vmatprep.subr.mxu0 0.0
    %6410 = vmatpush1.msra.mxu0 0.0
    %6411 = vmatprep.subr.mxu0 0.0
    %6412 = vmatpush1.msra.mxu0 0.0
    %6413 = vmatprep.subr.mxu0 0.0
    %6414 = vmatpush1.msra.mxu0 0.0
    %6415 = vmatprep.subr.mxu0 0.0
    %6416 = vmatpush1.msra.mxu0 0.0
    %6417 = vmatprep.subr.mxu0 0.0
    %6418 = vmatpush1.msra.mxu0 0.0
    %6419 = vmatprep.subr.mxu0 0.0
    %6420 = vmatpush1.msra.mxu0 0.0
    %6421 = vmatprep.subr.mxu0 0.0
    %6422 = vmatpush1.msra.mxu0 0.0
    %6423 = vmatprep.subr.mxu0 0.0
    %6424 = vmatpush1.msra.mxu0 0.0
    %6425 = vmatprep.subr.mxu0 0.0
    %6426 = vmatpush1.msra.mxu0 0.0
    %6427 = vmatprep.subr.mxu0 0.0
    %6428 = vmatpush1.msra.mxu0 0.0
    %6429 = vmatprep.subr.mxu0 0.0
    %6430 = vmatpush1.msra.mxu0 0.0
    %6431 = vmatprep.subr.mxu0 0.0
    %6432 = vmatpush1.msra.mxu0 0.0
    %6433 = vmatprep.subr.mxu0 0.0
    %6434 = vmatpush1.msra.mxu0 0.0
    %6435 = vmatprep.subr.mxu0 0.0
    %6436 = vmatpush1.msra.mxu0 0.0
    %6437 = vmatprep.subr.mxu0 0.0
    %6438 = vmatpush1.msra.mxu0 0.0
    %6439 = vmatprep.subr.mxu0 0.0
    %6440 = vmatpush1.msra.mxu0 0.0
    %6441 = vmatprep.subr.mxu0 0.0
    %6442 = vmatpush1.msra.mxu0 0.0
    %6443 = vmatprep.subr.mxu0 0.0
    %6444 = vmatpush1.msra.mxu0 0.0
    %6445 = vmatprep.subr.mxu0 0.0
    %6446 = vmatpush1.msra.mxu0 0.0
    %6447 = vmatprep.subr.mxu0 0.0
    %6448 = vmatpush1.msra.mxu0 0.0
    %6449 = vmatprep.mubr.f32.mxu0 0.0
    %6450 = vmatmul.mubr.f32.gmra.mrb[0].mxu0 %v6380
    %v6451 = vpop.f32.mrb[0].mxu0
    %v6452 = vadd.f32 %v6377, %v6451
    %v6453 = vpop.f32.mrb[0].mxu0
    %6454 = vmatprep.mubr.f32.mxu0 0.0
    %6455 = vmatmul.mubr.f32.gmra.mrb[0].mxu0 %v6383
    %v6456 = vpop.f32.mrb[0].mxu0
    %v6457 = vadd.f32 %v6377, %v6456
    %v6458 = vpop.f32.mrb[0].mxu0
    %6459 = vdwg.mxu0
    %v6460 = vsel %vm455, %v6452, -inf
    %6461 = vmax.xlane.f32.xlu0 %v6460
    %v6462 = vpop.xlane.xlu0 %6461
    %v6463 = vsel %vm455, %v6457, -inf
    %6464 = vmax.xlane.f32.xlu0 %v6463
    %v6465 = vpop.xlane.xlu0 %6464
    %vm6466 = vcmp.ge.f32.partialorder %v6452, %v6462
    %vm6467 = vcmp.ge.f32.partialorder %v6457, %v6465
    %v6468 = vsel %vm6466, -1e+30, %v6452
    %v6469 = vsel %vm6467, -1e+30, %v6457
    %v6470 = vsel %vm455, %v6468, -inf
    %6471 = vmax.xlane.f32.xlu0 %v6470
    %v6472 = vpop.xlane.xlu0 %6471
    %v6473 = vsel %vm455, %v6469, -inf
    %6474 = vmax.xlane.f32.xlu0 %v6473
    %v6475 = vpop.xlane.xlu0 %6474
    %vm6476 = vcmp.ge.f32.partialorder %v6452, %v6472
    %vm6477 = vcmp.ge.f32.partialorder %v6457, %v6475
    %v6478 = vsel %vm6476, %v6452, -1e+20
    %v6479 = vsel %vm6477, %v6457, -1e+20
    %v6480 = vsub.f32 %v6478, %v6462
    %v6481 = vsub.f32 %v6479, %v6465
    %v6482 = vmul.f32 %v6480, 1.442695
    %v6483 = vpow.pop %v6482
    %v6484 = vmul.f32 %v6481, 1.442695
    %v6485 = vpow.pop %v6484
    %v6486 = vsel %vm455, %v6483, 0.0
    %6487 = vadd.xlane.f32.xlu0 %v6486
    %v6488 = vpop.xlane.xlu0 %6487
    %v6489 = vsel %vm455, %v6485, 0.0
    %6490 = vadd.xlane.f32.xlu0 %v6489
    %v6491 = vpop.xlane.xlu0 %6490
    %v6492 = vrcp.pop %v6488
    %v6493 = vmul.f32 %v6483, %v6492
    %v6494 = vrcp.pop %v6491
    %v6495 = vmul.f32 %v6485, %v6494
    %s6496 = scalar_lea.vmem %s10, 288
    %v6497 = vld [vmem:[%s6496] sm:$0xff]
    %v6498 = vld [vmem:[%s6496 + $0x8] sm:$0xff]
    %v6499 = vld [vmem:[%s6496 + $0x10] sm:$0xff]
    %v6500 = vld [vmem:[%s6496 + $0x18] sm:$0xff]
    %v6501 = vld [vmem:[%s6496 + $0x20] sm:$0xff]
    %v6502 = vld [vmem:[%s6496 + $0x28] sm:$0xff]
    %v6503 = vld [vmem:[%s6496 + $0x30] sm:$0xff]
    %v6504 = vld [vmem:[%s6496 + $0x38] sm:$0xff]
    %v6505 = vld [vmem:[%s6496 + $0x40] sm:$0xff]
    %v6506 = vld [vmem:[%s6496 + $0x48] sm:$0xff]
    %v6507 = vld [vmem:[%s6496 + $0x50] sm:$0xff]
    %v6508 = vld [vmem:[%s6496 + $0x58] sm:$0xff]
    %v6509 = vld [vmem:[%s6496 + $0x60] sm:$0xff]
    %v6510 = vld [vmem:[%s6496 + $0x68] sm:$0xff]
    %v6511 = vld [vmem:[%s6496 + $0x70] sm:$0xff]
    %v6512 = vld [vmem:[%s6496 + $0x78] sm:$0xff]
    %v6513 = vld [vmem:[%s6496 + $0x80] sm:$0xff]
    %v6514 = vld [vmem:[%s6496 + $0x88] sm:$0xff]
    %v6515 = vld [vmem:[%s6496 + $0x90] sm:$0xff]
    %v6516 = vld [vmem:[%s6496 + $0x98] sm:$0xff]
    %v6517 = vld [vmem:[%s6496 + $0xa0] sm:$0xff]
    %v6518 = vld [vmem:[%s6496 + $0xa8] sm:$0xff]
    %v6519 = vld [vmem:[%s6496 + $0xb0] sm:$0xff]
    %v6520 = vld [vmem:[%s6496 + $0xb8] sm:$0xff]
    %v6521 = vld [vmem:[%s6496 + $0xc0] sm:$0xff]
    %v6522 = vld [vmem:[%s6496 + $0xc8] sm:$0xff]
    %v6523 = vld [vmem:[%s6496 + $0xd0] sm:$0xff]
    %v6524 = vld [vmem:[%s6496 + $0xd8] sm:$0xff]
    %v6525 = vld [vmem:[%s6496 + $0xe0] sm:$0xff]
    %v6526 = vld [vmem:[%s6496 + $0xe8] sm:$0xff]
    %v6527 = vld [vmem:[%s6496 + $0xf0] sm:$0xff]
    %v6528 = vld [vmem:[%s6496 + $0xf8] sm:$0xff]
    %v6529 = vld [vmem:[%s6496 + $0x100] sm:$0xff]
    %v6530 = vld [vmem:[%s6496 + $0x108] sm:$0xff]
    %v6531 = vld [vmem:[%s6496 + $0x110] sm:$0xff]
    %v6532 = vld [vmem:[%s6496 + $0x118] sm:$0xff]
    %6533 = vmatprep.subr.mxu0 %v6498
    %6534 = vmatpush1.msra.mxu0 %v6497
    %6535 = vmatprep.subr.mxu0 %v6507
    %6536 = vmatpush1.msra.mxu0 %v6506
    %6537 = vmatprep.subr.mxu0 %v6516
    %6538 = vmatpush1.msra.mxu0 %v6515
    %6539 = vmatprep.subr.mxu0 %v6525
    %6540 = vmatpush1.msra.mxu0 %v6524
    %6541 = vmatprep.subr.mxu0 0.0
    %6542 = vmatpush1.msra.mxu0 0.0
    %6543 = vmatprep.subr.mxu0 0.0
    %6544 = vmatpush1.msra.mxu0 0.0
    %6545 = vmatprep.subr.mxu0 0.0
    %6546 = vmatpush1.msra.mxu0 0.0
    %6547 = vmatprep.subr.mxu0 0.0
    %6548 = vmatpush1.msra.mxu0 0.0
    %6549 = vmatprep.subr.mxu0 0.0
    %6550 = vmatpush1.msra.mxu0 0.0
    %6551 = vmatprep.subr.mxu0 0.0
    %6552 = vmatpush1.msra.mxu0 0.0
    %6553 = vmatprep.subr.mxu0 0.0
    %6554 = vmatpush1.msra.mxu0 0.0
    %6555 = vmatprep.subr.mxu0 0.0
    %6556 = vmatpush1.msra.mxu0 0.0
    %6557 = vmatprep.subr.mxu0 0.0
    %6558 = vmatpush1.msra.mxu0 0.0
    %6559 = vmatprep.subr.mxu0 0.0
    %6560 = vmatpush1.msra.mxu0 0.0
    %6561 = vmatprep.subr.mxu0 0.0
    %6562 = vmatpush1.msra.mxu0 0.0
    %6563 = vmatprep.subr.mxu0 0.0
    %6564 = vmatpush1.msra.mxu0 0.0
    %6565 = vmatprep.subr.mxu0 0.0
    %6566 = vmatpush1.msra.mxu0 0.0
    %6567 = vmatprep.subr.mxu0 0.0
    %6568 = vmatpush1.msra.mxu0 0.0
    %6569 = vmatprep.subr.mxu0 0.0
    %6570 = vmatpush1.msra.mxu0 0.0
    %6571 = vmatprep.subr.mxu0 0.0
    %6572 = vmatpush1.msra.mxu0 0.0
    %6573 = vmatprep.subr.mxu0 0.0
    %6574 = vmatpush1.msra.mxu0 0.0
    %6575 = vmatprep.subr.mxu0 0.0
    %6576 = vmatpush1.msra.mxu0 0.0
    %6577 = vmatprep.subr.mxu0 0.0
    %6578 = vmatpush1.msra.mxu0 0.0
    %6579 = vmatprep.subr.mxu0 0.0
    %6580 = vmatpush1.msra.mxu0 0.0
    %6581 = vmatprep.subr.mxu0 0.0
    %6582 = vmatpush1.msra.mxu0 0.0
    %6583 = vmatprep.subr.mxu0 0.0
    %6584 = vmatpush1.msra.mxu0 0.0
    %6585 = vmatprep.subr.mxu0 0.0
    %6586 = vmatpush1.msra.mxu0 0.0
    %6587 = vmatprep.subr.mxu0 0.0
    %6588 = vmatpush1.msra.mxu0 0.0
    %6589 = vmatprep.subr.mxu0 0.0
    %6590 = vmatpush1.msra.mxu0 0.0
    %6591 = vmatprep.subr.mxu0 0.0
    %6592 = vmatpush1.msra.mxu0 0.0
    %6593 = vmatprep.subr.mxu0 0.0
    %6594 = vmatpush1.msra.mxu0 0.0
    %6595 = vmatprep.subr.mxu0 0.0
    %6596 = vmatpush1.msra.mxu0 0.0
    %6597 = vmatprep.mubr.f32.mxu0 0.0
    %6598 = vmatmul.mubr.f32.gmra.mrb[0].mxu0 %v6380
    %v6599 = vpop.f32.mrb[0].mxu0
    %v6600 = vadd.f32 0.0, %v6599
    %v6601 = vpop.f32.mrb[0].mxu0
    %v6602 = vadd.f32 0.0, %v6601
    %6603 = vmatprep.mubr.f32.mxu0 0.0
    %6604 = vmatmul.mubr.f32.gmra.mrb[0].mxu0 %v6383
    %v6605 = vpop.f32.mrb[0].mxu0
    %v6606 = vadd.f32 0.0, %v6605
    %v6607 = vpop.f32.mrb[0].mxu0
    %v6608 = vadd.f32 0.0, %v6607
    %6609 = vdwg.mxu0
    %6610 = vmatprep.subr.mxu0 %v6500
    %6611 = vmatpush1.msra.mxu0 %v6499
    %6612 = vmatprep.subr.mxu0 %v6509
    %6613 = vmatpush1.msra.mxu0 %v6508
    %6614 = vmatprep.subr.mxu0 %v6518
    %6615 = vmatpush1.msra.mxu0 %v6517
    %6616 = vmatprep.subr.mxu0 %v6527
    %6617 = vmatpush1.msra.mxu0 %v6526
    %6618 = vmatprep.subr.mxu0 0.0
    %6619 = vmatpush1.msra.mxu0 0.0
    %6620 = vmatprep.subr.mxu0 0.0
    %6621 = vmatpush1.msra.mxu0 0.0
    %6622 = vmatprep.subr.mxu0 0.0
    %6623 = vmatpush1.msra.mxu0 0.0
    %6624 = vmatprep.subr.mxu0 0.0
    %6625 = vmatpush1.msra.mxu0 0.0
    %6626 = vmatprep.subr.mxu0 0.0
    %6627 = vmatpush1.msra.mxu0 0.0
    %6628 = vmatprep.subr.mxu0 0.0
    %6629 = vmatpush1.msra.mxu0 0.0
    %6630 = vmatprep.subr.mxu0 0.0
    %6631 = vmatpush1.msra.mxu0 0.0
    %6632 = vmatprep.subr.mxu0 0.0
    %6633 = vmatpush1.msra.mxu0 0.0
    %6634 = vmatprep.subr.mxu0 0.0
    %6635 = vmatpush1.msra.mxu0 0.0
    %6636 = vmatprep.subr.mxu0 0.0
    %6637 = vmatpush1.msra.mxu0 0.0
    %6638 = vmatprep.subr.mxu0 0.0
    %6639 = vmatpush1.msra.mxu0 0.0
    %6640 = vmatprep.subr.mxu0 0.0
    %6641 = vmatpush1.msra.mxu0 0.0
    %6642 = vmatprep.subr.mxu0 0.0
    %6643 = vmatpush1.msra.mxu0 0.0
    %6644 = vmatprep.subr.mxu0 0.0
    %6645 = vmatpush1.msra.mxu0 0.0
    %6646 = vmatprep.subr.mxu0 0.0
    %6647 = vmatpush1.msra.mxu0 0.0
    %6648 = vmatprep.subr.mxu0 0.0
    %6649 = vmatpush1.msra.mxu0 0.0
    %6650 = vmatprep.subr.mxu0 0.0
    %6651 = vmatpush1.msra.mxu0 0.0
    %6652 = vmatprep.subr.mxu0 0.0
    %6653 = vmatpush1.msra.mxu0 0.0
    %6654 = vmatprep.subr.mxu0 0.0
    %6655 = vmatpush1.msra.mxu0 0.0
    %6656 = vmatprep.subr.mxu0 0.0
    %6657 = vmatpush1.msra.mxu0 0.0
    %6658 = vmatprep.subr.mxu0 0.0
    %6659 = vmatpush1.msra.mxu0 0.0
    %6660 = vmatprep.subr.mxu0 0.0
    %6661 = vmatpush1.msra.mxu0 0.0
    %6662 = vmatprep.subr.mxu0 0.0
    %6663 = vmatpush1.msra.mxu0 0.0
    %6664 = vmatprep.subr.mxu0 0.0
    %6665 = vmatpush1.msra.mxu0 0.0
    %6666 = vmatprep.subr.mxu0 0.0
    %6667 = vmatpush1.msra.mxu0 0.0
    %6668 = vmatprep.subr.mxu0 0.0
    %6669 = vmatpush1.msra.mxu0 0.0
    %6670 = vmatprep.subr.mxu0 0.0
    %6671 = vmatpush1.msra.mxu0 0.0
    %6672 = vmatprep.subr.mxu0 0.0
    %6673 = vmatpush1.msra.mxu0 0.0
    %6674 = vmatprep.mubr.f32.mxu0 0.0
    %6675 = vmatmul.mubr.f32.gmra.mrb[0].mxu0 %v6380
    %v6676 = vpop.f32.mrb[0].mxu0
    %v6677 = vadd.f32 0.0, %v6676
    %v6678 = vpop.f32.mrb[0].mxu0
    %v6679 = vadd.f32 0.0, %v6678
    %6680 = vmatprep.mubr.f32.mxu0 0.0
    %6681 = vmatmul.mubr.f32.gmra.mrb[0].mxu0 %v6383
    %v6682 = vpop.f32.mrb[0].mxu0
    %v6683 = vadd.f32 0.0, %v6682
    %v6684 = vpop.f32.mrb[0].mxu0
    %v6685 = vadd.f32 0.0, %v6684
    %6686 = vdwg.mxu0
    %6687 = vmatprep.subr.mxu0 %v6502
    %6688 = vmatpush1.msra.mxu0 %v6501
    %6689 = vmatprep.subr.mxu0 %v6511
    %6690 = vmatpush1.msra.mxu0 %v6510
    %6691 = vmatprep.subr.mxu0 %v6520
    %6692 = vmatpush1.msra.mxu0 %v6519
    %6693 = vmatprep.subr.mxu0 %v6529
    %6694 = vmatpush1.msra.mxu0 %v6528
    %6695 = vmatprep.subr.mxu0 0.0
    %6696 = vmatpush1.msra.mxu0 0.0
    %6697 = vmatprep.subr.mxu0 0.0
    %6698 = vmatpush1.msra.mxu0 0.0
    %6699 = vmatprep.subr.mxu0 0.0
    %6700 = vmatpush1.msra.mxu0 0.0
    %6701 = vmatprep.subr.mxu0 0.0
    %6702 = vmatpush1.msra.mxu0 0.0
    %6703 = vmatprep.subr.mxu0 0.0
    %6704 = vmatpush1.msra.mxu0 0.0
    %6705 = vmatprep.subr.mxu0 0.0
    %6706 = vmatpush1.msra.mxu0 0.0
    %6707 = vmatprep.subr.mxu0 0.0
    %6708 = vmatpush1.msra.mxu0 0.0
    %6709 = vmatprep.subr.mxu0 0.0
    %6710 = vmatpush1.msra.mxu0 0.0
    %6711 = vmatprep.subr.mxu0 0.0
    %6712 = vmatpush1.msra.mxu0 0.0
    %6713 = vmatprep.subr.mxu0 0.0
    %6714 = vmatpush1.msra.mxu0 0.0
    %6715 = vmatprep.subr.mxu0 0.0
    %6716 = vmatpush1.msra.mxu0 0.0
    %6717 = vmatprep.subr.mxu0 0.0
    %6718 = vmatpush1.msra.mxu0 0.0
    %6719 = vmatprep.subr.mxu0 0.0
    %6720 = vmatpush1.msra.mxu0 0.0
    %6721 = vmatprep.subr.mxu0 0.0
    %6722 = vmatpush1.msra.mxu0 0.0
    %6723 = vmatprep.subr.mxu0 0.0
    %6724 = vmatpush1.msra.mxu0 0.0
    %6725 = vmatprep.subr.mxu0 0.0
    %6726 = vmatpush1.msra.mxu0 0.0
    %6727 = vmatprep.subr.mxu0 0.0
    %6728 = vmatpush1.msra.mxu0 0.0
    %6729 = vmatprep.subr.mxu0 0.0
    %6730 = vmatpush1.msra.mxu0 0.0
    %6731 = vmatprep.subr.mxu0 0.0
    %6732 = vmatpush1.msra.mxu0 0.0
    %6733 = vmatprep.subr.mxu0 0.0
    %6734 = vmatpush1.msra.mxu0 0.0
    %6735 = vmatprep.subr.mxu0 0.0
    %6736 = vmatpush1.msra.mxu0 0.0
    %6737 = vmatprep.subr.mxu0 0.0
    %6738 = vmatpush1.msra.mxu0 0.0
    %6739 = vmatprep.subr.mxu0 0.0
    %6740 = vmatpush1.msra.mxu0 0.0
    %6741 = vmatprep.subr.mxu0 0.0
    %6742 = vmatpush1.msra.mxu0 0.0
    %6743 = vmatprep.subr.mxu0 0.0
    %6744 = vmatpush1.msra.mxu0 0.0
    %6745 = vmatprep.subr.mxu0 0.0
    %6746 = vmatpush1.msra.mxu0 0.0
    %6747 = vmatprep.subr.mxu0 0.0
    %6748 = vmatpush1.msra.mxu0 0.0
    %6749 = vmatprep.subr.mxu0 0.0
    %6750 = vmatpush1.msra.mxu0 0.0
    %6751 = vmatprep.mubr.f32.mxu0 0.0
    %6752 = vmatmul.mubr.f32.gmra.mrb[0].mxu0 %v6380
    %v6753 = vpop.f32.mrb[0].mxu0
    %v6754 = vadd.f32 0.0, %v6753
    %v6755 = vpop.f32.mrb[0].mxu0
    %v6756 = vadd.f32 0.0, %v6755
    %6757 = vmatprep.mubr.f32.mxu0 0.0
    %6758 = vmatmul.mubr.f32.gmra.mrb[0].mxu0 %v6383
    %v6759 = vpop.f32.mrb[0].mxu0
    %v6760 = vadd.f32 0.0, %v6759
    %v6761 = vpop.f32.mrb[0].mxu0
    %v6762 = vadd.f32 0.0, %v6761
    %6763 = vdwg.mxu0
    %6764 = vmatprep.subr.mxu0 %v6504
    %6765 = vmatpush1.msra.mxu0 %v6503
    %6766 = vmatprep.subr.mxu0 %v6513
    %6767 = vmatpush1.msra.mxu0 %v6512
    %6768 = vmatprep.subr.mxu0 %v6522
    %6769 = vmatpush1.msra.mxu0 %v6521
    %6770 = vmatprep.subr.mxu0 %v6531
    %6771 = vmatpush1.msra.mxu0 %v6530
    %6772 = vmatprep.subr.mxu0 0.0
    %6773 = vmatpush1.msra.mxu0 0.0
    %6774 = vmatprep.subr.mxu0 0.0
    %6775 = vmatpush1.msra.mxu0 0.0
    %6776 = vmatprep.subr.mxu0 0.0
    %6777 = vmatpush1.msra.mxu0 0.0
    %6778 = vmatprep.subr.mxu0 0.0
    %6779 = vmatpush1.msra.mxu0 0.0
    %6780 = vmatprep.subr.mxu0 0.0
    %6781 = vmatpush1.msra.mxu0 0.0
    %6782 = vmatprep.subr.mxu0 0.0
    %6783 = vmatpush1.msra.mxu0 0.0
    %6784 = vmatprep.subr.mxu0 0.0
    %6785 = vmatpush1.msra.mxu0 0.0
    %6786 = vmatprep.subr.mxu0 0.0
    %6787 = vmatpush1.msra.mxu0 0.0
    %6788 = vmatprep.subr.mxu0 0.0
    %6789 = vmatpush1.msra.mxu0 0.0
    %6790 = vmatprep.subr.mxu0 0.0
    %6791 = vmatpush1.msra.mxu0 0.0
    %6792 = vmatprep.subr.mxu0 0.0
    %6793 = vmatpush1.msra.mxu0 0.0
    %6794 = vmatprep.subr.mxu0 0.0
    %6795 = vmatpush1.msra.mxu0 0.0
    %6796 = vmatprep.subr.mxu0 0.0
    %6797 = vmatpush1.msra.mxu0 0.0
    %6798 = vmatprep.subr.mxu0 0.0
    %6799 = vmatpush1.msra.mxu0 0.0
    %6800 = vmatprep.subr.mxu0 0.0
    %6801 = vmatpush1.msra.mxu0 0.0
    %6802 = vmatprep.subr.mxu0 0.0
    %6803 = vmatpush1.msra.mxu0 0.0
    %6804 = vmatprep.subr.mxu0 0.0
    %6805 = vmatpush1.msra.mxu0 0.0
    %6806 = vmatprep.subr.mxu0 0.0
    %6807 = vmatpush1.msra.mxu0 0.0
    %6808 = vmatprep.subr.mxu0 0.0
    %6809 = vmatpush1.msra.mxu0 0.0
    %6810 = vmatprep.subr.mxu0 0.0
    %6811 = vmatpush1.msra.mxu0 0.0
    %6812 = vmatprep.subr.mxu0 0.0
    %6813 = vmatpush1.msra.mxu0 0.0
    %6814 = vmatprep.subr.mxu0 0.0
    %6815 = vmatpush1.msra.mxu0 0.0
    %6816 = vmatprep.subr.mxu0 0.0
    %6817 = vmatpush1.msra.mxu0 0.0
    %6818 = vmatprep.subr.mxu0 0.0
    %6819 = vmatpush1.msra.mxu0 0.0
    %6820 = vmatprep.subr.mxu0 0.0
    %6821 = vmatpush1.msra.mxu0 0.0
    %6822 = vmatprep.subr.mxu0 0.0
    %6823 = vmatpush1.msra.mxu0 0.0
    %6824 = vmatprep.subr.mxu0 0.0
    %6825 = vmatpush1.msra.mxu0 0.0
    %6826 = vmatprep.subr.mxu0 0.0
    %6827 = vmatpush1.msra.mxu0 0.0
    %6828 = vmatprep.mubr.f32.mxu0 0.0
    %6829 = vmatmul.mubr.f32.gmra.mrb[0].mxu0 %v6380
    %v6830 = vpop.f32.mrb[0].mxu0
    %v6831 = vadd.f32 0.0, %v6830
    %v6832 = vpop.f32.mrb[0].mxu0
    %v6833 = vadd.f32 0.0, %v6832
    %6834 = vmatprep.mubr.f32.mxu0 0.0
    %6835 = vmatmul.mubr.f32.gmra.mrb[0].mxu0 %v6383
    %v6836 = vpop.f32.mrb[0].mxu0
    %v6837 = vadd.f32 0.0, %v6836
    %v6838 = vpop.f32.mrb[0].mxu0
    %v6839 = vadd.f32 0.0, %v6838
    %6840 = vdwg.mxu0
    %6841 = vmatprep.subr.mxu0 0.0
    %6842 = vmatpush1.msra.mxu0 %v6505
    %6843 = vmatprep.subr.mxu0 0.0
    %6844 = vmatpush1.msra.mxu0 %v6514
    %6845 = vmatprep.subr.mxu0 0.0
    %6846 = vmatpush1.msra.mxu0 %v6523
    %6847 = vmatprep.subr.mxu0 0.0
    %6848 = vmatpush1.msra.mxu0 %v6532
    %6849 = vmatprep.subr.mxu0 0.0
    %6850 = vmatpush1.msra.mxu0 0.0
    %6851 = vmatprep.subr.mxu0 0.0
    %6852 = vmatpush1.msra.mxu0 0.0
    %6853 = vmatprep.subr.mxu0 0.0
    %6854 = vmatpush1.msra.mxu0 0.0
    %6855 = vmatprep.subr.mxu0 0.0
    %6856 = vmatpush1.msra.mxu0 0.0
    %6857 = vmatprep.subr.mxu0 0.0
    %6858 = vmatpush1.msra.mxu0 0.0
    %6859 = vmatprep.subr.mxu0 0.0
    %6860 = vmatpush1.msra.mxu0 0.0
    %6861 = vmatprep.subr.mxu0 0.0
    %6862 = vmatpush1.msra.mxu0 0.0
    %6863 = vmatprep.subr.mxu0 0.0
    %6864 = vmatpush1.msra.mxu0 0.0
    %6865 = vmatprep.subr.mxu0 0.0
    %6866 = vmatpush1.msra.mxu0 0.0
    %6867 = vmatprep.subr.mxu0 0.0
    %6868 = vmatpush1.msra.mxu0 0.0
    %6869 = vmatprep.subr.mxu0 0.0
    %6870 = vmatpush1.msra.mxu0 0.0
    %6871 = vmatprep.subr.mxu0 0.0
    %6872 = vmatpush1.msra.mxu0 0.0
    %6873 = vmatprep.subr.mxu0 0.0
    %6874 = vmatpush1.msra.mxu0 0.0
    %6875 = vmatprep.subr.mxu0 0.0
    %6876 = vmatpush1.msra.mxu0 0.0
    %6877 = vmatprep.subr.mxu0 0.0
    %6878 = vmatpush1.msra.mxu0 0.0
    %6879 = vmatprep.subr.mxu0 0.0
    %6880 = vmatpush1.msra.mxu0 0.0
    %6881 = vmatprep.subr.mxu0 0.0
    %6882 = vmatpush1.msra.mxu0 0.0
    %6883 = vmatprep.subr.mxu0 0.0
    %6884 = vmatpush1.msra.mxu0 0.0
    %6885 = vmatprep.subr.mxu0 0.0
    %6886 = vmatpush1.msra.mxu0 0.0
    %6887 = vmatprep.subr.mxu0 0.0
    %6888 = vmatpush1.msra.mxu0 0.0
    %6889 = vmatprep.subr.mxu0 0.0
    %6890 = vmatpush1.msra.mxu0 0.0
    %6891 = vmatprep.subr.mxu0 0.0
    %6892 = vmatpush1.msra.mxu0 0.0
    %6893 = vmatprep.subr.mxu0 0.0
    %6894 = vmatpush1.msra.mxu0 0.0
    %6895 = vmatprep.subr.mxu0 0.0
    %6896 = vmatpush1.msra.mxu0 0.0
    %6897 = vmatprep.subr.mxu0 0.0
    %6898 = vmatpush1.msra.mxu0 0.0
    %6899 = vmatprep.subr.mxu0 0.0
    %6900 = vmatpush1.msra.mxu0 0.0
    %6901 = vmatprep.subr.mxu0 0.0
    %6902 = vmatpush1.msra.mxu0 0.0
    %6903 = vmatprep.subr.mxu0 0.0
    %6904 = vmatpush1.msra.mxu0 0.0
    %6905 = vmatprep.mubr.f32.mxu0 0.0
    %6906 = vmatmul.mubr.f32.gmra.mrb[0].mxu0 %v6380
    %v6907 = vpop.f32.mrb[0].mxu0
    %v6908 = vadd.f32 0.0, %v6907
    %v6909 = vpop.f32.mrb[0].mxu0
    %6910 = vmatprep.mubr.f32.mxu0 0.0
    %6911 = vmatmul.mubr.f32.gmra.mrb[0].mxu0 %v6383
    %v6912 = vpop.f32.mrb[0].mxu0
    %v6913 = vadd.f32 0.0, %v6912
    %v6914 = vpop.f32.mrb[0].mxu0
    %6915 = vdwg.mxu0
    %v6916 = vxor.u32 %v6600, 2147483648
    %v6917 = vxor.u32 %v6602, 2147483648
    %v6918 = vxor.u32 %v6677, 2147483648
    %v6919 = vxor.u32 %v6679, 2147483648
    %v6920 = vxor.u32 %v6754, 2147483648
    %v6921 = vxor.u32 %v6606, 2147483648
    %v6922 = vxor.u32 %v6608, 2147483648
    %v6923 = vxor.u32 %v6683, 2147483648
    %v6924 = vxor.u32 %v6685, 2147483648
    %v6925 = vxor.u32 %v6760, 2147483648
    %v6926 = vmul.f32 %v6916, 1.442695
    %v6927 = vpow.pop %v6926
    %v6928 = vmul.f32 %v6917, 1.442695
    %v6929 = vpow.pop %v6928
    %v6930 = vmul.f32 %v6918, 1.442695
    %v6931 = vpow.pop %v6930
    %v6932 = vmul.f32 %v6919, 1.442695
    %v6933 = vpow.pop %v6932
    %v6934 = vmul.f32 %v6920, 1.442695
    %v6935 = vpow.pop %v6934
    %v6936 = vmul.f32 %v6921, 1.442695
    %v6937 = vpow.pop %v6936
    %v6938 = vmul.f32 %v6922, 1.442695
    %v6939 = vpow.pop %v6938
    %v6940 = vmul.f32 %v6923, 1.442695
    %v6941 = vpow.pop %v6940
    %v6942 = vmul.f32 %v6924, 1.442695
    %v6943 = vpow.pop %v6942
    %v6944 = vmul.f32 %v6925, 1.442695
    %v6945 = vpow.pop %v6944
    %v6946 = vadd.f32 %v6927, 1.0
    %v6947 = vadd.f32 %v6929, 1.0
    %v6948 = vadd.f32 %v6931, 1.0
    %v6949 = vadd.f32 %v6933, 1.0
    %v6950 = vadd.f32 %v6935, 1.0
    %v6951 = vadd.f32 %v6937, 1.0
    %v6952 = vadd.f32 %v6939, 1.0
    %v6953 = vadd.f32 %v6941, 1.0
    %v6954 = vadd.f32 %v6943, 1.0
    %v6955 = vadd.f32 %v6945, 1.0
    %v6956 = vrcp.pop %v6946
    %v6957 = vmul.f32 1.0, %v6956
    %v6958 = vrcp.pop %v6947
    %v6959 = vmul.f32 1.0, %v6958
    %v6960 = vrcp.pop %v6948
    %v6961 = vmul.f32 1.0, %v6960
    %v6962 = vrcp.pop %v6949
    %v6963 = vmul.f32 1.0, %v6962
    %v6964 = vrcp.pop %v6950
    %v6965 = vmul.f32 1.0, %v6964
    %v6966 = vrcp.pop %v6951
    %v6967 = vmul.f32 1.0, %v6966
    %v6968 = vrcp.pop %v6952
    %v6969 = vmul.f32 1.0, %v6968
    %v6970 = vrcp.pop %v6953
    %v6971 = vmul.f32 1.0, %v6970
    %v6972 = vrcp.pop %v6954
    %v6973 = vmul.f32 1.0, %v6972
    %v6974 = vrcp.pop %v6955
    %v6975 = vmul.f32 1.0, %v6974
    %v6976 = vmul.f32 %v6600, %v6957
    %v6977 = vmul.f32 %v6602, %v6959
    %v6978 = vmul.f32 %v6677, %v6961
    %v6979 = vmul.f32 %v6679, %v6963
    %v6980 = vmul.f32 %v6754, %v6965
    %v6981 = vmul.f32 %v6606, %v6967
    %v6982 = vmul.f32 %v6608, %v6969
    %v6983 = vmul.f32 %v6683, %v6971
    %v6984 = vmul.f32 %v6685, %v6973
    %v6985 = vmul.f32 %v6760, %v6975
    %6996 = vrot.lane.b32.xlu0 %v6754, 64
    %v6997 = vpop.permute.xlu0 %6996
    %6998 = vrot.lane.b32.xlu0 %v6756, 64
    %v6999 = vpop.permute.xlu0 %6998
    %7000 = vrot.lane.b32.xlu0 %v6831, 64
    %v7001 = vpop.permute.xlu0 %7000
    %7002 = vrot.lane.b32.xlu0 %v6833, 64
    %v7003 = vpop.permute.xlu0 %7002
    %7004 = vrot.lane.b32.xlu0 %v6908, 64
    %v7005 = vpop.permute.xlu0 %7004
    %7006 = vrot.lane.b32.xlu0 %v6760, 64
    %v7007 = vpop.permute.xlu0 %7006
    %7008 = vrot.lane.b32.xlu0 %v6762, 64
    %v7009 = vpop.permute.xlu0 %7008
    %7010 = vrot.lane.b32.xlu0 %v6837, 64
    %v7011 = vpop.permute.xlu0 %7010
    %7012 = vrot.lane.b32.xlu0 %v6839, 64
    %v7013 = vpop.permute.xlu0 %7012
    %7014 = vrot.lane.b32.xlu0 %v6913, 64
    %v7015 = vpop.permute.xlu0 %7014
    %v7016 = vsel %vm71, %v6997, %v6999
    %v7017 = vsel %vm71, %v6999, %v7001
    %v7018 = vsel %vm71, %v7001, %v7003
    %v7019 = vsel %vm71, %v7003, %v7005
    %v7020 = vsel %vm71, %v7007, %v7009
    %v7021 = vsel %vm71, %v7009, %v7011
    %v7022 = vsel %vm71, %v7011, %v7013
    %v7023 = vsel %vm71, %v7013, %v7015
    %v7034 = vmul.f32 %v6976, %v7016
    %v7035 = vmul.f32 %v6977, %v7017
    %v7036 = vmul.f32 %v6978, %v7018
    %v7037 = vmul.f32 %v6979, %v7019
    %v7038 = vmul.f32 %v6980, %v7005
    %v7039 = vmul.f32 %v6981, %v7020
    %v7040 = vmul.f32 %v6982, %v7021
    %v7041 = vmul.f32 %v6983, %v7022
    %v7042 = vmul.f32 %v6984, %v7023
    %v7043 = vmul.f32 %v6985, %v7015
    %v7044 = vld [vmem:[%s12] sm:$0xff]
    %v7045 = vld [vmem:[%s12 + $0x8] sm:$0xff]
    %v7046 = vld [vmem:[%s12 + $0x10] sm:$0xff]
    %v7047 = vld [vmem:[%s12 + $0x18] sm:$0xff]
    %v7048 = vld [vmem:[%s12 + $0x20] sm:$0xff]
    %v7049 = vld [vmem:[%s12 + $0x28] sm:$0x1]
    %v7050 = vld [vmem:[%s12 + $0x30] sm:$0x1]
    %v7051 = vld [vmem:[%s12 + $0x38] sm:$0x1]
    %v7052 = vld [vmem:[%s12 + $0x40] sm:$0x1]
    %v7053 = vld [vmem:[%s12 + $0x48] sm:$0x1]
    %v7054 = vlaneseq
    %v7055 = vshrl.u32 %v7054, 7
    %v7056 = vsub.s32 0, %v7055
    %v7057 = vrot.slane %v7049, %v7056
    %v7058 = vlaneseq
    %v7059 = vshrl.u32 %v7058, 7
    %v7060 = vsub.s32 0, %v7059
    %v7061 = vrot.slane %v7050, %v7060
    %v7062 = vlaneseq
    %v7063 = vshrl.u32 %v7062, 7
    %v7064 = vsub.s32 0, %v7063
    %v7065 = vrot.slane %v7051, %v7064
    %v7066 = vlaneseq
    %v7067 = vshrl.u32 %v7066, 7
    %v7068 = vsub.s32 0, %v7067
    %v7069 = vrot.slane %v7052, %v7068
    %v7070 = vlaneseq
    %v7071 = vshrl.u32 %v7070, 7
    %v7072 = vsub.s32 0, %v7071
    %v7073 = vrot.slane %v7053, %v7072
    %v7075 = vsel %vm455, %v6493, 0
    %v7078 = vsel %vm455, %v6495, 0
    %7080 = vmatprep.subr.mxu0 %v7045
    %7081 = vmatpush1.msra.mxu0 %v7044
    %7082 = vmatprep.subr.mxu0 0.0
    %7083 = vmatpush1.msra.mxu0 0.0
    %7084 = vmatprep.subr.mxu0 0.0
    %7085 = vmatpush1.msra.mxu0 0.0
    %7086 = vmatprep.subr.mxu0 0.0
    %7087 = vmatpush1.msra.mxu0 0.0
    %7088 = vmatprep.subr.mxu0 0.0
    %7089 = vmatpush1.msra.mxu0 0.0
    %7090 = vmatprep.subr.mxu0 0.0
    %7091 = vmatpush1.msra.mxu0 0.0
    %7092 = vmatprep.subr.mxu0 0.0
    %7093 = vmatpush1.msra.mxu0 0.0
    %7094 = vmatprep.subr.mxu0 0.0
    %7095 = vmatpush1.msra.mxu0 0.0
    %7096 = vmatprep.subr.mxu0 0.0
    %7097 = vmatpush1.msra.mxu0 0.0
    %7098 = vmatprep.subr.mxu0 0.0
    %7099 = vmatpush1.msra.mxu0 0.0
    %7100 = vmatprep.subr.mxu0 0.0
    %7101 = vmatpush1.msra.mxu0 0.0
    %7102 = vmatprep.subr.mxu0 0.0
    %7103 = vmatpush1.msra.mxu0 0.0
    %7104 = vmatprep.subr.mxu0 0.0
    %7105 = vmatpush1.msra.mxu0 0.0
    %7106 = vmatprep.subr.mxu0 0.0
    %7107 = vmatpush1.msra.mxu0 0.0
    %7108 = vmatprep.subr.mxu0 0.0
    %7109 = vmatpush1.msra.mxu0 0.0
    %7110 = vmatprep.subr.mxu0 0.0
    %7111 = vmatpush1.msra.mxu0 0.0
    %7112 = vmatprep.subr.mxu0 0.0
    %7113 = vmatpush1.msra.mxu0 0.0
    %7114 = vmatprep.subr.mxu0 0.0
    %7115 = vmatpush1.msra.mxu0 0.0
    %7116 = vmatprep.subr.mxu0 0.0
    %7117 = vmatpush1.msra.mxu0 0.0
    %7118 = vmatprep.subr.mxu0 0.0
    %7119 = vmatpush1.msra.mxu0 0.0
    %7120 = vmatprep.subr.mxu0 0.0
    %7121 = vmatpush1.msra.mxu0 0.0
    %7122 = vmatprep.subr.mxu0 0.0
    %7123 = vmatpush1.msra.mxu0 0.0
    %7124 = vmatprep.subr.mxu0 0.0
    %7125 = vmatpush1.msra.mxu0 0.0
    %7126 = vmatprep.subr.mxu0 0.0
    %7127 = vmatpush1.msra.mxu0 0.0
    %7128 = vmatprep.subr.mxu0 0.0
    %7129 = vmatpush1.msra.mxu0 0.0
    %7130 = vmatprep.subr.mxu0 0.0
    %7131 = vmatpush1.msra.mxu0 0.0
    %7132 = vmatprep.subr.mxu0 0.0
    %7133 = vmatpush1.msra.mxu0 0.0
    %7134 = vmatprep.subr.mxu0 0.0
    %7135 = vmatpush1.msra.mxu0 0.0
    %7136 = vmatprep.subr.mxu0 0.0
    %7137 = vmatpush1.msra.mxu0 0.0
    %7138 = vmatprep.subr.mxu0 0.0
    %7139 = vmatpush1.msra.mxu0 0.0
    %7140 = vmatprep.subr.mxu0 0.0
    %7141 = vmatpush1.msra.mxu0 0.0
    %7142 = vmatprep.subr.mxu0 0.0
    %7143 = vmatpush1.msra.mxu0 0.0
    %7144 = vmatprep.mubr.f32.mxu0 0.0
    %7145 = vmatmul.mubr.f32.gmra.mrb[0].mxu0 %v7075
    %v7146 = vpop.f32.mrb[0].mxu0
    %v7147 = vadd.f32 %v7057, %v7146
    %v7148 = vpop.f32.mrb[0].mxu0
    %v7149 = vadd.f32 %v7061, %v7148
    %7150 = vmatprep.mubr.f32.mxu0 0.0
    %7151 = vmatmul.mubr.f32.gmra.mrb[0].mxu0 %v7078
    %v7152 = vpop.f32.mrb[0].mxu0
    %v7153 = vadd.f32 %v7057, %v7152
    %v7154 = vpop.f32.mrb[0].mxu0
    %v7155 = vadd.f32 %v7061, %v7154
    %7156 = vdwg.mxu0
    %7157 = vmatprep.subr.mxu0 %v7047
    %7158 = vmatpush1.msra.mxu0 %v7046
    %7159 = vmatprep.subr.mxu0 0.0
    %7160 = vmatpush1.msra.mxu0 0.0
    %7161 = vmatprep.subr.mxu0 0.0
    %7162 = vmatpush1.msra.mxu0 0.0
    %7163 = vmatprep.subr.mxu0 0.0
    %7164 = vmatpush1.msra.mxu0 0.0
    %7165 = vmatprep.subr.mxu0 0.0
    %7166 = vmatpush1.msra.mxu0 0.0
    %7167 = vmatprep.subr.mxu0 0.0
    %7168 = vmatpush1.msra.mxu0 0.0
    %7169 = vmatprep.subr.mxu0 0.0
    %7170 = vmatpush1.msra.mxu0 0.0
    %7171 = vmatprep.subr.mxu0 0.0
    %7172 = vmatpush1.msra.mxu0 0.0
    %7173 = vmatprep.subr.mxu0 0.0
    %7174 = vmatpush1.msra.mxu0 0.0
    %7175 = vmatprep.subr.mxu0 0.0
    %7176 = vmatpush1.msra.mxu0 0.0
    %7177 = vmatprep.subr.mxu0 0.0
    %7178 = vmatpush1.msra.mxu0 0.0
    %7179 = vmatprep.subr.mxu0 0.0
    %7180 = vmatpush1.msra.mxu0 0.0
    %7181 = vmatprep.subr.mxu0 0.0
    %7182 = vmatpush1.msra.mxu0 0.0
    %7183 = vmatprep.subr.mxu0 0.0
    %7184 = vmatpush1.msra.mxu0 0.0
    %7185 = vmatprep.subr.mxu0 0.0
    %7186 = vmatpush1.msra.mxu0 0.0
    %7187 = vmatprep.subr.mxu0 0.0
    %7188 = vmatpush1.msra.mxu0 0.0
    %7189 = vmatprep.subr.mxu0 0.0
    %7190 = vmatpush1.msra.mxu0 0.0
    %7191 = vmatprep.subr.mxu0 0.0
    %7192 = vmatpush1.msra.mxu0 0.0
    %7193 = vmatprep.subr.mxu0 0.0
    %7194 = vmatpush1.msra.mxu0 0.0
    %7195 = vmatprep.subr.mxu0 0.0
    %7196 = vmatpush1.msra.mxu0 0.0
    %7197 = vmatprep.subr.mxu0 0.0
    %7198 = vmatpush1.msra.mxu0 0.0
    %7199 = vmatprep.subr.mxu0 0.0
    %7200 = vmatpush1.msra.mxu0 0.0
    %7201 = vmatprep.subr.mxu0 0.0
    %7202 = vmatpush1.msra.mxu0 0.0
    %7203 = vmatprep.subr.mxu0 0.0
    %7204 = vmatpush1.msra.mxu0 0.0
    %7205 = vmatprep.subr.mxu0 0.0
    %7206 = vmatpush1.msra.mxu0 0.0
    %7207 = vmatprep.subr.mxu0 0.0
    %7208 = vmatpush1.msra.mxu0 0.0
    %7209 = vmatprep.subr.mxu0 0.0
    %7210 = vmatpush1.msra.mxu0 0.0
    %7211 = vmatprep.subr.mxu0 0.0
    %7212 = vmatpush1.msra.mxu0 0.0
    %7213 = vmatprep.subr.mxu0 0.0
    %7214 = vmatpush1.msra.mxu0 0.0
    %7215 = vmatprep.subr.mxu0 0.0
    %7216 = vmatpush1.msra.mxu0 0.0
    %7217 = vmatprep.subr.mxu0 0.0
    %7218 = vmatpush1.msra.mxu0 0.0
    %7219 = vmatprep.subr.mxu0 0.0
    %7220 = vmatpush1.msra.mxu0 0.0
    %7221 = vmatprep.mubr.f32.mxu0 0.0
    %7222 = vmatmul.mubr.f32.gmra.mrb[0].mxu0 %v7075
    %v7223 = vpop.f32.mrb[0].mxu0
    %v7224 = vadd.f32 %v7065, %v7223
    %v7225 = vpop.f32.mrb[0].mxu0
    %v7226 = vadd.f32 %v7069, %v7225
    %7227 = vmatprep.mubr.f32.mxu0 0.0
    %7228 = vmatmul.mubr.f32.gmra.mrb[0].mxu0 %v7078
    %v7229 = vpop.f32.mrb[0].mxu0
    %v7230 = vadd.f32 %v7065, %v7229
    %v7231 = vpop.f32.mrb[0].mxu0
    %v7232 = vadd.f32 %v7069, %v7231
    %7233 = vdwg.mxu0
    %7234 = vmatprep.subr.mxu0 0.0
    %7235 = vmatpush1.msra.mxu0 %v7048
    %7236 = vmatprep.subr.mxu0 0.0
    %7237 = vmatpush1.msra.mxu0 0.0
    %7238 = vmatprep.subr.mxu0 0.0
    %7239 = vmatpush1.msra.mxu0 0.0
    %7240 = vmatprep.subr.mxu0 0.0
    %7241 = vmatpush1.msra.mxu0 0.0
    %7242 = vmatprep.subr.mxu0 0.0
    %7243 = vmatpush1.msra.mxu0 0.0
    %7244 = vmatprep.subr.mxu0 0.0
    %7245 = vmatpush1.msra.mxu0 0.0
    %7246 = vmatprep.subr.mxu0 0.0
    %7247 = vmatpush1.msra.mxu0 0.0
    %7248 = vmatprep.subr.mxu0 0.0
    %7249 = vmatpush1.msra.mxu0 0.0
    %7250 = vmatprep.subr.mxu0 0.0
    %7251 = vmatpush1.msra.mxu0 0.0
    %7252 = vmatprep.subr.mxu0 0.0
    %7253 = vmatpush1.msra.mxu0 0.0
    %7254 = vmatprep.subr.mxu0 0.0
    %7255 = vmatpush1.msra.mxu0 0.0
    %7256 = vmatprep.subr.mxu0 0.0
    %7257 = vmatpush1.msra.mxu0 0.0
    %7258 = vmatprep.subr.mxu0 0.0
    %7259 = vmatpush1.msra.mxu0 0.0
    %7260 = vmatprep.subr.mxu0 0.0
    %7261 = vmatpush1.msra.mxu0 0.0
    %7262 = vmatprep.subr.mxu0 0.0
    %7263 = vmatpush1.msra.mxu0 0.0
    %7264 = vmatprep.subr.mxu0 0.0
    %7265 = vmatpush1.msra.mxu0 0.0
    %7266 = vmatprep.subr.mxu0 0.0
    %7267 = vmatpush1.msra.mxu0 0.0
    %7268 = vmatprep.subr.mxu0 0.0
    %7269 = vmatpush1.msra.mxu0 0.0
    %7270 = vmatprep.subr.mxu0 0.0
    %7271 = vmatpush1.msra.mxu0 0.0
    %7272 = vmatprep.subr.mxu0 0.0
    %7273 = vmatpush1.msra.mxu0 0.0
    %7274 = vmatprep.subr.mxu0 0.0
    %7275 = vmatpush1.msra.mxu0 0.0
    %7276 = vmatprep.subr.mxu0 0.0
    %7277 = vmatpush1.msra.mxu0 0.0
    %7278 = vmatprep.subr.mxu0 0.0
    %7279 = vmatpush1.msra.mxu0 0.0
    %7280 = vmatprep.subr.mxu0 0.0
    %7281 = vmatpush1.msra.mxu0 0.0
    %7282 = vmatprep.subr.mxu0 0.0
    %7283 = vmatpush1.msra.mxu0 0.0
    %7284 = vmatprep.subr.mxu0 0.0
    %7285 = vmatpush1.msra.mxu0 0.0
    %7286 = vmatprep.subr.mxu0 0.0
    %7287 = vmatpush1.msra.mxu0 0.0
    %7288 = vmatprep.subr.mxu0 0.0
    %7289 = vmatpush1.msra.mxu0 0.0
    %7290 = vmatprep.subr.mxu0 0.0
    %7291 = vmatpush1.msra.mxu0 0.0
    %7292 = vmatprep.subr.mxu0 0.0
    %7293 = vmatpush1.msra.mxu0 0.0
    %7294 = vmatprep.subr.mxu0 0.0
    %7295 = vmatpush1.msra.mxu0 0.0
    %7296 = vmatprep.subr.mxu0 0.0
    %7297 = vmatpush1.msra.mxu0 0.0
    %7298 = vmatprep.mubr.f32.mxu0 0.0
    %7299 = vmatmul.mubr.f32.gmra.mrb[0].mxu0 %v7075
    %v7300 = vpop.f32.mrb[0].mxu0
    %v7301 = vadd.f32 %v7073, %v7300
    %v7302 = vpop.f32.mrb[0].mxu0
    %7303 = vmatprep.mubr.f32.mxu0 0.0
    %7304 = vmatmul.mubr.f32.gmra.mrb[0].mxu0 %v7078
    %v7305 = vpop.f32.mrb[0].mxu0
    %v7306 = vadd.f32 %v7073, %v7305
    %v7307 = vpop.f32.mrb[0].mxu0
    %7308 = vdwg.mxu0
    %v7309 = vmul.f32 %v7034, %v7147
    %v7310 = vmul.f32 %v7035, %v7149
    %v7311 = vmul.f32 %v7036, %v7224
    %v7312 = vmul.f32 %v7037, %v7226
    %v7313 = vmul.f32 %v7038, %v7301
    %v7314 = vmul.f32 %v7039, %v7153
    %v7315 = vmul.f32 %v7040, %v7155
    %v7316 = vmul.f32 %v7041, %v7230
    %v7317 = vmul.f32 %v7042, %v7232
    %v7318 = vmul.f32 %v7043, %v7306
    %s7319 = scalar_lea.vmem %s11, 576
    %v7320 = vld [vmem:[%s7319] sm:$0xff]
    %v7321 = vld [vmem:[%s7319 + $0x8] sm:$0xff]
    %v7322 = vld [vmem:[%s7319 + $0x10] sm:$0xff]
    %v7323 = vld [vmem:[%s7319 + $0x18] sm:$0xff]
    %v7324 = vld [vmem:[%s7319 + $0x20] sm:$0xff]
    %v7325 = vld [vmem:[%s7319 + $0x28] sm:$0xff]
    %v7326 = vld [vmem:[%s7319 + $0x30] sm:$0xff]
    %v7327 = vld [vmem:[%s7319 + $0x38] sm:$0xff]
    %v7328 = vld [vmem:[%s7319 + $0x40] sm:$0xff]
    %v7329 = vld [vmem:[%s7319 + $0x48] sm:$0xff]
    %v7330 = vld [vmem:[%s7319 + $0x50] sm:$0xff]
    %v7331 = vld [vmem:[%s7319 + $0x58] sm:$0xff]
    %v7332 = vld [vmem:[%s7319 + $0x60] sm:$0xff]
    %v7333 = vld [vmem:[%s7319 + $0x68] sm:$0xff]
    %v7334 = vld [vmem:[%s7319 + $0x70] sm:$0xff]
    %v7335 = vld [vmem:[%s7319 + $0x78] sm:$0xff]
    %v7336 = vld [vmem:[%s7319 + $0x80] sm:$0xff]
    %v7337 = vld [vmem:[%s7319 + $0x88] sm:$0xff]
    %v7338 = vld [vmem:[%s7319 + $0x90] sm:$0xff]
    %v7339 = vld [vmem:[%s7319 + $0x98] sm:$0xff]
    %v7340 = vld [vmem:[%s7319 + $0xa0] sm:$0xff]
    %v7341 = vld [vmem:[%s7319 + $0xa8] sm:$0xff]
    %v7342 = vld [vmem:[%s7319 + $0xb0] sm:$0xff]
    %v7343 = vld [vmem:[%s7319 + $0xb8] sm:$0xff]
    %v7344 = vld [vmem:[%s7319 + $0xc0] sm:$0xff]
    %v7345 = vld [vmem:[%s7319 + $0xc8] sm:$0xff]
    %v7346 = vld [vmem:[%s7319 + $0xd0] sm:$0xff]
    %v7347 = vld [vmem:[%s7319 + $0xd8] sm:$0xff]
    %v7348 = vld [vmem:[%s7319 + $0xe0] sm:$0xff]
    %v7349 = vld [vmem:[%s7319 + $0xe8] sm:$0xff]
    %v7350 = vld [vmem:[%s7319 + $0xf0] sm:$0xff]
    %v7351 = vld [vmem:[%s7319 + $0xf8] sm:$0xff]
    %v7352 = vld [vmem:[%s7319 + $0x100] sm:$0xff]
    %v7353 = vld [vmem:[%s7319 + $0x108] sm:$0xff]
    %v7354 = vld [vmem:[%s7319 + $0x110] sm:$0xff]
    %v7355 = vld [vmem:[%s7319 + $0x118] sm:$0xff]
    %v7356 = vld [vmem:[%s7319 + $0x120] sm:$0xff]
    %v7357 = vld [vmem:[%s7319 + $0x128] sm:$0xff]
    %v7358 = vld [vmem:[%s7319 + $0x130] sm:$0xff]
    %v7359 = vld [vmem:[%s7319 + $0x138] sm:$0xff]
    %v7360 = vld [vmem:[%s7319 + $0x140] sm:$0xff]
    %v7361 = vld [vmem:[%s7319 + $0x148] sm:$0xff]
    %v7362 = vld [vmem:[%s7319 + $0x150] sm:$0xff]
    %v7363 = vld [vmem:[%s7319 + $0x158] sm:$0xff]
    %v7364 = vld [vmem:[%s7319 + $0x160] sm:$0xff]
    %v7365 = vld [vmem:[%s7319 + $0x168] sm:$0xff]
    %v7366 = vld [vmem:[%s7319 + $0x170] sm:$0xff]
    %v7367 = vld [vmem:[%s7319 + $0x178] sm:$0xff]
    %v7368 = vld [vmem:[%s7319 + $0x180] sm:$0xff]
    %v7369 = vld [vmem:[%s7319 + $0x188] sm:$0xff]
    %v7370 = vld [vmem:[%s7319 + $0x190] sm:$0xff]
    %v7371 = vld [vmem:[%s7319 + $0x198] sm:$0xff]
    %v7372 = vld [vmem:[%s7319 + $0x1a0] sm:$0xff]
    %v7373 = vld [vmem:[%s7319 + $0x1a8] sm:$0xff]
    %v7374 = vld [vmem:[%s7319 + $0x1b0] sm:$0xff]
    %v7375 = vld [vmem:[%s7319 + $0x1b8] sm:$0xff]
    %v7376 = vld [vmem:[%s7319 + $0x1c0] sm:$0xff]
    %v7377 = vld [vmem:[%s7319 + $0x1c8] sm:$0xff]
    %v7378 = vld [vmem:[%s7319 + $0x1d0] sm:$0xff]
    %v7379 = vld [vmem:[%s7319 + $0x1d8] sm:$0xff]
    %v7380 = vld [vmem:[%s7319 + $0x1e0] sm:$0xff]
    %v7381 = vld [vmem:[%s7319 + $0x1e8] sm:$0xff]
    %v7382 = vld [vmem:[%s7319 + $0x1f0] sm:$0xff]
    %v7383 = vld [vmem:[%s7319 + $0x1f8] sm:$0xff]
    %v7384 = vld [vmem:[%s7319 + $0x200] sm:$0xff]
    %v7385 = vld [vmem:[%s7319 + $0x208] sm:$0xff]
    %v7386 = vld [vmem:[%s7319 + $0x210] sm:$0xff]
    %v7387 = vld [vmem:[%s7319 + $0x218] sm:$0xff]
    %v7388 = vld [vmem:[%s7319 + $0x220] sm:$0xff]
    %v7389 = vld [vmem:[%s7319 + $0x228] sm:$0xff]
    %v7390 = vld [vmem:[%s7319 + $0x230] sm:$0xff]
    %v7391 = vld [vmem:[%s7319 + $0x238] sm:$0xff]
    %v7393 = vsel %vm71, %v7313, 0
    %v7396 = vsel %vm71, %v7318, 0
    %7398 = vmatprep.subr.mxu0 0.0
    %7399 = vmatpush1.msra.mxu0 %v7320
    %7400 = vmatprep.subr.mxu0 0.0
    %7401 = vmatpush1.msra.mxu0 %v7321
    %7402 = vmatprep.subr.mxu0 0.0
    %7403 = vmatpush1.msra.mxu0 %v7322
    %7404 = vmatprep.subr.mxu0 0.0
    %7405 = vmatpush1.msra.mxu0 %v7323
    %7406 = vmatprep.subr.mxu0 0.0
    %7407 = vmatpush1.msra.mxu0 %v7324
    %7408 = vmatprep.subr.mxu0 0.0
    %7409 = vmatpush1.msra.mxu0 %v7325
    %7410 = vmatprep.subr.mxu0 0.0
    %7411 = vmatpush1.msra.mxu0 %v7326
    %7412 = vmatprep.subr.mxu0 0.0
    %7413 = vmatpush1.msra.mxu0 %v7327
    %7414 = vmatprep.subr.mxu0 0.0
    %7415 = vmatpush1.msra.mxu0 %v7328
    %7416 = vmatprep.subr.mxu0 0.0
    %7417 = vmatpush1.msra.mxu0 %v7329
    %7418 = vmatprep.subr.mxu0 0.0
    %7419 = vmatpush1.msra.mxu0 %v7330
    %7420 = vmatprep.subr.mxu0 0.0
    %7421 = vmatpush1.msra.mxu0 %v7331
    %7422 = vmatprep.subr.mxu0 0.0
    %7423 = vmatpush1.msra.mxu0 %v7332
    %7424 = vmatprep.subr.mxu0 0.0
    %7425 = vmatpush1.msra.mxu0 %v7333
    %7426 = vmatprep.subr.mxu0 0.0
    %7427 = vmatpush1.msra.mxu0 %v7334
    %7428 = vmatprep.subr.mxu0 0.0
    %7429 = vmatpush1.msra.mxu0 %v7335
    %7430 = vmatprep.subr.mxu0 0.0
    %7431 = vmatpush1.msra.mxu0 %v7336
    %7432 = vmatprep.subr.mxu0 0.0
    %7433 = vmatpush1.msra.mxu0 %v7337
    %7434 = vmatprep.subr.mxu0 0.0
    %7435 = vmatpush1.msra.mxu0 %v7338
    %7436 = vmatprep.subr.mxu0 0.0
    %7437 = vmatpush1.msra.mxu0 %v7339
    %7438 = vmatprep.subr.mxu0 0.0
    %7439 = vmatpush1.msra.mxu0 %v7340
    %7440 = vmatprep.subr.mxu0 0.0
    %7441 = vmatpush1.msra.mxu0 %v7341
    %7442 = vmatprep.subr.mxu0 0.0
    %7443 = vmatpush1.msra.mxu0 %v7342
    %7444 = vmatprep.subr.mxu0 0.0
    %7445 = vmatpush1.msra.mxu0 %v7343
    %7446 = vmatprep.subr.mxu0 0.0
    %7447 = vmatpush1.msra.mxu0 %v7344
    %7448 = vmatprep.subr.mxu0 0.0
    %7449 = vmatpush1.msra.mxu0 %v7345
    %7450 = vmatprep.subr.mxu0 0.0
    %7451 = vmatpush1.msra.mxu0 %v7346
    %7452 = vmatprep.subr.mxu0 0.0
    %7453 = vmatpush1.msra.mxu0 %v7347
    %7454 = vmatprep.subr.mxu0 0.0
    %7455 = vmatpush1.msra.mxu0 %v7348
    %7456 = vmatprep.subr.mxu0 0.0
    %7457 = vmatpush1.msra.mxu0 %v7349
    %7458 = vmatprep.subr.mxu0 0.0
    %7459 = vmatpush1.msra.mxu0 %v7350
    %7460 = vmatprep.subr.mxu0 0.0
    %7461 = vmatpush1.msra.mxu0 %v7351
    %7462 = vmatprep.mubr.f32.mxu0 %v7310
    %7463 = vmatmul.mubr.f32.gmra.mrb[0].mxu0 %v7309
    %v7464 = vpop.f32.mrb[0].mxu0
    %v7465 = vadd.f32 0.0, %v7464
    %v7466 = vpop.f32.mrb[0].mxu0
    %7467 = vmatprep.mubr.f32.mxu0 %v7315
    %7468 = vmatmul.mubr.f32.gmra.mrb[0].mxu0 %v7314
    %v7469 = vpop.f32.mrb[0].mxu0
    %v7470 = vadd.f32 0.0, %v7469
    %v7471 = vpop.f32.mrb[0].mxu0
    %7472 = vdwg.mxu0
    %7473 = vmatprep.subr.mxu0 0.0
    %7474 = vmatpush1.msra.mxu0 %v7352
    %7475 = vmatprep.subr.mxu0 0.0
    %7476 = vmatpush1.msra.mxu0 %v7353
    %7477 = vmatprep.subr.mxu0 0.0
    %7478 = vmatpush1.msra.mxu0 %v7354
    %7479 = vmatprep.subr.mxu0 0.0
    %7480 = vmatpush1.msra.mxu0 %v7355
    %7481 = vmatprep.subr.mxu0 0.0
    %7482 = vmatpush1.msra.mxu0 %v7356
    %7483 = vmatprep.subr.mxu0 0.0
    %7484 = vmatpush1.msra.mxu0 %v7357
    %7485 = vmatprep.subr.mxu0 0.0
    %7486 = vmatpush1.msra.mxu0 %v7358
    %7487 = vmatprep.subr.mxu0 0.0
    %7488 = vmatpush1.msra.mxu0 %v7359
    %7489 = vmatprep.subr.mxu0 0.0
    %7490 = vmatpush1.msra.mxu0 %v7360
    %7491 = vmatprep.subr.mxu0 0.0
    %7492 = vmatpush1.msra.mxu0 %v7361
    %7493 = vmatprep.subr.mxu0 0.0
    %7494 = vmatpush1.msra.mxu0 %v7362
    %7495 = vmatprep.subr.mxu0 0.0
    %7496 = vmatpush1.msra.mxu0 %v7363
    %7497 = vmatprep.subr.mxu0 0.0
    %7498 = vmatpush1.msra.mxu0 %v7364
    %7499 = vmatprep.subr.mxu0 0.0
    %7500 = vmatpush1.msra.mxu0 %v7365
    %7501 = vmatprep.subr.mxu0 0.0
    %7502 = vmatpush1.msra.mxu0 %v7366
    %7503 = vmatprep.subr.mxu0 0.0
    %7504 = vmatpush1.msra.mxu0 %v7367
    %7505 = vmatprep.subr.mxu0 0.0
    %7506 = vmatpush1.msra.mxu0 %v7368
    %7507 = vmatprep.subr.mxu0 0.0
    %7508 = vmatpush1.msra.mxu0 %v7369
    %7509 = vmatprep.subr.mxu0 0.0
    %7510 = vmatpush1.msra.mxu0 %v7370
    %7511 = vmatprep.subr.mxu0 0.0
    %7512 = vmatpush1.msra.mxu0 %v7371
    %7513 = vmatprep.subr.mxu0 0.0
    %7514 = vmatpush1.msra.mxu0 %v7372
    %7515 = vmatprep.subr.mxu0 0.0
    %7516 = vmatpush1.msra.mxu0 %v7373
    %7517 = vmatprep.subr.mxu0 0.0
    %7518 = vmatpush1.msra.mxu0 %v7374
    %7519 = vmatprep.subr.mxu0 0.0
    %7520 = vmatpush1.msra.mxu0 %v7375
    %7521 = vmatprep.subr.mxu0 0.0
    %7522 = vmatpush1.msra.mxu0 %v7376
    %7523 = vmatprep.subr.mxu0 0.0
    %7524 = vmatpush1.msra.mxu0 %v7377
    %7525 = vmatprep.subr.mxu0 0.0
    %7526 = vmatpush1.msra.mxu0 %v7378
    %7527 = vmatprep.subr.mxu0 0.0
    %7528 = vmatpush1.msra.mxu0 %v7379
    %7529 = vmatprep.subr.mxu0 0.0
    %7530 = vmatpush1.msra.mxu0 %v7380
    %7531 = vmatprep.subr.mxu0 0.0
    %7532 = vmatpush1.msra.mxu0 %v7381
    %7533 = vmatprep.subr.mxu0 0.0
    %7534 = vmatpush1.msra.mxu0 %v7382
    %7535 = vmatprep.subr.mxu0 0.0
    %7536 = vmatpush1.msra.mxu0 %v7383
    %7537 = vmatprep.mubr.f32.mxu0 %v7312
    %7538 = vmatmul.mubr.f32.gmra.mrb[0].mxu0 %v7311
    %v7539 = vpop.f32.mrb[0].mxu0
    %v7540 = vadd.f32 %v7465, %v7539
    %v7541 = vpop.f32.mrb[0].mxu0
    %7542 = vmatprep.mubr.f32.mxu0 %v7317
    %7543 = vmatmul.mubr.f32.gmra.mrb[0].mxu0 %v7316
    %v7544 = vpop.f32.mrb[0].mxu0
    %v7545 = vadd.f32 %v7470, %v7544
    %v7546 = vpop.f32.mrb[0].mxu0
    %7547 = vdwg.mxu0
    %7548 = vmatprep.subr.mxu0 0.0
    %7549 = vmatpush1.msra.mxu0 %v7384
    %7550 = vmatprep.subr.mxu0 0.0
    %7551 = vmatpush1.msra.mxu0 %v7385
    %7552 = vmatprep.subr.mxu0 0.0
    %7553 = vmatpush1.msra.mxu0 %v7386
    %7554 = vmatprep.subr.mxu0 0.0
    %7555 = vmatpush1.msra.mxu0 %v7387
    %7556 = vmatprep.subr.mxu0 0.0
    %7557 = vmatpush1.msra.mxu0 %v7388
    %7558 = vmatprep.subr.mxu0 0.0
    %7559 = vmatpush1.msra.mxu0 %v7389
    %7560 = vmatprep.subr.mxu0 0.0
    %7561 = vmatpush1.msra.mxu0 %v7390
    %7562 = vmatprep.subr.mxu0 0.0
    %7563 = vmatpush1.msra.mxu0 %v7391
    %7564 = vmatprep.subr.mxu0 0.0
    %7565 = vmatpush1.msra.mxu0 0.0
    %7566 = vmatprep.subr.mxu0 0.0
    %7567 = vmatpush1.msra.mxu0 0.0
    %7568 = vmatprep.subr.mxu0 0.0
    %7569 = vmatpush1.msra.mxu0 0.0
    %7570 = vmatprep.subr.mxu0 0.0
    %7571 = vmatpush1.msra.mxu0 0.0
    %7572 = vmatprep.subr.mxu0 0.0
    %7573 = vmatpush1.msra.mxu0 0.0
    %7574 = vmatprep.subr.mxu0 0.0
    %7575 = vmatpush1.msra.mxu0 0.0
    %7576 = vmatprep.subr.mxu0 0.0
    %7577 = vmatpush1.msra.mxu0 0.0
    %7578 = vmatprep.subr.mxu0 0.0
    %7579 = vmatpush1.msra.mxu0 0.0
    %7580 = vmatprep.subr.mxu0 0.0
    %7581 = vmatpush1.msra.mxu0 0.0
    %7582 = vmatprep.subr.mxu0 0.0
    %7583 = vmatpush1.msra.mxu0 0.0
    %7584 = vmatprep.subr.mxu0 0.0
    %7585 = vmatpush1.msra.mxu0 0.0
    %7586 = vmatprep.subr.mxu0 0.0
    %7587 = vmatpush1.msra.mxu0 0.0
    %7588 = vmatprep.subr.mxu0 0.0
    %7589 = vmatpush1.msra.mxu0 0.0
    %7590 = vmatprep.subr.mxu0 0.0
    %7591 = vmatpush1.msra.mxu0 0.0
    %7592 = vmatprep.subr.mxu0 0.0
    %7593 = vmatpush1.msra.mxu0 0.0
    %7594 = vmatprep.subr.mxu0 0.0
    %7595 = vmatpush1.msra.mxu0 0.0
    %7596 = vmatprep.subr.mxu0 0.0
    %7597 = vmatpush1.msra.mxu0 0.0
    %7598 = vmatprep.subr.mxu0 0.0
    %7599 = vmatpush1.msra.mxu0 0.0
    %7600 = vmatprep.subr.mxu0 0.0
    %7601 = vmatpush1.msra.mxu0 0.0
    %7602 = vmatprep.subr.mxu0 0.0
    %7603 = vmatpush1.msra.mxu0 0.0
    %7604 = vmatprep.subr.mxu0 0.0
    %7605 = vmatpush1.msra.mxu0 0.0
    %7606 = vmatprep.subr.mxu0 0.0
    %7607 = vmatpush1.msra.mxu0 0.0
    %7608 = vmatprep.subr.mxu0 0.0
    %7609 = vmatpush1.msra.mxu0 0.0
    %7610 = vmatprep.subr.mxu0 0.0
    %7611 = vmatpush1.msra.mxu0 0.0
    %7612 = vmatprep.mubr.f32.mxu0 0.0
    %7613 = vmatmul.mubr.f32.gmra.mrb[0].mxu0 %v7393
    %v7614 = vpop.f32.mrb[0].mxu0
    %v7615 = vadd.f32 %v7540, %v7614
    %v7616 = vpop.f32.mrb[0].mxu0
    %7617 = vmatprep.mubr.f32.mxu0 0.0
    %7618 = vmatmul.mubr.f32.gmra.mrb[0].mxu0 %v7396
    %v7619 = vpop.f32.mrb[0].mxu0
    %v7620 = vadd.f32 %v7545, %v7619
    %v7621 = vpop.f32.mrb[0].mxu0
    %7622 = vdwg.mxu0
    %v7623 = vadd.f32 %v6348, %v7615
    %v7624 = vadd.f32 %v6349, %v7620
    %v7625 = vmul.f32 %v7623, 1.4142135
    %v7626 = vmul.f32 %v7624, 1.4142135
    %v7627 = vmul.f32 %v7625, %v7625
    %v7628 = vmul.f32 %v7626, %v7626
    %v7629 = vsel %vm158, %v7627, 0.0
    %7630 = vadd.xlane.f32.xlu0 %v7629
    %v7631 = vpop.xlane.xlu0 %7630
    %v7632 = vsel %vm158, %v7628, 0.0
    %7633 = vadd.xlane.f32.xlu0 %v7632
    %v7634 = vpop.xlane.xlu0 %7633
    %v7635 = vmul.f32 %v7631, %v165
    %v7636 = vmul.f32 %v7634, %v165
    %v7637 = vadd.f32 %v7635, 1.1920929e-07
    %v7638 = vadd.f32 %v7636, 1.1920929e-07
    %v7639 = vrsqrt.pop %v7637
    %v7640 = vrsqrt.pop %v7638
    %v7641 = vmul.f32 %v7625, %v7639
    %v7642 = vmul.f32 %v7626, %v7640
    %v7643 = vld [vmem:[%s2] sm:$0xff]
    %v7644 = vld [vmem:[%s2 + $0x8] sm:$0xff]
    %v7645 = vld [vmem:[%s2 + $0x10] sm:$0xff]
    %v7646 = vld [vmem:[%s2 + $0x18] sm:$0xff]
    %v7648 = vsel %vm158, %v7641, 0
    %v7651 = vsel %vm158, %v7642, 0
    %7653 = vmatprep.subr.mxu0 0.0
    %7654 = vmatpush1.msra.mxu0 %v7643
    %7655 = vmatprep.subr.mxu0 0.0
    %7656 = vmatpush1.msra.mxu0 %v7644
    %7657 = vmatprep.subr.mxu0 0.0
    %7658 = vmatpush1.msra.mxu0 %v7645
    %7659 = vmatprep.subr.mxu0 0.0
    %7660 = vmatpush1.msra.mxu0 %v7646
    %7661 = vmatprep.subr.mxu0 0.0
    %7662 = vmatpush1.msra.mxu0 0.0
    %7663 = vmatprep.subr.mxu0 0.0
    %7664 = vmatpush1.msra.mxu0 0.0
    %7665 = vmatprep.subr.mxu0 0.0
    %7666 = vmatpush1.msra.mxu0 0.0
    %7667 = vmatprep.subr.mxu0 0.0
    %7668 = vmatpush1.msra.mxu0 0.0
    %7669 = vmatprep.subr.mxu0 0.0
    %7670 = vmatpush1.msra.mxu0 0.0
    %7671 = vmatprep.subr.mxu0 0.0
    %7672 = vmatpush1.msra.mxu0 0.0
    %7673 = vmatprep.subr.mxu0 0.0
    %7674 = vmatpush1.msra.mxu0 0.0
    %7675 = vmatprep.subr.mxu0 0.0
    %7676 = vmatpush1.msra.mxu0 0.0
    %7677 = vmatprep.subr.mxu0 0.0
    %7678 = vmatpush1.msra.mxu0 0.0
    %7679 = vmatprep.subr.mxu0 0.0
    %7680 = vmatpush1.msra.mxu0 0.0
    %7681 = vmatprep.subr.mxu0 0.0
    %7682 = vmatpush1.msra.mxu0 0.0
    %7683 = vmatprep.subr.mxu0 0.0
    %7684 = vmatpush1.msra.mxu0 0.0
    %7685 = vmatprep.subr.mxu0 0.0
    %7686 = vmatpush1.msra.mxu0 0.0
    %7687 = vmatprep.subr.mxu0 0.0
    %7688 = vmatpush1.msra.mxu0 0.0
    %7689 = vmatprep.subr.mxu0 0.0
    %7690 = vmatpush1.msra.mxu0 0.0
    %7691 = vmatprep.subr.mxu0 0.0
    %7692 = vmatpush1.msra.mxu0 0.0
    %7693 = vmatprep.subr.mxu0 0.0
    %7694 = vmatpush1.msra.mxu0 0.0
    %7695 = vmatprep.subr.mxu0 0.0
    %7696 = vmatpush1.msra.mxu0 0.0
    %7697 = vmatprep.subr.mxu0 0.0
    %7698 = vmatpush1.msra.mxu0 0.0
    %7699 = vmatprep.subr.mxu0 0.0
    %7700 = vmatpush1.msra.mxu0 0.0
    %7701 = vmatprep.subr.mxu0 0.0
    %7702 = vmatpush1.msra.mxu0 0.0
    %7703 = vmatprep.subr.mxu0 0.0
    %7704 = vmatpush1.msra.mxu0 0.0
    %7705 = vmatprep.subr.mxu0 0.0
    %7706 = vmatpush1.msra.mxu0 0.0
    %7707 = vmatprep.subr.mxu0 0.0
    %7708 = vmatpush1.msra.mxu0 0.0
    %7709 = vmatprep.subr.mxu0 0.0
    %7710 = vmatpush1.msra.mxu0 0.0
    %7711 = vmatprep.subr.mxu0 0.0
    %7712 = vmatpush1.msra.mxu0 0.0
    %7713 = vmatprep.subr.mxu0 0.0
    %7714 = vmatpush1.msra.mxu0 0.0
    %7715 = vmatprep.subr.mxu0 0.0
    %7716 = vmatpush1.msra.mxu0 0.0
    %7717 = vmatprep.mubr.f32.mxu0 0.0
    %7718 = vmatmul.mubr.f32.gmra.mrb[0].mxu0 %v7648
    %v7719 = vpop.f32.mrb[0].mxu0
    %v7720 = vadd.f32 0.0, %v7719
    %v7721 = vpop.f32.mrb[0].mxu0
    %7722 = vmatprep.mubr.f32.mxu0 0.0
    %7723 = vmatmul.mubr.f32.gmra.mrb[0].mxu0 %v7651
    %v7724 = vpop.f32.mrb[0].mxu0
    %v7725 = vadd.f32 0.0, %v7724
    %v7726 = vpop.f32.mrb[0].mxu0
    %7727 = vdwg.mxu0
    %7728 = vst.msk [vmem:[#allocation3] sm:$0xff] %vm71, %v7720
    %7729 = vst.msk [vmem:[#allocation3 + $0x8] sm:$0xff] %vm71, %v7725
    // Predicated region
    $region54: #{deepseek_forward.1} parent=1 // pred_check
      _
    $region55: #{deepseek_forward.1} parent=1 // pred_check_branch
      %7731 = sbr.rel (0) target = $region57
    $region56: #{deepseek_forward.1} parent=1 // pred_region
      %s7733 = ssub.s32 256, 256
      %7734 = vsyncadd [#allocation4], %s7733
      %s7735 = sshll.u32 [#allocation3], 4
      %s7736 = int_to_ptr.vmem [resolvable:$true] %s7735
      %7741 = dma.vmem_to_hbm [thread:$0]  %s7736, 256, %s13, [#allocation4], 128, 128, 8
    $region57: #{deepseek_forward.1} parent=1 // pred_fallthru
      _
    // Predicated region
    $region58: #{deepseek_forward.1} parent=1 // pred_check
      _
    $region59: #{deepseek_forward.1} parent=1 // pred_check_branch
      %7743 = sbr.rel (0) target = $region61
    $region60: #{deepseek_forward.1} parent=1 // pred_region
      %7744 = dma.done [#allocation4], 256
    $region61: #{deepseek_forward.1} parent=1 // pred_fallthru
      _
    %7745 = vsyncpa [#allocation4], 1

</llo_original>
